<compile_context>
chip_gen: v6e
topology: v6e:2x2x1
jax: 0.10.0
libtpu: 0.0.40
codegen_flags: <defaults>
</compile_context>

<pallas_src>
import functools

import jax
import jax.numpy as jnp
from jax.experimental import pallas as pl
from jax.experimental.pallas import tpu as pltpu

_N_CLASSES = 1283          # output Linear(160, 1283) in the reference module
USE_BF16 = False           # gated bf16 MXU path (keeps f32 accumulation)


def _round_up(x, m):
    return ((x + m - 1) // m) * m


def _vmem_limit_bytes(streamed_block_bytes, resident_bytes):
    """Scoped-VMEM cap from the tile footprint: 2x (double buffer) for the
    streamed blocks + resident weights, with headroom; clamped for v7x."""
    need = 2 * streamed_block_bytes + resident_bytes
    return int(min(max(2 * need + (4 << 20), 16 << 20), 48 << 20))


# ----------------------------- Pallas kernels -------------------------------

def _conv_relu_pool_kernel(tile_m, p_ref, w_ref, b_ref, o_ref):
    """Fused valid conv (im2col matmul) + bias + ReLU + 2x2/2 max-pool.

    p_ref: (4*tile_m, K) — the four pooling-parity patch matrices of the same
    tile_m pooled pixels, stacked along rows.  One MXU push, max on the VPU.
    """
    y = jnp.dot(p_ref[...], w_ref[...], preferred_element_type=jnp.float32)
    m = jnp.maximum(
        jnp.maximum(y[0 * tile_m:1 * tile_m, :], y[1 * tile_m:2 * tile_m, :]),
        jnp.maximum(y[2 * tile_m:3 * tile_m, :], y[3 * tile_m:4 * tile_m, :]))
    o_ref[...] = jnp.maximum(m + b_ref[...], 0.0).astype(o_ref.dtype)


def _tail_kernel(tile_b, p4_ref, xf_ref, w4_ref, b4_ref, w1_ref, w2_ref,
                 b12_ref, w3_ref, b3_ref, o_ref):
    """conv_4 + fc_1 + fc_2 + ReLU + output, fused.

    p4_ref: (npos*tile_b, K4) conv4 im2col patches, position-major within the
    batch tile.  fc_2 is applied position-by-position against row-blocks of
    its (960, 160) weight, so no lane-dim reshape is needed in-kernel.
    """
    npos = p4_ref.shape[0] // tile_b
    c4 = w4_ref.shape[1]
    # conv4 + bias + ReLU  -> (npos*tile_b, c4) in f32
    y4 = jnp.maximum(
        jnp.dot(p4_ref[...], w4_ref[...], preferred_element_type=jnp.float32)
        + b4_ref[...], 0.0)
    # fc_1(xf) + fc_2(yf): fc_2 accumulated per conv4 output position.
    h = jnp.dot(xf_ref[...], w1_ref[...], preferred_element_type=jnp.float32)
    for p in range(npos):
        h = h + jnp.dot(
            y4[p * tile_b:(p + 1) * tile_b, :].astype(w2_ref.dtype),
            w2_ref[pl.ds(p * c4, c4), :],
            preferred_element_type=jnp.float32)
    h = jnp.maximum(h + b12_ref[...], 0.0)
    o_ref[...] = (jnp.dot(h.astype(w3_ref.dtype), w3_ref[...],
                          preferred_element_type=jnp.float32)
                  + b3_ref[...]).astype(o_ref.dtype)


# ----------------------------- stage wrappers --------------------------------

def conv_relu_pool(x, w_mat, b_row, k, out_dtype):
    """x: (B,H,W,C) NHWC. One gridded pallas_call: conv(k)+bias+ReLU+pool."""
    B, H, W, C = x.shape
    Ho, Wo = H - k + 1, W - k + 1
    Hp, Wp = Ho // 2, Wo // 2
    K = k * k * C
    Cout = w_mat.shape[1]
    M = B * Hp * Wp

    tile_m = min(256, _round_up(M, 32))
    nblk = pl.cdiv(M, tile_m)
    Mpad = nblk * tile_m
    cdt = w_mat.dtype
    esz = jnp.dtype(cdt).itemsize
    osz = jnp.dtype(out_dtype).itemsize

    # Four pooling-parity im2col patch matrices (XLA glue), re-blocked so each
    # grid step streams one (4*tile_m, K) slab of the same tile_m pooled pixels.
    mats = []
    for dh in (0, 1):
        for dw in (0, 1):
            slabs = [x[:, dh + i:dh + i + 2 * Hp:2,
                         dw + j:dw + j + 2 * Wp:2, :]
                     for i in range(k) for j in range(k)]
            p = jnp.stack(slabs, axis=3)            # (B, Hp, Wp, k*k, C)
            assert p.shape == (B, Hp, Wp, k * k, C), p.shape
            mats.append(p.reshape(M, K))
    patches = jnp.stack(mats, axis=0).astype(cdt)                 # (4, M, K)
    patches = jnp.pad(patches, ((0, 0), (0, Mpad - M), (0, 0)))
    patches = patches.reshape(4, nblk, tile_m, K).transpose(1, 0, 2, 3)
    patches = patches.reshape(nblk * 4 * tile_m, K)

    streamed = 4 * tile_m * K * esz + tile_m * Cout * osz
    resident = K * Cout * esz + Cout * 4
    flops = 2 * 4 * Mpad * K * Cout
    bytes_acc = esz * (4 * Mpad * K + K * Cout) + 4 * Cout + osz * Mpad * Cout

    out = pl.pallas_call(
        functools.partial(_conv_relu_pool_kernel, tile_m),
        grid=(nblk,),
        out_shape=jax.ShapeDtypeStruct((Mpad, Cout), out_dtype),
        in_specs=[
            pl.BlockSpec((4 * tile_m, K), lambda i: (i, 0)),   # streamed
            pl.BlockSpec((K, Cout), lambda i: (0, 0)),         # resident
            pl.BlockSpec((1, Cout), lambda i: (0, 0)),         # resident
        ],
        out_specs=pl.BlockSpec((tile_m, Cout), lambda i: (i, 0)),
        compiler_params=pltpu.CompilerParams(
            dimension_semantics=("parallel",),
            vmem_limit_bytes=_vmem_limit_bytes(streamed, resident)),
        cost_estimate=pl.CostEstimate(flops=int(flops), transcendentals=0,
                                      bytes_accessed=int(bytes_acc)),
    )(patches, w_mat, b_row)
    return out[:M].reshape(B, Hp, Wp, Cout)


def conv4_fc_head(x3, w4, b4, w1, w2, b12, w3p, b3p, n_out):
    """Fused tail: conv_4 + fc_1 + fc_2 + ReLU + output in one pallas_call.

    x3: (B, 5, 4, 60) pooled conv_3 output (NHWC).  Returns (B, n_out) f32.
    """
    B, H3, W3, C3 = x3.shape
    k = 2
    Ho, Wo = H3 - k + 1, W3 - k + 1
    npos = Ho * Wo                       # 12
    K4 = k * k * C3                      # 240
    C4 = w4.shape[1]                     # 80
    K1 = w1.shape[0]                     # 1200
    H12 = w1.shape[1]                    # 160
    Npad = w3p.shape[1]                  # 1408
    cdt = w1.dtype
    esz = jnp.dtype(cdt).itemsize

    # NHWC flatten == torch permute(0,2,3,1).reshape(-1, 1200)
    xf = x3.reshape(B, H3 * W3 * C3).astype(cdt)

    slabs = [x3[:, i:i + Ho, j:j + Wo, :] for i in range(k) for j in range(k)]
    p4 = jnp.stack(slabs, axis=3)                      # (B, Ho, Wo, k*k, C3)
    assert p4.shape == (B, Ho, Wo, k * k, C3), p4.shape
    p4 = p4.reshape(B, npos, K4).astype(w4.dtype)

    tile_b = min(128, _round_up(B, 8))
    nb = pl.cdiv(B, tile_b)
    Bpad = nb * tile_b
    xf = jnp.pad(xf, ((0, Bpad - B), (0, 0)))
    p4 = jnp.pad(p4, ((0, Bpad - B), (0, 0), (0, 0)))
    # (nb, tile_b, npos, K4) -> (nb, npos, tile_b, K4): position-major inside
    # each batch tile so per-position row slices are contiguous in-kernel.
    p4 = p4.reshape(nb, tile_b, npos, K4).transpose(0, 2, 1, 3)
    p4 = p4.reshape(nb * npos * tile_b, K4)

    streamed = (npos * tile_b * K4 + tile_b * K1) * esz + tile_b * Npad * 4
    resident = (K4 * C4 + K1 * H12 + npos * C4 * H12 + H12 * Npad) * esz \
        + (C4 + H12 + Npad) * 4
    flops = 2 * Bpad * (npos * K4 * C4 + K1 * H12 + npos * C4 * H12
                        + H12 * Npad)
    bytes_acc = esz * (Bpad * npos * K4 + Bpad * K1 + K4 * C4 + K1 * H12
                       + npos * C4 * H12 + H12 * Npad) \
        + 4 * (C4 + H12 + Npad + Bpad * Npad)

    out = pl.pallas_call(
        functools.partial(_tail_kernel, tile_b),
        grid=(nb,),
        out_shape=jax.ShapeDtypeStruct((Bpad, Npad), jnp.float32),
        in_specs=[
            pl.BlockSpec((npos * tile_b, K4), lambda i: (i, 0)),  # streamed
            pl.BlockSpec((tile_b, K1), lambda i: (i, 0)),         # streamed
            pl.BlockSpec((K4, C4), lambda i: (0, 0)),              # resident
            pl.BlockSpec((1, C4), lambda i: (0, 0)),
            pl.BlockSpec((K1, H12), lambda i: (0, 0)),
            pl.BlockSpec((npos * C4, H12), lambda i: (0, 0)),
            pl.BlockSpec((1, H12), lambda i: (0, 0)),
            pl.BlockSpec((H12, Npad), lambda i: (0, 0)),
            pl.BlockSpec((1, Npad), lambda i: (0, 0)),
        ],
        out_specs=pl.BlockSpec((tile_b, Npad), lambda i: (i, 0)),
        compiler_params=pltpu.CompilerParams(
            dimension_semantics=("parallel",),
            vmem_limit_bytes=_vmem_limit_bytes(streamed, resident)),
        cost_estimate=pl.CostEstimate(flops=int(flops), transcendentals=0,
                                      bytes_accessed=int(bytes_acc)),
    )(p4, xf, w4, b4, w1, w2, b12, w3p, b3p)
    return out[:B, :n_out]


# ------------------------------- parameters ----------------------------------

def init_params(key):
    """Parameters in PyTorch layout (Conv2d: (Cout,Cin,KH,KW); Linear: (out,in))."""
    ks = jax.random.split(key, 14)
    s = 0.05

    def conv_w(k, cout, cin, kh, kw):
        return jax.random.normal(k, (cout, cin, kh, kw), jnp.float32) * s

    def vec(k, n):
        return jax.random.normal(k, (n,), jnp.float32) * s

    def lin_w(k, out_f, in_f):
        return jax.random.normal(k, (out_f, in_f), jnp.float32) * s

    return {
        "conv1_w": conv_w(ks[0], 20, 3, 4, 4),   "conv1_b": vec(ks[1], 20),
        "conv2_w": conv_w(ks[2], 40, 20, 3, 3),  "conv2_b": vec(ks[3], 40),
        "conv3_w": conv_w(ks[4], 60, 40, 3, 3),  "conv3_b": vec(ks[5], 60),
        "conv4_w": conv_w(ks[6], 80, 60, 2, 2),  "conv4_b": vec(ks[7], 80),
        "fc1_w": lin_w(ks[8], 160, 1200),        "fc1_b": vec(ks[9], 160),
        "fc2_w": lin_w(ks[10], 160, 960),        "fc2_b": vec(ks[11], 160),
        "out_w": lin_w(ks[12], 1283, 160),       "out_b": vec(ks[13], 1283),
    }


def prepare_params(raw, use_bf16=False):
    """One-time layout prep (hoisted out of the jitted forward):
    conv weights -> (KH*KW*Cin, Cout) im2col matrices; Linear -> (in, out);
    biases -> (1, N) f32; output layer zero-padded to a lane-dense 1408 cols;
    optional bf16 weight cast (f32 accumulation is kept in-kernel)."""
    cdt = jnp.bfloat16 if use_bf16 else jnp.float32

    def conv_mat(w):
        cout, cin, kh, kw = w.shape
        return jnp.transpose(w, (2, 3, 1, 0)).reshape(kh * kw * cin,
                                                      cout).astype(cdt)

    n_out = raw["out_b"].shape[0]
    n_pad = _round_up(n_out, 128)
    out_w = jnp.pad(raw["out_w"].T, ((0, 0), (0, n_pad - n_out))).astype(cdt)
    out_b = jnp.pad(raw["out_b"], (0, n_pad - n_out)).reshape(1, -1)

    return {
        "conv1_w": conv_mat(raw["conv1_w"]),
        "conv1_b": raw["conv1_b"].reshape(1, -1),
        "conv2_w": conv_mat(raw["conv2_w"]),
        "conv2_b": raw["conv2_b"].reshape(1, -1),
        "conv3_w": conv_mat(raw["conv3_w"]),
        "conv3_b": raw["conv3_b"].reshape(1, -1),
        "conv4_w": conv_mat(raw["conv4_w"]),
        "conv4_b": raw["conv4_b"].reshape(1, -1),
        "fc1_w": raw["fc1_w"].T.astype(cdt),                 # (1200, 160)
        "fc2_w": raw["fc2_w"].T.astype(cdt),                 # (960, 160)
        # relu(fc1(xf) + fc2(yf)) => single bias b1 + b2
        "fc12_b": (raw["fc1_b"] + raw["fc2_b"]).reshape(1, -1),
        "out_w": out_w,                                      # (160, 1408)
        "out_b": out_b,                                      # (1, 1408) f32
    }


# --------------------------------- forward -----------------------------------

def deepid_forward(p, x_nchw):
    cdt = p["conv1_w"].dtype
    x = jnp.transpose(x_nchw, (0, 2, 3, 1)).astype(cdt)      # NCHW -> NHWC
    x = conv_relu_pool(x, p["conv1_w"], p["conv1_b"], 4, cdt)  # (B,26,22,20)
    x = conv_relu_pool(x, p["conv2_w"], p["conv2_b"], 3, cdt)  # (B,12,10,40)
    x = conv_relu_pool(x, p["conv3_w"], p["conv3_b"], 3, cdt)  # (B, 5, 4,60)
    return conv4_fc_head(x, p["conv4_w"], p["conv4_b"],
                         p["fc1_w"], p["fc2_w"], p["fc12_b"],
                         p["out_w"], p["out_b"], _N_CLASSES)   # (B, 1283)


if __name__ == "__main__":
    key = jax.random.PRNGKey(0)
    pkey, xkey = jax.random.split(key)
    raw_params = init_params(pkey)
    params = prepare_params(raw_params, use_bf16=USE_BF16)  # one-time, outside jit
    # Spatial size 55x47 is implied by fc_1 (1200=60*5*4) / fc_2 (960=80*4*3).
    x = jax.random.normal(xkey, (2, 3, 55, 47), jnp.float32)
    fwd = jax.jit(deepid_forward)
    out = jax.block_until_ready(fwd(params, x))
    assert out.shape == (2, _N_CLASSES), out.shape
    assert out.dtype == jnp.float32
    print("KERNEL_OK")
</pallas_src>

<mosaic_0001>
module attributes {stable_mosaic.version = 11 : i64} {
  func.func @_conv_relu_pool_kernel(%arg0: i32, %arg1: memref<1024x48xf32, #tpu.memory_space<vmem>>, %arg2: memref<48x20xf32, #tpu.memory_space<vmem>>, %arg3: memref<1x20xf32, #tpu.memory_space<vmem>>, %arg4: memref<256x20xf32, #tpu.memory_space<vmem>>) attributes {dimension_semantics = [#tpu.dimension_semantics<parallel>], iteration_bounds = array<i64: 5>, scalar_prefetch = 0 : i64, scratch_operands = 0 : i64, tpu.core_type = #tpu.core_type<tc>, window_params = [{transform_indices = @transform_0, window_bounds = array<i64: 1024, 48>}, {pipeline_mode = #tpu.pipeline_mode<synchronous>, transform_indices = @transform_1, window_bounds = array<i64: 48, 20>}, {pipeline_mode = #tpu.pipeline_mode<synchronous>, transform_indices = @transform_2, window_bounds = array<i64: 1, 20>}, {transform_indices = @transform_3, window_bounds = array<i64: 256, 20>}]} {
    %c0 = arith.constant 0 : index
    %c0_0 = arith.constant 0 : index
    %0 = vector.load %arg1[%c0, %c0_0] : memref<1024x48xf32, #tpu.memory_space<vmem>>, vector<1024x48xf32>
    %c0_1 = arith.constant 0 : index
    %c0_2 = arith.constant 0 : index
    %1 = vector.load %arg2[%c0_1, %c0_2] : memref<48x20xf32, #tpu.memory_space<vmem>>, vector<48x20xf32>
    %cst = arith.constant dense<0.000000e+00> : vector<1024x20xf32>
    %2 = tpu.matmul %0, %1, %cst {dimension_numbers = #tpu.dot_dimension_numbers<[1], [0], [0], [1], [0, 0, 1, 1], [], []>} : vector<1024x48xf32>, vector<48x20xf32>, vector<1024x20xf32> -> vector<1024x20xf32>
    %3 = vector.extract_strided_slice %2 {offsets = [0, 0], sizes = [256, 20], strides = [1, 1]} : vector<1024x20xf32> to vector<256x20xf32>
    %4 = vector.extract_strided_slice %2 {offsets = [256, 0], sizes = [256, 20], strides = [1, 1]} : vector<1024x20xf32> to vector<256x20xf32>
    %5 = arith.maximumf %3, %4 : vector<256x20xf32>
    %6 = vector.extract_strided_slice %2 {offsets = [512, 0], sizes = [256, 20], strides = [1, 1]} : vector<1024x20xf32> to vector<256x20xf32>
    %7 = vector.extract_strided_slice %2 {offsets = [768, 0], sizes = [256, 20], strides = [1, 1]} : vector<1024x20xf32> to vector<256x20xf32>
    %8 = arith.maximumf %6, %7 : vector<256x20xf32>
    %9 = arith.maximumf %5, %8 : vector<256x20xf32>
    %c0_3 = arith.constant 0 : index
    %c0_4 = arith.constant 0 : index
    %10 = vector.load %arg3[%c0_3, %c0_4] : memref<1x20xf32, #tpu.memory_space<vmem>>, vector<1x20xf32>
    %11 = vector.broadcast %10 : vector<1x20xf32> to vector<256x20xf32>
    %12 = arith.addf %9, %11 : vector<256x20xf32>
    %cst_5 = arith.constant 0.000000e+00 : f32
    %13 = vector.broadcast %cst_5 : f32 to vector<256x20xf32>
    %14 = arith.maximumf %12, %13 : vector<256x20xf32>
    %c0_6 = arith.constant 0 : index
    %c0_7 = arith.constant 0 : index
    %15 = vector.load %arg4[%c0_6, %c0_7] : memref<256x20xf32, #tpu.memory_space<vmem>>, vector<256x20xf32>
    tpu.vector_store %arg4[%c0_6, %c0_7], %14 {strides = array<i32>} : memref<256x20xf32, #tpu.memory_space<vmem>>, vector<256x20xf32>,
    return
  }
  func.func @transform_0(%arg0: i32) -> (i32, i32) {
    %c0_i32 = arith.constant 0 : i32
    %c0_i32_0 = arith.constant 0 : i32
    return %arg0, %c0_i32 : i32, i32
  }
  func.func @transform_1(%arg0: i32) -> (i32, i32) {
    %c0_i32 = arith.constant 0 : i32
    %c0_i32_0 = arith.constant 0 : i32
    %c0_i32_1 = arith.constant 0 : i32
    return %c0_i32, %c0_i32_0 : i32, i32
  }
  func.func @transform_2(%arg0: i32) -> (i32, i32) {
    %c0_i32 = arith.constant 0 : i32
    %c0_i32_0 = arith.constant 0 : i32
    %c0_i32_1 = arith.constant 0 : i32
    return %c0_i32, %c0_i32_0 : i32, i32
  }
  func.func @transform_3(%arg0: i32) -> (i32, i32) {
    %c0_i32 = arith.constant 0 : i32
    %c0_i32_0 = arith.constant 0 : i32
    return %arg0, %c0_i32 : i32, i32
  }
}

module attributes {stable_mosaic.version = 11 : i64} {
  func.func @_conv_relu_pool_kernel(%arg0: i32, %arg1: memref<1024x180xf32, #tpu.memory_space<vmem>>, %arg2: memref<180x40xf32, #tpu.memory_space<vmem>>, %arg3: memref<1x40xf32, #tpu.memory_space<vmem>>, %arg4: memref<256x40xf32, #tpu.memory_space<vmem>>) attributes {dimension_semantics = [#tpu.dimension_semantics<parallel>], iteration_bounds = array<i64: 1>, scalar_prefetch = 0 : i64, scratch_operands = 0 : i64, tpu.core_type = #tpu.core_type<tc>, window_params = [{transform_indices = @transform_0, window_bounds = array<i64: 1024, 180>}, {pipeline_mode = #tpu.pipeline_mode<synchronous>, transform_indices = @transform_1, window_bounds = array<i64: 180, 40>}, {pipeline_mode = #tpu.pipeline_mode<synchronous>, transform_indices = @transform_2, window_bounds = array<i64: 1, 40>}, {transform_indices = @transform_3, window_bounds = array<i64: 256, 40>}]} {
    %c0 = arith.constant 0 : index
    %c0_0 = arith.constant 0 : index
    %0 = vector.load %arg1[%c0, %c0_0] : memref<1024x180xf32, #tpu.memory_space<vmem>>, vector<1024x180xf32>
    %c0_1 = arith.constant 0 : index
    %c0_2 = arith.constant 0 : index
    %1 = vector.load %arg2[%c0_1, %c0_2] : memref<180x40xf32, #tpu.memory_space<vmem>>, vector<180x40xf32>
    %cst = arith.constant dense<0.000000e+00> : vector<1024x40xf32>
    %2 = tpu.matmul %0, %1, %cst {dimension_numbers = #tpu.dot_dimension_numbers<[1], [0], [0], [1], [0, 0, 1, 1], [], []>} : vector<1024x180xf32>, vector<180x40xf32>, vector<1024x40xf32> -> vector<1024x40xf32>
    %3 = vector.extract_strided_slice %2 {offsets = [0, 0], sizes = [256, 40], strides = [1, 1]} : vector<1024x40xf32> to vector<256x40xf32>
    %4 = vector.extract_strided_slice %2 {offsets = [256, 0], sizes = [256, 40], strides = [1, 1]} : vector<1024x40xf32> to vector<256x40xf32>
    %5 = arith.maximumf %3, %4 : vector<256x40xf32>
    %6 = vector.extract_strided_slice %2 {offsets = [512, 0], sizes = [256, 40], strides = [1, 1]} : vector<1024x40xf32> to vector<256x40xf32>
    %7 = vector.extract_strided_slice %2 {offsets = [768, 0], sizes = [256, 40], strides = [1, 1]} : vector<1024x40xf32> to vector<256x40xf32>
    %8 = arith.maximumf %6, %7 : vector<256x40xf32>
    %9 = arith.maximumf %5, %8 : vector<256x40xf32>
    %c0_3 = arith.constant 0 : index
    %c0_4 = arith.constant 0 : index
    %10 = vector.load %arg3[%c0_3, %c0_4] : memref<1x40xf32, #tpu.memory_space<vmem>>, vector<1x40xf32>
    %11 = vector.broadcast %10 : vector<1x40xf32> to vector<256x40xf32>
    %12 = arith.addf %9, %11 : vector<256x40xf32>
    %cst_5 = arith.constant 0.000000e+00 : f32
    %13 = vector.broadcast %cst_5 : f32 to vector<256x40xf32>
    %14 = arith.maximumf %12, %13 : vector<256x40xf32>
    %c0_6 = arith.constant 0 : index
    %c0_7 = arith.constant 0 : index
    %15 = vector.load %arg4[%c0_6, %c0_7] : memref<256x40xf32, #tpu.memory_space<vmem>>, vector<256x40xf32>
    tpu.vector_store %arg4[%c0_6, %c0_7], %14 {strides = array<i32>} : memref<256x40xf32, #tpu.memory_space<vmem>>, vector<256x40xf32>,
    return
  }
  func.func @transform_0(%arg0: i32) -> (i32, i32) {
    %c0_i32 = arith.constant 0 : i32
    %c0_i32_0 = arith.constant 0 : i32
    return %arg0, %c0_i32 : i32, i32
  }
  func.func @transform_1(%arg0: i32) -> (i32, i32) {
    %c0_i32 = arith.constant 0 : i32
    %c0_i32_0 = arith.constant 0 : i32
    %c0_i32_1 = arith.constant 0 : i32
    return %c0_i32, %c0_i32_0 : i32, i32
  }
  func.func @transform_2(%arg0: i32) -> (i32, i32) {
    %c0_i32 = arith.constant 0 : i32
    %c0_i32_0 = arith.constant 0 : i32
    %c0_i32_1 = arith.constant 0 : i32
    return %c0_i32, %c0_i32_0 : i32, i32
  }
  func.func @transform_3(%arg0: i32) -> (i32, i32) {
    %c0_i32 = arith.constant 0 : i32
    %c0_i32_0 = arith.constant 0 : i32
    return %arg0, %c0_i32 : i32, i32
  }
}

module attributes {stable_mosaic.version = 11 : i64} {
  func.func @_conv_relu_pool_kernel(%arg0: i32, %arg1: memref<256x360xf32, #tpu.memory_space<vmem>>, %arg2: memref<360x60xf32, #tpu.memory_space<vmem>>, %arg3: memref<1x60xf32, #tpu.memory_space<vmem>>, %arg4: memref<64x60xf32, #tpu.memory_space<vmem>>) attributes {dimension_semantics = [#tpu.dimension_semantics<parallel>], iteration_bounds = array<i64: 1>, scalar_prefetch = 0 : i64, scratch_operands = 0 : i64, tpu.core_type = #tpu.core_type<tc>, window_params = [{transform_indices = @transform_0, window_bounds = array<i64: 256, 360>}, {pipeline_mode = #tpu.pipeline_mode<synchronous>, transform_indices = @transform_1, window_bounds = array<i64: 360, 60>}, {pipeline_mode = #tpu.pipeline_mode<synchronous>, transform_indices = @transform_2, window_bounds = array<i64: 1, 60>}, {transform_indices = @transform_3, window_bounds = array<i64: 64, 60>}]} {
    %c0 = arith.constant 0 : index
    %c0_0 = arith.constant 0 : index
    %0 = vector.load %arg1[%c0, %c0_0] : memref<256x360xf32, #tpu.memory_space<vmem>>, vector<256x360xf32>
    %c0_1 = arith.constant 0 : index
    %c0_2 = arith.constant 0 : index
    %1 = vector.load %arg2[%c0_1, %c0_2] : memref<360x60xf32, #tpu.memory_space<vmem>>, vector<360x60xf32>
    %cst = arith.constant dense<0.000000e+00> : vector<256x60xf32>
    %2 = tpu.matmul %0, %1, %cst {dimension_numbers = #tpu.dot_dimension_numbers<[1], [0], [0], [1], [0, 0, 1, 1], [], []>} : vector<256x360xf32>, vector<360x60xf32>, vector<256x60xf32> -> vector<256x60xf32>
    %3 = vector.extract_strided_slice %2 {offsets = [0, 0], sizes = [64, 60], strides = [1, 1]} : vector<256x60xf32> to vector<64x60xf32>
    %4 = vector.extract_strided_slice %2 {offsets = [64, 0], sizes = [64, 60], strides = [1, 1]} : vector<256x60xf32> to vector<64x60xf32>
    %5 = arith.maximumf %3, %4 : vector<64x60xf32>
    %6 = vector.extract_strided_slice %2 {offsets = [128, 0], sizes = [64, 60], strides = [1, 1]} : vector<256x60xf32> to vector<64x60xf32>
    %7 = vector.extract_strided_slice %2 {offsets = [192, 0], sizes = [64, 60], strides = [1, 1]} : vector<256x60xf32> to vector<64x60xf32>
    %8 = arith.maximumf %6, %7 : vector<64x60xf32>
    %9 = arith.maximumf %5, %8 : vector<64x60xf32>
    %c0_3 = arith.constant 0 : index
    %c0_4 = arith.constant 0 : index
    %10 = vector.load %arg3[%c0_3, %c0_4] : memref<1x60xf32, #tpu.memory_space<vmem>>, vector<1x60xf32>
    %11 = vector.broadcast %10 : vector<1x60xf32> to vector<64x60xf32>
    %12 = arith.addf %9, %11 : vector<64x60xf32>
    %cst_5 = arith.constant 0.000000e+00 : f32
    %13 = vector.broadcast %cst_5 : f32 to vector<64x60xf32>
    %14 = arith.maximumf %12, %13 : vector<64x60xf32>
    %c0_6 = arith.constant 0 : index
    %c0_7 = arith.constant 0 : index
    %15 = vector.load %arg4[%c0_6, %c0_7] : memref<64x60xf32, #tpu.memory_space<vmem>>, vector<64x60xf32>
    tpu.vector_store %arg4[%c0_6, %c0_7], %14 {strides = array<i32>} : memref<64x60xf32, #tpu.memory_space<vmem>>, vector<64x60xf32>,
    return
  }
  func.func @transform_0(%arg0: i32) -> (i32, i32) {
    %c0_i32 = arith.constant 0 : i32
    %c0_i32_0 = arith.constant 0 : i32
    return %arg0, %c0_i32 : i32, i32
  }
  func.func @transform_1(%arg0: i32) -> (i32, i32) {
    %c0_i32 = arith.constant 0 : i32
    %c0_i32_0 = arith.constant 0 : i32
    %c0_i32_1 = arith.constant 0 : i32
    return %c0_i32, %c0_i32_0 : i32, i32
  }
  func.func @transform_2(%arg0: i32) -> (i32, i32) {
    %c0_i32 = arith.constant 0 : i32
    %c0_i32_0 = arith.constant 0 : i32
    %c0_i32_1 = arith.constant 0 : i32
    return %c0_i32, %c0_i32_0 : i32, i32
  }
  func.func @transform_3(%arg0: i32) -> (i32, i32) {
    %c0_i32 = arith.constant 0 : i32
    %c0_i32_0 = arith.constant 0 : i32
    return %arg0, %c0_i32 : i32, i32
  }
}

module attributes {stable_mosaic.version = 11 : i64} {
  func.func @_tail_kernel(%arg0: i32, %arg1: memref<96x240xf32, #tpu.memory_space<vmem>>, %arg2: memref<8x1200xf32, #tpu.memory_space<vmem>>, %arg3: memref<240x80xf32, #tpu.memory_space<vmem>>, %arg4: memref<1x80xf32, #tpu.memory_space<vmem>>, %arg5: memref<1200x160xf32, #tpu.memory_space<vmem>>, %arg6: memref<960x160xf32, #tpu.memory_space<vmem>>, %arg7: memref<1x160xf32, #tpu.memory_space<vmem>>, %arg8: memref<160x1408xf32, #tpu.memory_space<vmem>>, %arg9: memref<1x1408xf32, #tpu.memory_space<vmem>>, %arg10: memref<8x1408xf32, #tpu.memory_space<vmem>>) attributes {dimension_semantics = [#tpu.dimension_semantics<parallel>], iteration_bounds = array<i64: 1>, scalar_prefetch = 0 : i64, scratch_operands = 0 : i64, tpu.core_type = #tpu.core_type<tc>, window_params = [{transform_indices = @transform_0, window_bounds = array<i64: 96, 240>}, {transform_indices = @transform_1, window_bounds = array<i64: 8, 1200>}, {pipeline_mode = #tpu.pipeline_mode<synchronous>, transform_indices = @transform_2, window_bounds = array<i64: 240, 80>}, {pipeline_mode = #tpu.pipeline_mode<synchronous>, transform_indices = @transform_3, window_bounds = array<i64: 1, 80>}, {pipeline_mode = #tpu.pipeline_mode<synchronous>, transform_indices = @transform_4, window_bounds = array<i64: 1200, 160>}, {pipeline_mode = #tpu.pipeline_mode<synchronous>, transform_indices = @transform_5, window_bounds = array<i64: 960, 160>}, {pipeline_mode = #tpu.pipeline_mode<synchronous>, transform_indices = @transform_6, window_bounds = array<i64: 1, 160>}, {pipeline_mode = #tpu.pipeline_mode<synchronous>, transform_indices = @transform_7, window_bounds = array<i64: 160, 1408>}, {pipeline_mode = #tpu.pipeline_mode<synchronous>, transform_indices = @transform_8, window_bounds = array<i64: 1, 1408>}, {transform_indices = @transform_9, window_bounds = array<i64: 8, 1408>}]} {
    %c0 = arith.constant 0 : index
    %c0_0 = arith.constant 0 : index
    %0 = vector.load %arg1[%c0, %c0_0] : memref<96x240xf32, #tpu.memory_space<vmem>>, vector<96x240xf32>
    %c0_1 = arith.constant 0 : index
    %c0_2 = arith.constant 0 : index
    %1 = vector.load %arg3[%c0_1, %c0_2] : memref<240x80xf32, #tpu.memory_space<vmem>>, vector<240x80xf32>
    %cst = arith.constant dense<0.000000e+00> : vector<96x80xf32>
    %2 = tpu.matmul %0, %1, %cst {dimension_numbers = #tpu.dot_dimension_numbers<[1], [0], [0], [1], [0, 0, 1, 1], [], []>} : vector<96x240xf32>, vector<240x80xf32>, vector<96x80xf32> -> vector<96x80xf32>
    %c0_3 = arith.constant 0 : index
    %c0_4 = arith.constant 0 : index
    %3 = vector.load %arg4[%c0_3, %c0_4] : memref<1x80xf32, #tpu.memory_space<vmem>>, vector<1x80xf32>
    %4 = vector.broadcast %3 : vector<1x80xf32> to vector<96x80xf32>
    %5 = arith.addf %2, %4 : vector<96x80xf32>
    %cst_5 = arith.constant 0.000000e+00 : f32
    %6 = vector.broadcast %cst_5 : f32 to vector<96x80xf32>
    %7 = arith.maximumf %5, %6 : vector<96x80xf32>
    %c0_6 = arith.constant 0 : index
    %c0_7 = arith.constant 0 : index
    %8 = vector.load %arg2[%c0_6, %c0_7] : memref<8x1200xf32, #tpu.memory_space<vmem>>, vector<8x1200xf32>
    %c0_8 = arith.constant 0 : index
    %c0_9 = arith.constant 0 : index
    %9 = vector.load %arg5[%c0_8, %c0_9] : memref<1200x160xf32, #tpu.memory_space<vmem>>, vector<1200x160xf32>
    %cst_10 = arith.constant dense<0.000000e+00> : vector<8x160xf32>
    %10 = tpu.matmul %8, %9, %cst_10 {dimension_numbers = #tpu.dot_dimension_numbers<[1], [0], [0], [1], [0, 0, 1, 1], [], []>} : vector<8x1200xf32>, vector<1200x160xf32>, vector<8x160xf32> -> vector<8x160xf32>
    %11 = vector.extract_strided_slice %7 {offsets = [0, 0], sizes = [8, 80], strides = [1, 1]} : vector<96x80xf32> to vector<8x80xf32>
    %c0_11 = arith.constant 0 : index
    %c0_12 = arith.constant 0 : index
    %12 = vector.load %arg6[%c0_11, %c0_12] : memref<960x160xf32, #tpu.memory_space<vmem>>, vector<80x160xf32>
    %cst_13 = arith.constant dense<0.000000e+00> : vector<8x160xf32>
    %13 = tpu.matmul %11, %12, %cst_13 {dimension_numbers = #tpu.dot_dimension_numbers<[1], [0], [0], [1], [0, 0, 1, 1], [], []>} : vector<8x80xf32>, vector<80x160xf32>, vector<8x160xf32> -> vector<8x160xf32>
    %14 = arith.addf %10, %13 : vector<8x160xf32>
    %15 = vector.extract_strided_slice %7 {offsets = [8, 0], sizes = [8, 80], strides = [1, 1]} : vector<96x80xf32> to vector<8x80xf32>
    %c80 = arith.constant 80 : index
    %c0_14 = arith.constant 0 : index
    %16 = vector.load %arg6[%c80, %c0_14] : memref<960x160xf32, #tpu.memory_space<vmem>>, vector<80x160xf32>
    %cst_15 = arith.constant dense<0.000000e+00> : vector<8x160xf32>
    %17 = tpu.matmul %15, %16, %cst_15 {dimension_numbers = #tpu.dot_dimension_numbers<[1], [0], [0], [1], [0, 0, 1, 1], [], []>} : vector<8x80xf32>, vector<80x160xf32>, vector<8x160xf32> -> vector<8x160xf32>
    %18 = arith.addf %14, %17 : vector<8x160xf32>
    %19 = vector.extract_strided_slice %7 {offsets = [16, 0], sizes = [8, 80], strides = [1, 1]} : vector<96x80xf32> to vector<8x80xf32>
    %c160 = arith.constant 160 : index
    %c0_16 = arith.constant 0 : index
    %20 = vector.load %arg6[%c160, %c0_16] : memref<960x160xf32, #tpu.memory_space<vmem>>, vector<80x160xf32>
    %cst_17 = arith.constant dense<0.000000e+00> : vector<8x160xf32>
    %21 = tpu.matmul %19, %20, %cst_17 {dimension_numbers = #tpu.dot_dimension_numbers<[1], [0], [0], [1], [0, 0, 1, 1], [], []>} : vector<8x80xf32>, vector<80x160xf32>, vector<8x160xf32> -> vector<8x160xf32>
    %22 = arith.addf %18, %21 : vector<8x160xf32>
    %23 = vector.extract_strided_slice %7 {offsets = [24, 0], sizes = [8, 80], strides = [1, 1]} : vector<96x80xf32> to vector<8x80xf32>
    %c240 = arith.constant 240 : index
    %c0_18 = arith.constant 0 : index
    %24 = vector.load %arg6[%c240, %c0_18] : memref<960x160xf32, #tpu.memory_space<vmem>>, vector<80x160xf32>
    %cst_19 = arith.constant dense<0.000000e+00> : vector<8x160xf32>
    %25 = tpu.matmul %23, %24, %cst_19 {dimension_numbers = #tpu.dot_dimension_numbers<[1], [0], [0], [1], [0, 0, 1, 1], [], []>} : vector<8x80xf32>, vector<80x160xf32>, vector<8x160xf32> -> vector<8x160xf32>
    %26 = arith.addf %22, %25 : vector<8x160xf32>
    %27 = vector.extract_strided_slice %7 {offsets = [32, 0], sizes = [8, 80], strides = [1, 1]} : vector<96x80xf32> to vector<8x80xf32>
    %c320 = arith.constant 320 : index
    %c0_20 = arith.constant 0 : index
    %28 = vector.load %arg6[%c320, %c0_20] : memref<960x160xf32, #tpu.memory_space<vmem>>, vector<80x160xf32>
    %cst_21 = arith.constant dense<0.000000e+00> : vector<8x160xf32>
    %29 = tpu.matmul %27, %28, %cst_21 {dimension_numbers = #tpu.dot_dimension_numbers<[1], [0], [0], [1], [0, 0, 1, 1], [], []>} : vector<8x80xf32>, vector<80x160xf32>, vector<8x160xf32> -> vector<8x160xf32>
    %30 = arith.addf %26, %29 : vector<8x160xf32>
    %31 = vector.extract_strided_slice %7 {offsets = [40, 0], sizes = [8, 80], strides = [1, 1]} : vector<96x80xf32> to vector<8x80xf32>
    %c400 = arith.constant 400 : index
    %c0_22 = arith.constant 0 : index
    %32 = vector.load %arg6[%c400, %c0_22] : memref<960x160xf32, #tpu.memory_space<vmem>>, vector<80x160xf32>
    %cst_23 = arith.constant dense<0.000000e+00> : vector<8x160xf32>
    %33 = tpu.matmul %31, %32, %cst_23 {dimension_numbers = #tpu.dot_dimension_numbers<[1], [0], [0], [1], [0, 0, 1, 1], [], []>} : vector<8x80xf32>, vector<80x160xf32>, vector<8x160xf32> -> vector<8x160xf32>
    %34 = arith.addf %30, %33 : vector<8x160xf32>
    %35 = vector.extract_strided_slice %7 {offsets = [48, 0], sizes = [8, 80], strides = [1, 1]} : vector<96x80xf32> to vector<8x80xf32>
    %c480 = arith.constant 480 : index
    %c0_24 = arith.constant 0 : index
    %36 = vector.load %arg6[%c480, %c0_24] : memref<960x160xf32, #tpu.memory_space<vmem>>, vector<80x160xf32>
    %cst_25 = arith.constant dense<0.000000e+00> : vector<8x160xf32>
    %37 = tpu.matmul %35, %36, %cst_25 {dimension_numbers = #tpu.dot_dimension_numbers<[1], [0], [0], [1], [0, 0, 1, 1], [], []>} : vector<8x80xf32>, vector<80x160xf32>, vector<8x160xf32> -> vector<8x160xf32>
    %38 = arith.addf %34, %37 : vector<8x160xf32>
    %39 = vector.extract_strided_slice %7 {offsets = [56, 0], sizes = [8, 80], strides = [1, 1]} : vector<96x80xf32> to vector<8x80xf32>
    %c560 = arith.constant 560 : index
    %c0_26 = arith.constant 0 : index
    %40 = vector.load %arg6[%c560, %c0_26] : memref<960x160xf32, #tpu.memory_space<vmem>>, vector<80x160xf32>
    %cst_27 = arith.constant dense<0.000000e+00> : vector<8x160xf32>
    %41 = tpu.matmul %39, %40, %cst_27 {dimension_numbers = #tpu.dot_dimension_numbers<[1], [0], [0], [1], [0, 0, 1, 1], [], []>} : vector<8x80xf32>, vector<80x160xf32>, vector<8x160xf32> -> vector<8x160xf32>
    %42 = arith.addf %38, %41 : vector<8x160xf32>
    %43 = vector.extract_strided_slice %7 {offsets = [64, 0], sizes = [8, 80], strides = [1, 1]} : vector<96x80xf32> to vector<8x80xf32>
    %c640 = arith.constant 640 : index
    %c0_28 = arith.constant 0 : index
    %44 = vector.load %arg6[%c640, %c0_28] : memref<960x160xf32, #tpu.memory_space<vmem>>, vector<80x160xf32>
    %cst_29 = arith.constant dense<0.000000e+00> : vector<8x160xf32>
    %45 = tpu.matmul %43, %44, %cst_29 {dimension_numbers = #tpu.dot_dimension_numbers<[1], [0], [0], [1], [0, 0, 1, 1], [], []>} : vector<8x80xf32>, vector<80x160xf32>, vector<8x160xf32> -> vector<8x160xf32>
    %46 = arith.addf %42, %45 : vector<8x160xf32>
    %47 = vector.extract_strided_slice %7 {offsets = [72, 0], sizes = [8, 80], strides = [1, 1]} : vector<96x80xf32> to vector<8x80xf32>
    %c720 = arith.constant 720 : index
    %c0_30 = arith.constant 0 : index
    %48 = vector.load %arg6[%c720, %c0_30] : memref<960x160xf32, #tpu.memory_space<vmem>>, vector<80x160xf32>
    %cst_31 = arith.constant dense<0.000000e+00> : vector<8x160xf32>
    %49 = tpu.matmul %47, %48, %cst_31 {dimension_numbers = #tpu.dot_dimension_numbers<[1], [0], [0], [1], [0, 0, 1, 1], [], []>} : vector<8x80xf32>, vector<80x160xf32>, vector<8x160xf32> -> vector<8x160xf32>
    %50 = arith.addf %46, %49 : vector<8x160xf32>
    %51 = vector.extract_strided_slice %7 {offsets = [80, 0], sizes = [8, 80], strides = [1, 1]} : vector<96x80xf32> to vector<8x80xf32>
    %c800 = arith.constant 800 : index
    %c0_32 = arith.constant 0 : index
    %52 = vector.load %arg6[%c800, %c0_32] : memref<960x160xf32, #tpu.memory_space<vmem>>, vector<80x160xf32>
    %cst_33 = arith.constant dense<0.000000e+00> : vector<8x160xf32>
    %53 = tpu.matmul %51, %52, %cst_33 {dimension_numbers = #tpu.dot_dimension_numbers<[1], [0], [0], [1], [0, 0, 1, 1], [], []>} : vector<8x80xf32>, vector<80x160xf32>, vector<8x160xf32> -> vector<8x160xf32>
    %54 = arith.addf %50, %53 : vector<8x160xf32>
    %55 = vector.extract_strided_slice %7 {offsets = [88, 0], sizes = [8, 80], strides = [1, 1]} : vector<96x80xf32> to vector<8x80xf32>
    %c880 = arith.constant 880 : index
    %c0_34 = arith.constant 0 : index
    %56 = vector.load %arg6[%c880, %c0_34] : memref<960x160xf32, #tpu.memory_space<vmem>>, vector<80x160xf32>
    %cst_35 = arith.constant dense<0.000000e+00> : vector<8x160xf32>
    %57 = tpu.matmul %55, %56, %cst_35 {dimension_numbers = #tpu.dot_dimension_numbers<[1], [0], [0], [1], [0, 0, 1, 1], [], []>} : vector<8x80xf32>, vector<80x160xf32>, vector<8x160xf32> -> vector<8x160xf32>
    %58 = arith.addf %54, %57 : vector<8x160xf32>
    %c0_36 = arith.constant 0 : index
    %c0_37 = arith.constant 0 : index
    %59 = vector.load %arg7[%c0_36, %c0_37] : memref<1x160xf32, #tpu.memory_space<vmem>>, vector<1x160xf32>
    %60 = vector.broadcast %59 : vector<1x160xf32> to vector<8x160xf32>
    %61 = arith.addf %58, %60 : vector<8x160xf32>
    %cst_38 = arith.constant 0.000000e+00 : f32
    %62 = vector.broadcast %cst_38 : f32 to vector<8x160xf32>
    %63 = arith.maximumf %61, %62 : vector<8x160xf32>
    %c0_39 = arith.constant 0 : index
    %c0_40 = arith.constant 0 : index
    %64 = vector.load %arg8[%c0_39, %c0_40] : memref<160x1408xf32, #tpu.memory_space<vmem>>, vector<160x1408xf32>
    %cst_41 = arith.constant dense<0.000000e+00> : vector<8x1408xf32>
    %65 = tpu.matmul %63, %64, %cst_41 {dimension_numbers = #tpu.dot_dimension_numbers<[1], [0], [0], [1], [0, 0, 1, 1], [], []>} : vector<8x160xf32>, vector<160x1408xf32>, vector<8x1408xf32> -> vector<8x1408xf32>
    %c0_42 = arith.constant 0 : index
    %c0_43 = arith.constant 0 : index
    %66 = vector.load %arg9[%c0_42, %c0_43] : memref<1x1408xf32, #tpu.memory_space<vmem>>, vector<1x1408xf32>
    %67 = vector.broadcast %66 : vector<1x1408xf32> to vector<8x1408xf32>
    %68 = arith.addf %65, %67 : vector<8x1408xf32>
    %c0_44 = arith.constant 0 : index
    %c0_45 = arith.constant 0 : index
    %69 = vector.load %arg10[%c0_44, %c0_45] : memref<8x1408xf32, #tpu.memory_space<vmem>>, vector<8x1408xf32>
    tpu.vector_store %arg10[%c0_44, %c0_45], %68 {strides = array<i32>} : memref<8x1408xf32, #tpu.memory_space<vmem>>, vector<8x1408xf32>,
    return
  }
  func.func @transform_0(%arg0: i32) -> (i32, i32) {
    %c0_i32 = arith.constant 0 : i32
    %c0_i32_0 = arith.constant 0 : i32
    return %arg0, %c0_i32 : i32, i32
  }
  func.func @transform_1(%arg0: i32) -> (i32, i32) {
    %c0_i32 = arith.constant 0 : i32
    %c0_i32_0 = arith.constant 0 : i32
    return %arg0, %c0_i32 : i32, i32
  }
  func.func @transform_2(%arg0: i32) -> (i32, i32) {
    %c0_i32 = arith.constant 0 : i32
    %c0_i32_0 = arith.constant 0 : i32
    %c0_i32_1 = arith.constant 0 : i32
    return %c0_i32, %c0_i32_0 : i32, i32
  }
  func.func @transform_3(%arg0: i32) -> (i32, i32) {
    %c0_i32 = arith.constant 0 : i32
    %c0_i32_0 = arith.constant 0 : i32
    %c0_i32_1 = arith.constant 0 : i32
    return %c0_i32, %c0_i32_0 : i32, i32
  }
  func.func @transform_4(%arg0: i32) -> (i32, i32) {
    %c0_i32 = arith.constant 0 : i32
    %c0_i32_0 = arith.constant 0 : i32
    %c0_i32_1 = arith.constant 0 : i32
    return %c0_i32, %c0_i32_0 : i32, i32
  }
  func.func @transform_5(%arg0: i32) -> (i32, i32) {
    %c0_i32 = arith.constant 0 : i32
    %c0_i32_0 = arith.constant 0 : i32
    %c0_i32_1 = arith.constant 0 : i32
    return %c0_i32, %c0_i32_0 : i32, i32
  }
  func.func @transform_6(%arg0: i32) -> (i32, i32) {
    %c0_i32 = arith.constant 0 : i32
    %c0_i32_0 = arith.constant 0 : i32
    %c0_i32_1 = arith.constant 0 : i32
    return %c0_i32, %c0_i32_0 : i32, i32
  }
  func.func @transform_7(%arg0: i32) -> (i32, i32) {
    %c0_i32 = arith.constant 0 : i32
    %c0_i32_0 = arith.constant 0 : i32
    %c0_i32_1 = arith.constant 0 : i32
    return %c0_i32, %c0_i32_0 : i32, i32
  }
  func.func @transform_8(%arg0: i32) -> (i32, i32) {
    %c0_i32 = arith.constant 0 : i32
    %c0_i32_0 = arith.constant 0 : i32
    %c0_i32_1 = arith.constant 0 : i32
    return %c0_i32, %c0_i32_0 : i32, i32
  }
  func.func @transform_9(%arg0: i32) -> (i32, i32) {
    %c0_i32 = arith.constant 0 : i32
    %c0_i32_0 = arith.constant 0 : i32
    return %arg0, %c0_i32 : i32, i32
  }
}

</mosaic_0001>

<llo_original>
// kernel: deepid_forward.4
$region0: #{deepid_forward.4}
  #allocation0 [shape = 'u32[]', space=smem, size = 0x4, offset = 0x4, fixed_abs, tag = 'smem constant byte address 0x4 - core index']
  #allocation1 [shape = 'u32[144,128]{1,0:T(1,128)}', space=vmem, size = 0x12000, scoped, tag = 'internal scratch']
  %s0 = inlined_call_operand.vmem [shape: f32[5120,48], index: 0, kind: input, shape index: {}]
  %s1 = inlined_call_operand.vmem [shape: f32[48,20], index: 1, kind: input, shape index: {}]
  %s2 = inlined_call_operand.vmem [shape: f32[1,20], index: 2, kind: input, shape index: {}]
  %s3 = inlined_call_operand.vmem [shape: f32[1280,20], index: 3, kind: output, shape index: {}]
  %s4 = sld [smem:[#allocation0]]
  $region45: #{deepid_forward.4} parent=0
    _
  %s6 = ssub.s32 1, %s4
  %s7 = scalar_select 0, %s6, %s4
  loop: start=0, step=1, limit=7
  $region2: #{deepid_forward.4} parent=0 // loop_pre_header
    _
  $region3: #{deepid_forward.4} parent=0 // loop_header
    %s9 = sphi 0, %s13
    %p10 = scmp.ge.s32.totalorder %s9, 7
    %s19 = sphi 0, %s21
    %s22 = sphi 0, %s19
    %s23 = sphi 0, %s22
    %s39 = sphi 0, %s23
    %s43 = sphi 0, %s43
    %s45 = sphi 0, %s43
    %s46 = sphi 0, %s45
    %s60 = sphi 0, %s46
    %s64 = sphi 0, %s64
    %s66 = sphi 0, %s64
    %s67 = sphi 0, %s66
    %s81 = sphi 0, %s67
    %s87 = sphi 0, %s89
    %s90 = sphi 0, %s87
    %s91 = sphi 0, %s90
    %s107 = sphi 0, %s91
  $region4: #{deepid_forward.4} parent=0 // loop_header_branch
    %12 = sbr.rel (%p10) target = $region8
  $region5: #{deepid_forward.4} parent=0 // loop_body
    %s14 = ssub.s32 %s9, 1
    %s15 = ssub.s32 %s9, 2
    %s16 = sadd.s32 %s9, 1
    %s17 = ssub.s32 %s9, %s16
    %p18 = scmp.eq.s32.totalorder %s17, 0
    %s20 = sadd.s32 %s19, 1
    %s21 = scalar_select %p18, %s19, %s20
    %p24 = pneg %p18
    %p25 = scmp.eq.s32.totalorder %s9, 4
    %p26 = por %p24, %p25
    %p27 = scmp.ne.s32.totalorder %s19, %s22
    %p28 = scmp.eq.s32.totalorder %s9, 0
    %p29 = por %p27, %p28
    %p30 = scmp.ne.s32.totalorder %s19, %s22
    %p31 = scmp.eq.s32.totalorder %s14, 4
    %p32 = por %p30, %p31
    %p33 = scmp.ne.s32.totalorder %s22, %s23
    %p34 = scmp.eq.s32.totalorder %s14, 0
    %p35 = por %p33, %p34
    %p36 = scmp.ne.s32.totalorder %s22, %s23
    %p37 = scmp.eq.s32.totalorder %s15, 4
    %p38 = por %p36, %p37
    %p40 = scmp.ne.s32.totalorder %s23, %s39
    %p41 = scmp.eq.s32.totalorder %s15, 0
    %p42 = por %p40, %p41
    %s44 = sadd.s32 %s43, 1
    %p47 = scmp.eq.s32.totalorder %s9, 4
    %p48 = scmp.ne.s32.totalorder %s43, %s45
    %p49 = scmp.eq.s32.totalorder %s9, 0
    %p50 = por %p48, %p49
    %p51 = scmp.ne.s32.totalorder %s43, %s45
    %p52 = scmp.eq.s32.totalorder %s14, 4
    %p53 = por %p51, %p52
    %p54 = scmp.ne.s32.totalorder %s45, %s46
    %p55 = scmp.eq.s32.totalorder %s14, 0
    %p56 = por %p54, %p55
    %p57 = scmp.ne.s32.totalorder %s45, %s46
    %p58 = scmp.eq.s32.totalorder %s15, 4
    %p59 = por %p57, %p58
    %p61 = scmp.ne.s32.totalorder %s46, %s60
    %p62 = scmp.eq.s32.totalorder %s15, 0
    %p63 = por %p61, %p62
    %s65 = sadd.s32 %s64, 1
    %p68 = scmp.eq.s32.totalorder %s9, 4
    %p69 = scmp.ne.s32.totalorder %s64, %s66
    %p70 = scmp.eq.s32.totalorder %s9, 0
    %p71 = por %p69, %p70
    %p72 = scmp.ne.s32.totalorder %s64, %s66
    %p73 = scmp.eq.s32.totalorder %s14, 4
    %p74 = por %p72, %p73
    %p75 = scmp.ne.s32.totalorder %s66, %s67
    %p76 = scmp.eq.s32.totalorder %s14, 0
    %p77 = por %p75, %p76
    %p78 = scmp.ne.s32.totalorder %s66, %s67
    %p79 = scmp.eq.s32.totalorder %s15, 4
    %p80 = por %p78, %p79
    %p82 = scmp.ne.s32.totalorder %s67, %s81
    %p83 = scmp.eq.s32.totalorder %s15, 0
    %p84 = por %p82, %p83
    %s85 = ssub.s32 %s9, %s16
    %p86 = scmp.eq.s32.totalorder %s85, 0
    %s88 = sadd.s32 %s87, 1
    %s89 = scalar_select %p86, %s87, %s88
    %p92 = pneg %p86
    %p93 = scmp.eq.s32.totalorder %s9, 4
    %p94 = por %p92, %p93
    %p95 = scmp.ne.s32.totalorder %s87, %s90
    %p96 = scmp.eq.s32.totalorder %s9, 0
    %p97 = por %p95, %p96
    %p98 = scmp.ne.s32.totalorder %s87, %s90
    %p99 = scmp.eq.s32.totalorder %s14, 4
    %p100 = por %p98, %p99
    %p101 = scmp.ne.s32.totalorder %s90, %s91
    %p102 = scmp.eq.s32.totalorder %s14, 0
    %p103 = por %p101, %p102
    %p104 = scmp.ne.s32.totalorder %s90, %s91
    %p105 = scmp.eq.s32.totalorder %s15, 4
    %p106 = por %p104, %p105
    %p108 = scmp.ne.s32.totalorder %s91, %s107
    %p109 = scmp.eq.s32.totalorder %s15, 0
    %p110 = por %p108, %p109
    %p111 = scmp.le.s32.totalorder 1, %s9
    %p112 = scmp.lt.s32.totalorder %s9, 6
    %p113 = pnand %p111, %p112
    %p114 = pneg %p113
    // Predicated region
    $region9: #{deepid_forward.4} parent=5 // pred_check
      _
    $region10: #{deepid_forward.4} parent=5 // pred_check_branch
      %116 = sbr.rel (%p113) target = $region12
    $region11: #{deepid_forward.4} parent=5 // pred_region
      %s117 = ssub.s32 %s9, 1
      // Predicated region
      $region13: #{deepid_forward.4} parent=11 // pred_check
        %p118 = pneg %p56
      $region14: #{deepid_forward.4} parent=11 // pred_check_branch
        %120 = sbr.rel (%p118) target = $region16
      $region15: #{deepid_forward.4} parent=11 // pred_region
        _
      $region16: #{deepid_forward.4} parent=11 // pred_fallthru
        _
      // Predicated region
      $region17: #{deepid_forward.4} parent=11 // pred_check
        %p121 = pneg %p77
      $region18: #{deepid_forward.4} parent=11 // pred_check_branch
        %123 = sbr.rel (%p121) target = $region20
      $region19: #{deepid_forward.4} parent=11 // pred_region
        _
      $region20: #{deepid_forward.4} parent=11 // pred_fallthru
        _
    $region12: #{deepid_forward.4} parent=5 // pred_fallthru
      _
    %p124 = scmp.lt.s32.totalorder %s9, 5
    // Predicated region
    $region21: #{deepid_forward.4} parent=5 // pred_check
      %p125 = pneg %p124
    $region22: #{deepid_forward.4} parent=5 // pred_check_branch
      %127 = sbr.rel (%p125) target = $region24
    $region23: #{deepid_forward.4} parent=5 // pred_region
      // Predicated region
      $region25: #{deepid_forward.4} parent=23 // pred_check
        %p128 = pneg %p29
      $region26: #{deepid_forward.4} parent=23 // pred_check_branch
        %130 = sbr.rel (%p128) target = $region28
      $region27: #{deepid_forward.4} parent=23 // pred_region
        %s131 = smul.u32 128, %s9
        %p132 = scmp.lt.s32.totalorder %s131, 639
        %s133 = scalar_select %p132, %s131, 639
        %s134 = smul.addr %s133, 8
        %s135 = scalar_lea.vmem %s0, %s134
        %s136 = smul.u32 128, %s9
      $region28: #{deepid_forward.4} parent=23 // pred_fallthru
        _
    $region24: #{deepid_forward.4} parent=5 // pred_fallthru
      _
    %p137 = scmp.le.s32.totalorder 1, %s9
    %p138 = scmp.lt.s32.totalorder %s9, 6
    %p139 = pnand %p137, %p138
    %p140 = pneg %p139
    // Predicated region
    $region29: #{deepid_forward.4} parent=5 // pred_check
      _
    $region30: #{deepid_forward.4} parent=5 // pred_check_branch
      %142 = sbr.rel (%p139) target = $region32
    $region31: #{deepid_forward.4} parent=5 // pred_region
      %s143 = ssub.s32 %s9, 1
      %s144 = smul.u32 128, %s14
      %p145 = scmp.lt.s32.totalorder %s144, 639
      %s146 = scalar_select %p145, %s144, 639
      %s147 = smul.addr %s146, 8
      %s148 = scalar_lea.vmem %s0, %s147
      %p149 = pneg %p35
      %p150 = pneg %p32
      %p151 = pneg %p56
      %p152 = pneg %p53
      %p153 = pneg %p77
      %p154 = pneg %p74
      %p155 = pneg %p103
      %p156 = pneg %p100
      %s157 = smul.u32 32, %s14
      %p158 = scmp.lt.s32.totalorder %s157, 159
      %s159 = scalar_select %p158, %s157, 159
      %s160 = smul.addr %s159, 8
      %s161 = scalar_lea.vmem %s3, %s160
      %s162 = smul.u32 128, %s14
      %p163 = scmp.lt.s32.totalorder %s162, 639
      %s164 = scalar_select %p163, %s162, 639
      %s165 = smul.addr %s164, 8
      %s166 = scalar_lea.vmem %s0, %s165
      %s167 = smul.u32 128, %s14
      %s168 = smul.u32 32, %s14
      %p169 = scmp.lt.s32.totalorder %s168, 159
      %s170 = scalar_select %p169, %s168, 159
      %s171 = smul.addr %s170, 8
      %s172 = scalar_lea.vmem %s3, %s171
      %s173 = smul.u32 32, %s14
      %v174 = vld [vmem:[%s166] sm:$0xff]
      %v175 = vld [vmem:[%s166 + $0x8] sm:$0xff]
      %v176 = vld [vmem:[%s166 + $0x10] sm:$0xff]
      %v177 = vld [vmem:[%s166 + $0x18] sm:$0xff]
      %v178 = vld [vmem:[%s166 + $0x20] sm:$0xff]
      %v179 = vld [vmem:[%s166 + $0x28] sm:$0xff]
      %v180 = vld [vmem:[%s166 + $0x30] sm:$0xff]
      %v181 = vld [vmem:[%s166 + $0x38] sm:$0xff]
      %v182 = vld [vmem:[%s166 + $0x40] sm:$0xff]
      %v183 = vld [vmem:[%s166 + $0x48] sm:$0xff]
      %v184 = vld [vmem:[%s166 + $0x50] sm:$0xff]
      %v185 = vld [vmem:[%s166 + $0x58] sm:$0xff]
      %v186 = vld [vmem:[%s166 + $0x60] sm:$0xff]
      %v187 = vld [vmem:[%s166 + $0x68] sm:$0xff]
      %v188 = vld [vmem:[%s166 + $0x70] sm:$0xff]
      %v189 = vld [vmem:[%s166 + $0x78] sm:$0xff]
      %v190 = vld [vmem:[%s166 + $0x80] sm:$0xff]
      %v191 = vld [vmem:[%s166 + $0x88] sm:$0xff]
      %v192 = vld [vmem:[%s166 + $0x90] sm:$0xff]
      %v193 = vld [vmem:[%s166 + $0x98] sm:$0xff]
      %v194 = vld [vmem:[%s166 + $0xa0] sm:$0xff]
      %v195 = vld [vmem:[%s166 + $0xa8] sm:$0xff]
      %v196 = vld [vmem:[%s166 + $0xb0] sm:$0xff]
      %v197 = vld [vmem:[%s166 + $0xb8] sm:$0xff]
      %v198 = vld [vmem:[%s166 + $0xc0] sm:$0xff]
      %v199 = vld [vmem:[%s166 + $0xc8] sm:$0xff]
      %v200 = vld [vmem:[%s166 + $0xd0] sm:$0xff]
      %v201 = vld [vmem:[%s166 + $0xd8] sm:$0xff]
      %v202 = vld [vmem:[%s166 + $0xe0] sm:$0xff]
      %v203 = vld [vmem:[%s166 + $0xe8] sm:$0xff]
      %v204 = vld [vmem:[%s166 + $0xf0] sm:$0xff]
      %v205 = vld [vmem:[%s166 + $0xf8] sm:$0xff]
      %v206 = vld [vmem:[%s166 + $0x100] sm:$0xff]
      %v207 = vld [vmem:[%s166 + $0x108] sm:$0xff]
      %v208 = vld [vmem:[%s166 + $0x110] sm:$0xff]
      %v209 = vld [vmem:[%s166 + $0x118] sm:$0xff]
      %v210 = vld [vmem:[%s166 + $0x120] sm:$0xff]
      %v211 = vld [vmem:[%s166 + $0x128] sm:$0xff]
      %v212 = vld [vmem:[%s166 + $0x130] sm:$0xff]
      %v213 = vld [vmem:[%s166 + $0x138] sm:$0xff]
      %v214 = vld [vmem:[%s166 + $0x140] sm:$0xff]
      %v215 = vld [vmem:[%s166 + $0x148] sm:$0xff]
      %v216 = vld [vmem:[%s166 + $0x150] sm:$0xff]
      %v217 = vld [vmem:[%s166 + $0x158] sm:$0xff]
      %v218 = vld [vmem:[%s166 + $0x160] sm:$0xff]
      %v219 = vld [vmem:[%s166 + $0x168] sm:$0xff]
      %v220 = vld [vmem:[%s166 + $0x170] sm:$0xff]
      %v221 = vld [vmem:[%s166 + $0x178] sm:$0xff]
      %v222 = vld [vmem:[%s166 + $0x180] sm:$0xff]
      %v223 = vld [vmem:[%s166 + $0x188] sm:$0xff]
      %v224 = vld [vmem:[%s166 + $0x190] sm:$0xff]
      %v225 = vld [vmem:[%s166 + $0x198] sm:$0xff]
      %v226 = vld [vmem:[%s166 + $0x1a0] sm:$0xff]
      %v227 = vld [vmem:[%s166 + $0x1a8] sm:$0xff]
      %v228 = vld [vmem:[%s166 + $0x1b0] sm:$0xff]
      %v229 = vld [vmem:[%s166 + $0x1b8] sm:$0xff]
      %v230 = vld [vmem:[%s166 + $0x1c0] sm:$0xff]
      %v231 = vld [vmem:[%s166 + $0x1c8] sm:$0xff]
      %v232 = vld [vmem:[%s166 + $0x1d0] sm:$0xff]
      %v233 = vld [vmem:[%s166 + $0x1d8] sm:$0xff]
      %v234 = vld [vmem:[%s166 + $0x1e0] sm:$0xff]
      %v235 = vld [vmem:[%s166 + $0x1e8] sm:$0xff]
      %v236 = vld [vmem:[%s166 + $0x1f0] sm:$0xff]
      %v237 = vld [vmem:[%s166 + $0x1f8] sm:$0xff]
      %v238 = vld [vmem:[%s166 + $0x200] sm:$0xff]
      %v239 = vld [vmem:[%s166 + $0x208] sm:$0xff]
      %v240 = vld [vmem:[%s166 + $0x210] sm:$0xff]
      %v241 = vld [vmem:[%s166 + $0x218] sm:$0xff]
      %v242 = vld [vmem:[%s166 + $0x220] sm:$0xff]
      %v243 = vld [vmem:[%s166 + $0x228] sm:$0xff]
      %v244 = vld [vmem:[%s166 + $0x230] sm:$0xff]
      %v245 = vld [vmem:[%s166 + $0x238] sm:$0xff]
      %v246 = vld [vmem:[%s166 + $0x240] sm:$0xff]
      %v247 = vld [vmem:[%s166 + $0x248] sm:$0xff]
      %v248 = vld [vmem:[%s166 + $0x250] sm:$0xff]
      %v249 = vld [vmem:[%s166 + $0x258] sm:$0xff]
      %v250 = vld [vmem:[%s166 + $0x260] sm:$0xff]
      %v251 = vld [vmem:[%s166 + $0x268] sm:$0xff]
      %v252 = vld [vmem:[%s166 + $0x270] sm:$0xff]
      %v253 = vld [vmem:[%s166 + $0x278] sm:$0xff]
      %v254 = vld [vmem:[%s166 + $0x280] sm:$0xff]
      %v255 = vld [vmem:[%s166 + $0x288] sm:$0xff]
      %v256 = vld [vmem:[%s166 + $0x290] sm:$0xff]
      %v257 = vld [vmem:[%s166 + $0x298] sm:$0xff]
      %v258 = vld [vmem:[%s166 + $0x2a0] sm:$0xff]
      %v259 = vld [vmem:[%s166 + $0x2a8] sm:$0xff]
      %v260 = vld [vmem:[%s166 + $0x2b0] sm:$0xff]
      %v261 = vld [vmem:[%s166 + $0x2b8] sm:$0xff]
      %v262 = vld [vmem:[%s166 + $0x2c0] sm:$0xff]
      %v263 = vld [vmem:[%s166 + $0x2c8] sm:$0xff]
      %v264 = vld [vmem:[%s166 + $0x2d0] sm:$0xff]
      %v265 = vld [vmem:[%s166 + $0x2d8] sm:$0xff]
      %v266 = vld [vmem:[%s166 + $0x2e0] sm:$0xff]
      %v267 = vld [vmem:[%s166 + $0x2e8] sm:$0xff]
      %v268 = vld [vmem:[%s166 + $0x2f0] sm:$0xff]
      %v269 = vld [vmem:[%s166 + $0x2f8] sm:$0xff]
      %v270 = vld [vmem:[%s166 + $0x300] sm:$0xff]
      %v271 = vld [vmem:[%s166 + $0x308] sm:$0xff]
      %v272 = vld [vmem:[%s166 + $0x310] sm:$0xff]
      %v273 = vld [vmem:[%s166 + $0x318] sm:$0xff]
      %v274 = vld [vmem:[%s166 + $0x320] sm:$0xff]
      %v275 = vld [vmem:[%s166 + $0x328] sm:$0xff]
      %v276 = vld [vmem:[%s166 + $0x330] sm:$0xff]
      %v277 = vld [vmem:[%s166 + $0x338] sm:$0xff]
      %v278 = vld [vmem:[%s166 + $0x340] sm:$0xff]
      %v279 = vld [vmem:[%s166 + $0x348] sm:$0xff]
      %v280 = vld [vmem:[%s166 + $0x350] sm:$0xff]
      %v281 = vld [vmem:[%s166 + $0x358] sm:$0xff]
      %v282 = vld [vmem:[%s166 + $0x360] sm:$0xff]
      %v283 = vld [vmem:[%s166 + $0x368] sm:$0xff]
      %v284 = vld [vmem:[%s166 + $0x370] sm:$0xff]
      %v285 = vld [vmem:[%s166 + $0x378] sm:$0xff]
      %v286 = vld [vmem:[%s166 + $0x380] sm:$0xff]
      %v287 = vld [vmem:[%s166 + $0x388] sm:$0xff]
      %v288 = vld [vmem:[%s166 + $0x390] sm:$0xff]
      %v289 = vld [vmem:[%s166 + $0x398] sm:$0xff]
      %v290 = vld [vmem:[%s166 + $0x3a0] sm:$0xff]
      %v291 = vld [vmem:[%s166 + $0x3a8] sm:$0xff]
      %v292 = vld [vmem:[%s166 + $0x3b0] sm:$0xff]
      %v293 = vld [vmem:[%s166 + $0x3b8] sm:$0xff]
      %v294 = vld [vmem:[%s166 + $0x3c0] sm:$0xff]
      %v295 = vld [vmem:[%s166 + $0x3c8] sm:$0xff]
      %v296 = vld [vmem:[%s166 + $0x3d0] sm:$0xff]
      %v297 = vld [vmem:[%s166 + $0x3d8] sm:$0xff]
      %v298 = vld [vmem:[%s166 + $0x3e0] sm:$0xff]
      %v299 = vld [vmem:[%s166 + $0x3e8] sm:$0xff]
      %v300 = vld [vmem:[%s166 + $0x3f0] sm:$0xff]
      %v301 = vld [vmem:[%s166 + $0x3f8] sm:$0xff]
      %v302 = vld [vmem:[%s1] sm:$0xff]
      %v303 = vld [vmem:[%s1 + $0x8] sm:$0xff]
      %v304 = vld [vmem:[%s1 + $0x10] sm:$0xff]
      %v305 = vld [vmem:[%s1 + $0x18] sm:$0xff]
      %v306 = vld [vmem:[%s1 + $0x20] sm:$0xff]
      %v307 = vld [vmem:[%s1 + $0x28] sm:$0xff]
      %vm308 = vcmask 392192
      %v310 = vsel %vm308, %v174, 0
      %v313 = vsel %vm308, %v175, 0
      %v316 = vsel %vm308, %v176, 0
      %v319 = vsel %vm308, %v177, 0
      %v322 = vsel %vm308, %v178, 0
      %v325 = vsel %vm308, %v179, 0
      %v328 = vsel %vm308, %v180, 0
      %v331 = vsel %vm308, %v181, 0
      %v334 = vsel %vm308, %v182, 0
      %v337 = vsel %vm308, %v183, 0
      %v340 = vsel %vm308, %v184, 0
      %v343 = vsel %vm308, %v185, 0
      %v346 = vsel %vm308, %v186, 0
      %v349 = vsel %vm308, %v187, 0
      %v352 = vsel %vm308, %v188, 0
      %v355 = vsel %vm308, %v189, 0
      %v358 = vsel %vm308, %v190, 0
      %v361 = vsel %vm308, %v191, 0
      %v364 = vsel %vm308, %v192, 0
      %v367 = vsel %vm308, %v193, 0
      %v370 = vsel %vm308, %v194, 0
      %v373 = vsel %vm308, %v195, 0
      %v376 = vsel %vm308, %v196, 0
      %v379 = vsel %vm308, %v197, 0
      %v382 = vsel %vm308, %v198, 0
      %v385 = vsel %vm308, %v199, 0
      %v388 = vsel %vm308, %v200, 0
      %v391 = vsel %vm308, %v201, 0
      %v394 = vsel %vm308, %v202, 0
      %v397 = vsel %vm308, %v203, 0
      %v400 = vsel %vm308, %v204, 0
      %v403 = vsel %vm308, %v205, 0
      %v406 = vsel %vm308, %v206, 0
      %v409 = vsel %vm308, %v207, 0
      %v412 = vsel %vm308, %v208, 0
      %v415 = vsel %vm308, %v209, 0
      %v418 = vsel %vm308, %v210, 0
      %v421 = vsel %vm308, %v211, 0
      %v424 = vsel %vm308, %v212, 0
      %v427 = vsel %vm308, %v213, 0
      %v430 = vsel %vm308, %v214, 0
      %v433 = vsel %vm308, %v215, 0
      %v436 = vsel %vm308, %v216, 0
      %v439 = vsel %vm308, %v217, 0
      %v442 = vsel %vm308, %v218, 0
      %v445 = vsel %vm308, %v219, 0
      %v448 = vsel %vm308, %v220, 0
      %v451 = vsel %vm308, %v221, 0
      %v454 = vsel %vm308, %v222, 0
      %v457 = vsel %vm308, %v223, 0
      %v460 = vsel %vm308, %v224, 0
      %v463 = vsel %vm308, %v225, 0
      %v466 = vsel %vm308, %v226, 0
      %v469 = vsel %vm308, %v227, 0
      %v472 = vsel %vm308, %v228, 0
      %v475 = vsel %vm308, %v229, 0
      %v478 = vsel %vm308, %v230, 0
      %v481 = vsel %vm308, %v231, 0
      %v484 = vsel %vm308, %v232, 0
      %v487 = vsel %vm308, %v233, 0
      %v490 = vsel %vm308, %v234, 0
      %v493 = vsel %vm308, %v235, 0
      %v496 = vsel %vm308, %v236, 0
      %v499 = vsel %vm308, %v237, 0
      %v502 = vsel %vm308, %v238, 0
      %v505 = vsel %vm308, %v239, 0
      %v508 = vsel %vm308, %v240, 0
      %v511 = vsel %vm308, %v241, 0
      %v514 = vsel %vm308, %v242, 0
      %v517 = vsel %vm308, %v243, 0
      %v520 = vsel %vm308, %v244, 0
      %v523 = vsel %vm308, %v245, 0
      %v526 = vsel %vm308, %v246, 0
      %v529 = vsel %vm308, %v247, 0
      %v532 = vsel %vm308, %v248, 0
      %v535 = vsel %vm308, %v249, 0
      %v538 = vsel %vm308, %v250, 0
      %v541 = vsel %vm308, %v251, 0
      %v544 = vsel %vm308, %v252, 0
      %v547 = vsel %vm308, %v253, 0
      %v550 = vsel %vm308, %v254, 0
      %v553 = vsel %vm308, %v255, 0
      %v556 = vsel %vm308, %v256, 0
      %v559 = vsel %vm308, %v257, 0
      %v562 = vsel %vm308, %v258, 0
      %v565 = vsel %vm308, %v259, 0
      %v568 = vsel %vm308, %v260, 0
      %v571 = vsel %vm308, %v261, 0
      %v574 = vsel %vm308, %v262, 0
      %v577 = vsel %vm308, %v263, 0
      %v580 = vsel %vm308, %v264, 0
      %v583 = vsel %vm308, %v265, 0
      %v586 = vsel %vm308, %v266, 0
      %v589 = vsel %vm308, %v267, 0
      %v592 = vsel %vm308, %v268, 0
      %v595 = vsel %vm308, %v269, 0
      %v598 = vsel %vm308, %v270, 0
      %v601 = vsel %vm308, %v271, 0
      %v604 = vsel %vm308, %v272, 0
      %v607 = vsel %vm308, %v273, 0
      %v610 = vsel %vm308, %v274, 0
      %v613 = vsel %vm308, %v275, 0
      %v616 = vsel %vm308, %v276, 0
      %v619 = vsel %vm308, %v277, 0
      %v622 = vsel %vm308, %v278, 0
      %v625 = vsel %vm308, %v279, 0
      %v628 = vsel %vm308, %v280, 0
      %v631 = vsel %vm308, %v281, 0
      %v634 = vsel %vm308, %v282, 0
      %v637 = vsel %vm308, %v283, 0
      %v640 = vsel %vm308, %v284, 0
      %v643 = vsel %vm308, %v285, 0
      %v646 = vsel %vm308, %v286, 0
      %v649 = vsel %vm308, %v287, 0
      %v652 = vsel %vm308, %v288, 0
      %v655 = vsel %vm308, %v289, 0
      %v658 = vsel %vm308, %v290, 0
      %v661 = vsel %vm308, %v291, 0
      %v664 = vsel %vm308, %v292, 0
      %v667 = vsel %vm308, %v293, 0
      %v670 = vsel %vm308, %v294, 0
      %v673 = vsel %vm308, %v295, 0
      %v676 = vsel %vm308, %v296, 0
      %v679 = vsel %vm308, %v297, 0
      %v682 = vsel %vm308, %v298, 0
      %v685 = vsel %vm308, %v299, 0
      %v688 = vsel %vm308, %v300, 0
      %v691 = vsel %vm308, %v301, 0
      %693 = vmatprep.subr.mxu0 0.0
      %694 = vmatpush1.msra.mxu0 0.0
      %695 = vmatprep.subr.mxu0 0.0
      %696 = vmatpush1.msra.mxu0 0.0
      %697 = vmatprep.subr.mxu0 0.0
      %698 = vmatpush1.msra.mxu0 0.0
      %699 = vmatprep.subr.mxu0 0.0
      %700 = vmatpush1.msra.mxu0 0.0
      %701 = vmatprep.subr.mxu0 0.0
      %702 = vmatpush1.msra.mxu0 0.0
      %703 = vmatprep.subr.mxu0 0.0
      %704 = vmatpush1.msra.mxu0 0.0
      %705 = vmatprep.subr.mxu0 0.0
      %706 = vmatpush1.msra.mxu0 0.0
      %707 = vmatprep.subr.mxu0 0.0
      %708 = vmatpush1.msra.mxu0 0.0
      %709 = vmatprep.subr.mxu0 0.0
      %710 = vmatpush1.msra.mxu0 0.0
      %711 = vmatprep.subr.mxu0 0.0
      %712 = vmatpush1.msra.mxu0 0.0
      %713 = vmatprep.subr.mxu0 0.0
      %714 = vmatpush1.msra.mxu0 %v307
      %715 = vmatprep.subr.mxu0 0.0
      %716 = vmatpush1.msra.mxu0 %v306
      %717 = vmatprep.subr.mxu0 0.0
      %718 = vmatpush1.msra.mxu0 %v305
      %719 = vmatprep.subr.mxu0 0.0
      %720 = vmatpush1.msra.mxu0 %v304
      %721 = vmatprep.subr.mxu0 0.0
      %722 = vmatpush1.msra.mxu0 %v303
      %723 = vmatprep.subr.mxu0 0.0
      %724 = vmatpush1.msra.mxu0 %v302
      %725 = vmatprep.subr.mxu0 0.0
      %726 = vmatpush2.msra.mxu0 0.0
      %727 = vmatprep.subr.mxu0 0.0
      %728 = vmatpush2.msra.mxu0 0.0
      %729 = vmatprep.subr.mxu0 0.0
      %730 = vmatpush2.msra.mxu0 0.0
      %731 = vmatprep.subr.mxu0 0.0
      %732 = vmatpush2.msra.mxu0 0.0
      %733 = vmatprep.subr.mxu0 0.0
      %734 = vmatpush2.msra.mxu0 0.0
      %735 = vmatprep.subr.mxu0 0.0
      %736 = vmatpush2.msra.mxu0 0.0
      %737 = vmatprep.subr.mxu0 0.0
      %738 = vmatpush2.msra.mxu0 0.0
      %739 = vmatprep.subr.mxu0 0.0
      %740 = vmatpush2.msra.mxu0 0.0
      %741 = vmatprep.subr.mxu0 0.0
      %742 = vmatpush2.msra.mxu0 0.0
      %743 = vmatprep.subr.mxu0 0.0
      %744 = vmatpush2.msra.mxu0 0.0
      %745 = vmatprep.subr.mxu0 0.0
      %746 = vmatpush2.msra.mxu0 0.0
      %747 = vmatprep.subr.mxu0 0.0
      %748 = vmatpush2.msra.mxu0 0.0
      %749 = vmatprep.subr.mxu0 0.0
      %750 = vmatpush2.msra.mxu0 0.0
      %751 = vmatprep.subr.mxu0 0.0
      %752 = vmatpush2.msra.mxu0 0.0
      %753 = vmatprep.subr.mxu0 0.0
      %754 = vmatpush2.msra.mxu0 0.0
      %755 = vmatprep.subr.mxu0 0.0
      %756 = vmatpush2.msra.mxu0 0.0
      %757 = vmatprep.mubr.f32.mxu0 0.0
      %758 = vmatmul.mubr.f32.gmra.mxu0 %v310
      %v759 = vpop.f32.mrf.mxu0
      %v760 = vadd.f32 0.0, %v759
      %v761 = vpop.f32.mrf.mxu0
      %762 = vmatprep.mubr.f32.mxu0 0.0
      %763 = vmatmul.mubr.f32.gmra.mxu0 %v313
      %v764 = vpop.f32.mrf.mxu0
      %v765 = vadd.f32 0.0, %v764
      %v766 = vpop.f32.mrf.mxu0
      %767 = vmatprep.mubr.f32.mxu0 0.0
      %768 = vmatmul.mubr.f32.gmra.mxu0 %v316
      %v769 = vpop.f32.mrf.mxu0
      %v770 = vadd.f32 0.0, %v769
      %v771 = vpop.f32.mrf.mxu0
      %772 = vmatprep.mubr.f32.mxu0 0.0
      %773 = vmatmul.mubr.f32.gmra.mxu0 %v319
      %v774 = vpop.f32.mrf.mxu0
      %v775 = vadd.f32 0.0, %v774
      %v776 = vpop.f32.mrf.mxu0
      %777 = vmatprep.mubr.f32.mxu0 0.0
      %778 = vmatmul.mubr.f32.gmra.mxu0 %v322
      %v779 = vpop.f32.mrf.mxu0
      %v780 = vadd.f32 0.0, %v779
      %v781 = vpop.f32.mrf.mxu0
      %782 = vmatprep.mubr.f32.mxu0 0.0
      %783 = vmatmul.mubr.f32.gmra.mxu0 %v325
      %v784 = vpop.f32.mrf.mxu0
      %v785 = vadd.f32 0.0, %v784
      %v786 = vpop.f32.mrf.mxu0
      %787 = vmatprep.mubr.f32.mxu0 0.0
      %788 = vmatmul.mubr.f32.gmra.mxu0 %v328
      %v789 = vpop.f32.mrf.mxu0
      %v790 = vadd.f32 0.0, %v789
      %v791 = vpop.f32.mrf.mxu0
      %792 = vmatprep.mubr.f32.mxu0 0.0
      %793 = vmatmul.mubr.f32.gmra.mxu0 %v331
      %v794 = vpop.f32.mrf.mxu0
      %v795 = vadd.f32 0.0, %v794
      %v796 = vpop.f32.mrf.mxu0
      %797 = vmatprep.mubr.f32.mxu0 0.0
      %798 = vmatmul.mubr.f32.gmra.mxu0 %v334
      %v799 = vpop.f32.mrf.mxu0
      %v800 = vadd.f32 0.0, %v799
      %v801 = vpop.f32.mrf.mxu0
      %802 = vmatprep.mubr.f32.mxu0 0.0
      %803 = vmatmul.mubr.f32.gmra.mxu0 %v337
      %v804 = vpop.f32.mrf.mxu0
      %v805 = vadd.f32 0.0, %v804
      %v806 = vpop.f32.mrf.mxu0
      %807 = vmatprep.mubr.f32.mxu0 0.0
      %808 = vmatmul.mubr.f32.gmra.mxu0 %v340
      %v809 = vpop.f32.mrf.mxu0
      %v810 = vadd.f32 0.0, %v809
      %v811 = vpop.f32.mrf.mxu0
      %812 = vmatprep.mubr.f32.mxu0 0.0
      %813 = vmatmul.mubr.f32.gmra.mxu0 %v343
      %v814 = vpop.f32.mrf.mxu0
      %v815 = vadd.f32 0.0, %v814
      %v816 = vpop.f32.mrf.mxu0
      %817 = vmatprep.mubr.f32.mxu0 0.0
      %818 = vmatmul.mubr.f32.gmra.mxu0 %v346
      %v819 = vpop.f32.mrf.mxu0
      %v820 = vadd.f32 0.0, %v819
      %v821 = vpop.f32.mrf.mxu0
      %822 = vmatprep.mubr.f32.mxu0 0.0
      %823 = vmatmul.mubr.f32.gmra.mxu0 %v349
      %v824 = vpop.f32.mrf.mxu0
      %v825 = vadd.f32 0.0, %v824
      %v826 = vpop.f32.mrf.mxu0
      %827 = vmatprep.mubr.f32.mxu0 0.0
      %828 = vmatmul.mubr.f32.gmra.mxu0 %v352
      %v829 = vpop.f32.mrf.mxu0
      %v830 = vadd.f32 0.0, %v829
      %v831 = vpop.f32.mrf.mxu0
      %832 = vmatprep.mubr.f32.mxu0 0.0
      %833 = vmatmul.mubr.f32.gmra.mxu0 %v355
      %v834 = vpop.f32.mrf.mxu0
      %v835 = vadd.f32 0.0, %v834
      %v836 = vpop.f32.mrf.mxu0
      %837 = vmatprep.mubr.f32.mxu0 0.0
      %838 = vmatmul.mubr.f32.gmra.mxu0 %v358
      %v839 = vpop.f32.mrf.mxu0
      %v840 = vadd.f32 0.0, %v839
      %v841 = vpop.f32.mrf.mxu0
      %842 = vmatprep.mubr.f32.mxu0 0.0
      %843 = vmatmul.mubr.f32.gmra.mxu0 %v361
      %v844 = vpop.f32.mrf.mxu0
      %v845 = vadd.f32 0.0, %v844
      %v846 = vpop.f32.mrf.mxu0
      %847 = vmatprep.mubr.f32.mxu0 0.0
      %848 = vmatmul.mubr.f32.gmra.mxu0 %v364
      %v849 = vpop.f32.mrf.mxu0
      %v850 = vadd.f32 0.0, %v849
      %v851 = vpop.f32.mrf.mxu0
      %852 = vmatprep.mubr.f32.mxu0 0.0
      %853 = vmatmul.mubr.f32.gmra.mxu0 %v367
      %v854 = vpop.f32.mrf.mxu0
      %v855 = vadd.f32 0.0, %v854
      %v856 = vpop.f32.mrf.mxu0
      %857 = vmatprep.mubr.f32.mxu0 0.0
      %858 = vmatmul.mubr.f32.gmra.mxu0 %v370
      %v859 = vpop.f32.mrf.mxu0
      %v860 = vadd.f32 0.0, %v859
      %v861 = vpop.f32.mrf.mxu0
      %862 = vmatprep.mubr.f32.mxu0 0.0
      %863 = vmatmul.mubr.f32.gmra.mxu0 %v373
      %v864 = vpop.f32.mrf.mxu0
      %v865 = vadd.f32 0.0, %v864
      %v866 = vpop.f32.mrf.mxu0
      %867 = vmatprep.mubr.f32.mxu0 0.0
      %868 = vmatmul.mubr.f32.gmra.mxu0 %v376
      %v869 = vpop.f32.mrf.mxu0
      %v870 = vadd.f32 0.0, %v869
      %v871 = vpop.f32.mrf.mxu0
      %872 = vmatprep.mubr.f32.mxu0 0.0
      %873 = vmatmul.mubr.f32.gmra.mxu0 %v379
      %v874 = vpop.f32.mrf.mxu0
      %v875 = vadd.f32 0.0, %v874
      %v876 = vpop.f32.mrf.mxu0
      %877 = vmatprep.mubr.f32.mxu0 0.0
      %878 = vmatmul.mubr.f32.gmra.mxu0 %v382
      %v879 = vpop.f32.mrf.mxu0
      %v880 = vadd.f32 0.0, %v879
      %v881 = vpop.f32.mrf.mxu0
      %882 = vmatprep.mubr.f32.mxu0 0.0
      %883 = vmatmul.mubr.f32.gmra.mxu0 %v385
      %v884 = vpop.f32.mrf.mxu0
      %v885 = vadd.f32 0.0, %v884
      %v886 = vpop.f32.mrf.mxu0
      %887 = vmatprep.mubr.f32.mxu0 0.0
      %888 = vmatmul.mubr.f32.gmra.mxu0 %v388
      %v889 = vpop.f32.mrf.mxu0
      %v890 = vadd.f32 0.0, %v889
      %v891 = vpop.f32.mrf.mxu0
      %892 = vmatprep.mubr.f32.mxu0 0.0
      %893 = vmatmul.mubr.f32.gmra.mxu0 %v391
      %v894 = vpop.f32.mrf.mxu0
      %v895 = vadd.f32 0.0, %v894
      %v896 = vpop.f32.mrf.mxu0
      %897 = vmatprep.mubr.f32.mxu0 0.0
      %898 = vmatmul.mubr.f32.gmra.mxu0 %v394
      %v899 = vpop.f32.mrf.mxu0
      %v900 = vadd.f32 0.0, %v899
      %v901 = vpop.f32.mrf.mxu0
      %902 = vmatprep.mubr.f32.mxu0 0.0
      %903 = vmatmul.mubr.f32.gmra.mxu0 %v397
      %v904 = vpop.f32.mrf.mxu0
      %v905 = vadd.f32 0.0, %v904
      %v906 = vpop.f32.mrf.mxu0
      %907 = vmatprep.mubr.f32.mxu0 0.0
      %908 = vmatmul.mubr.f32.gmra.mxu0 %v400
      %v909 = vpop.f32.mrf.mxu0
      %v910 = vadd.f32 0.0, %v909
      %v911 = vpop.f32.mrf.mxu0
      %912 = vmatprep.mubr.f32.mxu0 0.0
      %913 = vmatmul.mubr.f32.gmra.mxu0 %v403
      %v914 = vpop.f32.mrf.mxu0
      %v915 = vadd.f32 0.0, %v914
      %v916 = vpop.f32.mrf.mxu0
      %917 = vmatprep.mubr.f32.mxu0 0.0
      %918 = vmatmul.mubr.f32.gmra.mxu0 %v406
      %v919 = vpop.f32.mrf.mxu0
      %v920 = vadd.f32 0.0, %v919
      %v921 = vpop.f32.mrf.mxu0
      %922 = vmatprep.mubr.f32.mxu0 0.0
      %923 = vmatmul.mubr.f32.gmra.mxu0 %v409
      %v924 = vpop.f32.mrf.mxu0
      %v925 = vadd.f32 0.0, %v924
      %v926 = vpop.f32.mrf.mxu0
      %927 = vmatprep.mubr.f32.mxu0 0.0
      %928 = vmatmul.mubr.f32.gmra.mxu0 %v412
      %v929 = vpop.f32.mrf.mxu0
      %v930 = vadd.f32 0.0, %v929
      %v931 = vpop.f32.mrf.mxu0
      %932 = vmatprep.mubr.f32.mxu0 0.0
      %933 = vmatmul.mubr.f32.gmra.mxu0 %v415
      %v934 = vpop.f32.mrf.mxu0
      %v935 = vadd.f32 0.0, %v934
      %v936 = vpop.f32.mrf.mxu0
      %937 = vmatprep.mubr.f32.mxu0 0.0
      %938 = vmatmul.mubr.f32.gmra.mxu0 %v418
      %v939 = vpop.f32.mrf.mxu0
      %v940 = vadd.f32 0.0, %v939
      %v941 = vpop.f32.mrf.mxu0
      %942 = vmatprep.mubr.f32.mxu0 0.0
      %943 = vmatmul.mubr.f32.gmra.mxu0 %v421
      %v944 = vpop.f32.mrf.mxu0
      %v945 = vadd.f32 0.0, %v944
      %v946 = vpop.f32.mrf.mxu0
      %947 = vmatprep.mubr.f32.mxu0 0.0
      %948 = vmatmul.mubr.f32.gmra.mxu0 %v424
      %v949 = vpop.f32.mrf.mxu0
      %v950 = vadd.f32 0.0, %v949
      %v951 = vpop.f32.mrf.mxu0
      %952 = vmatprep.mubr.f32.mxu0 0.0
      %953 = vmatmul.mubr.f32.gmra.mxu0 %v427
      %v954 = vpop.f32.mrf.mxu0
      %v955 = vadd.f32 0.0, %v954
      %v956 = vpop.f32.mrf.mxu0
      %957 = vmatprep.mubr.f32.mxu0 0.0
      %958 = vmatmul.mubr.f32.gmra.mxu0 %v430
      %v959 = vpop.f32.mrf.mxu0
      %v960 = vadd.f32 0.0, %v959
      %v961 = vpop.f32.mrf.mxu0
      %962 = vmatprep.mubr.f32.mxu0 0.0
      %963 = vmatmul.mubr.f32.gmra.mxu0 %v433
      %v964 = vpop.f32.mrf.mxu0
      %v965 = vadd.f32 0.0, %v964
      %v966 = vpop.f32.mrf.mxu0
      %967 = vmatprep.mubr.f32.mxu0 0.0
      %968 = vmatmul.mubr.f32.gmra.mxu0 %v436
      %v969 = vpop.f32.mrf.mxu0
      %v970 = vadd.f32 0.0, %v969
      %v971 = vpop.f32.mrf.mxu0
      %972 = vmatprep.mubr.f32.mxu0 0.0
      %973 = vmatmul.mubr.f32.gmra.mxu0 %v439
      %v974 = vpop.f32.mrf.mxu0
      %v975 = vadd.f32 0.0, %v974
      %v976 = vpop.f32.mrf.mxu0
      %977 = vmatprep.mubr.f32.mxu0 0.0
      %978 = vmatmul.mubr.f32.gmra.mxu0 %v442
      %v979 = vpop.f32.mrf.mxu0
      %v980 = vadd.f32 0.0, %v979
      %v981 = vpop.f32.mrf.mxu0
      %982 = vmatprep.mubr.f32.mxu0 0.0
      %983 = vmatmul.mubr.f32.gmra.mxu0 %v445
      %v984 = vpop.f32.mrf.mxu0
      %v985 = vadd.f32 0.0, %v984
      %v986 = vpop.f32.mrf.mxu0
      %987 = vmatprep.mubr.f32.mxu0 0.0
      %988 = vmatmul.mubr.f32.gmra.mxu0 %v448
      %v989 = vpop.f32.mrf.mxu0
      %v990 = vadd.f32 0.0, %v989
      %v991 = vpop.f32.mrf.mxu0
      %992 = vmatprep.mubr.f32.mxu0 0.0
      %993 = vmatmul.mubr.f32.gmra.mxu0 %v451
      %v994 = vpop.f32.mrf.mxu0
      %v995 = vadd.f32 0.0, %v994
      %v996 = vpop.f32.mrf.mxu0
      %997 = vmatprep.mubr.f32.mxu0 0.0
      %998 = vmatmul.mubr.f32.gmra.mxu0 %v454
      %v999 = vpop.f32.mrf.mxu0
      %v1000 = vadd.f32 0.0, %v999
      %v1001 = vpop.f32.mrf.mxu0
      %1002 = vmatprep.mubr.f32.mxu0 0.0
      %1003 = vmatmul.mubr.f32.gmra.mxu0 %v457
      %v1004 = vpop.f32.mrf.mxu0
      %v1005 = vadd.f32 0.0, %v1004
      %v1006 = vpop.f32.mrf.mxu0
      %1007 = vmatprep.mubr.f32.mxu0 0.0
      %1008 = vmatmul.mubr.f32.gmra.mxu0 %v460
      %v1009 = vpop.f32.mrf.mxu0
      %v1010 = vadd.f32 0.0, %v1009
      %v1011 = vpop.f32.mrf.mxu0
      %1012 = vmatprep.mubr.f32.mxu0 0.0
      %1013 = vmatmul.mubr.f32.gmra.mxu0 %v463
      %v1014 = vpop.f32.mrf.mxu0
      %v1015 = vadd.f32 0.0, %v1014
      %v1016 = vpop.f32.mrf.mxu0
      %1017 = vmatprep.mubr.f32.mxu0 0.0
      %1018 = vmatmul.mubr.f32.gmra.mxu0 %v466
      %v1019 = vpop.f32.mrf.mxu0
      %v1020 = vadd.f32 0.0, %v1019
      %v1021 = vpop.f32.mrf.mxu0
      %1022 = vmatprep.mubr.f32.mxu0 0.0
      %1023 = vmatmul.mubr.f32.gmra.mxu0 %v469
      %v1024 = vpop.f32.mrf.mxu0
      %v1025 = vadd.f32 0.0, %v1024
      %v1026 = vpop.f32.mrf.mxu0
      %1027 = vmatprep.mubr.f32.mxu0 0.0
      %1028 = vmatmul.mubr.f32.gmra.mxu0 %v472
      %v1029 = vpop.f32.mrf.mxu0
      %v1030 = vadd.f32 0.0, %v1029
      %v1031 = vpop.f32.mrf.mxu0
      %1032 = vmatprep.mubr.f32.mxu0 0.0
      %1033 = vmatmul.mubr.f32.gmra.mxu0 %v475
      %v1034 = vpop.f32.mrf.mxu0
      %v1035 = vadd.f32 0.0, %v1034
      %v1036 = vpop.f32.mrf.mxu0
      %1037 = vmatprep.mubr.f32.mxu0 0.0
      %1038 = vmatmul.mubr.f32.gmra.mxu0 %v478
      %v1039 = vpop.f32.mrf.mxu0
      %v1040 = vadd.f32 0.0, %v1039
      %v1041 = vpop.f32.mrf.mxu0
      %1042 = vmatprep.mubr.f32.mxu0 0.0
      %1043 = vmatmul.mubr.f32.gmra.mxu0 %v481
      %v1044 = vpop.f32.mrf.mxu0
      %v1045 = vadd.f32 0.0, %v1044
      %v1046 = vpop.f32.mrf.mxu0
      %1047 = vmatprep.mubr.f32.mxu0 0.0
      %1048 = vmatmul.mubr.f32.gmra.mxu0 %v484
      %v1049 = vpop.f32.mrf.mxu0
      %v1050 = vadd.f32 0.0, %v1049
      %v1051 = vpop.f32.mrf.mxu0
      %1052 = vmatprep.mubr.f32.mxu0 0.0
      %1053 = vmatmul.mubr.f32.gmra.mxu0 %v487
      %v1054 = vpop.f32.mrf.mxu0
      %v1055 = vadd.f32 0.0, %v1054
      %v1056 = vpop.f32.mrf.mxu0
      %1057 = vmatprep.mubr.f32.mxu0 0.0
      %1058 = vmatmul.mubr.f32.gmra.mxu0 %v490
      %v1059 = vpop.f32.mrf.mxu0
      %v1060 = vadd.f32 0.0, %v1059
      %v1061 = vpop.f32.mrf.mxu0
      %1062 = vmatprep.mubr.f32.mxu0 0.0
      %1063 = vmatmul.mubr.f32.gmra.mxu0 %v493
      %v1064 = vpop.f32.mrf.mxu0
      %v1065 = vadd.f32 0.0, %v1064
      %v1066 = vpop.f32.mrf.mxu0
      %1067 = vmatprep.mubr.f32.mxu0 0.0
      %1068 = vmatmul.mubr.f32.gmra.mxu0 %v496
      %v1069 = vpop.f32.mrf.mxu0
      %v1070 = vadd.f32 0.0, %v1069
      %v1071 = vpop.f32.mrf.mxu0
      %1072 = vmatprep.mubr.f32.mxu0 0.0
      %1073 = vmatmul.mubr.f32.gmra.mxu0 %v499
      %v1074 = vpop.f32.mrf.mxu0
      %v1075 = vadd.f32 0.0, %v1074
      %v1076 = vpop.f32.mrf.mxu0
      %1077 = vmatprep.mubr.f32.mxu0 0.0
      %1078 = vmatmul.mubr.f32.gmra.mxu0 %v502
      %v1079 = vpop.f32.mrf.mxu0
      %v1080 = vadd.f32 0.0, %v1079
      %v1081 = vpop.f32.mrf.mxu0
      %1082 = vmatprep.mubr.f32.mxu0 0.0
      %1083 = vmatmul.mubr.f32.gmra.mxu0 %v505
      %v1084 = vpop.f32.mrf.mxu0
      %v1085 = vadd.f32 0.0, %v1084
      %v1086 = vpop.f32.mrf.mxu0
      %1087 = vmatprep.mubr.f32.mxu0 0.0
      %1088 = vmatmul.mubr.f32.gmra.mxu0 %v508
      %v1089 = vpop.f32.mrf.mxu0
      %v1090 = vadd.f32 0.0, %v1089
      %v1091 = vpop.f32.mrf.mxu0
      %1092 = vmatprep.mubr.f32.mxu0 0.0
      %1093 = vmatmul.mubr.f32.gmra.mxu0 %v511
      %v1094 = vpop.f32.mrf.mxu0
      %v1095 = vadd.f32 0.0, %v1094
      %v1096 = vpop.f32.mrf.mxu0
      %1097 = vmatprep.mubr.f32.mxu0 0.0
      %1098 = vmatmul.mubr.f32.gmra.mxu0 %v514
      %v1099 = vpop.f32.mrf.mxu0
      %v1100 = vadd.f32 0.0, %v1099
      %v1101 = vpop.f32.mrf.mxu0
      %1102 = vmatprep.mubr.f32.mxu0 0.0
      %1103 = vmatmul.mubr.f32.gmra.mxu0 %v517
      %v1104 = vpop.f32.mrf.mxu0
      %v1105 = vadd.f32 0.0, %v1104
      %v1106 = vpop.f32.mrf.mxu0
      %1107 = vmatprep.mubr.f32.mxu0 0.0
      %1108 = vmatmul.mubr.f32.gmra.mxu0 %v520
      %v1109 = vpop.f32.mrf.mxu0
      %v1110 = vadd.f32 0.0, %v1109
      %v1111 = vpop.f32.mrf.mxu0
      %1112 = vmatprep.mubr.f32.mxu0 0.0
      %1113 = vmatmul.mubr.f32.gmra.mxu0 %v523
      %v1114 = vpop.f32.mrf.mxu0
      %v1115 = vadd.f32 0.0, %v1114
      %v1116 = vpop.f32.mrf.mxu0
      %1117 = vmatprep.mubr.f32.mxu0 0.0
      %1118 = vmatmul.mubr.f32.gmra.mxu0 %v526
      %v1119 = vpop.f32.mrf.mxu0
      %v1120 = vadd.f32 0.0, %v1119
      %v1121 = vpop.f32.mrf.mxu0
      %1122 = vmatprep.mubr.f32.mxu0 0.0
      %1123 = vmatmul.mubr.f32.gmra.mxu0 %v529
      %v1124 = vpop.f32.mrf.mxu0
      %v1125 = vadd.f32 0.0, %v1124
      %v1126 = vpop.f32.mrf.mxu0
      %1127 = vmatprep.mubr.f32.mxu0 0.0
      %1128 = vmatmul.mubr.f32.gmra.mxu0 %v532
      %v1129 = vpop.f32.mrf.mxu0
      %v1130 = vadd.f32 0.0, %v1129
      %v1131 = vpop.f32.mrf.mxu0
      %1132 = vmatprep.mubr.f32.mxu0 0.0
      %1133 = vmatmul.mubr.f32.gmra.mxu0 %v535
      %v1134 = vpop.f32.mrf.mxu0
      %v1135 = vadd.f32 0.0, %v1134
      %v1136 = vpop.f32.mrf.mxu0
      %1137 = vmatprep.mubr.f32.mxu0 0.0
      %1138 = vmatmul.mubr.f32.gmra.mxu0 %v538
      %v1139 = vpop.f32.mrf.mxu0
      %v1140 = vadd.f32 0.0, %v1139
      %v1141 = vpop.f32.mrf.mxu0
      %1142 = vmatprep.mubr.f32.mxu0 0.0
      %1143 = vmatmul.mubr.f32.gmra.mxu0 %v541
      %v1144 = vpop.f32.mrf.mxu0
      %v1145 = vadd.f32 0.0, %v1144
      %v1146 = vpop.f32.mrf.mxu0
      %1147 = vmatprep.mubr.f32.mxu0 0.0
      %1148 = vmatmul.mubr.f32.gmra.mxu0 %v544
      %v1149 = vpop.f32.mrf.mxu0
      %v1150 = vadd.f32 0.0, %v1149
      %v1151 = vpop.f32.mrf.mxu0
      %1152 = vmatprep.mubr.f32.mxu0 0.0
      %1153 = vmatmul.mubr.f32.gmra.mxu0 %v547
      %v1154 = vpop.f32.mrf.mxu0
      %v1155 = vadd.f32 0.0, %v1154
      %v1156 = vpop.f32.mrf.mxu0
      %1157 = vmatprep.mubr.f32.mxu0 0.0
      %1158 = vmatmul.mubr.f32.gmra.mxu0 %v550
      %v1159 = vpop.f32.mrf.mxu0
      %v1160 = vadd.f32 0.0, %v1159
      %v1161 = vpop.f32.mrf.mxu0
      %1162 = vmatprep.mubr.f32.mxu0 0.0
      %1163 = vmatmul.mubr.f32.gmra.mxu0 %v553
      %v1164 = vpop.f32.mrf.mxu0
      %v1165 = vadd.f32 0.0, %v1164
      %v1166 = vpop.f32.mrf.mxu0
      %1167 = vmatprep.mubr.f32.mxu0 0.0
      %1168 = vmatmul.mubr.f32.gmra.mxu0 %v556
      %v1169 = vpop.f32.mrf.mxu0
      %v1170 = vadd.f32 0.0, %v1169
      %v1171 = vpop.f32.mrf.mxu0
      %1172 = vmatprep.mubr.f32.mxu0 0.0
      %1173 = vmatmul.mubr.f32.gmra.mxu0 %v559
      %v1174 = vpop.f32.mrf.mxu0
      %v1175 = vadd.f32 0.0, %v1174
      %v1176 = vpop.f32.mrf.mxu0
      %1177 = vmatprep.mubr.f32.mxu0 0.0
      %1178 = vmatmul.mubr.f32.gmra.mxu0 %v562
      %v1179 = vpop.f32.mrf.mxu0
      %v1180 = vadd.f32 0.0, %v1179
      %v1181 = vpop.f32.mrf.mxu0
      %1182 = vmatprep.mubr.f32.mxu0 0.0
      %1183 = vmatmul.mubr.f32.gmra.mxu0 %v565
      %v1184 = vpop.f32.mrf.mxu0
      %v1185 = vadd.f32 0.0, %v1184
      %v1186 = vpop.f32.mrf.mxu0
      %1187 = vmatprep.mubr.f32.mxu0 0.0
      %1188 = vmatmul.mubr.f32.gmra.mxu0 %v568
      %v1189 = vpop.f32.mrf.mxu0
      %v1190 = vadd.f32 0.0, %v1189
      %v1191 = vpop.f32.mrf.mxu0
      %1192 = vmatprep.mubr.f32.mxu0 0.0
      %1193 = vmatmul.mubr.f32.gmra.mxu0 %v571
      %v1194 = vpop.f32.mrf.mxu0
      %v1195 = vadd.f32 0.0, %v1194
      %v1196 = vpop.f32.mrf.mxu0
      %1197 = vmatprep.mubr.f32.mxu0 0.0
      %1198 = vmatmul.mubr.f32.gmra.mxu0 %v574
      %v1199 = vpop.f32.mrf.mxu0
      %v1200 = vadd.f32 0.0, %v1199
      %v1201 = vpop.f32.mrf.mxu0
      %1202 = vmatprep.mubr.f32.mxu0 0.0
      %1203 = vmatmul.mubr.f32.gmra.mxu0 %v577
      %v1204 = vpop.f32.mrf.mxu0
      %v1205 = vadd.f32 0.0, %v1204
      %v1206 = vpop.f32.mrf.mxu0
      %1207 = vmatprep.mubr.f32.mxu0 0.0
      %1208 = vmatmul.mubr.f32.gmra.mxu0 %v580
      %v1209 = vpop.f32.mrf.mxu0
      %v1210 = vadd.f32 0.0, %v1209
      %v1211 = vpop.f32.mrf.mxu0
      %1212 = vmatprep.mubr.f32.mxu0 0.0
      %1213 = vmatmul.mubr.f32.gmra.mxu0 %v583
      %v1214 = vpop.f32.mrf.mxu0
      %v1215 = vadd.f32 0.0, %v1214
      %v1216 = vpop.f32.mrf.mxu0
      %1217 = vmatprep.mubr.f32.mxu0 0.0
      %1218 = vmatmul.mubr.f32.gmra.mxu0 %v586
      %v1219 = vpop.f32.mrf.mxu0
      %v1220 = vadd.f32 0.0, %v1219
      %v1221 = vpop.f32.mrf.mxu0
      %1222 = vmatprep.mubr.f32.mxu0 0.0
      %1223 = vmatmul.mubr.f32.gmra.mxu0 %v589
      %v1224 = vpop.f32.mrf.mxu0
      %v1225 = vadd.f32 0.0, %v1224
      %v1226 = vpop.f32.mrf.mxu0
      %1227 = vmatprep.mubr.f32.mxu0 0.0
      %1228 = vmatmul.mubr.f32.gmra.mxu0 %v592
      %v1229 = vpop.f32.mrf.mxu0
      %v1230 = vadd.f32 0.0, %v1229
      %v1231 = vpop.f32.mrf.mxu0
      %1232 = vmatprep.mubr.f32.mxu0 0.0
      %1233 = vmatmul.mubr.f32.gmra.mxu0 %v595
      %v1234 = vpop.f32.mrf.mxu0
      %v1235 = vadd.f32 0.0, %v1234
      %v1236 = vpop.f32.mrf.mxu0
      %1237 = vmatprep.mubr.f32.mxu0 0.0
      %1238 = vmatmul.mubr.f32.gmra.mxu0 %v598
      %v1239 = vpop.f32.mrf.mxu0
      %v1240 = vadd.f32 0.0, %v1239
      %v1241 = vpop.f32.mrf.mxu0
      %1242 = vmatprep.mubr.f32.mxu0 0.0
      %1243 = vmatmul.mubr.f32.gmra.mxu0 %v601
      %v1244 = vpop.f32.mrf.mxu0
      %v1245 = vadd.f32 0.0, %v1244
      %v1246 = vpop.f32.mrf.mxu0
      %1247 = vmatprep.mubr.f32.mxu0 0.0
      %1248 = vmatmul.mubr.f32.gmra.mxu0 %v604
      %v1249 = vpop.f32.mrf.mxu0
      %v1250 = vadd.f32 0.0, %v1249
      %v1251 = vpop.f32.mrf.mxu0
      %1252 = vmatprep.mubr.f32.mxu0 0.0
      %1253 = vmatmul.mubr.f32.gmra.mxu0 %v607
      %v1254 = vpop.f32.mrf.mxu0
      %v1255 = vadd.f32 0.0, %v1254
      %v1256 = vpop.f32.mrf.mxu0
      %1257 = vmatprep.mubr.f32.mxu0 0.0
      %1258 = vmatmul.mubr.f32.gmra.mxu0 %v610
      %v1259 = vpop.f32.mrf.mxu0
      %v1260 = vadd.f32 0.0, %v1259
      %v1261 = vpop.f32.mrf.mxu0
      %1262 = vmatprep.mubr.f32.mxu0 0.0
      %1263 = vmatmul.mubr.f32.gmra.mxu0 %v613
      %v1264 = vpop.f32.mrf.mxu0
      %v1265 = vadd.f32 0.0, %v1264
      %v1266 = vpop.f32.mrf.mxu0
      %1267 = vmatprep.mubr.f32.mxu0 0.0
      %1268 = vmatmul.mubr.f32.gmra.mxu0 %v616
      %v1269 = vpop.f32.mrf.mxu0
      %v1270 = vadd.f32 0.0, %v1269
      %v1271 = vpop.f32.mrf.mxu0
      %1272 = vmatprep.mubr.f32.mxu0 0.0
      %1273 = vmatmul.mubr.f32.gmra.mxu0 %v619
      %v1274 = vpop.f32.mrf.mxu0
      %v1275 = vadd.f32 0.0, %v1274
      %v1276 = vpop.f32.mrf.mxu0
      %1277 = vmatprep.mubr.f32.mxu0 0.0
      %1278 = vmatmul.mubr.f32.gmra.mxu0 %v622
      %v1279 = vpop.f32.mrf.mxu0
      %v1280 = vadd.f32 0.0, %v1279
      %v1281 = vpop.f32.mrf.mxu0
      %1282 = vmatprep.mubr.f32.mxu0 0.0
      %1283 = vmatmul.mubr.f32.gmra.mxu0 %v625
      %v1284 = vpop.f32.mrf.mxu0
      %v1285 = vadd.f32 0.0, %v1284
      %v1286 = vpop.f32.mrf.mxu0
      %1287 = vmatprep.mubr.f32.mxu0 0.0
      %1288 = vmatmul.mubr.f32.gmra.mxu0 %v628
      %v1289 = vpop.f32.mrf.mxu0
      %v1290 = vadd.f32 0.0, %v1289
      %v1291 = vpop.f32.mrf.mxu0
      %1292 = vmatprep.mubr.f32.mxu0 0.0
      %1293 = vmatmul.mubr.f32.gmra.mxu0 %v631
      %v1294 = vpop.f32.mrf.mxu0
      %v1295 = vadd.f32 0.0, %v1294
      %v1296 = vpop.f32.mrf.mxu0
      %1297 = vmatprep.mubr.f32.mxu0 0.0
      %1298 = vmatmul.mubr.f32.gmra.mxu0 %v634
      %v1299 = vpop.f32.mrf.mxu0
      %v1300 = vadd.f32 0.0, %v1299
      %v1301 = vpop.f32.mrf.mxu0
      %1302 = vmatprep.mubr.f32.mxu0 0.0
      %1303 = vmatmul.mubr.f32.gmra.mxu0 %v637
      %v1304 = vpop.f32.mrf.mxu0
      %v1305 = vadd.f32 0.0, %v1304
      %v1306 = vpop.f32.mrf.mxu0
      %1307 = vmatprep.mubr.f32.mxu0 0.0
      %1308 = vmatmul.mubr.f32.gmra.mxu0 %v640
      %v1309 = vpop.f32.mrf.mxu0
      %v1310 = vadd.f32 0.0, %v1309
      %v1311 = vpop.f32.mrf.mxu0
      %1312 = vmatprep.mubr.f32.mxu0 0.0
      %1313 = vmatmul.mubr.f32.gmra.mxu0 %v643
      %v1314 = vpop.f32.mrf.mxu0
      %v1315 = vadd.f32 0.0, %v1314
      %v1316 = vpop.f32.mrf.mxu0
      %1317 = vmatprep.mubr.f32.mxu0 0.0
      %1318 = vmatmul.mubr.f32.gmra.mxu0 %v646
      %v1319 = vpop.f32.mrf.mxu0
      %v1320 = vadd.f32 0.0, %v1319
      %v1321 = vpop.f32.mrf.mxu0
      %1322 = vmatprep.mubr.f32.mxu0 0.0
      %1323 = vmatmul.mubr.f32.gmra.mxu0 %v649
      %v1324 = vpop.f32.mrf.mxu0
      %v1325 = vadd.f32 0.0, %v1324
      %v1326 = vpop.f32.mrf.mxu0
      %1327 = vmatprep.mubr.f32.mxu0 0.0
      %1328 = vmatmul.mubr.f32.gmra.mxu0 %v652
      %v1329 = vpop.f32.mrf.mxu0
      %v1330 = vadd.f32 0.0, %v1329
      %v1331 = vpop.f32.mrf.mxu0
      %1332 = vmatprep.mubr.f32.mxu0 0.0
      %1333 = vmatmul.mubr.f32.gmra.mxu0 %v655
      %v1334 = vpop.f32.mrf.mxu0
      %v1335 = vadd.f32 0.0, %v1334
      %v1336 = vpop.f32.mrf.mxu0
      %1337 = vmatprep.mubr.f32.mxu0 0.0
      %1338 = vmatmul.mubr.f32.gmra.mxu0 %v658
      %v1339 = vpop.f32.mrf.mxu0
      %v1340 = vadd.f32 0.0, %v1339
      %v1341 = vpop.f32.mrf.mxu0
      %1342 = vmatprep.mubr.f32.mxu0 0.0
      %1343 = vmatmul.mubr.f32.gmra.mxu0 %v661
      %v1344 = vpop.f32.mrf.mxu0
      %v1345 = vadd.f32 0.0, %v1344
      %v1346 = vpop.f32.mrf.mxu0
      %1347 = vmatprep.mubr.f32.mxu0 0.0
      %1348 = vmatmul.mubr.f32.gmra.mxu0 %v664
      %v1349 = vpop.f32.mrf.mxu0
      %v1350 = vadd.f32 0.0, %v1349
      %v1351 = vpop.f32.mrf.mxu0
      %1352 = vmatprep.mubr.f32.mxu0 0.0
      %1353 = vmatmul.mubr.f32.gmra.mxu0 %v667
      %v1354 = vpop.f32.mrf.mxu0
      %v1355 = vadd.f32 0.0, %v1354
      %v1356 = vpop.f32.mrf.mxu0
      %1357 = vmatprep.mubr.f32.mxu0 0.0
      %1358 = vmatmul.mubr.f32.gmra.mxu0 %v670
      %v1359 = vpop.f32.mrf.mxu0
      %v1360 = vadd.f32 0.0, %v1359
      %v1361 = vpop.f32.mrf.mxu0
      %1362 = vmatprep.mubr.f32.mxu0 0.0
      %1363 = vmatmul.mubr.f32.gmra.mxu0 %v673
      %v1364 = vpop.f32.mrf.mxu0
      %v1365 = vadd.f32 0.0, %v1364
      %v1366 = vpop.f32.mrf.mxu0
      %1367 = vmatprep.mubr.f32.mxu0 0.0
      %1368 = vmatmul.mubr.f32.gmra.mxu0 %v676
      %v1369 = vpop.f32.mrf.mxu0
      %v1370 = vadd.f32 0.0, %v1369
      %v1371 = vpop.f32.mrf.mxu0
      %1372 = vmatprep.mubr.f32.mxu0 0.0
      %1373 = vmatmul.mubr.f32.gmra.mxu0 %v679
      %v1374 = vpop.f32.mrf.mxu0
      %v1375 = vadd.f32 0.0, %v1374
      %v1376 = vpop.f32.mrf.mxu0
      %1377 = vmatprep.mubr.f32.mxu0 0.0
      %1378 = vmatmul.mubr.f32.gmra.mxu0 %v682
      %v1379 = vpop.f32.mrf.mxu0
      %v1380 = vadd.f32 0.0, %v1379
      %v1381 = vpop.f32.mrf.mxu0
      %1382 = vmatprep.mubr.f32.mxu0 0.0
      %1383 = vmatmul.mubr.f32.gmra.mxu0 %v685
      %v1384 = vpop.f32.mrf.mxu0
      %v1385 = vadd.f32 0.0, %v1384
      %v1386 = vpop.f32.mrf.mxu0
      %1387 = vmatprep.mubr.f32.mxu0 0.0
      %1388 = vmatmul.mubr.f32.gmra.mxu0 %v688
      %v1389 = vpop.f32.mrf.mxu0
      %v1390 = vadd.f32 0.0, %v1389
      %v1391 = vpop.f32.mrf.mxu0
      %1392 = vmatprep.mubr.f32.mxu0 0.0
      %1393 = vmatmul.mubr.f32.gmra.mxu0 %v691
      %v1394 = vpop.f32.mrf.mxu0
      %v1395 = vadd.f32 0.0, %v1394
      %v1396 = vpop.f32.mrf.mxu0
      %1397 = vdwg.mxu0
      %v1398 = vmax.f32 %v760, %v920
      %v1399 = vmax.f32 %v765, %v925
      %v1400 = vmax.f32 %v770, %v930
      %v1401 = vmax.f32 %v775, %v935
      %v1402 = vmax.f32 %v780, %v940
      %v1403 = vmax.f32 %v785, %v945
      %v1404 = vmax.f32 %v790, %v950
      %v1405 = vmax.f32 %v795, %v955
      %v1406 = vmax.f32 %v800, %v960
      %v1407 = vmax.f32 %v805, %v965
      %v1408 = vmax.f32 %v810, %v970
      %v1409 = vmax.f32 %v815, %v975
      %v1410 = vmax.f32 %v820, %v980
      %v1411 = vmax.f32 %v825, %v985
      %v1412 = vmax.f32 %v830, %v990
      %v1413 = vmax.f32 %v835, %v995
      %v1414 = vmax.f32 %v840, %v1000
      %v1415 = vmax.f32 %v845, %v1005
      %v1416 = vmax.f32 %v850, %v1010
      %v1417 = vmax.f32 %v855, %v1015
      %v1418 = vmax.f32 %v860, %v1020
      %v1419 = vmax.f32 %v865, %v1025
      %v1420 = vmax.f32 %v870, %v1030
      %v1421 = vmax.f32 %v875, %v1035
      %v1422 = vmax.f32 %v880, %v1040
      %v1423 = vmax.f32 %v885, %v1045
      %v1424 = vmax.f32 %v890, %v1050
      %v1425 = vmax.f32 %v895, %v1055
      %v1426 = vmax.f32 %v900, %v1060
      %v1427 = vmax.f32 %v905, %v1065
      %v1428 = vmax.f32 %v910, %v1070
      %v1429 = vmax.f32 %v915, %v1075
      %v1430 = vmax.f32 %v1080, %v1240
      %v1431 = vmax.f32 %v1085, %v1245
      %v1432 = vmax.f32 %v1090, %v1250
      %v1433 = vmax.f32 %v1095, %v1255
      %v1434 = vmax.f32 %v1100, %v1260
      %v1435 = vmax.f32 %v1105, %v1265
      %v1436 = vmax.f32 %v1110, %v1270
      %v1437 = vmax.f32 %v1115, %v1275
      %v1438 = vmax.f32 %v1120, %v1280
      %v1439 = vmax.f32 %v1125, %v1285
      %v1440 = vmax.f32 %v1130, %v1290
      %v1441 = vmax.f32 %v1135, %v1295
      %v1442 = vmax.f32 %v1140, %v1300
      %v1443 = vmax.f32 %v1145, %v1305
      %v1444 = vmax.f32 %v1150, %v1310
      %v1445 = vmax.f32 %v1155, %v1315
      %v1446 = vmax.f32 %v1160, %v1320
      %v1447 = vmax.f32 %v1165, %v1325
      %v1448 = vmax.f32 %v1170, %v1330
      %v1449 = vmax.f32 %v1175, %v1335
      %v1450 = vmax.f32 %v1180, %v1340
      %v1451 = vmax.f32 %v1185, %v1345
      %v1452 = vmax.f32 %v1190, %v1350
      %v1453 = vmax.f32 %v1195, %v1355
      %v1454 = vmax.f32 %v1200, %v1360
      %v1455 = vmax.f32 %v1205, %v1365
      %v1456 = vmax.f32 %v1210, %v1370
      %v1457 = vmax.f32 %v1215, %v1375
      %v1458 = vmax.f32 %v1220, %v1380
      %v1459 = vmax.f32 %v1225, %v1385
      %v1460 = vmax.f32 %v1230, %v1390
      %v1461 = vmax.f32 %v1235, %v1395
      %v1462 = vmax.f32 %v1398, %v1430
      %v1463 = vmax.f32 %v1399, %v1431
      %v1464 = vmax.f32 %v1400, %v1432
      %v1465 = vmax.f32 %v1401, %v1433
      %v1466 = vmax.f32 %v1402, %v1434
      %v1467 = vmax.f32 %v1403, %v1435
      %v1468 = vmax.f32 %v1404, %v1436
      %v1469 = vmax.f32 %v1405, %v1437
      %v1470 = vmax.f32 %v1406, %v1438
      %v1471 = vmax.f32 %v1407, %v1439
      %v1472 = vmax.f32 %v1408, %v1440
      %v1473 = vmax.f32 %v1409, %v1441
      %v1474 = vmax.f32 %v1410, %v1442
      %v1475 = vmax.f32 %v1411, %v1443
      %v1476 = vmax.f32 %v1412, %v1444
      %v1477 = vmax.f32 %v1413, %v1445
      %v1478 = vmax.f32 %v1414, %v1446
      %v1479 = vmax.f32 %v1415, %v1447
      %v1480 = vmax.f32 %v1416, %v1448
      %v1481 = vmax.f32 %v1417, %v1449
      %v1482 = vmax.f32 %v1418, %v1450
      %v1483 = vmax.f32 %v1419, %v1451
      %v1484 = vmax.f32 %v1420, %v1452
      %v1485 = vmax.f32 %v1421, %v1453
      %v1486 = vmax.f32 %v1422, %v1454
      %v1487 = vmax.f32 %v1423, %v1455
      %v1488 = vmax.f32 %v1424, %v1456
      %v1489 = vmax.f32 %v1425, %v1457
      %v1490 = vmax.f32 %v1426, %v1458
      %v1491 = vmax.f32 %v1427, %v1459
      %v1492 = vmax.f32 %v1428, %v1460
      %v1493 = vmax.f32 %v1429, %v1461
      %v1494 = vld [vmem:[%s2] sm:$0x1]
      %v1496 = vlaneseq
      %v1497 = vshrl.u32 %v1496, 7
      %v1498 = vsub.s32 0, %v1497
      %v1499 = vrot.slane %v1494, %v1498
      %v1501 = vadd.f32 %v1462, %v1499
      %v1502 = vadd.f32 %v1463, %v1499
      %v1503 = vadd.f32 %v1464, %v1499
      %v1504 = vadd.f32 %v1465, %v1499
      %v1505 = vadd.f32 %v1466, %v1499
      %v1506 = vadd.f32 %v1467, %v1499
      %v1507 = vadd.f32 %v1468, %v1499
      %v1508 = vadd.f32 %v1469, %v1499
      %v1509 = vadd.f32 %v1470, %v1499
      %v1510 = vadd.f32 %v1471, %v1499
      %v1511 = vadd.f32 %v1472, %v1499
      %v1512 = vadd.f32 %v1473, %v1499
      %v1513 = vadd.f32 %v1474, %v1499
      %v1514 = vadd.f32 %v1475, %v1499
      %v1515 = vadd.f32 %v1476, %v1499
      %v1516 = vadd.f32 %v1477, %v1499
      %v1517 = vadd.f32 %v1478, %v1499
      %v1518 = vadd.f32 %v1479, %v1499
      %v1519 = vadd.f32 %v1480, %v1499
      %v1520 = vadd.f32 %v1481, %v1499
      %v1521 = vadd.f32 %v1482, %v1499
      %v1522 = vadd.f32 %v1483, %v1499
      %v1523 = vadd.f32 %v1484, %v1499
      %v1524 = vadd.f32 %v1485, %v1499
      %v1525 = vadd.f32 %v1486, %v1499
      %v1526 = vadd.f32 %v1487, %v1499
      %v1527 = vadd.f32 %v1488, %v1499
      %v1528 = vadd.f32 %v1489, %v1499
      %v1529 = vadd.f32 %v1490, %v1499
      %v1530 = vadd.f32 %v1491, %v1499
      %v1531 = vadd.f32 %v1492, %v1499
      %v1532 = vadd.f32 %v1493, %v1499
      %v1533 = vmax.f32 %v1501, 0.0
      %v1534 = vmax.f32 %v1502, 0.0
      %v1535 = vmax.f32 %v1503, 0.0
      %v1536 = vmax.f32 %v1504, 0.0
      %v1537 = vmax.f32 %v1505, 0.0
      %v1538 = vmax.f32 %v1506, 0.0
      %v1539 = vmax.f32 %v1507, 0.0
      %v1540 = vmax.f32 %v1508, 0.0
      %v1541 = vmax.f32 %v1509, 0.0
      %v1542 = vmax.f32 %v1510, 0.0
      %v1543 = vmax.f32 %v1511, 0.0
      %v1544 = vmax.f32 %v1512, 0.0
      %v1545 = vmax.f32 %v1513, 0.0
      %v1546 = vmax.f32 %v1514, 0.0
      %v1547 = vmax.f32 %v1515, 0.0
      %v1548 = vmax.f32 %v1516, 0.0
      %v1549 = vmax.f32 %v1517, 0.0
      %v1550 = vmax.f32 %v1518, 0.0
      %v1551 = vmax.f32 %v1519, 0.0
      %v1552 = vmax.f32 %v1520, 0.0
      %v1553 = vmax.f32 %v1521, 0.0
      %v1554 = vmax.f32 %v1522, 0.0
      %v1555 = vmax.f32 %v1523, 0.0
      %v1556 = vmax.f32 %v1524, 0.0
      %v1557 = vmax.f32 %v1525, 0.0
      %v1558 = vmax.f32 %v1526, 0.0
      %v1559 = vmax.f32 %v1527, 0.0
      %v1560 = vmax.f32 %v1528, 0.0
      %v1561 = vmax.f32 %v1529, 0.0
      %v1562 = vmax.f32 %v1530, 0.0
      %v1563 = vmax.f32 %v1531, 0.0
      %v1564 = vmax.f32 %v1532, 0.0
      %vm1565 = vcmask 162816
      %1566 = vst.msk [vmem:[%s172] sm:$0xff] %vm1565, %v1533
      %1567 = vst.msk [vmem:[%s172 + $0x8] sm:$0xff] %vm1565, %v1534
      %1568 = vst.msk [vmem:[%s172 + $0x10] sm:$0xff] %vm1565, %v1535
      %1569 = vst.msk [vmem:[%s172 + $0x18] sm:$0xff] %vm1565, %v1536
      %1570 = vst.msk [vmem:[%s172 + $0x20] sm:$0xff] %vm1565, %v1537
      %1571 = vst.msk [vmem:[%s172 + $0x28] sm:$0xff] %vm1565, %v1538
      %1572 = vst.msk [vmem:[%s172 + $0x30] sm:$0xff] %vm1565, %v1539
      %1573 = vst.msk [vmem:[%s172 + $0x38] sm:$0xff] %vm1565, %v1540
      %1574 = vst.msk [vmem:[%s172 + $0x40] sm:$0xff] %vm1565, %v1541
      %1575 = vst.msk [vmem:[%s172 + $0x48] sm:$0xff] %vm1565, %v1542
      %1576 = vst.msk [vmem:[%s172 + $0x50] sm:$0xff] %vm1565, %v1543
      %1577 = vst.msk [vmem:[%s172 + $0x58] sm:$0xff] %vm1565, %v1544
      %1578 = vst.msk [vmem:[%s172 + $0x60] sm:$0xff] %vm1565, %v1545
      %1579 = vst.msk [vmem:[%s172 + $0x68] sm:$0xff] %vm1565, %v1546
      %1580 = vst.msk [vmem:[%s172 + $0x70] sm:$0xff] %vm1565, %v1547
      %1581 = vst.msk [vmem:[%s172 + $0x78] sm:$0xff] %vm1565, %v1548
      %1582 = vst.msk [vmem:[%s172 + $0x80] sm:$0xff] %vm1565, %v1549
      %1583 = vst.msk [vmem:[%s172 + $0x88] sm:$0xff] %vm1565, %v1550
      %1584 = vst.msk [vmem:[%s172 + $0x90] sm:$0xff] %vm1565, %v1551
      %1585 = vst.msk [vmem:[%s172 + $0x98] sm:$0xff] %vm1565, %v1552
      %1586 = vst.msk [vmem:[%s172 + $0xa0] sm:$0xff] %vm1565, %v1553
      %1587 = vst.msk [vmem:[%s172 + $0xa8] sm:$0xff] %vm1565, %v1554
      %1588 = vst.msk [vmem:[%s172 + $0xb0] sm:$0xff] %vm1565, %v1555
      %1589 = vst.msk [vmem:[%s172 + $0xb8] sm:$0xff] %vm1565, %v1556
      %1590 = vst.msk [vmem:[%s172 + $0xc0] sm:$0xff] %vm1565, %v1557
      %1591 = vst.msk [vmem:[%s172 + $0xc8] sm:$0xff] %vm1565, %v1558
      %1592 = vst.msk [vmem:[%s172 + $0xd0] sm:$0xff] %vm1565, %v1559
      %1593 = vst.msk [vmem:[%s172 + $0xd8] sm:$0xff] %vm1565, %v1560
      %1594 = vst.msk [vmem:[%s172 + $0xe0] sm:$0xff] %vm1565, %v1561
      %1595 = vst.msk [vmem:[%s172 + $0xe8] sm:$0xff] %vm1565, %v1562
      %1596 = vst.msk [vmem:[%s172 + $0xf0] sm:$0xff] %vm1565, %v1563
      %1597 = vst.msk [vmem:[%s172 + $0xf8] sm:$0xff] %vm1565, %v1564
      %s1598 = smul.u32 32, %s14
      %p1599 = scmp.lt.s32.totalorder %s1598, 159
      %s1600 = scalar_select %p1599, %s1598, 159
      %s1601 = smul.addr %s1600, 8
      %s1602 = scalar_lea.vmem %s3, %s1601
      // Predicated region
      $region33: #{deepid_forward.4} parent=31 // pred_check
        %p1603 = pneg %p100
      $region34: #{deepid_forward.4} parent=31 // pred_check_branch
        %1605 = sbr.rel (%p1603) target = $region36
      $region35: #{deepid_forward.4} parent=31 // pred_region
        %s1606 = smul.u32 32, %s14
      $region36: #{deepid_forward.4} parent=31 // pred_fallthru
        _
    $region32: #{deepid_forward.4} parent=5 // pred_fallthru
      _
    %p1607 = scmp.le.s32.totalorder 2, %s9
    // Predicated region
    $region37: #{deepid_forward.4} parent=5 // pred_check
      %p1608 = pneg %p1607
    $region38: #{deepid_forward.4} parent=5 // pred_check_branch
      %1610 = sbr.rel (%p1608) target = $region40
    $region39: #{deepid_forward.4} parent=5 // pred_region
      %s1611 = ssub.s32 %s9, 2
      // Predicated region
      $region41: #{deepid_forward.4} parent=39 // pred_check
        %p1612 = pneg %p106
      $region42: #{deepid_forward.4} parent=39 // pred_check_branch
        %1614 = sbr.rel (%p1612) target = $region44
      $region43: #{deepid_forward.4} parent=39 // pred_region
        %s1615 = smul.u32 32, %s15
        %p1616 = scmp.lt.s32.totalorder %s1615, 159
        %s1617 = scalar_select %p1616, %s1615, 159
        %s1618 = smul.addr %s1617, 8
        %s1619 = scalar_lea.vmem %s3, %s1618
      $region44: #{deepid_forward.4} parent=39 // pred_fallthru
        _
    $region40: #{deepid_forward.4} parent=5 // pred_fallthru
      _
  $region6: #{deepid_forward.4} parent=0 // loop_footer
    %s13 = sadd.s32 1, %s9
  $region7: #{deepid_forward.4} parent=0 // loop_footer_branch
    %8 = sbr.rel target = $region3
  $region8: #{deepid_forward.4} parent=0 // loop_exit
    _

// kernel: deepid_forward.5
$region0: #{deepid_forward.5}
  #allocation0 [shape = 'u32[]', space=smem, size = 0x4, offset = 0x4, fixed_abs, tag = 'smem constant byte address 0x4 - core index']
  #allocation1 [shape = 'u32[144,128]{1,0:T(1,128)}', space=vmem, size = 0x12000, scoped, tag = 'internal scratch']
  %s0 = inlined_call_operand.vmem [shape: f32[1024,180], index: 0, kind: input, shape index: {}]
  %s1 = inlined_call_operand.vmem [shape: f32[180,40], index: 1, kind: input, shape index: {}]
  %s2 = inlined_call_operand.vmem [shape: f32[1,40], index: 2, kind: input, shape index: {}]
  %s3 = inlined_call_operand.vmem [shape: f32[256,40], index: 3, kind: output, shape index: {}]
  %s4 = sld [smem:[#allocation0]]
  $region22: #{deepid_forward.5} parent=0
    _
  %s6 = ssub.s32 1, %s4
  %s7 = scalar_select 0, %s6, %s4
  // Predicated region
  $region2: #{deepid_forward.5} parent=0 // pred_check
    _
  $region3: #{deepid_forward.5} parent=0 // pred_check_branch
    %9 = sbr.rel (0) target = $region5
  $region4: #{deepid_forward.5} parent=0 // pred_region
    _
  $region5: #{deepid_forward.5} parent=0 // pred_fallthru
    _
  // Predicated region
  $region6: #{deepid_forward.5} parent=0 // pred_check
    _
  $region7: #{deepid_forward.5} parent=0 // pred_check_branch
    %11 = sbr.rel (0) target = $region9
  $region8: #{deepid_forward.5} parent=0 // pred_region
    _
  $region9: #{deepid_forward.5} parent=0 // pred_fallthru
    _
  // Predicated region
  $region10: #{deepid_forward.5} parent=0 // pred_check
    _
  $region11: #{deepid_forward.5} parent=0 // pred_check_branch
    %13 = sbr.rel (0) target = $region13
  $region12: #{deepid_forward.5} parent=0 // pred_region
    _
  $region13: #{deepid_forward.5} parent=0 // pred_fallthru
    _
  %v14 = vld [vmem:[%s0] sm:$0xff]
  %v15 = vld [vmem:[%s0 + $0x8] sm:$0xff]
  %v16 = vld [vmem:[%s0 + $0x10] sm:$0xff]
  %v17 = vld [vmem:[%s0 + $0x18] sm:$0xff]
  %v18 = vld [vmem:[%s0 + $0x20] sm:$0xff]
  %v19 = vld [vmem:[%s0 + $0x28] sm:$0xff]
  %v20 = vld [vmem:[%s0 + $0x30] sm:$0xff]
  %v21 = vld [vmem:[%s0 + $0x38] sm:$0xff]
  %v22 = vld [vmem:[%s0 + $0x40] sm:$0xff]
  %v23 = vld [vmem:[%s0 + $0x48] sm:$0xff]
  %v24 = vld [vmem:[%s0 + $0x50] sm:$0xff]
  %v25 = vld [vmem:[%s0 + $0x58] sm:$0xff]
  %v26 = vld [vmem:[%s0 + $0x60] sm:$0xff]
  %v27 = vld [vmem:[%s0 + $0x68] sm:$0xff]
  %v28 = vld [vmem:[%s0 + $0x70] sm:$0xff]
  %v29 = vld [vmem:[%s0 + $0x78] sm:$0xff]
  %v30 = vld [vmem:[%s0 + $0x80] sm:$0xff]
  %v31 = vld [vmem:[%s0 + $0x88] sm:$0xff]
  %v32 = vld [vmem:[%s0 + $0x90] sm:$0xff]
  %v33 = vld [vmem:[%s0 + $0x98] sm:$0xff]
  %v34 = vld [vmem:[%s0 + $0xa0] sm:$0xff]
  %v35 = vld [vmem:[%s0 + $0xa8] sm:$0xff]
  %v36 = vld [vmem:[%s0 + $0xb0] sm:$0xff]
  %v37 = vld [vmem:[%s0 + $0xb8] sm:$0xff]
  %v38 = vld [vmem:[%s0 + $0xc0] sm:$0xff]
  %v39 = vld [vmem:[%s0 + $0xc8] sm:$0xff]
  %v40 = vld [vmem:[%s0 + $0xd0] sm:$0xff]
  %v41 = vld [vmem:[%s0 + $0xd8] sm:$0xff]
  %v42 = vld [vmem:[%s0 + $0xe0] sm:$0xff]
  %v43 = vld [vmem:[%s0 + $0xe8] sm:$0xff]
  %v44 = vld [vmem:[%s0 + $0xf0] sm:$0xff]
  %v45 = vld [vmem:[%s0 + $0xf8] sm:$0xff]
  %v46 = vld [vmem:[%s0 + $0x100] sm:$0xff]
  %v47 = vld [vmem:[%s0 + $0x108] sm:$0xff]
  %v48 = vld [vmem:[%s0 + $0x110] sm:$0xff]
  %v49 = vld [vmem:[%s0 + $0x118] sm:$0xff]
  %v50 = vld [vmem:[%s0 + $0x120] sm:$0xff]
  %v51 = vld [vmem:[%s0 + $0x128] sm:$0xff]
  %v52 = vld [vmem:[%s0 + $0x130] sm:$0xff]
  %v53 = vld [vmem:[%s0 + $0x138] sm:$0xff]
  %v54 = vld [vmem:[%s0 + $0x140] sm:$0xff]
  %v55 = vld [vmem:[%s0 + $0x148] sm:$0xff]
  %v56 = vld [vmem:[%s0 + $0x150] sm:$0xff]
  %v57 = vld [vmem:[%s0 + $0x158] sm:$0xff]
  %v58 = vld [vmem:[%s0 + $0x160] sm:$0xff]
  %v59 = vld [vmem:[%s0 + $0x168] sm:$0xff]
  %v60 = vld [vmem:[%s0 + $0x170] sm:$0xff]
  %v61 = vld [vmem:[%s0 + $0x178] sm:$0xff]
  %v62 = vld [vmem:[%s0 + $0x180] sm:$0xff]
  %v63 = vld [vmem:[%s0 + $0x188] sm:$0xff]
  %v64 = vld [vmem:[%s0 + $0x190] sm:$0xff]
  %v65 = vld [vmem:[%s0 + $0x198] sm:$0xff]
  %v66 = vld [vmem:[%s0 + $0x1a0] sm:$0xff]
  %v67 = vld [vmem:[%s0 + $0x1a8] sm:$0xff]
  %v68 = vld [vmem:[%s0 + $0x1b0] sm:$0xff]
  %v69 = vld [vmem:[%s0 + $0x1b8] sm:$0xff]
  %v70 = vld [vmem:[%s0 + $0x1c0] sm:$0xff]
  %v71 = vld [vmem:[%s0 + $0x1c8] sm:$0xff]
  %v72 = vld [vmem:[%s0 + $0x1d0] sm:$0xff]
  %v73 = vld [vmem:[%s0 + $0x1d8] sm:$0xff]
  %v74 = vld [vmem:[%s0 + $0x1e0] sm:$0xff]
  %v75 = vld [vmem:[%s0 + $0x1e8] sm:$0xff]
  %v76 = vld [vmem:[%s0 + $0x1f0] sm:$0xff]
  %v77 = vld [vmem:[%s0 + $0x1f8] sm:$0xff]
  %v78 = vld [vmem:[%s0 + $0x200] sm:$0xff]
  %v79 = vld [vmem:[%s0 + $0x208] sm:$0xff]
  %v80 = vld [vmem:[%s0 + $0x210] sm:$0xff]
  %v81 = vld [vmem:[%s0 + $0x218] sm:$0xff]
  %v82 = vld [vmem:[%s0 + $0x220] sm:$0xff]
  %v83 = vld [vmem:[%s0 + $0x228] sm:$0xff]
  %v84 = vld [vmem:[%s0 + $0x230] sm:$0xff]
  %v85 = vld [vmem:[%s0 + $0x238] sm:$0xff]
  %v86 = vld [vmem:[%s0 + $0x240] sm:$0xff]
  %v87 = vld [vmem:[%s0 + $0x248] sm:$0xff]
  %v88 = vld [vmem:[%s0 + $0x250] sm:$0xff]
  %v89 = vld [vmem:[%s0 + $0x258] sm:$0xff]
  %v90 = vld [vmem:[%s0 + $0x260] sm:$0xff]
  %v91 = vld [vmem:[%s0 + $0x268] sm:$0xff]
  %v92 = vld [vmem:[%s0 + $0x270] sm:$0xff]
  %v93 = vld [vmem:[%s0 + $0x278] sm:$0xff]
  %v94 = vld [vmem:[%s0 + $0x280] sm:$0xff]
  %v95 = vld [vmem:[%s0 + $0x288] sm:$0xff]
  %v96 = vld [vmem:[%s0 + $0x290] sm:$0xff]
  %v97 = vld [vmem:[%s0 + $0x298] sm:$0xff]
  %v98 = vld [vmem:[%s0 + $0x2a0] sm:$0xff]
  %v99 = vld [vmem:[%s0 + $0x2a8] sm:$0xff]
  %v100 = vld [vmem:[%s0 + $0x2b0] sm:$0xff]
  %v101 = vld [vmem:[%s0 + $0x2b8] sm:$0xff]
  %v102 = vld [vmem:[%s0 + $0x2c0] sm:$0xff]
  %v103 = vld [vmem:[%s0 + $0x2c8] sm:$0xff]
  %v104 = vld [vmem:[%s0 + $0x2d0] sm:$0xff]
  %v105 = vld [vmem:[%s0 + $0x2d8] sm:$0xff]
  %v106 = vld [vmem:[%s0 + $0x2e0] sm:$0xff]
  %v107 = vld [vmem:[%s0 + $0x2e8] sm:$0xff]
  %v108 = vld [vmem:[%s0 + $0x2f0] sm:$0xff]
  %v109 = vld [vmem:[%s0 + $0x2f8] sm:$0xff]
  %v110 = vld [vmem:[%s0 + $0x300] sm:$0xff]
  %v111 = vld [vmem:[%s0 + $0x308] sm:$0xff]
  %v112 = vld [vmem:[%s0 + $0x310] sm:$0xff]
  %v113 = vld [vmem:[%s0 + $0x318] sm:$0xff]
  %v114 = vld [vmem:[%s0 + $0x320] sm:$0xff]
  %v115 = vld [vmem:[%s0 + $0x328] sm:$0xff]
  %v116 = vld [vmem:[%s0 + $0x330] sm:$0xff]
  %v117 = vld [vmem:[%s0 + $0x338] sm:$0xff]
  %v118 = vld [vmem:[%s0 + $0x340] sm:$0xff]
  %v119 = vld [vmem:[%s0 + $0x348] sm:$0xff]
  %v120 = vld [vmem:[%s0 + $0x350] sm:$0xff]
  %v121 = vld [vmem:[%s0 + $0x358] sm:$0xff]
  %v122 = vld [vmem:[%s0 + $0x360] sm:$0xff]
  %v123 = vld [vmem:[%s0 + $0x368] sm:$0xff]
  %v124 = vld [vmem:[%s0 + $0x370] sm:$0xff]
  %v125 = vld [vmem:[%s0 + $0x378] sm:$0xff]
  %v126 = vld [vmem:[%s0 + $0x380] sm:$0xff]
  %v127 = vld [vmem:[%s0 + $0x388] sm:$0xff]
  %v128 = vld [vmem:[%s0 + $0x390] sm:$0xff]
  %v129 = vld [vmem:[%s0 + $0x398] sm:$0xff]
  %v130 = vld [vmem:[%s0 + $0x3a0] sm:$0xff]
  %v131 = vld [vmem:[%s0 + $0x3a8] sm:$0xff]
  %v132 = vld [vmem:[%s0 + $0x3b0] sm:$0xff]
  %v133 = vld [vmem:[%s0 + $0x3b8] sm:$0xff]
  %v134 = vld [vmem:[%s0 + $0x3c0] sm:$0xff]
  %v135 = vld [vmem:[%s0 + $0x3c8] sm:$0xff]
  %v136 = vld [vmem:[%s0 + $0x3d0] sm:$0xff]
  %v137 = vld [vmem:[%s0 + $0x3d8] sm:$0xff]
  %v138 = vld [vmem:[%s0 + $0x3e0] sm:$0xff]
  %v139 = vld [vmem:[%s0 + $0x3e8] sm:$0xff]
  %v140 = vld [vmem:[%s0 + $0x3f0] sm:$0xff]
  %v141 = vld [vmem:[%s0 + $0x3f8] sm:$0xff]
  %v142 = vld [vmem:[%s0 + $0x400] sm:$0xff]
  %v143 = vld [vmem:[%s0 + $0x408] sm:$0xff]
  %v144 = vld [vmem:[%s0 + $0x410] sm:$0xff]
  %v145 = vld [vmem:[%s0 + $0x418] sm:$0xff]
  %v146 = vld [vmem:[%s0 + $0x420] sm:$0xff]
  %v147 = vld [vmem:[%s0 + $0x428] sm:$0xff]
  %v148 = vld [vmem:[%s0 + $0x430] sm:$0xff]
  %v149 = vld [vmem:[%s0 + $0x438] sm:$0xff]
  %v150 = vld [vmem:[%s0 + $0x440] sm:$0xff]
  %v151 = vld [vmem:[%s0 + $0x448] sm:$0xff]
  %v152 = vld [vmem:[%s0 + $0x450] sm:$0xff]
  %v153 = vld [vmem:[%s0 + $0x458] sm:$0xff]
  %v154 = vld [vmem:[%s0 + $0x460] sm:$0xff]
  %v155 = vld [vmem:[%s0 + $0x468] sm:$0xff]
  %v156 = vld [vmem:[%s0 + $0x470] sm:$0xff]
  %v157 = vld [vmem:[%s0 + $0x478] sm:$0xff]
  %v158 = vld [vmem:[%s0 + $0x480] sm:$0xff]
  %v159 = vld [vmem:[%s0 + $0x488] sm:$0xff]
  %v160 = vld [vmem:[%s0 + $0x490] sm:$0xff]
  %v161 = vld [vmem:[%s0 + $0x498] sm:$0xff]
  %v162 = vld [vmem:[%s0 + $0x4a0] sm:$0xff]
  %v163 = vld [vmem:[%s0 + $0x4a8] sm:$0xff]
  %v164 = vld [vmem:[%s0 + $0x4b0] sm:$0xff]
  %v165 = vld [vmem:[%s0 + $0x4b8] sm:$0xff]
  %v166 = vld [vmem:[%s0 + $0x4c0] sm:$0xff]
  %v167 = vld [vmem:[%s0 + $0x4c8] sm:$0xff]
  %v168 = vld [vmem:[%s0 + $0x4d0] sm:$0xff]
  %v169 = vld [vmem:[%s0 + $0x4d8] sm:$0xff]
  %v170 = vld [vmem:[%s0 + $0x4e0] sm:$0xff]
  %v171 = vld [vmem:[%s0 + $0x4e8] sm:$0xff]
  %v172 = vld [vmem:[%s0 + $0x4f0] sm:$0xff]
  %v173 = vld [vmem:[%s0 + $0x4f8] sm:$0xff]
  %v174 = vld [vmem:[%s0 + $0x500] sm:$0xff]
  %v175 = vld [vmem:[%s0 + $0x508] sm:$0xff]
  %v176 = vld [vmem:[%s0 + $0x510] sm:$0xff]
  %v177 = vld [vmem:[%s0 + $0x518] sm:$0xff]
  %v178 = vld [vmem:[%s0 + $0x520] sm:$0xff]
  %v179 = vld [vmem:[%s0 + $0x528] sm:$0xff]
  %v180 = vld [vmem:[%s0 + $0x530] sm:$0xff]
  %v181 = vld [vmem:[%s0 + $0x538] sm:$0xff]
  %v182 = vld [vmem:[%s0 + $0x540] sm:$0xff]
  %v183 = vld [vmem:[%s0 + $0x548] sm:$0xff]
  %v184 = vld [vmem:[%s0 + $0x550] sm:$0xff]
  %v185 = vld [vmem:[%s0 + $0x558] sm:$0xff]
  %v186 = vld [vmem:[%s0 + $0x560] sm:$0xff]
  %v187 = vld [vmem:[%s0 + $0x568] sm:$0xff]
  %v188 = vld [vmem:[%s0 + $0x570] sm:$0xff]
  %v189 = vld [vmem:[%s0 + $0x578] sm:$0xff]
  %v190 = vld [vmem:[%s0 + $0x580] sm:$0xff]
  %v191 = vld [vmem:[%s0 + $0x588] sm:$0xff]
  %v192 = vld [vmem:[%s0 + $0x590] sm:$0xff]
  %v193 = vld [vmem:[%s0 + $0x598] sm:$0xff]
  %v194 = vld [vmem:[%s0 + $0x5a0] sm:$0xff]
  %v195 = vld [vmem:[%s0 + $0x5a8] sm:$0xff]
  %v196 = vld [vmem:[%s0 + $0x5b0] sm:$0xff]
  %v197 = vld [vmem:[%s0 + $0x5b8] sm:$0xff]
  %v198 = vld [vmem:[%s0 + $0x5c0] sm:$0xff]
  %v199 = vld [vmem:[%s0 + $0x5c8] sm:$0xff]
  %v200 = vld [vmem:[%s0 + $0x5d0] sm:$0xff]
  %v201 = vld [vmem:[%s0 + $0x5d8] sm:$0xff]
  %v202 = vld [vmem:[%s0 + $0x5e0] sm:$0xff]
  %v203 = vld [vmem:[%s0 + $0x5e8] sm:$0xff]
  %v204 = vld [vmem:[%s0 + $0x5f0] sm:$0xff]
  %v205 = vld [vmem:[%s0 + $0x5f8] sm:$0xff]
  %v206 = vld [vmem:[%s0 + $0x600] sm:$0xff]
  %v207 = vld [vmem:[%s0 + $0x608] sm:$0xff]
  %v208 = vld [vmem:[%s0 + $0x610] sm:$0xff]
  %v209 = vld [vmem:[%s0 + $0x618] sm:$0xff]
  %v210 = vld [vmem:[%s0 + $0x620] sm:$0xff]
  %v211 = vld [vmem:[%s0 + $0x628] sm:$0xff]
  %v212 = vld [vmem:[%s0 + $0x630] sm:$0xff]
  %v213 = vld [vmem:[%s0 + $0x638] sm:$0xff]
  %v214 = vld [vmem:[%s0 + $0x640] sm:$0xff]
  %v215 = vld [vmem:[%s0 + $0x648] sm:$0xff]
  %v216 = vld [vmem:[%s0 + $0x650] sm:$0xff]
  %v217 = vld [vmem:[%s0 + $0x658] sm:$0xff]
  %v218 = vld [vmem:[%s0 + $0x660] sm:$0xff]
  %v219 = vld [vmem:[%s0 + $0x668] sm:$0xff]
  %v220 = vld [vmem:[%s0 + $0x670] sm:$0xff]
  %v221 = vld [vmem:[%s0 + $0x678] sm:$0xff]
  %v222 = vld [vmem:[%s0 + $0x680] sm:$0xff]
  %v223 = vld [vmem:[%s0 + $0x688] sm:$0xff]
  %v224 = vld [vmem:[%s0 + $0x690] sm:$0xff]
  %v225 = vld [vmem:[%s0 + $0x698] sm:$0xff]
  %v226 = vld [vmem:[%s0 + $0x6a0] sm:$0xff]
  %v227 = vld [vmem:[%s0 + $0x6a8] sm:$0xff]
  %v228 = vld [vmem:[%s0 + $0x6b0] sm:$0xff]
  %v229 = vld [vmem:[%s0 + $0x6b8] sm:$0xff]
  %v230 = vld [vmem:[%s0 + $0x6c0] sm:$0xff]
  %v231 = vld [vmem:[%s0 + $0x6c8] sm:$0xff]
  %v232 = vld [vmem:[%s0 + $0x6d0] sm:$0xff]
  %v233 = vld [vmem:[%s0 + $0x6d8] sm:$0xff]
  %v234 = vld [vmem:[%s0 + $0x6e0] sm:$0xff]
  %v235 = vld [vmem:[%s0 + $0x6e8] sm:$0xff]
  %v236 = vld [vmem:[%s0 + $0x6f0] sm:$0xff]
  %v237 = vld [vmem:[%s0 + $0x6f8] sm:$0xff]
  %v238 = vld [vmem:[%s0 + $0x700] sm:$0xff]
  %v239 = vld [vmem:[%s0 + $0x708] sm:$0xff]
  %v240 = vld [vmem:[%s0 + $0x710] sm:$0xff]
  %v241 = vld [vmem:[%s0 + $0x718] sm:$0xff]
  %v242 = vld [vmem:[%s0 + $0x720] sm:$0xff]
  %v243 = vld [vmem:[%s0 + $0x728] sm:$0xff]
  %v244 = vld [vmem:[%s0 + $0x730] sm:$0xff]
  %v245 = vld [vmem:[%s0 + $0x738] sm:$0xff]
  %v246 = vld [vmem:[%s0 + $0x740] sm:$0xff]
  %v247 = vld [vmem:[%s0 + $0x748] sm:$0xff]
  %v248 = vld [vmem:[%s0 + $0x750] sm:$0xff]
  %v249 = vld [vmem:[%s0 + $0x758] sm:$0xff]
  %v250 = vld [vmem:[%s0 + $0x760] sm:$0xff]
  %v251 = vld [vmem:[%s0 + $0x768] sm:$0xff]
  %v252 = vld [vmem:[%s0 + $0x770] sm:$0xff]
  %v253 = vld [vmem:[%s0 + $0x778] sm:$0xff]
  %v254 = vld [vmem:[%s0 + $0x780] sm:$0xff]
  %v255 = vld [vmem:[%s0 + $0x788] sm:$0xff]
  %v256 = vld [vmem:[%s0 + $0x790] sm:$0xff]
  %v257 = vld [vmem:[%s0 + $0x798] sm:$0xff]
  %v258 = vld [vmem:[%s0 + $0x7a0] sm:$0xff]
  %v259 = vld [vmem:[%s0 + $0x7a8] sm:$0xff]
  %v260 = vld [vmem:[%s0 + $0x7b0] sm:$0xff]
  %v261 = vld [vmem:[%s0 + $0x7b8] sm:$0xff]
  %v262 = vld [vmem:[%s0 + $0x7c0] sm:$0xff]
  %v263 = vld [vmem:[%s0 + $0x7c8] sm:$0xff]
  %v264 = vld [vmem:[%s0 + $0x7d0] sm:$0xff]
  %v265 = vld [vmem:[%s0 + $0x7d8] sm:$0xff]
  %v266 = vld [vmem:[%s0 + $0x7e0] sm:$0xff]
  %v267 = vld [vmem:[%s0 + $0x7e8] sm:$0xff]
  %v268 = vld [vmem:[%s0 + $0x7f0] sm:$0xff]
  %v269 = vld [vmem:[%s0 + $0x7f8] sm:$0xff]
  %v270 = vld [vmem:[%s1] sm:$0xff]
  %v271 = vld [vmem:[%s1 + $0x8] sm:$0xff]
  %v272 = vld [vmem:[%s1 + $0x10] sm:$0xff]
  %v273 = vld [vmem:[%s1 + $0x18] sm:$0xff]
  %v274 = vld [vmem:[%s1 + $0x20] sm:$0xff]
  %v275 = vld [vmem:[%s1 + $0x28] sm:$0xff]
  %v276 = vld [vmem:[%s1 + $0x30] sm:$0xff]
  %v277 = vld [vmem:[%s1 + $0x38] sm:$0xff]
  %v278 = vld [vmem:[%s1 + $0x40] sm:$0xff]
  %v279 = vld [vmem:[%s1 + $0x48] sm:$0xff]
  %v280 = vld [vmem:[%s1 + $0x50] sm:$0xff]
  %v281 = vld [vmem:[%s1 + $0x58] sm:$0xff]
  %v282 = vld [vmem:[%s1 + $0x60] sm:$0xff]
  %v283 = vld [vmem:[%s1 + $0x68] sm:$0xff]
  %v284 = vld [vmem:[%s1 + $0x70] sm:$0xff]
  %v285 = vld [vmem:[%s1 + $0x78] sm:$0xff]
  %v286 = vld [vmem:[%s1 + $0x80] sm:$0xff]
  %v287 = vld [vmem:[%s1 + $0x88] sm:$0xff]
  %v288 = vld [vmem:[%s1 + $0x90] sm:$0xff]
  %v289 = vld [vmem:[%s1 + $0x98] sm:$0xff]
  %v290 = vld [vmem:[%s1 + $0xa0] sm:$0xff]
  %v291 = vld [vmem:[%s1 + $0xa8] sm:$0xff]
  %v292 = vld [vmem:[%s1 + $0xb0] sm:$0xf]
  %vm293 = vcmask 424960
  %v295 = vsel %vm293, %v15, 0
  %v298 = vsel %vm293, %v17, 0
  %v301 = vsel %vm293, %v19, 0
  %v304 = vsel %vm293, %v21, 0
  %v307 = vsel %vm293, %v23, 0
  %v310 = vsel %vm293, %v25, 0
  %v313 = vsel %vm293, %v27, 0
  %v316 = vsel %vm293, %v29, 0
  %v319 = vsel %vm293, %v31, 0
  %v322 = vsel %vm293, %v33, 0
  %v325 = vsel %vm293, %v35, 0
  %v328 = vsel %vm293, %v37, 0
  %v331 = vsel %vm293, %v39, 0
  %v334 = vsel %vm293, %v41, 0
  %v337 = vsel %vm293, %v43, 0
  %v340 = vsel %vm293, %v45, 0
  %v343 = vsel %vm293, %v47, 0
  %v346 = vsel %vm293, %v49, 0
  %v349 = vsel %vm293, %v51, 0
  %v352 = vsel %vm293, %v53, 0
  %v355 = vsel %vm293, %v55, 0
  %v358 = vsel %vm293, %v57, 0
  %v361 = vsel %vm293, %v59, 0
  %v364 = vsel %vm293, %v61, 0
  %v367 = vsel %vm293, %v63, 0
  %v370 = vsel %vm293, %v65, 0
  %v373 = vsel %vm293, %v67, 0
  %v376 = vsel %vm293, %v69, 0
  %v379 = vsel %vm293, %v71, 0
  %v382 = vsel %vm293, %v73, 0
  %v385 = vsel %vm293, %v75, 0
  %v388 = vsel %vm293, %v77, 0
  %v391 = vsel %vm293, %v79, 0
  %v394 = vsel %vm293, %v81, 0
  %v397 = vsel %vm293, %v83, 0
  %v400 = vsel %vm293, %v85, 0
  %v403 = vsel %vm293, %v87, 0
  %v406 = vsel %vm293, %v89, 0
  %v409 = vsel %vm293, %v91, 0
  %v412 = vsel %vm293, %v93, 0
  %v415 = vsel %vm293, %v95, 0
  %v418 = vsel %vm293, %v97, 0
  %v421 = vsel %vm293, %v99, 0
  %v424 = vsel %vm293, %v101, 0
  %v427 = vsel %vm293, %v103, 0
  %v430 = vsel %vm293, %v105, 0
  %v433 = vsel %vm293, %v107, 0
  %v436 = vsel %vm293, %v109, 0
  %v439 = vsel %vm293, %v111, 0
  %v442 = vsel %vm293, %v113, 0
  %v445 = vsel %vm293, %v115, 0
  %v448 = vsel %vm293, %v117, 0
  %v451 = vsel %vm293, %v119, 0
  %v454 = vsel %vm293, %v121, 0
  %v457 = vsel %vm293, %v123, 0
  %v460 = vsel %vm293, %v125, 0
  %v463 = vsel %vm293, %v127, 0
  %v466 = vsel %vm293, %v129, 0
  %v469 = vsel %vm293, %v131, 0
  %v472 = vsel %vm293, %v133, 0
  %v475 = vsel %vm293, %v135, 0
  %v478 = vsel %vm293, %v137, 0
  %v481 = vsel %vm293, %v139, 0
  %v484 = vsel %vm293, %v141, 0
  %v487 = vsel %vm293, %v143, 0
  %v490 = vsel %vm293, %v145, 0
  %v493 = vsel %vm293, %v147, 0
  %v496 = vsel %vm293, %v149, 0
  %v499 = vsel %vm293, %v151, 0
  %v502 = vsel %vm293, %v153, 0
  %v505 = vsel %vm293, %v155, 0
  %v508 = vsel %vm293, %v157, 0
  %v511 = vsel %vm293, %v159, 0
  %v514 = vsel %vm293, %v161, 0
  %v517 = vsel %vm293, %v163, 0
  %v520 = vsel %vm293, %v165, 0
  %v523 = vsel %vm293, %v167, 0
  %v526 = vsel %vm293, %v169, 0
  %v529 = vsel %vm293, %v171, 0
  %v532 = vsel %vm293, %v173, 0
  %v535 = vsel %vm293, %v175, 0
  %v538 = vsel %vm293, %v177, 0
  %v541 = vsel %vm293, %v179, 0
  %v544 = vsel %vm293, %v181, 0
  %v547 = vsel %vm293, %v183, 0
  %v550 = vsel %vm293, %v185, 0
  %v553 = vsel %vm293, %v187, 0
  %v556 = vsel %vm293, %v189, 0
  %v559 = vsel %vm293, %v191, 0
  %v562 = vsel %vm293, %v193, 0
  %v565 = vsel %vm293, %v195, 0
  %v568 = vsel %vm293, %v197, 0
  %v571 = vsel %vm293, %v199, 0
  %v574 = vsel %vm293, %v201, 0
  %v577 = vsel %vm293, %v203, 0
  %v580 = vsel %vm293, %v205, 0
  %v583 = vsel %vm293, %v207, 0
  %v586 = vsel %vm293, %v209, 0
  %v589 = vsel %vm293, %v211, 0
  %v592 = vsel %vm293, %v213, 0
  %v595 = vsel %vm293, %v215, 0
  %v598 = vsel %vm293, %v217, 0
  %v601 = vsel %vm293, %v219, 0
  %v604 = vsel %vm293, %v221, 0
  %v607 = vsel %vm293, %v223, 0
  %v610 = vsel %vm293, %v225, 0
  %v613 = vsel %vm293, %v227, 0
  %v616 = vsel %vm293, %v229, 0
  %v619 = vsel %vm293, %v231, 0
  %v622 = vsel %vm293, %v233, 0
  %v625 = vsel %vm293, %v235, 0
  %v628 = vsel %vm293, %v237, 0
  %v631 = vsel %vm293, %v239, 0
  %v634 = vsel %vm293, %v241, 0
  %v637 = vsel %vm293, %v243, 0
  %v640 = vsel %vm293, %v245, 0
  %v643 = vsel %vm293, %v247, 0
  %v646 = vsel %vm293, %v249, 0
  %v649 = vsel %vm293, %v251, 0
  %v652 = vsel %vm293, %v253, 0
  %v655 = vsel %vm293, %v255, 0
  %v658 = vsel %vm293, %v257, 0
  %v661 = vsel %vm293, %v259, 0
  %v664 = vsel %vm293, %v261, 0
  %v667 = vsel %vm293, %v263, 0
  %v670 = vsel %vm293, %v265, 0
  %v673 = vsel %vm293, %v267, 0
  %v676 = vsel %vm293, %v269, 0
  %vm678 = vcmask 1043456
  %v680 = vsel %vm678, %v292, 0
  %682 = vmatprep.subr.mxu0 0.0
  %683 = vmatpush1.msra.mxu0 %v285
  %684 = vmatprep.subr.mxu0 0.0
  %685 = vmatpush1.msra.mxu0 %v284
  %686 = vmatprep.subr.mxu0 0.0
  %687 = vmatpush1.msra.mxu0 %v283
  %688 = vmatprep.subr.mxu0 0.0
  %689 = vmatpush1.msra.mxu0 %v282
  %690 = vmatprep.subr.mxu0 0.0
  %691 = vmatpush1.msra.mxu0 %v281
  %692 = vmatprep.subr.mxu0 0.0
  %693 = vmatpush1.msra.mxu0 %v280
  %694 = vmatprep.subr.mxu0 0.0
  %695 = vmatpush1.msra.mxu0 %v279
  %696 = vmatprep.subr.mxu0 0.0
  %697 = vmatpush1.msra.mxu0 %v278
  %698 = vmatprep.subr.mxu0 0.0
  %699 = vmatpush1.msra.mxu0 %v277
  %700 = vmatprep.subr.mxu0 0.0
  %701 = vmatpush1.msra.mxu0 %v276
  %702 = vmatprep.subr.mxu0 0.0
  %703 = vmatpush1.msra.mxu0 %v275
  %704 = vmatprep.subr.mxu0 0.0
  %705 = vmatpush1.msra.mxu0 %v274
  %706 = vmatprep.subr.mxu0 0.0
  %707 = vmatpush1.msra.mxu0 %v273
  %708 = vmatprep.subr.mxu0 0.0
  %709 = vmatpush1.msra.mxu0 %v272
  %710 = vmatprep.subr.mxu0 0.0
  %711 = vmatpush1.msra.mxu0 %v271
  %712 = vmatprep.subr.mxu0 0.0
  %713 = vmatpush1.msra.mxu0 %v270
  %714 = vmatprep.subr.mxu0 0.0
  %715 = vmatpush2.msra.mxu0 0.0
  %716 = vmatprep.subr.mxu0 0.0
  %717 = vmatpush2.msra.mxu0 0.0
  %718 = vmatprep.subr.mxu0 0.0
  %719 = vmatpush2.msra.mxu0 0.0
  %720 = vmatprep.subr.mxu0 0.0
  %721 = vmatpush2.msra.mxu0 0.0
  %722 = vmatprep.subr.mxu0 0.0
  %723 = vmatpush2.msra.mxu0 0.0
  %724 = vmatprep.subr.mxu0 0.0
  %725 = vmatpush2.msra.mxu0 0.0
  %726 = vmatprep.subr.mxu0 0.0
  %727 = vmatpush2.msra.mxu0 0.0
  %728 = vmatprep.subr.mxu0 0.0
  %729 = vmatpush2.msra.mxu0 0.0
  %730 = vmatprep.subr.mxu0 0.0
  %731 = vmatpush2.msra.mxu0 0.0
  %732 = vmatprep.subr.mxu0 0.0
  %733 = vmatpush2.msra.mxu0 %v680
  %734 = vmatprep.subr.mxu0 0.0
  %735 = vmatpush2.msra.mxu0 %v291
  %736 = vmatprep.subr.mxu0 0.0
  %737 = vmatpush2.msra.mxu0 %v290
  %738 = vmatprep.subr.mxu0 0.0
  %739 = vmatpush2.msra.mxu0 %v289
  %740 = vmatprep.subr.mxu0 0.0
  %741 = vmatpush2.msra.mxu0 %v288
  %742 = vmatprep.subr.mxu0 0.0
  %743 = vmatpush2.msra.mxu0 %v287
  %744 = vmatprep.subr.mxu0 0.0
  %745 = vmatpush2.msra.mxu0 %v286
  %746 = vmatprep.mubr.f32.mxu0 %v295
  %747 = vmatmul.mubr.f32.gmra.mxu0 %v14
  %v748 = vpop.f32.mrf.mxu0
  %v749 = vadd.f32 0.0, %v748
  %v750 = vpop.f32.mrf.mxu0
  %751 = vmatprep.mubr.f32.mxu0 %v298
  %752 = vmatmul.mubr.f32.gmra.mxu0 %v16
  %v753 = vpop.f32.mrf.mxu0
  %v754 = vadd.f32 0.0, %v753
  %v755 = vpop.f32.mrf.mxu0
  %756 = vmatprep.mubr.f32.mxu0 %v301
  %757 = vmatmul.mubr.f32.gmra.mxu0 %v18
  %v758 = vpop.f32.mrf.mxu0
  %v759 = vadd.f32 0.0, %v758
  %v760 = vpop.f32.mrf.mxu0
  %761 = vmatprep.mubr.f32.mxu0 %v304
  %762 = vmatmul.mubr.f32.gmra.mxu0 %v20
  %v763 = vpop.f32.mrf.mxu0
  %v764 = vadd.f32 0.0, %v763
  %v765 = vpop.f32.mrf.mxu0
  %766 = vmatprep.mubr.f32.mxu0 %v307
  %767 = vmatmul.mubr.f32.gmra.mxu0 %v22
  %v768 = vpop.f32.mrf.mxu0
  %v769 = vadd.f32 0.0, %v768
  %v770 = vpop.f32.mrf.mxu0
  %771 = vmatprep.mubr.f32.mxu0 %v310
  %772 = vmatmul.mubr.f32.gmra.mxu0 %v24
  %v773 = vpop.f32.mrf.mxu0
  %v774 = vadd.f32 0.0, %v773
  %v775 = vpop.f32.mrf.mxu0
  %776 = vmatprep.mubr.f32.mxu0 %v313
  %777 = vmatmul.mubr.f32.gmra.mxu0 %v26
  %v778 = vpop.f32.mrf.mxu0
  %v779 = vadd.f32 0.0, %v778
  %v780 = vpop.f32.mrf.mxu0
  %781 = vmatprep.mubr.f32.mxu0 %v316
  %782 = vmatmul.mubr.f32.gmra.mxu0 %v28
  %v783 = vpop.f32.mrf.mxu0
  %v784 = vadd.f32 0.0, %v783
  %v785 = vpop.f32.mrf.mxu0
  %786 = vmatprep.mubr.f32.mxu0 %v319
  %787 = vmatmul.mubr.f32.gmra.mxu0 %v30
  %v788 = vpop.f32.mrf.mxu0
  %v789 = vadd.f32 0.0, %v788
  %v790 = vpop.f32.mrf.mxu0
  %791 = vmatprep.mubr.f32.mxu0 %v322
  %792 = vmatmul.mubr.f32.gmra.mxu0 %v32
  %v793 = vpop.f32.mrf.mxu0
  %v794 = vadd.f32 0.0, %v793
  %v795 = vpop.f32.mrf.mxu0
  %796 = vmatprep.mubr.f32.mxu0 %v325
  %797 = vmatmul.mubr.f32.gmra.mxu0 %v34
  %v798 = vpop.f32.mrf.mxu0
  %v799 = vadd.f32 0.0, %v798
  %v800 = vpop.f32.mrf.mxu0
  %801 = vmatprep.mubr.f32.mxu0 %v328
  %802 = vmatmul.mubr.f32.gmra.mxu0 %v36
  %v803 = vpop.f32.mrf.mxu0
  %v804 = vadd.f32 0.0, %v803
  %v805 = vpop.f32.mrf.mxu0
  %806 = vmatprep.mubr.f32.mxu0 %v331
  %807 = vmatmul.mubr.f32.gmra.mxu0 %v38
  %v808 = vpop.f32.mrf.mxu0
  %v809 = vadd.f32 0.0, %v808
  %v810 = vpop.f32.mrf.mxu0
  %811 = vmatprep.mubr.f32.mxu0 %v334
  %812 = vmatmul.mubr.f32.gmra.mxu0 %v40
  %v813 = vpop.f32.mrf.mxu0
  %v814 = vadd.f32 0.0, %v813
  %v815 = vpop.f32.mrf.mxu0
  %816 = vmatprep.mubr.f32.mxu0 %v337
  %817 = vmatmul.mubr.f32.gmra.mxu0 %v42
  %v818 = vpop.f32.mrf.mxu0
  %v819 = vadd.f32 0.0, %v818
  %v820 = vpop.f32.mrf.mxu0
  %821 = vmatprep.mubr.f32.mxu0 %v340
  %822 = vmatmul.mubr.f32.gmra.mxu0 %v44
  %v823 = vpop.f32.mrf.mxu0
  %v824 = vadd.f32 0.0, %v823
  %v825 = vpop.f32.mrf.mxu0
  %826 = vmatprep.mubr.f32.mxu0 %v343
  %827 = vmatmul.mubr.f32.gmra.mxu0 %v46
  %v828 = vpop.f32.mrf.mxu0
  %v829 = vadd.f32 0.0, %v828
  %v830 = vpop.f32.mrf.mxu0
  %831 = vmatprep.mubr.f32.mxu0 %v346
  %832 = vmatmul.mubr.f32.gmra.mxu0 %v48
  %v833 = vpop.f32.mrf.mxu0
  %v834 = vadd.f32 0.0, %v833
  %v835 = vpop.f32.mrf.mxu0
  %836 = vmatprep.mubr.f32.mxu0 %v349
  %837 = vmatmul.mubr.f32.gmra.mxu0 %v50
  %v838 = vpop.f32.mrf.mxu0
  %v839 = vadd.f32 0.0, %v838
  %v840 = vpop.f32.mrf.mxu0
  %841 = vmatprep.mubr.f32.mxu0 %v352
  %842 = vmatmul.mubr.f32.gmra.mxu0 %v52
  %v843 = vpop.f32.mrf.mxu0
  %v844 = vadd.f32 0.0, %v843
  %v845 = vpop.f32.mrf.mxu0
  %846 = vmatprep.mubr.f32.mxu0 %v355
  %847 = vmatmul.mubr.f32.gmra.mxu0 %v54
  %v848 = vpop.f32.mrf.mxu0
  %v849 = vadd.f32 0.0, %v848
  %v850 = vpop.f32.mrf.mxu0
  %851 = vmatprep.mubr.f32.mxu0 %v358
  %852 = vmatmul.mubr.f32.gmra.mxu0 %v56
  %v853 = vpop.f32.mrf.mxu0
  %v854 = vadd.f32 0.0, %v853
  %v855 = vpop.f32.mrf.mxu0
  %856 = vmatprep.mubr.f32.mxu0 %v361
  %857 = vmatmul.mubr.f32.gmra.mxu0 %v58
  %v858 = vpop.f32.mrf.mxu0
  %v859 = vadd.f32 0.0, %v858
  %v860 = vpop.f32.mrf.mxu0
  %861 = vmatprep.mubr.f32.mxu0 %v364
  %862 = vmatmul.mubr.f32.gmra.mxu0 %v60
  %v863 = vpop.f32.mrf.mxu0
  %v864 = vadd.f32 0.0, %v863
  %v865 = vpop.f32.mrf.mxu0
  %866 = vmatprep.mubr.f32.mxu0 %v367
  %867 = vmatmul.mubr.f32.gmra.mxu0 %v62
  %v868 = vpop.f32.mrf.mxu0
  %v869 = vadd.f32 0.0, %v868
  %v870 = vpop.f32.mrf.mxu0
  %871 = vmatprep.mubr.f32.mxu0 %v370
  %872 = vmatmul.mubr.f32.gmra.mxu0 %v64
  %v873 = vpop.f32.mrf.mxu0
  %v874 = vadd.f32 0.0, %v873
  %v875 = vpop.f32.mrf.mxu0
  %876 = vmatprep.mubr.f32.mxu0 %v373
  %877 = vmatmul.mubr.f32.gmra.mxu0 %v66
  %v878 = vpop.f32.mrf.mxu0
  %v879 = vadd.f32 0.0, %v878
  %v880 = vpop.f32.mrf.mxu0
  %881 = vmatprep.mubr.f32.mxu0 %v376
  %882 = vmatmul.mubr.f32.gmra.mxu0 %v68
  %v883 = vpop.f32.mrf.mxu0
  %v884 = vadd.f32 0.0, %v883
  %v885 = vpop.f32.mrf.mxu0
  %886 = vmatprep.mubr.f32.mxu0 %v379
  %887 = vmatmul.mubr.f32.gmra.mxu0 %v70
  %v888 = vpop.f32.mrf.mxu0
  %v889 = vadd.f32 0.0, %v888
  %v890 = vpop.f32.mrf.mxu0
  %891 = vmatprep.mubr.f32.mxu0 %v382
  %892 = vmatmul.mubr.f32.gmra.mxu0 %v72
  %v893 = vpop.f32.mrf.mxu0
  %v894 = vadd.f32 0.0, %v893
  %v895 = vpop.f32.mrf.mxu0
  %896 = vmatprep.mubr.f32.mxu0 %v385
  %897 = vmatmul.mubr.f32.gmra.mxu0 %v74
  %v898 = vpop.f32.mrf.mxu0
  %v899 = vadd.f32 0.0, %v898
  %v900 = vpop.f32.mrf.mxu0
  %901 = vmatprep.mubr.f32.mxu0 %v388
  %902 = vmatmul.mubr.f32.gmra.mxu0 %v76
  %v903 = vpop.f32.mrf.mxu0
  %v904 = vadd.f32 0.0, %v903
  %v905 = vpop.f32.mrf.mxu0
  %906 = vmatprep.mubr.f32.mxu0 %v391
  %907 = vmatmul.mubr.f32.gmra.mxu0 %v78
  %v908 = vpop.f32.mrf.mxu0
  %v909 = vadd.f32 0.0, %v908
  %v910 = vpop.f32.mrf.mxu0
  %911 = vmatprep.mubr.f32.mxu0 %v394
  %912 = vmatmul.mubr.f32.gmra.mxu0 %v80
  %v913 = vpop.f32.mrf.mxu0
  %v914 = vadd.f32 0.0, %v913
  %v915 = vpop.f32.mrf.mxu0
  %916 = vmatprep.mubr.f32.mxu0 %v397
  %917 = vmatmul.mubr.f32.gmra.mxu0 %v82
  %v918 = vpop.f32.mrf.mxu0
  %v919 = vadd.f32 0.0, %v918
  %v920 = vpop.f32.mrf.mxu0
  %921 = vmatprep.mubr.f32.mxu0 %v400
  %922 = vmatmul.mubr.f32.gmra.mxu0 %v84
  %v923 = vpop.f32.mrf.mxu0
  %v924 = vadd.f32 0.0, %v923
  %v925 = vpop.f32.mrf.mxu0
  %926 = vmatprep.mubr.f32.mxu0 %v403
  %927 = vmatmul.mubr.f32.gmra.mxu0 %v86
  %v928 = vpop.f32.mrf.mxu0
  %v929 = vadd.f32 0.0, %v928
  %v930 = vpop.f32.mrf.mxu0
  %931 = vmatprep.mubr.f32.mxu0 %v406
  %932 = vmatmul.mubr.f32.gmra.mxu0 %v88
  %v933 = vpop.f32.mrf.mxu0
  %v934 = vadd.f32 0.0, %v933
  %v935 = vpop.f32.mrf.mxu0
  %936 = vmatprep.mubr.f32.mxu0 %v409
  %937 = vmatmul.mubr.f32.gmra.mxu0 %v90
  %v938 = vpop.f32.mrf.mxu0
  %v939 = vadd.f32 0.0, %v938
  %v940 = vpop.f32.mrf.mxu0
  %941 = vmatprep.mubr.f32.mxu0 %v412
  %942 = vmatmul.mubr.f32.gmra.mxu0 %v92
  %v943 = vpop.f32.mrf.mxu0
  %v944 = vadd.f32 0.0, %v943
  %v945 = vpop.f32.mrf.mxu0
  %946 = vmatprep.mubr.f32.mxu0 %v415
  %947 = vmatmul.mubr.f32.gmra.mxu0 %v94
  %v948 = vpop.f32.mrf.mxu0
  %v949 = vadd.f32 0.0, %v948
  %v950 = vpop.f32.mrf.mxu0
  %951 = vmatprep.mubr.f32.mxu0 %v418
  %952 = vmatmul.mubr.f32.gmra.mxu0 %v96
  %v953 = vpop.f32.mrf.mxu0
  %v954 = vadd.f32 0.0, %v953
  %v955 = vpop.f32.mrf.mxu0
  %956 = vmatprep.mubr.f32.mxu0 %v421
  %957 = vmatmul.mubr.f32.gmra.mxu0 %v98
  %v958 = vpop.f32.mrf.mxu0
  %v959 = vadd.f32 0.0, %v958
  %v960 = vpop.f32.mrf.mxu0
  %961 = vmatprep.mubr.f32.mxu0 %v424
  %962 = vmatmul.mubr.f32.gmra.mxu0 %v100
  %v963 = vpop.f32.mrf.mxu0
  %v964 = vadd.f32 0.0, %v963
  %v965 = vpop.f32.mrf.mxu0
  %966 = vmatprep.mubr.f32.mxu0 %v427
  %967 = vmatmul.mubr.f32.gmra.mxu0 %v102
  %v968 = vpop.f32.mrf.mxu0
  %v969 = vadd.f32 0.0, %v968
  %v970 = vpop.f32.mrf.mxu0
  %971 = vmatprep.mubr.f32.mxu0 %v430
  %972 = vmatmul.mubr.f32.gmra.mxu0 %v104
  %v973 = vpop.f32.mrf.mxu0
  %v974 = vadd.f32 0.0, %v973
  %v975 = vpop.f32.mrf.mxu0
  %976 = vmatprep.mubr.f32.mxu0 %v433
  %977 = vmatmul.mubr.f32.gmra.mxu0 %v106
  %v978 = vpop.f32.mrf.mxu0
  %v979 = vadd.f32 0.0, %v978
  %v980 = vpop.f32.mrf.mxu0
  %981 = vmatprep.mubr.f32.mxu0 %v436
  %982 = vmatmul.mubr.f32.gmra.mxu0 %v108
  %v983 = vpop.f32.mrf.mxu0
  %v984 = vadd.f32 0.0, %v983
  %v985 = vpop.f32.mrf.mxu0
  %986 = vmatprep.mubr.f32.mxu0 %v439
  %987 = vmatmul.mubr.f32.gmra.mxu0 %v110
  %v988 = vpop.f32.mrf.mxu0
  %v989 = vadd.f32 0.0, %v988
  %v990 = vpop.f32.mrf.mxu0
  %991 = vmatprep.mubr.f32.mxu0 %v442
  %992 = vmatmul.mubr.f32.gmra.mxu0 %v112
  %v993 = vpop.f32.mrf.mxu0
  %v994 = vadd.f32 0.0, %v993
  %v995 = vpop.f32.mrf.mxu0
  %996 = vmatprep.mubr.f32.mxu0 %v445
  %997 = vmatmul.mubr.f32.gmra.mxu0 %v114
  %v998 = vpop.f32.mrf.mxu0
  %v999 = vadd.f32 0.0, %v998
  %v1000 = vpop.f32.mrf.mxu0
  %1001 = vmatprep.mubr.f32.mxu0 %v448
  %1002 = vmatmul.mubr.f32.gmra.mxu0 %v116
  %v1003 = vpop.f32.mrf.mxu0
  %v1004 = vadd.f32 0.0, %v1003
  %v1005 = vpop.f32.mrf.mxu0
  %1006 = vmatprep.mubr.f32.mxu0 %v451
  %1007 = vmatmul.mubr.f32.gmra.mxu0 %v118
  %v1008 = vpop.f32.mrf.mxu0
  %v1009 = vadd.f32 0.0, %v1008
  %v1010 = vpop.f32.mrf.mxu0
  %1011 = vmatprep.mubr.f32.mxu0 %v454
  %1012 = vmatmul.mubr.f32.gmra.mxu0 %v120
  %v1013 = vpop.f32.mrf.mxu0
  %v1014 = vadd.f32 0.0, %v1013
  %v1015 = vpop.f32.mrf.mxu0
  %1016 = vmatprep.mubr.f32.mxu0 %v457
  %1017 = vmatmul.mubr.f32.gmra.mxu0 %v122
  %v1018 = vpop.f32.mrf.mxu0
  %v1019 = vadd.f32 0.0, %v1018
  %v1020 = vpop.f32.mrf.mxu0
  %1021 = vmatprep.mubr.f32.mxu0 %v460
  %1022 = vmatmul.mubr.f32.gmra.mxu0 %v124
  %v1023 = vpop.f32.mrf.mxu0
  %v1024 = vadd.f32 0.0, %v1023
  %v1025 = vpop.f32.mrf.mxu0
  %1026 = vmatprep.mubr.f32.mxu0 %v463
  %1027 = vmatmul.mubr.f32.gmra.mxu0 %v126
  %v1028 = vpop.f32.mrf.mxu0
  %v1029 = vadd.f32 0.0, %v1028
  %v1030 = vpop.f32.mrf.mxu0
  %1031 = vmatprep.mubr.f32.mxu0 %v466
  %1032 = vmatmul.mubr.f32.gmra.mxu0 %v128
  %v1033 = vpop.f32.mrf.mxu0
  %v1034 = vadd.f32 0.0, %v1033
  %v1035 = vpop.f32.mrf.mxu0
  %1036 = vmatprep.mubr.f32.mxu0 %v469
  %1037 = vmatmul.mubr.f32.gmra.mxu0 %v130
  %v1038 = vpop.f32.mrf.mxu0
  %v1039 = vadd.f32 0.0, %v1038
  %v1040 = vpop.f32.mrf.mxu0
  %1041 = vmatprep.mubr.f32.mxu0 %v472
  %1042 = vmatmul.mubr.f32.gmra.mxu0 %v132
  %v1043 = vpop.f32.mrf.mxu0
  %v1044 = vadd.f32 0.0, %v1043
  %v1045 = vpop.f32.mrf.mxu0
  %1046 = vmatprep.mubr.f32.mxu0 %v475
  %1047 = vmatmul.mubr.f32.gmra.mxu0 %v134
  %v1048 = vpop.f32.mrf.mxu0
  %v1049 = vadd.f32 0.0, %v1048
  %v1050 = vpop.f32.mrf.mxu0
  %1051 = vmatprep.mubr.f32.mxu0 %v478
  %1052 = vmatmul.mubr.f32.gmra.mxu0 %v136
  %v1053 = vpop.f32.mrf.mxu0
  %v1054 = vadd.f32 0.0, %v1053
  %v1055 = vpop.f32.mrf.mxu0
  %1056 = vmatprep.mubr.f32.mxu0 %v481
  %1057 = vmatmul.mubr.f32.gmra.mxu0 %v138
  %v1058 = vpop.f32.mrf.mxu0
  %v1059 = vadd.f32 0.0, %v1058
  %v1060 = vpop.f32.mrf.mxu0
  %1061 = vmatprep.mubr.f32.mxu0 %v484
  %1062 = vmatmul.mubr.f32.gmra.mxu0 %v140
  %v1063 = vpop.f32.mrf.mxu0
  %v1064 = vadd.f32 0.0, %v1063
  %v1065 = vpop.f32.mrf.mxu0
  %1066 = vmatprep.mubr.f32.mxu0 %v487
  %1067 = vmatmul.mubr.f32.gmra.mxu0 %v142
  %v1068 = vpop.f32.mrf.mxu0
  %v1069 = vadd.f32 0.0, %v1068
  %v1070 = vpop.f32.mrf.mxu0
  %1071 = vmatprep.mubr.f32.mxu0 %v490
  %1072 = vmatmul.mubr.f32.gmra.mxu0 %v144
  %v1073 = vpop.f32.mrf.mxu0
  %v1074 = vadd.f32 0.0, %v1073
  %v1075 = vpop.f32.mrf.mxu0
  %1076 = vmatprep.mubr.f32.mxu0 %v493
  %1077 = vmatmul.mubr.f32.gmra.mxu0 %v146
  %v1078 = vpop.f32.mrf.mxu0
  %v1079 = vadd.f32 0.0, %v1078
  %v1080 = vpop.f32.mrf.mxu0
  %1081 = vmatprep.mubr.f32.mxu0 %v496
  %1082 = vmatmul.mubr.f32.gmra.mxu0 %v148
  %v1083 = vpop.f32.mrf.mxu0
  %v1084 = vadd.f32 0.0, %v1083
  %v1085 = vpop.f32.mrf.mxu0
  %1086 = vmatprep.mubr.f32.mxu0 %v499
  %1087 = vmatmul.mubr.f32.gmra.mxu0 %v150
  %v1088 = vpop.f32.mrf.mxu0
  %v1089 = vadd.f32 0.0, %v1088
  %v1090 = vpop.f32.mrf.mxu0
  %1091 = vmatprep.mubr.f32.mxu0 %v502
  %1092 = vmatmul.mubr.f32.gmra.mxu0 %v152
  %v1093 = vpop.f32.mrf.mxu0
  %v1094 = vadd.f32 0.0, %v1093
  %v1095 = vpop.f32.mrf.mxu0
  %1096 = vmatprep.mubr.f32.mxu0 %v505
  %1097 = vmatmul.mubr.f32.gmra.mxu0 %v154
  %v1098 = vpop.f32.mrf.mxu0
  %v1099 = vadd.f32 0.0, %v1098
  %v1100 = vpop.f32.mrf.mxu0
  %1101 = vmatprep.mubr.f32.mxu0 %v508
  %1102 = vmatmul.mubr.f32.gmra.mxu0 %v156
  %v1103 = vpop.f32.mrf.mxu0
  %v1104 = vadd.f32 0.0, %v1103
  %v1105 = vpop.f32.mrf.mxu0
  %1106 = vmatprep.mubr.f32.mxu0 %v511
  %1107 = vmatmul.mubr.f32.gmra.mxu0 %v158
  %v1108 = vpop.f32.mrf.mxu0
  %v1109 = vadd.f32 0.0, %v1108
  %v1110 = vpop.f32.mrf.mxu0
  %1111 = vmatprep.mubr.f32.mxu0 %v514
  %1112 = vmatmul.mubr.f32.gmra.mxu0 %v160
  %v1113 = vpop.f32.mrf.mxu0
  %v1114 = vadd.f32 0.0, %v1113
  %v1115 = vpop.f32.mrf.mxu0
  %1116 = vmatprep.mubr.f32.mxu0 %v517
  %1117 = vmatmul.mubr.f32.gmra.mxu0 %v162
  %v1118 = vpop.f32.mrf.mxu0
  %v1119 = vadd.f32 0.0, %v1118
  %v1120 = vpop.f32.mrf.mxu0
  %1121 = vmatprep.mubr.f32.mxu0 %v520
  %1122 = vmatmul.mubr.f32.gmra.mxu0 %v164
  %v1123 = vpop.f32.mrf.mxu0
  %v1124 = vadd.f32 0.0, %v1123
  %v1125 = vpop.f32.mrf.mxu0
  %1126 = vmatprep.mubr.f32.mxu0 %v523
  %1127 = vmatmul.mubr.f32.gmra.mxu0 %v166
  %v1128 = vpop.f32.mrf.mxu0
  %v1129 = vadd.f32 0.0, %v1128
  %v1130 = vpop.f32.mrf.mxu0
  %1131 = vmatprep.mubr.f32.mxu0 %v526
  %1132 = vmatmul.mubr.f32.gmra.mxu0 %v168
  %v1133 = vpop.f32.mrf.mxu0
  %v1134 = vadd.f32 0.0, %v1133
  %v1135 = vpop.f32.mrf.mxu0
  %1136 = vmatprep.mubr.f32.mxu0 %v529
  %1137 = vmatmul.mubr.f32.gmra.mxu0 %v170
  %v1138 = vpop.f32.mrf.mxu0
  %v1139 = vadd.f32 0.0, %v1138
  %v1140 = vpop.f32.mrf.mxu0
  %1141 = vmatprep.mubr.f32.mxu0 %v532
  %1142 = vmatmul.mubr.f32.gmra.mxu0 %v172
  %v1143 = vpop.f32.mrf.mxu0
  %v1144 = vadd.f32 0.0, %v1143
  %v1145 = vpop.f32.mrf.mxu0
  %1146 = vmatprep.mubr.f32.mxu0 %v535
  %1147 = vmatmul.mubr.f32.gmra.mxu0 %v174
  %v1148 = vpop.f32.mrf.mxu0
  %v1149 = vadd.f32 0.0, %v1148
  %v1150 = vpop.f32.mrf.mxu0
  %1151 = vmatprep.mubr.f32.mxu0 %v538
  %1152 = vmatmul.mubr.f32.gmra.mxu0 %v176
  %v1153 = vpop.f32.mrf.mxu0
  %v1154 = vadd.f32 0.0, %v1153
  %v1155 = vpop.f32.mrf.mxu0
  %1156 = vmatprep.mubr.f32.mxu0 %v541
  %1157 = vmatmul.mubr.f32.gmra.mxu0 %v178
  %v1158 = vpop.f32.mrf.mxu0
  %v1159 = vadd.f32 0.0, %v1158
  %v1160 = vpop.f32.mrf.mxu0
  %1161 = vmatprep.mubr.f32.mxu0 %v544
  %1162 = vmatmul.mubr.f32.gmra.mxu0 %v180
  %v1163 = vpop.f32.mrf.mxu0
  %v1164 = vadd.f32 0.0, %v1163
  %v1165 = vpop.f32.mrf.mxu0
  %1166 = vmatprep.mubr.f32.mxu0 %v547
  %1167 = vmatmul.mubr.f32.gmra.mxu0 %v182
  %v1168 = vpop.f32.mrf.mxu0
  %v1169 = vadd.f32 0.0, %v1168
  %v1170 = vpop.f32.mrf.mxu0
  %1171 = vmatprep.mubr.f32.mxu0 %v550
  %1172 = vmatmul.mubr.f32.gmra.mxu0 %v184
  %v1173 = vpop.f32.mrf.mxu0
  %v1174 = vadd.f32 0.0, %v1173
  %v1175 = vpop.f32.mrf.mxu0
  %1176 = vmatprep.mubr.f32.mxu0 %v553
  %1177 = vmatmul.mubr.f32.gmra.mxu0 %v186
  %v1178 = vpop.f32.mrf.mxu0
  %v1179 = vadd.f32 0.0, %v1178
  %v1180 = vpop.f32.mrf.mxu0
  %1181 = vmatprep.mubr.f32.mxu0 %v556
  %1182 = vmatmul.mubr.f32.gmra.mxu0 %v188
  %v1183 = vpop.f32.mrf.mxu0
  %v1184 = vadd.f32 0.0, %v1183
  %v1185 = vpop.f32.mrf.mxu0
  %1186 = vmatprep.mubr.f32.mxu0 %v559
  %1187 = vmatmul.mubr.f32.gmra.mxu0 %v190
  %v1188 = vpop.f32.mrf.mxu0
  %v1189 = vadd.f32 0.0, %v1188
  %v1190 = vpop.f32.mrf.mxu0
  %1191 = vmatprep.mubr.f32.mxu0 %v562
  %1192 = vmatmul.mubr.f32.gmra.mxu0 %v192
  %v1193 = vpop.f32.mrf.mxu0
  %v1194 = vadd.f32 0.0, %v1193
  %v1195 = vpop.f32.mrf.mxu0
  %1196 = vmatprep.mubr.f32.mxu0 %v565
  %1197 = vmatmul.mubr.f32.gmra.mxu0 %v194
  %v1198 = vpop.f32.mrf.mxu0
  %v1199 = vadd.f32 0.0, %v1198
  %v1200 = vpop.f32.mrf.mxu0
  %1201 = vmatprep.mubr.f32.mxu0 %v568
  %1202 = vmatmul.mubr.f32.gmra.mxu0 %v196
  %v1203 = vpop.f32.mrf.mxu0
  %v1204 = vadd.f32 0.0, %v1203
  %v1205 = vpop.f32.mrf.mxu0
  %1206 = vmatprep.mubr.f32.mxu0 %v571
  %1207 = vmatmul.mubr.f32.gmra.mxu0 %v198
  %v1208 = vpop.f32.mrf.mxu0
  %v1209 = vadd.f32 0.0, %v1208
  %v1210 = vpop.f32.mrf.mxu0
  %1211 = vmatprep.mubr.f32.mxu0 %v574
  %1212 = vmatmul.mubr.f32.gmra.mxu0 %v200
  %v1213 = vpop.f32.mrf.mxu0
  %v1214 = vadd.f32 0.0, %v1213
  %v1215 = vpop.f32.mrf.mxu0
  %1216 = vmatprep.mubr.f32.mxu0 %v577
  %1217 = vmatmul.mubr.f32.gmra.mxu0 %v202
  %v1218 = vpop.f32.mrf.mxu0
  %v1219 = vadd.f32 0.0, %v1218
  %v1220 = vpop.f32.mrf.mxu0
  %1221 = vmatprep.mubr.f32.mxu0 %v580
  %1222 = vmatmul.mubr.f32.gmra.mxu0 %v204
  %v1223 = vpop.f32.mrf.mxu0
  %v1224 = vadd.f32 0.0, %v1223
  %v1225 = vpop.f32.mrf.mxu0
  %1226 = vmatprep.mubr.f32.mxu0 %v583
  %1227 = vmatmul.mubr.f32.gmra.mxu0 %v206
  %v1228 = vpop.f32.mrf.mxu0
  %v1229 = vadd.f32 0.0, %v1228
  %v1230 = vpop.f32.mrf.mxu0
  %1231 = vmatprep.mubr.f32.mxu0 %v586
  %1232 = vmatmul.mubr.f32.gmra.mxu0 %v208
  %v1233 = vpop.f32.mrf.mxu0
  %v1234 = vadd.f32 0.0, %v1233
  %v1235 = vpop.f32.mrf.mxu0
  %1236 = vmatprep.mubr.f32.mxu0 %v589
  %1237 = vmatmul.mubr.f32.gmra.mxu0 %v210
  %v1238 = vpop.f32.mrf.mxu0
  %v1239 = vadd.f32 0.0, %v1238
  %v1240 = vpop.f32.mrf.mxu0
  %1241 = vmatprep.mubr.f32.mxu0 %v592
  %1242 = vmatmul.mubr.f32.gmra.mxu0 %v212
  %v1243 = vpop.f32.mrf.mxu0
  %v1244 = vadd.f32 0.0, %v1243
  %v1245 = vpop.f32.mrf.mxu0
  %1246 = vmatprep.mubr.f32.mxu0 %v595
  %1247 = vmatmul.mubr.f32.gmra.mxu0 %v214
  %v1248 = vpop.f32.mrf.mxu0
  %v1249 = vadd.f32 0.0, %v1248
  %v1250 = vpop.f32.mrf.mxu0
  %1251 = vmatprep.mubr.f32.mxu0 %v598
  %1252 = vmatmul.mubr.f32.gmra.mxu0 %v216
  %v1253 = vpop.f32.mrf.mxu0
  %v1254 = vadd.f32 0.0, %v1253
  %v1255 = vpop.f32.mrf.mxu0
  %1256 = vmatprep.mubr.f32.mxu0 %v601
  %1257 = vmatmul.mubr.f32.gmra.mxu0 %v218
  %v1258 = vpop.f32.mrf.mxu0
  %v1259 = vadd.f32 0.0, %v1258
  %v1260 = vpop.f32.mrf.mxu0
  %1261 = vmatprep.mubr.f32.mxu0 %v604
  %1262 = vmatmul.mubr.f32.gmra.mxu0 %v220
  %v1263 = vpop.f32.mrf.mxu0
  %v1264 = vadd.f32 0.0, %v1263
  %v1265 = vpop.f32.mrf.mxu0
  %1266 = vmatprep.mubr.f32.mxu0 %v607
  %1267 = vmatmul.mubr.f32.gmra.mxu0 %v222
  %v1268 = vpop.f32.mrf.mxu0
  %v1269 = vadd.f32 0.0, %v1268
  %v1270 = vpop.f32.mrf.mxu0
  %1271 = vmatprep.mubr.f32.mxu0 %v610
  %1272 = vmatmul.mubr.f32.gmra.mxu0 %v224
  %v1273 = vpop.f32.mrf.mxu0
  %v1274 = vadd.f32 0.0, %v1273
  %v1275 = vpop.f32.mrf.mxu0
  %1276 = vmatprep.mubr.f32.mxu0 %v613
  %1277 = vmatmul.mubr.f32.gmra.mxu0 %v226
  %v1278 = vpop.f32.mrf.mxu0
  %v1279 = vadd.f32 0.0, %v1278
  %v1280 = vpop.f32.mrf.mxu0
  %1281 = vmatprep.mubr.f32.mxu0 %v616
  %1282 = vmatmul.mubr.f32.gmra.mxu0 %v228
  %v1283 = vpop.f32.mrf.mxu0
  %v1284 = vadd.f32 0.0, %v1283
  %v1285 = vpop.f32.mrf.mxu0
  %1286 = vmatprep.mubr.f32.mxu0 %v619
  %1287 = vmatmul.mubr.f32.gmra.mxu0 %v230
  %v1288 = vpop.f32.mrf.mxu0
  %v1289 = vadd.f32 0.0, %v1288
  %v1290 = vpop.f32.mrf.mxu0
  %1291 = vmatprep.mubr.f32.mxu0 %v622
  %1292 = vmatmul.mubr.f32.gmra.mxu0 %v232
  %v1293 = vpop.f32.mrf.mxu0
  %v1294 = vadd.f32 0.0, %v1293
  %v1295 = vpop.f32.mrf.mxu0
  %1296 = vmatprep.mubr.f32.mxu0 %v625
  %1297 = vmatmul.mubr.f32.gmra.mxu0 %v234
  %v1298 = vpop.f32.mrf.mxu0
  %v1299 = vadd.f32 0.0, %v1298
  %v1300 = vpop.f32.mrf.mxu0
  %1301 = vmatprep.mubr.f32.mxu0 %v628
  %1302 = vmatmul.mubr.f32.gmra.mxu0 %v236
  %v1303 = vpop.f32.mrf.mxu0
  %v1304 = vadd.f32 0.0, %v1303
  %v1305 = vpop.f32.mrf.mxu0
  %1306 = vmatprep.mubr.f32.mxu0 %v631
  %1307 = vmatmul.mubr.f32.gmra.mxu0 %v238
  %v1308 = vpop.f32.mrf.mxu0
  %v1309 = vadd.f32 0.0, %v1308
  %v1310 = vpop.f32.mrf.mxu0
  %1311 = vmatprep.mubr.f32.mxu0 %v634
  %1312 = vmatmul.mubr.f32.gmra.mxu0 %v240
  %v1313 = vpop.f32.mrf.mxu0
  %v1314 = vadd.f32 0.0, %v1313
  %v1315 = vpop.f32.mrf.mxu0
  %1316 = vmatprep.mubr.f32.mxu0 %v637
  %1317 = vmatmul.mubr.f32.gmra.mxu0 %v242
  %v1318 = vpop.f32.mrf.mxu0
  %v1319 = vadd.f32 0.0, %v1318
  %v1320 = vpop.f32.mrf.mxu0
  %1321 = vmatprep.mubr.f32.mxu0 %v640
  %1322 = vmatmul.mubr.f32.gmra.mxu0 %v244
  %v1323 = vpop.f32.mrf.mxu0
  %v1324 = vadd.f32 0.0, %v1323
  %v1325 = vpop.f32.mrf.mxu0
  %1326 = vmatprep.mubr.f32.mxu0 %v643
  %1327 = vmatmul.mubr.f32.gmra.mxu0 %v246
  %v1328 = vpop.f32.mrf.mxu0
  %v1329 = vadd.f32 0.0, %v1328
  %v1330 = vpop.f32.mrf.mxu0
  %1331 = vmatprep.mubr.f32.mxu0 %v646
  %1332 = vmatmul.mubr.f32.gmra.mxu0 %v248
  %v1333 = vpop.f32.mrf.mxu0
  %v1334 = vadd.f32 0.0, %v1333
  %v1335 = vpop.f32.mrf.mxu0
  %1336 = vmatprep.mubr.f32.mxu0 %v649
  %1337 = vmatmul.mubr.f32.gmra.mxu0 %v250
  %v1338 = vpop.f32.mrf.mxu0
  %v1339 = vadd.f32 0.0, %v1338
  %v1340 = vpop.f32.mrf.mxu0
  %1341 = vmatprep.mubr.f32.mxu0 %v652
  %1342 = vmatmul.mubr.f32.gmra.mxu0 %v252
  %v1343 = vpop.f32.mrf.mxu0
  %v1344 = vadd.f32 0.0, %v1343
  %v1345 = vpop.f32.mrf.mxu0
  %1346 = vmatprep.mubr.f32.mxu0 %v655
  %1347 = vmatmul.mubr.f32.gmra.mxu0 %v254
  %v1348 = vpop.f32.mrf.mxu0
  %v1349 = vadd.f32 0.0, %v1348
  %v1350 = vpop.f32.mrf.mxu0
  %1351 = vmatprep.mubr.f32.mxu0 %v658
  %1352 = vmatmul.mubr.f32.gmra.mxu0 %v256
  %v1353 = vpop.f32.mrf.mxu0
  %v1354 = vadd.f32 0.0, %v1353
  %v1355 = vpop.f32.mrf.mxu0
  %1356 = vmatprep.mubr.f32.mxu0 %v661
  %1357 = vmatmul.mubr.f32.gmra.mxu0 %v258
  %v1358 = vpop.f32.mrf.mxu0
  %v1359 = vadd.f32 0.0, %v1358
  %v1360 = vpop.f32.mrf.mxu0
  %1361 = vmatprep.mubr.f32.mxu0 %v664
  %1362 = vmatmul.mubr.f32.gmra.mxu0 %v260
  %v1363 = vpop.f32.mrf.mxu0
  %v1364 = vadd.f32 0.0, %v1363
  %v1365 = vpop.f32.mrf.mxu0
  %1366 = vmatprep.mubr.f32.mxu0 %v667
  %1367 = vmatmul.mubr.f32.gmra.mxu0 %v262
  %v1368 = vpop.f32.mrf.mxu0
  %v1369 = vadd.f32 0.0, %v1368
  %v1370 = vpop.f32.mrf.mxu0
  %1371 = vmatprep.mubr.f32.mxu0 %v670
  %1372 = vmatmul.mubr.f32.gmra.mxu0 %v264
  %v1373 = vpop.f32.mrf.mxu0
  %v1374 = vadd.f32 0.0, %v1373
  %v1375 = vpop.f32.mrf.mxu0
  %1376 = vmatprep.mubr.f32.mxu0 %v673
  %1377 = vmatmul.mubr.f32.gmra.mxu0 %v266
  %v1378 = vpop.f32.mrf.mxu0
  %v1379 = vadd.f32 0.0, %v1378
  %v1380 = vpop.f32.mrf.mxu0
  %1381 = vmatprep.mubr.f32.mxu0 %v676
  %1382 = vmatmul.mubr.f32.gmra.mxu0 %v268
  %v1383 = vpop.f32.mrf.mxu0
  %v1384 = vadd.f32 0.0, %v1383
  %v1385 = vpop.f32.mrf.mxu0
  %1386 = vdwg.mxu0
  %v1387 = vmax.f32 %v749, %v909
  %v1388 = vmax.f32 %v754, %v914
  %v1389 = vmax.f32 %v759, %v919
  %v1390 = vmax.f32 %v764, %v924
  %v1391 = vmax.f32 %v769, %v929
  %v1392 = vmax.f32 %v774, %v934
  %v1393 = vmax.f32 %v779, %v939
  %v1394 = vmax.f32 %v784, %v944
  %v1395 = vmax.f32 %v789, %v949
  %v1396 = vmax.f32 %v794, %v954
  %v1397 = vmax.f32 %v799, %v959
  %v1398 = vmax.f32 %v804, %v964
  %v1399 = vmax.f32 %v809, %v969
  %v1400 = vmax.f32 %v814, %v974
  %v1401 = vmax.f32 %v819, %v979
  %v1402 = vmax.f32 %v824, %v984
  %v1403 = vmax.f32 %v829, %v989
  %v1404 = vmax.f32 %v834, %v994
  %v1405 = vmax.f32 %v839, %v999
  %v1406 = vmax.f32 %v844, %v1004
  %v1407 = vmax.f32 %v849, %v1009
  %v1408 = vmax.f32 %v854, %v1014
  %v1409 = vmax.f32 %v859, %v1019
  %v1410 = vmax.f32 %v864, %v1024
  %v1411 = vmax.f32 %v869, %v1029
  %v1412 = vmax.f32 %v874, %v1034
  %v1413 = vmax.f32 %v879, %v1039
  %v1414 = vmax.f32 %v884, %v1044
  %v1415 = vmax.f32 %v889, %v1049
  %v1416 = vmax.f32 %v894, %v1054
  %v1417 = vmax.f32 %v899, %v1059
  %v1418 = vmax.f32 %v904, %v1064
  %v1419 = vmax.f32 %v1069, %v1229
  %v1420 = vmax.f32 %v1074, %v1234
  %v1421 = vmax.f32 %v1079, %v1239
  %v1422 = vmax.f32 %v1084, %v1244
  %v1423 = vmax.f32 %v1089, %v1249
  %v1424 = vmax.f32 %v1094, %v1254
  %v1425 = vmax.f32 %v1099, %v1259
  %v1426 = vmax.f32 %v1104, %v1264
  %v1427 = vmax.f32 %v1109, %v1269
  %v1428 = vmax.f32 %v1114, %v1274
  %v1429 = vmax.f32 %v1119, %v1279
  %v1430 = vmax.f32 %v1124, %v1284
  %v1431 = vmax.f32 %v1129, %v1289
  %v1432 = vmax.f32 %v1134, %v1294
  %v1433 = vmax.f32 %v1139, %v1299
  %v1434 = vmax.f32 %v1144, %v1304
  %v1435 = vmax.f32 %v1149, %v1309
  %v1436 = vmax.f32 %v1154, %v1314
  %v1437 = vmax.f32 %v1159, %v1319
  %v1438 = vmax.f32 %v1164, %v1324
  %v1439 = vmax.f32 %v1169, %v1329
  %v1440 = vmax.f32 %v1174, %v1334
  %v1441 = vmax.f32 %v1179, %v1339
  %v1442 = vmax.f32 %v1184, %v1344
  %v1443 = vmax.f32 %v1189, %v1349
  %v1444 = vmax.f32 %v1194, %v1354
  %v1445 = vmax.f32 %v1199, %v1359
  %v1446 = vmax.f32 %v1204, %v1364
  %v1447 = vmax.f32 %v1209, %v1369
  %v1448 = vmax.f32 %v1214, %v1374
  %v1449 = vmax.f32 %v1219, %v1379
  %v1450 = vmax.f32 %v1224, %v1384
  %v1451 = vmax.f32 %v1387, %v1419
  %v1452 = vmax.f32 %v1388, %v1420
  %v1453 = vmax.f32 %v1389, %v1421
  %v1454 = vmax.f32 %v1390, %v1422
  %v1455 = vmax.f32 %v1391, %v1423
  %v1456 = vmax.f32 %v1392, %v1424
  %v1457 = vmax.f32 %v1393, %v1425
  %v1458 = vmax.f32 %v1394, %v1426
  %v1459 = vmax.f32 %v1395, %v1427
  %v1460 = vmax.f32 %v1396, %v1428
  %v1461 = vmax.f32 %v1397, %v1429
  %v1462 = vmax.f32 %v1398, %v1430
  %v1463 = vmax.f32 %v1399, %v1431
  %v1464 = vmax.f32 %v1400, %v1432
  %v1465 = vmax.f32 %v1401, %v1433
  %v1466 = vmax.f32 %v1402, %v1434
  %v1467 = vmax.f32 %v1403, %v1435
  %v1468 = vmax.f32 %v1404, %v1436
  %v1469 = vmax.f32 %v1405, %v1437
  %v1470 = vmax.f32 %v1406, %v1438
  %v1471 = vmax.f32 %v1407, %v1439
  %v1472 = vmax.f32 %v1408, %v1440
  %v1473 = vmax.f32 %v1409, %v1441
  %v1474 = vmax.f32 %v1410, %v1442
  %v1475 = vmax.f32 %v1411, %v1443
  %v1476 = vmax.f32 %v1412, %v1444
  %v1477 = vmax.f32 %v1413, %v1445
  %v1478 = vmax.f32 %v1414, %v1446
  %v1479 = vmax.f32 %v1415, %v1447
  %v1480 = vmax.f32 %v1416, %v1448
  %v1481 = vmax.f32 %v1417, %v1449
  %v1482 = vmax.f32 %v1418, %v1450
  %v1483 = vld [vmem:[%s2] sm:$0x1]
  %v1485 = vlaneseq
  %v1486 = vshrl.u32 %v1485, 7
  %v1487 = vsub.s32 0, %v1486
  %v1488 = vrot.slane %v1483, %v1487
  %v1490 = vadd.f32 %v1451, %v1488
  %v1491 = vadd.f32 %v1452, %v1488
  %v1492 = vadd.f32 %v1453, %v1488
  %v1493 = vadd.f32 %v1454, %v1488
  %v1494 = vadd.f32 %v1455, %v1488
  %v1495 = vadd.f32 %v1456, %v1488
  %v1496 = vadd.f32 %v1457, %v1488
  %v1497 = vadd.f32 %v1458, %v1488
  %v1498 = vadd.f32 %v1459, %v1488
  %v1499 = vadd.f32 %v1460, %v1488
  %v1500 = vadd.f32 %v1461, %v1488
  %v1501 = vadd.f32 %v1462, %v1488
  %v1502 = vadd.f32 %v1463, %v1488
  %v1503 = vadd.f32 %v1464, %v1488
  %v1504 = vadd.f32 %v1465, %v1488
  %v1505 = vadd.f32 %v1466, %v1488
  %v1506 = vadd.f32 %v1467, %v1488
  %v1507 = vadd.f32 %v1468, %v1488
  %v1508 = vadd.f32 %v1469, %v1488
  %v1509 = vadd.f32 %v1470, %v1488
  %v1510 = vadd.f32 %v1471, %v1488
  %v1511 = vadd.f32 %v1472, %v1488
  %v1512 = vadd.f32 %v1473, %v1488
  %v1513 = vadd.f32 %v1474, %v1488
  %v1514 = vadd.f32 %v1475, %v1488
  %v1515 = vadd.f32 %v1476, %v1488
  %v1516 = vadd.f32 %v1477, %v1488
  %v1517 = vadd.f32 %v1478, %v1488
  %v1518 = vadd.f32 %v1479, %v1488
  %v1519 = vadd.f32 %v1480, %v1488
  %v1520 = vadd.f32 %v1481, %v1488
  %v1521 = vadd.f32 %v1482, %v1488
  %v1522 = vmax.f32 %v1490, 0.0
  %v1523 = vmax.f32 %v1491, 0.0
  %v1524 = vmax.f32 %v1492, 0.0
  %v1525 = vmax.f32 %v1493, 0.0
  %v1526 = vmax.f32 %v1494, 0.0
  %v1527 = vmax.f32 %v1495, 0.0
  %v1528 = vmax.f32 %v1496, 0.0
  %v1529 = vmax.f32 %v1497, 0.0
  %v1530 = vmax.f32 %v1498, 0.0
  %v1531 = vmax.f32 %v1499, 0.0
  %v1532 = vmax.f32 %v1500, 0.0
  %v1533 = vmax.f32 %v1501, 0.0
  %v1534 = vmax.f32 %v1502, 0.0
  %v1535 = vmax.f32 %v1503, 0.0
  %v1536 = vmax.f32 %v1504, 0.0
  %v1537 = vmax.f32 %v1505, 0.0
  %v1538 = vmax.f32 %v1506, 0.0
  %v1539 = vmax.f32 %v1507, 0.0
  %v1540 = vmax.f32 %v1508, 0.0
  %v1541 = vmax.f32 %v1509, 0.0
  %v1542 = vmax.f32 %v1510, 0.0
  %v1543 = vmax.f32 %v1511, 0.0
  %v1544 = vmax.f32 %v1512, 0.0
  %v1545 = vmax.f32 %v1513, 0.0
  %v1546 = vmax.f32 %v1514, 0.0
  %v1547 = vmax.f32 %v1515, 0.0
  %v1548 = vmax.f32 %v1516, 0.0
  %v1549 = vmax.f32 %v1517, 0.0
  %v1550 = vmax.f32 %v1518, 0.0
  %v1551 = vmax.f32 %v1519, 0.0
  %v1552 = vmax.f32 %v1520, 0.0
  %v1553 = vmax.f32 %v1521, 0.0
  %vm1554 = vcmask 326656
  %1555 = vst.msk [vmem:[%s3] sm:$0xff] %vm1554, %v1522
  %1556 = vst.msk [vmem:[%s3 + $0x8] sm:$0xff] %vm1554, %v1523
  %1557 = vst.msk [vmem:[%s3 + $0x10] sm:$0xff] %vm1554, %v1524
  %1558 = vst.msk [vmem:[%s3 + $0x18] sm:$0xff] %vm1554, %v1525
  %1559 = vst.msk [vmem:[%s3 + $0x20] sm:$0xff] %vm1554, %v1526
  %1560 = vst.msk [vmem:[%s3 + $0x28] sm:$0xff] %vm1554, %v1527
  %1561 = vst.msk [vmem:[%s3 + $0x30] sm:$0xff] %vm1554, %v1528
  %1562 = vst.msk [vmem:[%s3 + $0x38] sm:$0xff] %vm1554, %v1529
  %1563 = vst.msk [vmem:[%s3 + $0x40] sm:$0xff] %vm1554, %v1530
  %1564 = vst.msk [vmem:[%s3 + $0x48] sm:$0xff] %vm1554, %v1531
  %1565 = vst.msk [vmem:[%s3 + $0x50] sm:$0xff] %vm1554, %v1532
  %1566 = vst.msk [vmem:[%s3 + $0x58] sm:$0xff] %vm1554, %v1533
  %1567 = vst.msk [vmem:[%s3 + $0x60] sm:$0xff] %vm1554, %v1534
  %1568 = vst.msk [vmem:[%s3 + $0x68] sm:$0xff] %vm1554, %v1535
  %1569 = vst.msk [vmem:[%s3 + $0x70] sm:$0xff] %vm1554, %v1536
  %1570 = vst.msk [vmem:[%s3 + $0x78] sm:$0xff] %vm1554, %v1537
  %1571 = vst.msk [vmem:[%s3 + $0x80] sm:$0xff] %vm1554, %v1538
  %1572 = vst.msk [vmem:[%s3 + $0x88] sm:$0xff] %vm1554, %v1539
  %1573 = vst.msk [vmem:[%s3 + $0x90] sm:$0xff] %vm1554, %v1540
  %1574 = vst.msk [vmem:[%s3 + $0x98] sm:$0xff] %vm1554, %v1541
  %1575 = vst.msk [vmem:[%s3 + $0xa0] sm:$0xff] %vm1554, %v1542
  %1576 = vst.msk [vmem:[%s3 + $0xa8] sm:$0xff] %vm1554, %v1543
  %1577 = vst.msk [vmem:[%s3 + $0xb0] sm:$0xff] %vm1554, %v1544
  %1578 = vst.msk [vmem:[%s3 + $0xb8] sm:$0xff] %vm1554, %v1545
  %1579 = vst.msk [vmem:[%s3 + $0xc0] sm:$0xff] %vm1554, %v1546
  %1580 = vst.msk [vmem:[%s3 + $0xc8] sm:$0xff] %vm1554, %v1547
  %1581 = vst.msk [vmem:[%s3 + $0xd0] sm:$0xff] %vm1554, %v1548
  %1582 = vst.msk [vmem:[%s3 + $0xd8] sm:$0xff] %vm1554, %v1549
  %1583 = vst.msk [vmem:[%s3 + $0xe0] sm:$0xff] %vm1554, %v1550
  %1584 = vst.msk [vmem:[%s3 + $0xe8] sm:$0xff] %vm1554, %v1551
  %1585 = vst.msk [vmem:[%s3 + $0xf0] sm:$0xff] %vm1554, %v1552
  %1586 = vst.msk [vmem:[%s3 + $0xf8] sm:$0xff] %vm1554, %v1553
  // Predicated region
  $region14: #{deepid_forward.5} parent=0 // pred_check
    _
  $region15: #{deepid_forward.5} parent=0 // pred_check_branch
    %1588 = sbr.rel (0) target = $region17
  $region16: #{deepid_forward.5} parent=0 // pred_region
    _
  $region17: #{deepid_forward.5} parent=0 // pred_fallthru
    _
  // Predicated region
  $region18: #{deepid_forward.5} parent=0 // pred_check
    _
  $region19: #{deepid_forward.5} parent=0 // pred_check_branch
    %1590 = sbr.rel (0) target = $region21
  $region20: #{deepid_forward.5} parent=0 // pred_region
    _
  $region21: #{deepid_forward.5} parent=0 // pred_fallthru
    _

// kernel: deepid_forward.6
$region0: #{deepid_forward.6}
  #allocation0 [shape = 'u32[]', space=smem, size = 0x4, offset = 0x4, fixed_abs, tag = 'smem constant byte address 0x4 - core index']
  #allocation1 [shape = 'u32[144,128]{1,0:T(1,128)}', space=vmem, size = 0x12000, scoped, tag = 'internal scratch']
  %s0 = inlined_call_operand.vmem [shape: f32[256,360], index: 0, kind: input, shape index: {}]
  %s1 = inlined_call_operand.vmem [shape: f32[360,60], index: 1, kind: input, shape index: {}]
  %s2 = inlined_call_operand.vmem [shape: f32[1,60], index: 2, kind: input, shape index: {}]
  %s3 = inlined_call_operand.vmem [shape: f32[64,60], index: 3, kind: output, shape index: {}]
  %s4 = sld [smem:[#allocation0]]
  $region22: #{deepid_forward.6} parent=0
    _
  %s6 = ssub.s32 1, %s4
  %s7 = scalar_select 0, %s6, %s4
  // Predicated region
  $region2: #{deepid_forward.6} parent=0 // pred_check
    _
  $region3: #{deepid_forward.6} parent=0 // pred_check_branch
    %9 = sbr.rel (0) target = $region5
  $region4: #{deepid_forward.6} parent=0 // pred_region
    _
  $region5: #{deepid_forward.6} parent=0 // pred_fallthru
    _
  // Predicated region
  $region6: #{deepid_forward.6} parent=0 // pred_check
    _
  $region7: #{deepid_forward.6} parent=0 // pred_check_branch
    %11 = sbr.rel (0) target = $region9
  $region8: #{deepid_forward.6} parent=0 // pred_region
    _
  $region9: #{deepid_forward.6} parent=0 // pred_fallthru
    _
  // Predicated region
  $region10: #{deepid_forward.6} parent=0 // pred_check
    _
  $region11: #{deepid_forward.6} parent=0 // pred_check_branch
    %13 = sbr.rel (0) target = $region13
  $region12: #{deepid_forward.6} parent=0 // pred_region
    _
  $region13: #{deepid_forward.6} parent=0 // pred_fallthru
    _
  %v14 = vld [vmem:[%s0] sm:$0xff]
  %v15 = vld [vmem:[%s0 + $0x8] sm:$0xff]
  %v16 = vld [vmem:[%s0 + $0x10] sm:$0xff]
  %v17 = vld [vmem:[%s0 + $0x18] sm:$0xff]
  %v18 = vld [vmem:[%s0 + $0x20] sm:$0xff]
  %v19 = vld [vmem:[%s0 + $0x28] sm:$0xff]
  %v20 = vld [vmem:[%s0 + $0x30] sm:$0xff]
  %v21 = vld [vmem:[%s0 + $0x38] sm:$0xff]
  %v22 = vld [vmem:[%s0 + $0x40] sm:$0xff]
  %v23 = vld [vmem:[%s0 + $0x48] sm:$0xff]
  %v24 = vld [vmem:[%s0 + $0x50] sm:$0xff]
  %v25 = vld [vmem:[%s0 + $0x58] sm:$0xff]
  %v26 = vld [vmem:[%s0 + $0x60] sm:$0xff]
  %v27 = vld [vmem:[%s0 + $0x68] sm:$0xff]
  %v28 = vld [vmem:[%s0 + $0x70] sm:$0xff]
  %v29 = vld [vmem:[%s0 + $0x78] sm:$0xff]
  %v30 = vld [vmem:[%s0 + $0x80] sm:$0xff]
  %v31 = vld [vmem:[%s0 + $0x88] sm:$0xff]
  %v32 = vld [vmem:[%s0 + $0x90] sm:$0xff]
  %v33 = vld [vmem:[%s0 + $0x98] sm:$0xff]
  %v34 = vld [vmem:[%s0 + $0xa0] sm:$0xff]
  %v35 = vld [vmem:[%s0 + $0xa8] sm:$0xff]
  %v36 = vld [vmem:[%s0 + $0xb0] sm:$0xff]
  %v37 = vld [vmem:[%s0 + $0xb8] sm:$0xff]
  %v38 = vld [vmem:[%s0 + $0xc0] sm:$0xff]
  %v39 = vld [vmem:[%s0 + $0xc8] sm:$0xff]
  %v40 = vld [vmem:[%s0 + $0xd0] sm:$0xff]
  %v41 = vld [vmem:[%s0 + $0xd8] sm:$0xff]
  %v42 = vld [vmem:[%s0 + $0xe0] sm:$0xff]
  %v43 = vld [vmem:[%s0 + $0xe8] sm:$0xff]
  %v44 = vld [vmem:[%s0 + $0xf0] sm:$0xff]
  %v45 = vld [vmem:[%s0 + $0xf8] sm:$0xff]
  %v46 = vld [vmem:[%s0 + $0x100] sm:$0xff]
  %v47 = vld [vmem:[%s0 + $0x108] sm:$0xff]
  %v48 = vld [vmem:[%s0 + $0x110] sm:$0xff]
  %v49 = vld [vmem:[%s0 + $0x118] sm:$0xff]
  %v50 = vld [vmem:[%s0 + $0x120] sm:$0xff]
  %v51 = vld [vmem:[%s0 + $0x128] sm:$0xff]
  %v52 = vld [vmem:[%s0 + $0x130] sm:$0xff]
  %v53 = vld [vmem:[%s0 + $0x138] sm:$0xff]
  %v54 = vld [vmem:[%s0 + $0x140] sm:$0xff]
  %v55 = vld [vmem:[%s0 + $0x148] sm:$0xff]
  %v56 = vld [vmem:[%s0 + $0x150] sm:$0xff]
  %v57 = vld [vmem:[%s0 + $0x158] sm:$0xff]
  %v58 = vld [vmem:[%s0 + $0x160] sm:$0xff]
  %v59 = vld [vmem:[%s0 + $0x168] sm:$0xff]
  %v60 = vld [vmem:[%s0 + $0x170] sm:$0xff]
  %v61 = vld [vmem:[%s0 + $0x178] sm:$0xff]
  %v62 = vld [vmem:[%s0 + $0x180] sm:$0xff]
  %v63 = vld [vmem:[%s0 + $0x188] sm:$0xff]
  %v64 = vld [vmem:[%s0 + $0x190] sm:$0xff]
  %v65 = vld [vmem:[%s0 + $0x198] sm:$0xff]
  %v66 = vld [vmem:[%s0 + $0x1a0] sm:$0xff]
  %v67 = vld [vmem:[%s0 + $0x1a8] sm:$0xff]
  %v68 = vld [vmem:[%s0 + $0x1b0] sm:$0xff]
  %v69 = vld [vmem:[%s0 + $0x1b8] sm:$0xff]
  %v70 = vld [vmem:[%s0 + $0x1c0] sm:$0xff]
  %v71 = vld [vmem:[%s0 + $0x1c8] sm:$0xff]
  %v72 = vld [vmem:[%s0 + $0x1d0] sm:$0xff]
  %v73 = vld [vmem:[%s0 + $0x1d8] sm:$0xff]
  %v74 = vld [vmem:[%s0 + $0x1e0] sm:$0xff]
  %v75 = vld [vmem:[%s0 + $0x1e8] sm:$0xff]
  %v76 = vld [vmem:[%s0 + $0x1f0] sm:$0xff]
  %v77 = vld [vmem:[%s0 + $0x1f8] sm:$0xff]
  %v78 = vld [vmem:[%s0 + $0x200] sm:$0xff]
  %v79 = vld [vmem:[%s0 + $0x208] sm:$0xff]
  %v80 = vld [vmem:[%s0 + $0x210] sm:$0xff]
  %v81 = vld [vmem:[%s0 + $0x218] sm:$0xff]
  %v82 = vld [vmem:[%s0 + $0x220] sm:$0xff]
  %v83 = vld [vmem:[%s0 + $0x228] sm:$0xff]
  %v84 = vld [vmem:[%s0 + $0x230] sm:$0xff]
  %v85 = vld [vmem:[%s0 + $0x238] sm:$0xff]
  %v86 = vld [vmem:[%s0 + $0x240] sm:$0xff]
  %v87 = vld [vmem:[%s0 + $0x248] sm:$0xff]
  %v88 = vld [vmem:[%s0 + $0x250] sm:$0xff]
  %v89 = vld [vmem:[%s0 + $0x258] sm:$0xff]
  %v90 = vld [vmem:[%s0 + $0x260] sm:$0xff]
  %v91 = vld [vmem:[%s0 + $0x268] sm:$0xff]
  %v92 = vld [vmem:[%s0 + $0x270] sm:$0xff]
  %v93 = vld [vmem:[%s0 + $0x278] sm:$0xff]
  %v94 = vld [vmem:[%s0 + $0x280] sm:$0xff]
  %v95 = vld [vmem:[%s0 + $0x288] sm:$0xff]
  %v96 = vld [vmem:[%s0 + $0x290] sm:$0xff]
  %v97 = vld [vmem:[%s0 + $0x298] sm:$0xff]
  %v98 = vld [vmem:[%s0 + $0x2a0] sm:$0xff]
  %v99 = vld [vmem:[%s0 + $0x2a8] sm:$0xff]
  %v100 = vld [vmem:[%s0 + $0x2b0] sm:$0xff]
  %v101 = vld [vmem:[%s0 + $0x2b8] sm:$0xff]
  %v102 = vld [vmem:[%s0 + $0x2c0] sm:$0xff]
  %v103 = vld [vmem:[%s0 + $0x2c8] sm:$0xff]
  %v104 = vld [vmem:[%s0 + $0x2d0] sm:$0xff]
  %v105 = vld [vmem:[%s0 + $0x2d8] sm:$0xff]
  %v106 = vld [vmem:[%s0 + $0x2e0] sm:$0xff]
  %v107 = vld [vmem:[%s0 + $0x2e8] sm:$0xff]
  %v108 = vld [vmem:[%s0 + $0x2f0] sm:$0xff]
  %v109 = vld [vmem:[%s0 + $0x2f8] sm:$0xff]
  %v110 = vld [vmem:[%s1] sm:$0xff]
  %v111 = vld [vmem:[%s1 + $0x8] sm:$0xff]
  %v112 = vld [vmem:[%s1 + $0x10] sm:$0xff]
  %v113 = vld [vmem:[%s1 + $0x18] sm:$0xff]
  %v114 = vld [vmem:[%s1 + $0x20] sm:$0xff]
  %v115 = vld [vmem:[%s1 + $0x28] sm:$0xff]
  %v116 = vld [vmem:[%s1 + $0x30] sm:$0xff]
  %v117 = vld [vmem:[%s1 + $0x38] sm:$0xff]
  %v118 = vld [vmem:[%s1 + $0x40] sm:$0xff]
  %v119 = vld [vmem:[%s1 + $0x48] sm:$0xff]
  %v120 = vld [vmem:[%s1 + $0x50] sm:$0xff]
  %v121 = vld [vmem:[%s1 + $0x58] sm:$0xff]
  %v122 = vld [vmem:[%s1 + $0x60] sm:$0xff]
  %v123 = vld [vmem:[%s1 + $0x68] sm:$0xff]
  %v124 = vld [vmem:[%s1 + $0x70] sm:$0xff]
  %v125 = vld [vmem:[%s1 + $0x78] sm:$0xff]
  %v126 = vld [vmem:[%s1 + $0x80] sm:$0xff]
  %v127 = vld [vmem:[%s1 + $0x88] sm:$0xff]
  %v128 = vld [vmem:[%s1 + $0x90] sm:$0xff]
  %v129 = vld [vmem:[%s1 + $0x98] sm:$0xff]
  %v130 = vld [vmem:[%s1 + $0xa0] sm:$0xff]
  %v131 = vld [vmem:[%s1 + $0xa8] sm:$0xff]
  %v132 = vld [vmem:[%s1 + $0xb0] sm:$0xff]
  %v133 = vld [vmem:[%s1 + $0xb8] sm:$0xff]
  %v134 = vld [vmem:[%s1 + $0xc0] sm:$0xff]
  %v135 = vld [vmem:[%s1 + $0xc8] sm:$0xff]
  %v136 = vld [vmem:[%s1 + $0xd0] sm:$0xff]
  %v137 = vld [vmem:[%s1 + $0xd8] sm:$0xff]
  %v138 = vld [vmem:[%s1 + $0xe0] sm:$0xff]
  %v139 = vld [vmem:[%s1 + $0xe8] sm:$0xff]
  %v140 = vld [vmem:[%s1 + $0xf0] sm:$0xff]
  %v141 = vld [vmem:[%s1 + $0xf8] sm:$0xff]
  %v142 = vld [vmem:[%s1 + $0x100] sm:$0xff]
  %v143 = vld [vmem:[%s1 + $0x108] sm:$0xff]
  %v144 = vld [vmem:[%s1 + $0x110] sm:$0xff]
  %v145 = vld [vmem:[%s1 + $0x118] sm:$0xff]
  %v146 = vld [vmem:[%s1 + $0x120] sm:$0xff]
  %v147 = vld [vmem:[%s1 + $0x128] sm:$0xff]
  %v148 = vld [vmem:[%s1 + $0x130] sm:$0xff]
  %v149 = vld [vmem:[%s1 + $0x138] sm:$0xff]
  %v150 = vld [vmem:[%s1 + $0x140] sm:$0xff]
  %v151 = vld [vmem:[%s1 + $0x148] sm:$0xff]
  %v152 = vld [vmem:[%s1 + $0x150] sm:$0xff]
  %v153 = vld [vmem:[%s1 + $0x158] sm:$0xff]
  %v154 = vld [vmem:[%s1 + $0x160] sm:$0xff]
  %vm155 = vcmask 850944
  %v157 = vsel %vm155, %v16, 0
  %v160 = vsel %vm155, %v19, 0
  %v163 = vsel %vm155, %v22, 0
  %v166 = vsel %vm155, %v25, 0
  %v169 = vsel %vm155, %v28, 0
  %v172 = vsel %vm155, %v31, 0
  %v175 = vsel %vm155, %v34, 0
  %v178 = vsel %vm155, %v37, 0
  %v181 = vsel %vm155, %v40, 0
  %v184 = vsel %vm155, %v43, 0
  %v187 = vsel %vm155, %v46, 0
  %v190 = vsel %vm155, %v49, 0
  %v193 = vsel %vm155, %v52, 0
  %v196 = vsel %vm155, %v55, 0
  %v199 = vsel %vm155, %v58, 0
  %v202 = vsel %vm155, %v61, 0
  %v205 = vsel %vm155, %v64, 0
  %v208 = vsel %vm155, %v67, 0
  %v211 = vsel %vm155, %v70, 0
  %v214 = vsel %vm155, %v73, 0
  %v217 = vsel %vm155, %v76, 0
  %v220 = vsel %vm155, %v79, 0
  %v223 = vsel %vm155, %v82, 0
  %v226 = vsel %vm155, %v85, 0
  %v229 = vsel %vm155, %v88, 0
  %v232 = vsel %vm155, %v91, 0
  %v235 = vsel %vm155, %v94, 0
  %v238 = vsel %vm155, %v97, 0
  %v241 = vsel %vm155, %v100, 0
  %v244 = vsel %vm155, %v103, 0
  %v247 = vsel %vm155, %v106, 0
  %v250 = vsel %vm155, %v109, 0
  %252 = vmatprep.subr.mxu0 0.0
  %253 = vmatpush1.msra.mxu0 %v125
  %254 = vmatprep.subr.mxu0 0.0
  %255 = vmatpush1.msra.mxu0 %v124
  %256 = vmatprep.subr.mxu0 0.0
  %257 = vmatpush1.msra.mxu0 %v123
  %258 = vmatprep.subr.mxu0 0.0
  %259 = vmatpush1.msra.mxu0 %v122
  %260 = vmatprep.subr.mxu0 0.0
  %261 = vmatpush1.msra.mxu0 %v121
  %262 = vmatprep.subr.mxu0 0.0
  %263 = vmatpush1.msra.mxu0 %v120
  %264 = vmatprep.subr.mxu0 0.0
  %265 = vmatpush1.msra.mxu0 %v119
  %266 = vmatprep.subr.mxu0 0.0
  %267 = vmatpush1.msra.mxu0 %v118
  %268 = vmatprep.subr.mxu0 0.0
  %269 = vmatpush1.msra.mxu0 %v117
  %270 = vmatprep.subr.mxu0 0.0
  %271 = vmatpush1.msra.mxu0 %v116
  %272 = vmatprep.subr.mxu0 0.0
  %273 = vmatpush1.msra.mxu0 %v115
  %274 = vmatprep.subr.mxu0 0.0
  %275 = vmatpush1.msra.mxu0 %v114
  %276 = vmatprep.subr.mxu0 0.0
  %277 = vmatpush1.msra.mxu0 %v113
  %278 = vmatprep.subr.mxu0 0.0
  %279 = vmatpush1.msra.mxu0 %v112
  %280 = vmatprep.subr.mxu0 0.0
  %281 = vmatpush1.msra.mxu0 %v111
  %282 = vmatprep.subr.mxu0 0.0
  %283 = vmatpush1.msra.mxu0 %v110
  %284 = vmatprep.subr.mxu0 0.0
  %285 = vmatpush2.msra.mxu0 %v141
  %286 = vmatprep.subr.mxu0 0.0
  %287 = vmatpush2.msra.mxu0 %v140
  %288 = vmatprep.subr.mxu0 0.0
  %289 = vmatpush2.msra.mxu0 %v139
  %290 = vmatprep.subr.mxu0 0.0
  %291 = vmatpush2.msra.mxu0 %v138
  %292 = vmatprep.subr.mxu0 0.0
  %293 = vmatpush2.msra.mxu0 %v137
  %294 = vmatprep.subr.mxu0 0.0
  %295 = vmatpush2.msra.mxu0 %v136
  %296 = vmatprep.subr.mxu0 0.0
  %297 = vmatpush2.msra.mxu0 %v135
  %298 = vmatprep.subr.mxu0 0.0
  %299 = vmatpush2.msra.mxu0 %v134
  %300 = vmatprep.subr.mxu0 0.0
  %301 = vmatpush2.msra.mxu0 %v133
  %302 = vmatprep.subr.mxu0 0.0
  %303 = vmatpush2.msra.mxu0 %v132
  %304 = vmatprep.subr.mxu0 0.0
  %305 = vmatpush2.msra.mxu0 %v131
  %306 = vmatprep.subr.mxu0 0.0
  %307 = vmatpush2.msra.mxu0 %v130
  %308 = vmatprep.subr.mxu0 0.0
  %309 = vmatpush2.msra.mxu0 %v129
  %310 = vmatprep.subr.mxu0 0.0
  %311 = vmatpush2.msra.mxu0 %v128
  %312 = vmatprep.subr.mxu0 0.0
  %313 = vmatpush2.msra.mxu0 %v127
  %314 = vmatprep.subr.mxu0 0.0
  %315 = vmatpush2.msra.mxu0 %v126
  %316 = vmatprep.mubr.f32.mxu0 %v15
  %317 = vmatmul.mubr.f32.gmra.mxu0 %v14
  %v318 = vpop.f32.mrf.mxu0
  %v319 = vadd.f32 0.0, %v318
  %v320 = vpop.f32.mrf.mxu0
  %321 = vmatprep.mubr.f32.mxu0 %v18
  %322 = vmatmul.mubr.f32.gmra.mxu0 %v17
  %v323 = vpop.f32.mrf.mxu0
  %v324 = vadd.f32 0.0, %v323
  %v325 = vpop.f32.mrf.mxu0
  %326 = vmatprep.mubr.f32.mxu0 %v21
  %327 = vmatmul.mubr.f32.gmra.mxu0 %v20
  %v328 = vpop.f32.mrf.mxu0
  %v329 = vadd.f32 0.0, %v328
  %v330 = vpop.f32.mrf.mxu0
  %331 = vmatprep.mubr.f32.mxu0 %v24
  %332 = vmatmul.mubr.f32.gmra.mxu0 %v23
  %v333 = vpop.f32.mrf.mxu0
  %v334 = vadd.f32 0.0, %v333
  %v335 = vpop.f32.mrf.mxu0
  %336 = vmatprep.mubr.f32.mxu0 %v27
  %337 = vmatmul.mubr.f32.gmra.mxu0 %v26
  %v338 = vpop.f32.mrf.mxu0
  %v339 = vadd.f32 0.0, %v338
  %v340 = vpop.f32.mrf.mxu0
  %341 = vmatprep.mubr.f32.mxu0 %v30
  %342 = vmatmul.mubr.f32.gmra.mxu0 %v29
  %v343 = vpop.f32.mrf.mxu0
  %v344 = vadd.f32 0.0, %v343
  %v345 = vpop.f32.mrf.mxu0
  %346 = vmatprep.mubr.f32.mxu0 %v33
  %347 = vmatmul.mubr.f32.gmra.mxu0 %v32
  %v348 = vpop.f32.mrf.mxu0
  %v349 = vadd.f32 0.0, %v348
  %v350 = vpop.f32.mrf.mxu0
  %351 = vmatprep.mubr.f32.mxu0 %v36
  %352 = vmatmul.mubr.f32.gmra.mxu0 %v35
  %v353 = vpop.f32.mrf.mxu0
  %v354 = vadd.f32 0.0, %v353
  %v355 = vpop.f32.mrf.mxu0
  %356 = vmatprep.mubr.f32.mxu0 %v39
  %357 = vmatmul.mubr.f32.gmra.mxu0 %v38
  %v358 = vpop.f32.mrf.mxu0
  %v359 = vadd.f32 0.0, %v358
  %v360 = vpop.f32.mrf.mxu0
  %361 = vmatprep.mubr.f32.mxu0 %v42
  %362 = vmatmul.mubr.f32.gmra.mxu0 %v41
  %v363 = vpop.f32.mrf.mxu0
  %v364 = vadd.f32 0.0, %v363
  %v365 = vpop.f32.mrf.mxu0
  %366 = vmatprep.mubr.f32.mxu0 %v45
  %367 = vmatmul.mubr.f32.gmra.mxu0 %v44
  %v368 = vpop.f32.mrf.mxu0
  %v369 = vadd.f32 0.0, %v368
  %v370 = vpop.f32.mrf.mxu0
  %371 = vmatprep.mubr.f32.mxu0 %v48
  %372 = vmatmul.mubr.f32.gmra.mxu0 %v47
  %v373 = vpop.f32.mrf.mxu0
  %v374 = vadd.f32 0.0, %v373
  %v375 = vpop.f32.mrf.mxu0
  %376 = vmatprep.mubr.f32.mxu0 %v51
  %377 = vmatmul.mubr.f32.gmra.mxu0 %v50
  %v378 = vpop.f32.mrf.mxu0
  %v379 = vadd.f32 0.0, %v378
  %v380 = vpop.f32.mrf.mxu0
  %381 = vmatprep.mubr.f32.mxu0 %v54
  %382 = vmatmul.mubr.f32.gmra.mxu0 %v53
  %v383 = vpop.f32.mrf.mxu0
  %v384 = vadd.f32 0.0, %v383
  %v385 = vpop.f32.mrf.mxu0
  %386 = vmatprep.mubr.f32.mxu0 %v57
  %387 = vmatmul.mubr.f32.gmra.mxu0 %v56
  %v388 = vpop.f32.mrf.mxu0
  %v389 = vadd.f32 0.0, %v388
  %v390 = vpop.f32.mrf.mxu0
  %391 = vmatprep.mubr.f32.mxu0 %v60
  %392 = vmatmul.mubr.f32.gmra.mxu0 %v59
  %v393 = vpop.f32.mrf.mxu0
  %v394 = vadd.f32 0.0, %v393
  %v395 = vpop.f32.mrf.mxu0
  %396 = vmatprep.mubr.f32.mxu0 %v63
  %397 = vmatmul.mubr.f32.gmra.mxu0 %v62
  %v398 = vpop.f32.mrf.mxu0
  %v399 = vadd.f32 0.0, %v398
  %v400 = vpop.f32.mrf.mxu0
  %401 = vmatprep.mubr.f32.mxu0 %v66
  %402 = vmatmul.mubr.f32.gmra.mxu0 %v65
  %v403 = vpop.f32.mrf.mxu0
  %v404 = vadd.f32 0.0, %v403
  %v405 = vpop.f32.mrf.mxu0
  %406 = vmatprep.mubr.f32.mxu0 %v69
  %407 = vmatmul.mubr.f32.gmra.mxu0 %v68
  %v408 = vpop.f32.mrf.mxu0
  %v409 = vadd.f32 0.0, %v408
  %v410 = vpop.f32.mrf.mxu0
  %411 = vmatprep.mubr.f32.mxu0 %v72
  %412 = vmatmul.mubr.f32.gmra.mxu0 %v71
  %v413 = vpop.f32.mrf.mxu0
  %v414 = vadd.f32 0.0, %v413
  %v415 = vpop.f32.mrf.mxu0
  %416 = vmatprep.mubr.f32.mxu0 %v75
  %417 = vmatmul.mubr.f32.gmra.mxu0 %v74
  %v418 = vpop.f32.mrf.mxu0
  %v419 = vadd.f32 0.0, %v418
  %v420 = vpop.f32.mrf.mxu0
  %421 = vmatprep.mubr.f32.mxu0 %v78
  %422 = vmatmul.mubr.f32.gmra.mxu0 %v77
  %v423 = vpop.f32.mrf.mxu0
  %v424 = vadd.f32 0.0, %v423
  %v425 = vpop.f32.mrf.mxu0
  %426 = vmatprep.mubr.f32.mxu0 %v81
  %427 = vmatmul.mubr.f32.gmra.mxu0 %v80
  %v428 = vpop.f32.mrf.mxu0
  %v429 = vadd.f32 0.0, %v428
  %v430 = vpop.f32.mrf.mxu0
  %431 = vmatprep.mubr.f32.mxu0 %v84
  %432 = vmatmul.mubr.f32.gmra.mxu0 %v83
  %v433 = vpop.f32.mrf.mxu0
  %v434 = vadd.f32 0.0, %v433
  %v435 = vpop.f32.mrf.mxu0
  %436 = vmatprep.mubr.f32.mxu0 %v87
  %437 = vmatmul.mubr.f32.gmra.mxu0 %v86
  %v438 = vpop.f32.mrf.mxu0
  %v439 = vadd.f32 0.0, %v438
  %v440 = vpop.f32.mrf.mxu0
  %441 = vmatprep.mubr.f32.mxu0 %v90
  %442 = vmatmul.mubr.f32.gmra.mxu0 %v89
  %v443 = vpop.f32.mrf.mxu0
  %v444 = vadd.f32 0.0, %v443
  %v445 = vpop.f32.mrf.mxu0
  %446 = vmatprep.mubr.f32.mxu0 %v93
  %447 = vmatmul.mubr.f32.gmra.mxu0 %v92
  %v448 = vpop.f32.mrf.mxu0
  %v449 = vadd.f32 0.0, %v448
  %v450 = vpop.f32.mrf.mxu0
  %451 = vmatprep.mubr.f32.mxu0 %v96
  %452 = vmatmul.mubr.f32.gmra.mxu0 %v95
  %v453 = vpop.f32.mrf.mxu0
  %v454 = vadd.f32 0.0, %v453
  %v455 = vpop.f32.mrf.mxu0
  %456 = vmatprep.mubr.f32.mxu0 %v99
  %457 = vmatmul.mubr.f32.gmra.mxu0 %v98
  %v458 = vpop.f32.mrf.mxu0
  %v459 = vadd.f32 0.0, %v458
  %v460 = vpop.f32.mrf.mxu0
  %461 = vmatprep.mubr.f32.mxu0 %v102
  %462 = vmatmul.mubr.f32.gmra.mxu0 %v101
  %v463 = vpop.f32.mrf.mxu0
  %v464 = vadd.f32 0.0, %v463
  %v465 = vpop.f32.mrf.mxu0
  %466 = vmatprep.mubr.f32.mxu0 %v105
  %467 = vmatmul.mubr.f32.gmra.mxu0 %v104
  %v468 = vpop.f32.mrf.mxu0
  %v469 = vadd.f32 0.0, %v468
  %v470 = vpop.f32.mrf.mxu0
  %471 = vmatprep.mubr.f32.mxu0 %v108
  %472 = vmatmul.mubr.f32.gmra.mxu0 %v107
  %v473 = vpop.f32.mrf.mxu0
  %v474 = vadd.f32 0.0, %v473
  %v475 = vpop.f32.mrf.mxu0
  %476 = vdwg.mxu0
  %477 = vmatprep.subr.mxu0 0.0
  %478 = vmatpush1.msra.mxu0 0.0
  %479 = vmatprep.subr.mxu0 0.0
  %480 = vmatpush1.msra.mxu0 0.0
  %481 = vmatprep.subr.mxu0 0.0
  %482 = vmatpush1.msra.mxu0 0.0
  %483 = vmatprep.subr.mxu0 0.0
  %484 = vmatpush1.msra.mxu0 %v154
  %485 = vmatprep.subr.mxu0 0.0
  %486 = vmatpush1.msra.mxu0 %v153
  %487 = vmatprep.subr.mxu0 0.0
  %488 = vmatpush1.msra.mxu0 %v152
  %489 = vmatprep.subr.mxu0 0.0
  %490 = vmatpush1.msra.mxu0 %v151
  %491 = vmatprep.subr.mxu0 0.0
  %492 = vmatpush1.msra.mxu0 %v150
  %493 = vmatprep.subr.mxu0 0.0
  %494 = vmatpush1.msra.mxu0 %v149
  %495 = vmatprep.subr.mxu0 0.0
  %496 = vmatpush1.msra.mxu0 %v148
  %497 = vmatprep.subr.mxu0 0.0
  %498 = vmatpush1.msra.mxu0 %v147
  %499 = vmatprep.subr.mxu0 0.0
  %500 = vmatpush1.msra.mxu0 %v146
  %501 = vmatprep.subr.mxu0 0.0
  %502 = vmatpush1.msra.mxu0 %v145
  %503 = vmatprep.subr.mxu0 0.0
  %504 = vmatpush1.msra.mxu0 %v144
  %505 = vmatprep.subr.mxu0 0.0
  %506 = vmatpush1.msra.mxu0 %v143
  %507 = vmatprep.subr.mxu0 0.0
  %508 = vmatpush1.msra.mxu0 %v142
  %509 = vmatprep.subr.mxu0 0.0
  %510 = vmatpush2.msra.mxu0 0.0
  %511 = vmatprep.subr.mxu0 0.0
  %512 = vmatpush2.msra.mxu0 0.0
  %513 = vmatprep.subr.mxu0 0.0
  %514 = vmatpush2.msra.mxu0 0.0
  %515 = vmatprep.subr.mxu0 0.0
  %516 = vmatpush2.msra.mxu0 0.0
  %517 = vmatprep.subr.mxu0 0.0
  %518 = vmatpush2.msra.mxu0 0.0
  %519 = vmatprep.subr.mxu0 0.0
  %520 = vmatpush2.msra.mxu0 0.0
  %521 = vmatprep.subr.mxu0 0.0
  %522 = vmatpush2.msra.mxu0 0.0
  %523 = vmatprep.subr.mxu0 0.0
  %524 = vmatpush2.msra.mxu0 0.0
  %525 = vmatprep.subr.mxu0 0.0
  %526 = vmatpush2.msra.mxu0 0.0
  %527 = vmatprep.subr.mxu0 0.0
  %528 = vmatpush2.msra.mxu0 0.0
  %529 = vmatprep.subr.mxu0 0.0
  %530 = vmatpush2.msra.mxu0 0.0
  %531 = vmatprep.subr.mxu0 0.0
  %532 = vmatpush2.msra.mxu0 0.0
  %533 = vmatprep.subr.mxu0 0.0
  %534 = vmatpush2.msra.mxu0 0.0
  %535 = vmatprep.subr.mxu0 0.0
  %536 = vmatpush2.msra.mxu0 0.0
  %537 = vmatprep.subr.mxu0 0.0
  %538 = vmatpush2.msra.mxu0 0.0
  %539 = vmatprep.subr.mxu0 0.0
  %540 = vmatpush2.msra.mxu0 0.0
  %541 = vmatprep.mubr.f32.mxu0 0.0
  %542 = vmatmul.mubr.f32.gmra.mxu0 %v157
  %v543 = vpop.f32.mrf.mxu0
  %v544 = vadd.f32 %v319, %v543
  %v545 = vpop.f32.mrf.mxu0
  %546 = vmatprep.mubr.f32.mxu0 0.0
  %547 = vmatmul.mubr.f32.gmra.mxu0 %v160
  %v548 = vpop.f32.mrf.mxu0
  %v549 = vadd.f32 %v324, %v548
  %v550 = vpop.f32.mrf.mxu0
  %551 = vmatprep.mubr.f32.mxu0 0.0
  %552 = vmatmul.mubr.f32.gmra.mxu0 %v163
  %v553 = vpop.f32.mrf.mxu0
  %v554 = vadd.f32 %v329, %v553
  %v555 = vpop.f32.mrf.mxu0
  %556 = vmatprep.mubr.f32.mxu0 0.0
  %557 = vmatmul.mubr.f32.gmra.mxu0 %v166
  %v558 = vpop.f32.mrf.mxu0
  %v559 = vadd.f32 %v334, %v558
  %v560 = vpop.f32.mrf.mxu0
  %561 = vmatprep.mubr.f32.mxu0 0.0
  %562 = vmatmul.mubr.f32.gmra.mxu0 %v169
  %v563 = vpop.f32.mrf.mxu0
  %v564 = vadd.f32 %v339, %v563
  %v565 = vpop.f32.mrf.mxu0
  %566 = vmatprep.mubr.f32.mxu0 0.0
  %567 = vmatmul.mubr.f32.gmra.mxu0 %v172
  %v568 = vpop.f32.mrf.mxu0
  %v569 = vadd.f32 %v344, %v568
  %v570 = vpop.f32.mrf.mxu0
  %571 = vmatprep.mubr.f32.mxu0 0.0
  %572 = vmatmul.mubr.f32.gmra.mxu0 %v175
  %v573 = vpop.f32.mrf.mxu0
  %v574 = vadd.f32 %v349, %v573
  %v575 = vpop.f32.mrf.mxu0
  %576 = vmatprep.mubr.f32.mxu0 0.0
  %577 = vmatmul.mubr.f32.gmra.mxu0 %v178
  %v578 = vpop.f32.mrf.mxu0
  %v579 = vadd.f32 %v354, %v578
  %v580 = vpop.f32.mrf.mxu0
  %581 = vmatprep.mubr.f32.mxu0 0.0
  %582 = vmatmul.mubr.f32.gmra.mxu0 %v181
  %v583 = vpop.f32.mrf.mxu0
  %v584 = vadd.f32 %v359, %v583
  %v585 = vpop.f32.mrf.mxu0
  %586 = vmatprep.mubr.f32.mxu0 0.0
  %587 = vmatmul.mubr.f32.gmra.mxu0 %v184
  %v588 = vpop.f32.mrf.mxu0
  %v589 = vadd.f32 %v364, %v588
  %v590 = vpop.f32.mrf.mxu0
  %591 = vmatprep.mubr.f32.mxu0 0.0
  %592 = vmatmul.mubr.f32.gmra.mxu0 %v187
  %v593 = vpop.f32.mrf.mxu0
  %v594 = vadd.f32 %v369, %v593
  %v595 = vpop.f32.mrf.mxu0
  %596 = vmatprep.mubr.f32.mxu0 0.0
  %597 = vmatmul.mubr.f32.gmra.mxu0 %v190
  %v598 = vpop.f32.mrf.mxu0
  %v599 = vadd.f32 %v374, %v598
  %v600 = vpop.f32.mrf.mxu0
  %601 = vmatprep.mubr.f32.mxu0 0.0
  %602 = vmatmul.mubr.f32.gmra.mxu0 %v193
  %v603 = vpop.f32.mrf.mxu0
  %v604 = vadd.f32 %v379, %v603
  %v605 = vpop.f32.mrf.mxu0
  %606 = vmatprep.mubr.f32.mxu0 0.0
  %607 = vmatmul.mubr.f32.gmra.mxu0 %v196
  %v608 = vpop.f32.mrf.mxu0
  %v609 = vadd.f32 %v384, %v608
  %v610 = vpop.f32.mrf.mxu0
  %611 = vmatprep.mubr.f32.mxu0 0.0
  %612 = vmatmul.mubr.f32.gmra.mxu0 %v199
  %v613 = vpop.f32.mrf.mxu0
  %v614 = vadd.f32 %v389, %v613
  %v615 = vpop.f32.mrf.mxu0
  %616 = vmatprep.mubr.f32.mxu0 0.0
  %617 = vmatmul.mubr.f32.gmra.mxu0 %v202
  %v618 = vpop.f32.mrf.mxu0
  %v619 = vadd.f32 %v394, %v618
  %v620 = vpop.f32.mrf.mxu0
  %621 = vmatprep.mubr.f32.mxu0 0.0
  %622 = vmatmul.mubr.f32.gmra.mxu0 %v205
  %v623 = vpop.f32.mrf.mxu0
  %v624 = vadd.f32 %v399, %v623
  %v625 = vpop.f32.mrf.mxu0
  %626 = vmatprep.mubr.f32.mxu0 0.0
  %627 = vmatmul.mubr.f32.gmra.mxu0 %v208
  %v628 = vpop.f32.mrf.mxu0
  %v629 = vadd.f32 %v404, %v628
  %v630 = vpop.f32.mrf.mxu0
  %631 = vmatprep.mubr.f32.mxu0 0.0
  %632 = vmatmul.mubr.f32.gmra.mxu0 %v211
  %v633 = vpop.f32.mrf.mxu0
  %v634 = vadd.f32 %v409, %v633
  %v635 = vpop.f32.mrf.mxu0
  %636 = vmatprep.mubr.f32.mxu0 0.0
  %637 = vmatmul.mubr.f32.gmra.mxu0 %v214
  %v638 = vpop.f32.mrf.mxu0
  %v639 = vadd.f32 %v414, %v638
  %v640 = vpop.f32.mrf.mxu0
  %641 = vmatprep.mubr.f32.mxu0 0.0
  %642 = vmatmul.mubr.f32.gmra.mxu0 %v217
  %v643 = vpop.f32.mrf.mxu0
  %v644 = vadd.f32 %v419, %v643
  %v645 = vpop.f32.mrf.mxu0
  %646 = vmatprep.mubr.f32.mxu0 0.0
  %647 = vmatmul.mubr.f32.gmra.mxu0 %v220
  %v648 = vpop.f32.mrf.mxu0
  %v649 = vadd.f32 %v424, %v648
  %v650 = vpop.f32.mrf.mxu0
  %651 = vmatprep.mubr.f32.mxu0 0.0
  %652 = vmatmul.mubr.f32.gmra.mxu0 %v223
  %v653 = vpop.f32.mrf.mxu0
  %v654 = vadd.f32 %v429, %v653
  %v655 = vpop.f32.mrf.mxu0
  %656 = vmatprep.mubr.f32.mxu0 0.0
  %657 = vmatmul.mubr.f32.gmra.mxu0 %v226
  %v658 = vpop.f32.mrf.mxu0
  %v659 = vadd.f32 %v434, %v658
  %v660 = vpop.f32.mrf.mxu0
  %661 = vmatprep.mubr.f32.mxu0 0.0
  %662 = vmatmul.mubr.f32.gmra.mxu0 %v229
  %v663 = vpop.f32.mrf.mxu0
  %v664 = vadd.f32 %v439, %v663
  %v665 = vpop.f32.mrf.mxu0
  %666 = vmatprep.mubr.f32.mxu0 0.0
  %667 = vmatmul.mubr.f32.gmra.mxu0 %v232
  %v668 = vpop.f32.mrf.mxu0
  %v669 = vadd.f32 %v444, %v668
  %v670 = vpop.f32.mrf.mxu0
  %671 = vmatprep.mubr.f32.mxu0 0.0
  %672 = vmatmul.mubr.f32.gmra.mxu0 %v235
  %v673 = vpop.f32.mrf.mxu0
  %v674 = vadd.f32 %v449, %v673
  %v675 = vpop.f32.mrf.mxu0
  %676 = vmatprep.mubr.f32.mxu0 0.0
  %677 = vmatmul.mubr.f32.gmra.mxu0 %v238
  %v678 = vpop.f32.mrf.mxu0
  %v679 = vadd.f32 %v454, %v678
  %v680 = vpop.f32.mrf.mxu0
  %681 = vmatprep.mubr.f32.mxu0 0.0
  %682 = vmatmul.mubr.f32.gmra.mxu0 %v241
  %v683 = vpop.f32.mrf.mxu0
  %v684 = vadd.f32 %v459, %v683
  %v685 = vpop.f32.mrf.mxu0
  %686 = vmatprep.mubr.f32.mxu0 0.0
  %687 = vmatmul.mubr.f32.gmra.mxu0 %v244
  %v688 = vpop.f32.mrf.mxu0
  %v689 = vadd.f32 %v464, %v688
  %v690 = vpop.f32.mrf.mxu0
  %691 = vmatprep.mubr.f32.mxu0 0.0
  %692 = vmatmul.mubr.f32.gmra.mxu0 %v247
  %v693 = vpop.f32.mrf.mxu0
  %v694 = vadd.f32 %v469, %v693
  %v695 = vpop.f32.mrf.mxu0
  %696 = vmatprep.mubr.f32.mxu0 0.0
  %697 = vmatmul.mubr.f32.gmra.mxu0 %v250
  %v698 = vpop.f32.mrf.mxu0
  %v699 = vadd.f32 %v474, %v698
  %v700 = vpop.f32.mrf.mxu0
  %701 = vdwg.mxu0
  %v702 = vmax.f32 %v544, %v584
  %v703 = vmax.f32 %v549, %v589
  %v704 = vmax.f32 %v554, %v594
  %v705 = vmax.f32 %v559, %v599
  %v706 = vmax.f32 %v564, %v604
  %v707 = vmax.f32 %v569, %v609
  %v708 = vmax.f32 %v574, %v614
  %v709 = vmax.f32 %v579, %v619
  %v710 = vmax.f32 %v624, %v664
  %v711 = vmax.f32 %v629, %v669
  %v712 = vmax.f32 %v634, %v674
  %v713 = vmax.f32 %v639, %v679
  %v714 = vmax.f32 %v644, %v684
  %v715 = vmax.f32 %v649, %v689
  %v716 = vmax.f32 %v654, %v694
  %v717 = vmax.f32 %v659, %v699
  %v718 = vmax.f32 %v702, %v710
  %v719 = vmax.f32 %v703, %v711
  %v720 = vmax.f32 %v704, %v712
  %v721 = vmax.f32 %v705, %v713
  %v722 = vmax.f32 %v706, %v714
  %v723 = vmax.f32 %v707, %v715
  %v724 = vmax.f32 %v708, %v716
  %v725 = vmax.f32 %v709, %v717
  %v726 = vld [vmem:[%s2] sm:$0x1]
  %v728 = vlaneseq
  %v729 = vshrl.u32 %v728, 7
  %v730 = vsub.s32 0, %v729
  %v731 = vrot.slane %v726, %v730
  %v733 = vadd.f32 %v718, %v731
  %v734 = vadd.f32 %v719, %v731
  %v735 = vadd.f32 %v720, %v731
  %v736 = vadd.f32 %v721, %v731
  %v737 = vadd.f32 %v722, %v731
  %v738 = vadd.f32 %v723, %v731
  %v739 = vadd.f32 %v724, %v731
  %v740 = vadd.f32 %v725, %v731
  %v741 = vmax.f32 %v733, 0.0
  %v742 = vmax.f32 %v734, 0.0
  %v743 = vmax.f32 %v735, 0.0
  %v744 = vmax.f32 %v736, 0.0
  %v745 = vmax.f32 %v737, 0.0
  %v746 = vmax.f32 %v738, 0.0
  %v747 = vmax.f32 %v739, 0.0
  %v748 = vmax.f32 %v740, 0.0
  %vm749 = vcmask 490496
  %750 = vst.msk [vmem:[%s3] sm:$0xff] %vm749, %v741
  %751 = vst.msk [vmem:[%s3 + $0x8] sm:$0xff] %vm749, %v742
  %752 = vst.msk [vmem:[%s3 + $0x10] sm:$0xff] %vm749, %v743
  %753 = vst.msk [vmem:[%s3 + $0x18] sm:$0xff] %vm749, %v744
  %754 = vst.msk [vmem:[%s3 + $0x20] sm:$0xff] %vm749, %v745
  %755 = vst.msk [vmem:[%s3 + $0x28] sm:$0xff] %vm749, %v746
  %756 = vst.msk [vmem:[%s3 + $0x30] sm:$0xff] %vm749, %v747
  %757 = vst.msk [vmem:[%s3 + $0x38] sm:$0xff] %vm749, %v748
  // Predicated region
  $region14: #{deepid_forward.6} parent=0 // pred_check
    _
  $region15: #{deepid_forward.6} parent=0 // pred_check_branch
    %759 = sbr.rel (0) target = $region17
  $region16: #{deepid_forward.6} parent=0 // pred_region
    _
  $region17: #{deepid_forward.6} parent=0 // pred_fallthru
    _
  // Predicated region
  $region18: #{deepid_forward.6} parent=0 // pred_check
    _
  $region19: #{deepid_forward.6} parent=0 // pred_check_branch
    %761 = sbr.rel (0) target = $region21
  $region20: #{deepid_forward.6} parent=0 // pred_region
    _
  $region21: #{deepid_forward.6} parent=0 // pred_fallthru
    _

// kernel: deepid_forward.7
$region0: #{deepid_forward.7}
  #allocation0 [shape = 'u32[]', space=smem, size = 0x4, offset = 0x4, fixed_abs, tag = 'smem constant byte address 0x4 - core index']
  #allocation1 [shape = 'u32[144,128]{1,0:T(1,128)}', space=vmem, size = 0x12000, scoped, tag = 'internal scratch']
  %s0 = inlined_call_operand.vmem [shape: f32[96,240], index: 0, kind: input, shape index: {}]
  %s1 = inlined_call_operand.vmem [shape: f32[8,1200], index: 1, kind: input, shape index: {}]
  %s2 = inlined_call_operand.vmem [shape: f32[240,80], index: 2, kind: input, shape index: {}]
  %s3 = inlined_call_operand.vmem [shape: f32[1,80], index: 3, kind: input, shape index: {}]
  %s4 = inlined_call_operand.vmem [shape: f32[1200,160], index: 4, kind: input, shape index: {}]
  %s5 = inlined_call_operand.vmem [shape: f32[960,160], index: 5, kind: input, shape index: {}]
  %s6 = inlined_call_operand.vmem [shape: f32[1,160], index: 6, kind: input, shape index: {}]
  %s7 = inlined_call_operand.vmem [shape: f32[160,1408], index: 7, kind: input, shape index: {}]
  %s8 = inlined_call_operand.vmem [shape: f32[1,1408], index: 8, kind: input, shape index: {}]
  %s9 = inlined_call_operand.vmem [shape: f32[8,1408], index: 9, kind: output, shape index: {}]
  %s10 = sld [smem:[#allocation0]]
  $region46: #{deepid_forward.7} parent=0
    _
  %s12 = ssub.s32 1, %s10
  %s13 = scalar_select 0, %s12, %s10
  // Predicated region
  $region2: #{deepid_forward.7} parent=0 // pred_check
    _
  $region3: #{deepid_forward.7} parent=0 // pred_check_branch
    %15 = sbr.rel (0) target = $region5
  $region4: #{deepid_forward.7} parent=0 // pred_region
    _
  $region5: #{deepid_forward.7} parent=0 // pred_fallthru
    _
  // Predicated region
  $region6: #{deepid_forward.7} parent=0 // pred_check
    _
  $region7: #{deepid_forward.7} parent=0 // pred_check_branch
    %17 = sbr.rel (0) target = $region9
  $region8: #{deepid_forward.7} parent=0 // pred_region
    _
  $region9: #{deepid_forward.7} parent=0 // pred_fallthru
    _
  // Predicated region
  $region10: #{deepid_forward.7} parent=0 // pred_check
    _
  $region11: #{deepid_forward.7} parent=0 // pred_check_branch
    %19 = sbr.rel (0) target = $region13
  $region12: #{deepid_forward.7} parent=0 // pred_region
    _
  $region13: #{deepid_forward.7} parent=0 // pred_fallthru
    _
  // Predicated region
  $region14: #{deepid_forward.7} parent=0 // pred_check
    _
  $region15: #{deepid_forward.7} parent=0 // pred_check_branch
    %21 = sbr.rel (0) target = $region17
  $region16: #{deepid_forward.7} parent=0 // pred_region
    _
  $region17: #{deepid_forward.7} parent=0 // pred_fallthru
    _
  // Predicated region
  $region18: #{deepid_forward.7} parent=0 // pred_check
    _
  $region19: #{deepid_forward.7} parent=0 // pred_check_branch
    %23 = sbr.rel (0) target = $region21
  $region20: #{deepid_forward.7} parent=0 // pred_region
    _
  $region21: #{deepid_forward.7} parent=0 // pred_fallthru
    _
  // Predicated region
  $region22: #{deepid_forward.7} parent=0 // pred_check
    _
  $region23: #{deepid_forward.7} parent=0 // pred_check_branch
    %25 = sbr.rel (0) target = $region25
  $region24: #{deepid_forward.7} parent=0 // pred_region
    _
  $region25: #{deepid_forward.7} parent=0 // pred_fallthru
    _
  // Predicated region
  $region26: #{deepid_forward.7} parent=0 // pred_check
    _
  $region27: #{deepid_forward.7} parent=0 // pred_check_branch
    %27 = sbr.rel (0) target = $region29
  $region28: #{deepid_forward.7} parent=0 // pred_region
    _
  $region29: #{deepid_forward.7} parent=0 // pred_fallthru
    _
  // Predicated region
  $region30: #{deepid_forward.7} parent=0 // pred_check
    _
  $region31: #{deepid_forward.7} parent=0 // pred_check_branch
    %29 = sbr.rel (0) target = $region33
  $region32: #{deepid_forward.7} parent=0 // pred_region
    _
  $region33: #{deepid_forward.7} parent=0 // pred_fallthru
    _
  // Predicated region
  $region34: #{deepid_forward.7} parent=0 // pred_check
    _
  $region35: #{deepid_forward.7} parent=0 // pred_check_branch
    %31 = sbr.rel (0) target = $region37
  $region36: #{deepid_forward.7} parent=0 // pred_region
    _
  $region37: #{deepid_forward.7} parent=0 // pred_fallthru
    _
  %v32 = vld [vmem:[%s0] sm:$0xff]
  %v33 = vld [vmem:[%s0 + $0x8] sm:$0xff]
  %v34 = vld [vmem:[%s0 + $0x10] sm:$0xff]
  %v35 = vld [vmem:[%s0 + $0x18] sm:$0xff]
  %v36 = vld [vmem:[%s0 + $0x20] sm:$0xff]
  %v37 = vld [vmem:[%s0 + $0x28] sm:$0xff]
  %v38 = vld [vmem:[%s0 + $0x30] sm:$0xff]
  %v39 = vld [vmem:[%s0 + $0x38] sm:$0xff]
  %v40 = vld [vmem:[%s0 + $0x40] sm:$0xff]
  %v41 = vld [vmem:[%s0 + $0x48] sm:$0xff]
  %v42 = vld [vmem:[%s0 + $0x50] sm:$0xff]
  %v43 = vld [vmem:[%s0 + $0x58] sm:$0xff]
  %v44 = vld [vmem:[%s0 + $0x60] sm:$0xff]
  %v45 = vld [vmem:[%s0 + $0x68] sm:$0xff]
  %v46 = vld [vmem:[%s0 + $0x70] sm:$0xff]
  %v47 = vld [vmem:[%s0 + $0x78] sm:$0xff]
  %v48 = vld [vmem:[%s0 + $0x80] sm:$0xff]
  %v49 = vld [vmem:[%s0 + $0x88] sm:$0xff]
  %v50 = vld [vmem:[%s0 + $0x90] sm:$0xff]
  %v51 = vld [vmem:[%s0 + $0x98] sm:$0xff]
  %v52 = vld [vmem:[%s0 + $0xa0] sm:$0xff]
  %v53 = vld [vmem:[%s0 + $0xa8] sm:$0xff]
  %v54 = vld [vmem:[%s0 + $0xb0] sm:$0xff]
  %v55 = vld [vmem:[%s0 + $0xb8] sm:$0xff]
  %v56 = vld [vmem:[%s2] sm:$0xff]
  %v57 = vld [vmem:[%s2 + $0x8] sm:$0xff]
  %v58 = vld [vmem:[%s2 + $0x10] sm:$0xff]
  %v59 = vld [vmem:[%s2 + $0x18] sm:$0xff]
  %v60 = vld [vmem:[%s2 + $0x20] sm:$0xff]
  %v61 = vld [vmem:[%s2 + $0x28] sm:$0xff]
  %v62 = vld [vmem:[%s2 + $0x30] sm:$0xff]
  %v63 = vld [vmem:[%s2 + $0x38] sm:$0xff]
  %v64 = vld [vmem:[%s2 + $0x40] sm:$0xff]
  %v65 = vld [vmem:[%s2 + $0x48] sm:$0xff]
  %v66 = vld [vmem:[%s2 + $0x50] sm:$0xff]
  %v67 = vld [vmem:[%s2 + $0x58] sm:$0xff]
  %v68 = vld [vmem:[%s2 + $0x60] sm:$0xff]
  %v69 = vld [vmem:[%s2 + $0x68] sm:$0xff]
  %v70 = vld [vmem:[%s2 + $0x70] sm:$0xff]
  %v71 = vld [vmem:[%s2 + $0x78] sm:$0xff]
  %v72 = vld [vmem:[%s2 + $0x80] sm:$0xff]
  %v73 = vld [vmem:[%s2 + $0x88] sm:$0xff]
  %v74 = vld [vmem:[%s2 + $0x90] sm:$0xff]
  %v75 = vld [vmem:[%s2 + $0x98] sm:$0xff]
  %v76 = vld [vmem:[%s2 + $0xa0] sm:$0xff]
  %v77 = vld [vmem:[%s2 + $0xa8] sm:$0xff]
  %v78 = vld [vmem:[%s2 + $0xb0] sm:$0xff]
  %v79 = vld [vmem:[%s2 + $0xb8] sm:$0xff]
  %v80 = vld [vmem:[%s2 + $0xc0] sm:$0xff]
  %v81 = vld [vmem:[%s2 + $0xc8] sm:$0xff]
  %v82 = vld [vmem:[%s2 + $0xd0] sm:$0xff]
  %v83 = vld [vmem:[%s2 + $0xd8] sm:$0xff]
  %v84 = vld [vmem:[%s2 + $0xe0] sm:$0xff]
  %v85 = vld [vmem:[%s2 + $0xe8] sm:$0xff]
  %v86 = vld [vmem:[%s3] sm:$0x1]
  %v88 = vlaneseq
  %v89 = vshrl.u32 %v88, 7
  %v90 = vsub.s32 0, %v89
  %v91 = vrot.slane %v86, %v90
  %vm93 = vcmask 916480
  %v95 = vsel %vm93, %v33, 0
  %v98 = vsel %vm93, %v35, 0
  %v101 = vsel %vm93, %v37, 0
  %v104 = vsel %vm93, %v39, 0
  %v107 = vsel %vm93, %v41, 0
  %v110 = vsel %vm93, %v43, 0
  %v113 = vsel %vm93, %v45, 0
  %v116 = vsel %vm93, %v47, 0
  %v119 = vsel %vm93, %v49, 0
  %v122 = vsel %vm93, %v51, 0
  %v125 = vsel %vm93, %v53, 0
  %v128 = vsel %vm93, %v55, 0
  %130 = vmatprep.subr.mxu0 0.0
  %131 = vmatpush1.msra.mxu0 %v71
  %132 = vmatprep.subr.mxu0 0.0
  %133 = vmatpush1.msra.mxu0 %v70
  %134 = vmatprep.subr.mxu0 0.0
  %135 = vmatpush1.msra.mxu0 %v69
  %136 = vmatprep.subr.mxu0 0.0
  %137 = vmatpush1.msra.mxu0 %v68
  %138 = vmatprep.subr.mxu0 0.0
  %139 = vmatpush1.msra.mxu0 %v67
  %140 = vmatprep.subr.mxu0 0.0
  %141 = vmatpush1.msra.mxu0 %v66
  %142 = vmatprep.subr.mxu0 0.0
  %143 = vmatpush1.msra.mxu0 %v65
  %144 = vmatprep.subr.mxu0 0.0
  %145 = vmatpush1.msra.mxu0 %v64
  %146 = vmatprep.subr.mxu0 0.0
  %147 = vmatpush1.msra.mxu0 %v63
  %148 = vmatprep.subr.mxu0 0.0
  %149 = vmatpush1.msra.mxu0 %v62
  %150 = vmatprep.subr.mxu0 0.0
  %151 = vmatpush1.msra.mxu0 %v61
  %152 = vmatprep.subr.mxu0 0.0
  %153 = vmatpush1.msra.mxu0 %v60
  %154 = vmatprep.subr.mxu0 0.0
  %155 = vmatpush1.msra.mxu0 %v59
  %156 = vmatprep.subr.mxu0 0.0
  %157 = vmatpush1.msra.mxu0 %v58
  %158 = vmatprep.subr.mxu0 0.0
  %159 = vmatpush1.msra.mxu0 %v57
  %160 = vmatprep.subr.mxu0 0.0
  %161 = vmatpush1.msra.mxu0 %v56
  %162 = vmatprep.subr.mxu0 0.0
  %163 = vmatpush2.msra.mxu0 0.0
  %164 = vmatprep.subr.mxu0 0.0
  %165 = vmatpush2.msra.mxu0 0.0
  %166 = vmatprep.subr.mxu0 0.0
  %167 = vmatpush2.msra.mxu0 %v85
  %168 = vmatprep.subr.mxu0 0.0
  %169 = vmatpush2.msra.mxu0 %v84
  %170 = vmatprep.subr.mxu0 0.0
  %171 = vmatpush2.msra.mxu0 %v83
  %172 = vmatprep.subr.mxu0 0.0
  %173 = vmatpush2.msra.mxu0 %v82
  %174 = vmatprep.subr.mxu0 0.0
  %175 = vmatpush2.msra.mxu0 %v81
  %176 = vmatprep.subr.mxu0 0.0
  %177 = vmatpush2.msra.mxu0 %v80
  %178 = vmatprep.subr.mxu0 0.0
  %179 = vmatpush2.msra.mxu0 %v79
  %180 = vmatprep.subr.mxu0 0.0
  %181 = vmatpush2.msra.mxu0 %v78
  %182 = vmatprep.subr.mxu0 0.0
  %183 = vmatpush2.msra.mxu0 %v77
  %184 = vmatprep.subr.mxu0 0.0
  %185 = vmatpush2.msra.mxu0 %v76
  %186 = vmatprep.subr.mxu0 0.0
  %187 = vmatpush2.msra.mxu0 %v75
  %188 = vmatprep.subr.mxu0 0.0
  %189 = vmatpush2.msra.mxu0 %v74
  %190 = vmatprep.subr.mxu0 0.0
  %191 = vmatpush2.msra.mxu0 %v73
  %192 = vmatprep.subr.mxu0 0.0
  %193 = vmatpush2.msra.mxu0 %v72
  %194 = vmatprep.mubr.f32.mxu0 %v95
  %195 = vmatmul.mubr.f32.gmra.mxu0 %v32
  %v196 = vpop.f32.mrf.mxu0
  %v197 = vadd.f32 %v91, %v196
  %v198 = vpop.f32.mrf.mxu0
  %199 = vmatprep.mubr.f32.mxu0 %v98
  %200 = vmatmul.mubr.f32.gmra.mxu0 %v34
  %v201 = vpop.f32.mrf.mxu0
  %v202 = vadd.f32 %v91, %v201
  %v203 = vpop.f32.mrf.mxu0
  %204 = vmatprep.mubr.f32.mxu0 %v101
  %205 = vmatmul.mubr.f32.gmra.mxu0 %v36
  %v206 = vpop.f32.mrf.mxu0
  %v207 = vadd.f32 %v91, %v206
  %v208 = vpop.f32.mrf.mxu0
  %209 = vmatprep.mubr.f32.mxu0 %v104
  %210 = vmatmul.mubr.f32.gmra.mxu0 %v38
  %v211 = vpop.f32.mrf.mxu0
  %v212 = vadd.f32 %v91, %v211
  %v213 = vpop.f32.mrf.mxu0
  %214 = vmatprep.mubr.f32.mxu0 %v107
  %215 = vmatmul.mubr.f32.gmra.mxu0 %v40
  %v216 = vpop.f32.mrf.mxu0
  %v217 = vadd.f32 %v91, %v216
  %v218 = vpop.f32.mrf.mxu0
  %219 = vmatprep.mubr.f32.mxu0 %v110
  %220 = vmatmul.mubr.f32.gmra.mxu0 %v42
  %v221 = vpop.f32.mrf.mxu0
  %v222 = vadd.f32 %v91, %v221
  %v223 = vpop.f32.mrf.mxu0
  %224 = vmatprep.mubr.f32.mxu0 %v113
  %225 = vmatmul.mubr.f32.gmra.mxu0 %v44
  %v226 = vpop.f32.mrf.mxu0
  %v227 = vadd.f32 %v91, %v226
  %v228 = vpop.f32.mrf.mxu0
  %229 = vmatprep.mubr.f32.mxu0 %v116
  %230 = vmatmul.mubr.f32.gmra.mxu0 %v46
  %v231 = vpop.f32.mrf.mxu0
  %v232 = vadd.f32 %v91, %v231
  %v233 = vpop.f32.mrf.mxu0
  %234 = vmatprep.mubr.f32.mxu0 %v119
  %235 = vmatmul.mubr.f32.gmra.mxu0 %v48
  %v236 = vpop.f32.mrf.mxu0
  %v237 = vadd.f32 %v91, %v236
  %v238 = vpop.f32.mrf.mxu0
  %239 = vmatprep.mubr.f32.mxu0 %v122
  %240 = vmatmul.mubr.f32.gmra.mxu0 %v50
  %v241 = vpop.f32.mrf.mxu0
  %v242 = vadd.f32 %v91, %v241
  %v243 = vpop.f32.mrf.mxu0
  %244 = vmatprep.mubr.f32.mxu0 %v125
  %245 = vmatmul.mubr.f32.gmra.mxu0 %v52
  %v246 = vpop.f32.mrf.mxu0
  %v247 = vadd.f32 %v91, %v246
  %v248 = vpop.f32.mrf.mxu0
  %249 = vmatprep.mubr.f32.mxu0 %v128
  %250 = vmatmul.mubr.f32.gmra.mxu0 %v54
  %v251 = vpop.f32.mrf.mxu0
  %v252 = vadd.f32 %v91, %v251
  %v253 = vpop.f32.mrf.mxu0
  %254 = vdwg.mxu0
  %v255 = vmax.f32 %v197, 0.0
  %v256 = vmax.f32 %v202, 0.0
  %v257 = vmax.f32 %v207, 0.0
  %v258 = vmax.f32 %v212, 0.0
  %v259 = vmax.f32 %v217, 0.0
  %v260 = vmax.f32 %v222, 0.0
  %v261 = vmax.f32 %v227, 0.0
  %v262 = vmax.f32 %v232, 0.0
  %v263 = vmax.f32 %v237, 0.0
  %v264 = vmax.f32 %v242, 0.0
  %v265 = vmax.f32 %v247, 0.0
  %v266 = vmax.f32 %v252, 0.0
  %v267 = vld [vmem:[%s1] sm:$0xff]
  %v268 = vld [vmem:[%s1 + $0x8] sm:$0xff]
  %v269 = vld [vmem:[%s1 + $0x10] sm:$0xff]
  %v270 = vld [vmem:[%s1 + $0x18] sm:$0xff]
  %v271 = vld [vmem:[%s1 + $0x20] sm:$0xff]
  %v272 = vld [vmem:[%s1 + $0x28] sm:$0xff]
  %v273 = vld [vmem:[%s1 + $0x30] sm:$0xff]
  %v274 = vld [vmem:[%s1 + $0x38] sm:$0xff]
  %v275 = vld [vmem:[%s1 + $0x40] sm:$0xff]
  %v276 = vld [vmem:[%s1 + $0x48] sm:$0xff]
  %v277 = vld [vmem:[%s4] sm:$0xff]
  %v278 = vld [vmem:[%s4 + $0x8] sm:$0xff]
  %v279 = vld [vmem:[%s4 + $0x10] sm:$0xff]
  %v280 = vld [vmem:[%s4 + $0x18] sm:$0xff]
  %v281 = vld [vmem:[%s4 + $0x20] sm:$0xff]
  %v282 = vld [vmem:[%s4 + $0x28] sm:$0xff]
  %v283 = vld [vmem:[%s4 + $0x30] sm:$0xff]
  %v284 = vld [vmem:[%s4 + $0x38] sm:$0xff]
  %v285 = vld [vmem:[%s4 + $0x40] sm:$0xff]
  %v286 = vld [vmem:[%s4 + $0x48] sm:$0xff]
  %v287 = vld [vmem:[%s4 + $0x50] sm:$0xff]
  %v288 = vld [vmem:[%s4 + $0x58] sm:$0xff]
  %v289 = vld [vmem:[%s4 + $0x60] sm:$0xff]
  %v290 = vld [vmem:[%s4 + $0x68] sm:$0xff]
  %v291 = vld [vmem:[%s4 + $0x70] sm:$0xff]
  %v292 = vld [vmem:[%s4 + $0x78] sm:$0xff]
  %v293 = vld [vmem:[%s4 + $0x80] sm:$0xff]
  %v294 = vld [vmem:[%s4 + $0x88] sm:$0xff]
  %v295 = vld [vmem:[%s4 + $0x90] sm:$0xff]
  %v296 = vld [vmem:[%s4 + $0x98] sm:$0xff]
  %v297 = vld [vmem:[%s4 + $0xa0] sm:$0xff]
  %v298 = vld [vmem:[%s4 + $0xa8] sm:$0xff]
  %v299 = vld [vmem:[%s4 + $0xb0] sm:$0xff]
  %v300 = vld [vmem:[%s4 + $0xb8] sm:$0xff]
  %v301 = vld [vmem:[%s4 + $0xc0] sm:$0xff]
  %v302 = vld [vmem:[%s4 + $0xc8] sm:$0xff]
  %v303 = vld [vmem:[%s4 + $0xd0] sm:$0xff]
  %v304 = vld [vmem:[%s4 + $0xd8] sm:$0xff]
  %v305 = vld [vmem:[%s4 + $0xe0] sm:$0xff]
  %v306 = vld [vmem:[%s4 + $0xe8] sm:$0xff]
  %v307 = vld [vmem:[%s4 + $0xf0] sm:$0xff]
  %v308 = vld [vmem:[%s4 + $0xf8] sm:$0xff]
  %v309 = vld [vmem:[%s4 + $0x100] sm:$0xff]
  %v310 = vld [vmem:[%s4 + $0x108] sm:$0xff]
  %v311 = vld [vmem:[%s4 + $0x110] sm:$0xff]
  %v312 = vld [vmem:[%s4 + $0x118] sm:$0xff]
  %v313 = vld [vmem:[%s4 + $0x120] sm:$0xff]
  %v314 = vld [vmem:[%s4 + $0x128] sm:$0xff]
  %v315 = vld [vmem:[%s4 + $0x130] sm:$0xff]
  %v316 = vld [vmem:[%s4 + $0x138] sm:$0xff]
  %v317 = vld [vmem:[%s4 + $0x140] sm:$0xff]
  %v318 = vld [vmem:[%s4 + $0x148] sm:$0xff]
  %v319 = vld [vmem:[%s4 + $0x150] sm:$0xff]
  %v320 = vld [vmem:[%s4 + $0x158] sm:$0xff]
  %v321 = vld [vmem:[%s4 + $0x160] sm:$0xff]
  %v322 = vld [vmem:[%s4 + $0x168] sm:$0xff]
  %v323 = vld [vmem:[%s4 + $0x170] sm:$0xff]
  %v324 = vld [vmem:[%s4 + $0x178] sm:$0xff]
  %v325 = vld [vmem:[%s4 + $0x180] sm:$0xff]
  %v326 = vld [vmem:[%s4 + $0x188] sm:$0xff]
  %v327 = vld [vmem:[%s4 + $0x190] sm:$0xff]
  %v328 = vld [vmem:[%s4 + $0x198] sm:$0xff]
  %v329 = vld [vmem:[%s4 + $0x1a0] sm:$0xff]
  %v330 = vld [vmem:[%s4 + $0x1a8] sm:$0xff]
  %v331 = vld [vmem:[%s4 + $0x1b0] sm:$0xff]
  %v332 = vld [vmem:[%s4 + $0x1b8] sm:$0xff]
  %v333 = vld [vmem:[%s4 + $0x1c0] sm:$0xff]
  %v334 = vld [vmem:[%s4 + $0x1c8] sm:$0xff]
  %v335 = vld [vmem:[%s4 + $0x1d0] sm:$0xff]
  %v336 = vld [vmem:[%s4 + $0x1d8] sm:$0xff]
  %v337 = vld [vmem:[%s4 + $0x1e0] sm:$0xff]
  %v338 = vld [vmem:[%s4 + $0x1e8] sm:$0xff]
  %v339 = vld [vmem:[%s4 + $0x1f0] sm:$0xff]
  %v340 = vld [vmem:[%s4 + $0x1f8] sm:$0xff]
  %v341 = vld [vmem:[%s4 + $0x200] sm:$0xff]
  %v342 = vld [vmem:[%s4 + $0x208] sm:$0xff]
  %v343 = vld [vmem:[%s4 + $0x210] sm:$0xff]
  %v344 = vld [vmem:[%s4 + $0x218] sm:$0xff]
  %v345 = vld [vmem:[%s4 + $0x220] sm:$0xff]
  %v346 = vld [vmem:[%s4 + $0x228] sm:$0xff]
  %v347 = vld [vmem:[%s4 + $0x230] sm:$0xff]
  %v348 = vld [vmem:[%s4 + $0x238] sm:$0xff]
  %v349 = vld [vmem:[%s4 + $0x240] sm:$0xff]
  %v350 = vld [vmem:[%s4 + $0x248] sm:$0xff]
  %v351 = vld [vmem:[%s4 + $0x250] sm:$0xff]
  %v352 = vld [vmem:[%s4 + $0x258] sm:$0xff]
  %v353 = vld [vmem:[%s4 + $0x260] sm:$0xff]
  %v354 = vld [vmem:[%s4 + $0x268] sm:$0xff]
  %v355 = vld [vmem:[%s4 + $0x270] sm:$0xff]
  %v356 = vld [vmem:[%s4 + $0x278] sm:$0xff]
  %v357 = vld [vmem:[%s4 + $0x280] sm:$0xff]
  %v358 = vld [vmem:[%s4 + $0x288] sm:$0xff]
  %v359 = vld [vmem:[%s4 + $0x290] sm:$0xff]
  %v360 = vld [vmem:[%s4 + $0x298] sm:$0xff]
  %v361 = vld [vmem:[%s4 + $0x2a0] sm:$0xff]
  %v362 = vld [vmem:[%s4 + $0x2a8] sm:$0xff]
  %v363 = vld [vmem:[%s4 + $0x2b0] sm:$0xff]
  %v364 = vld [vmem:[%s4 + $0x2b8] sm:$0xff]
  %v365 = vld [vmem:[%s4 + $0x2c0] sm:$0xff]
  %v366 = vld [vmem:[%s4 + $0x2c8] sm:$0xff]
  %v367 = vld [vmem:[%s4 + $0x2d0] sm:$0xff]
  %v368 = vld [vmem:[%s4 + $0x2d8] sm:$0xff]
  %v369 = vld [vmem:[%s4 + $0x2e0] sm:$0xff]
  %v370 = vld [vmem:[%s4 + $0x2e8] sm:$0xff]
  %v371 = vld [vmem:[%s4 + $0x2f0] sm:$0xff]
  %v372 = vld [vmem:[%s4 + $0x2f8] sm:$0xff]
  %v373 = vld [vmem:[%s4 + $0x300] sm:$0xff]
  %v374 = vld [vmem:[%s4 + $0x308] sm:$0xff]
  %v375 = vld [vmem:[%s4 + $0x310] sm:$0xff]
  %v376 = vld [vmem:[%s4 + $0x318] sm:$0xff]
  %v377 = vld [vmem:[%s4 + $0x320] sm:$0xff]
  %v378 = vld [vmem:[%s4 + $0x328] sm:$0xff]
  %v379 = vld [vmem:[%s4 + $0x330] sm:$0xff]
  %v380 = vld [vmem:[%s4 + $0x338] sm:$0xff]
  %v381 = vld [vmem:[%s4 + $0x340] sm:$0xff]
  %v382 = vld [vmem:[%s4 + $0x348] sm:$0xff]
  %v383 = vld [vmem:[%s4 + $0x350] sm:$0xff]
  %v384 = vld [vmem:[%s4 + $0x358] sm:$0xff]
  %v385 = vld [vmem:[%s4 + $0x360] sm:$0xff]
  %v386 = vld [vmem:[%s4 + $0x368] sm:$0xff]
  %v387 = vld [vmem:[%s4 + $0x370] sm:$0xff]
  %v388 = vld [vmem:[%s4 + $0x378] sm:$0xff]
  %v389 = vld [vmem:[%s4 + $0x380] sm:$0xff]
  %v390 = vld [vmem:[%s4 + $0x388] sm:$0xff]
  %v391 = vld [vmem:[%s4 + $0x390] sm:$0xff]
  %v392 = vld [vmem:[%s4 + $0x398] sm:$0xff]
  %v393 = vld [vmem:[%s4 + $0x3a0] sm:$0xff]
  %v394 = vld [vmem:[%s4 + $0x3a8] sm:$0xff]
  %v395 = vld [vmem:[%s4 + $0x3b0] sm:$0xff]
  %v396 = vld [vmem:[%s4 + $0x3b8] sm:$0xff]
  %v397 = vld [vmem:[%s4 + $0x3c0] sm:$0xff]
  %v398 = vld [vmem:[%s4 + $0x3c8] sm:$0xff]
  %v399 = vld [vmem:[%s4 + $0x3d0] sm:$0xff]
  %v400 = vld [vmem:[%s4 + $0x3d8] sm:$0xff]
  %v401 = vld [vmem:[%s4 + $0x3e0] sm:$0xff]
  %v402 = vld [vmem:[%s4 + $0x3e8] sm:$0xff]
  %v403 = vld [vmem:[%s4 + $0x3f0] sm:$0xff]
  %v404 = vld [vmem:[%s4 + $0x3f8] sm:$0xff]
  %v405 = vld [vmem:[%s4 + $0x400] sm:$0xff]
  %v406 = vld [vmem:[%s4 + $0x408] sm:$0xff]
  %v407 = vld [vmem:[%s4 + $0x410] sm:$0xff]
  %v408 = vld [vmem:[%s4 + $0x418] sm:$0xff]
  %v409 = vld [vmem:[%s4 + $0x420] sm:$0xff]
  %v410 = vld [vmem:[%s4 + $0x428] sm:$0xff]
  %v411 = vld [vmem:[%s4 + $0x430] sm:$0xff]
  %v412 = vld [vmem:[%s4 + $0x438] sm:$0xff]
  %v413 = vld [vmem:[%s4 + $0x440] sm:$0xff]
  %v414 = vld [vmem:[%s4 + $0x448] sm:$0xff]
  %v415 = vld [vmem:[%s4 + $0x450] sm:$0xff]
  %v416 = vld [vmem:[%s4 + $0x458] sm:$0xff]
  %v417 = vld [vmem:[%s4 + $0x460] sm:$0xff]
  %v418 = vld [vmem:[%s4 + $0x468] sm:$0xff]
  %v419 = vld [vmem:[%s4 + $0x470] sm:$0xff]
  %v420 = vld [vmem:[%s4 + $0x478] sm:$0xff]
  %v421 = vld [vmem:[%s4 + $0x480] sm:$0xff]
  %v422 = vld [vmem:[%s4 + $0x488] sm:$0xff]
  %v423 = vld [vmem:[%s4 + $0x490] sm:$0xff]
  %v424 = vld [vmem:[%s4 + $0x498] sm:$0xff]
  %v425 = vld [vmem:[%s4 + $0x4a0] sm:$0xff]
  %v426 = vld [vmem:[%s4 + $0x4a8] sm:$0xff]
  %v427 = vld [vmem:[%s4 + $0x4b0] sm:$0xff]
  %v428 = vld [vmem:[%s4 + $0x4b8] sm:$0xff]
  %v429 = vld [vmem:[%s4 + $0x4c0] sm:$0xff]
  %v430 = vld [vmem:[%s4 + $0x4c8] sm:$0xff]
  %v431 = vld [vmem:[%s4 + $0x4d0] sm:$0xff]
  %v432 = vld [vmem:[%s4 + $0x4d8] sm:$0xff]
  %v433 = vld [vmem:[%s4 + $0x4e0] sm:$0xff]
  %v434 = vld [vmem:[%s4 + $0x4e8] sm:$0xff]
  %v435 = vld [vmem:[%s4 + $0x4f0] sm:$0xff]
  %v436 = vld [vmem:[%s4 + $0x4f8] sm:$0xff]
  %v437 = vld [vmem:[%s4 + $0x500] sm:$0xff]
  %v438 = vld [vmem:[%s4 + $0x508] sm:$0xff]
  %v439 = vld [vmem:[%s4 + $0x510] sm:$0xff]
  %v440 = vld [vmem:[%s4 + $0x518] sm:$0xff]
  %v441 = vld [vmem:[%s4 + $0x520] sm:$0xff]
  %v442 = vld [vmem:[%s4 + $0x528] sm:$0xff]
  %v443 = vld [vmem:[%s4 + $0x530] sm:$0xff]
  %v444 = vld [vmem:[%s4 + $0x538] sm:$0xff]
  %v445 = vld [vmem:[%s4 + $0x540] sm:$0xff]
  %v446 = vld [vmem:[%s4 + $0x548] sm:$0xff]
  %v447 = vld [vmem:[%s4 + $0x550] sm:$0xff]
  %v448 = vld [vmem:[%s4 + $0x558] sm:$0xff]
  %v449 = vld [vmem:[%s4 + $0x560] sm:$0xff]
  %v450 = vld [vmem:[%s4 + $0x568] sm:$0xff]
  %v451 = vld [vmem:[%s4 + $0x570] sm:$0xff]
  %v452 = vld [vmem:[%s4 + $0x578] sm:$0xff]
  %v453 = vld [vmem:[%s4 + $0x580] sm:$0xff]
  %v454 = vld [vmem:[%s4 + $0x588] sm:$0xff]
  %v455 = vld [vmem:[%s4 + $0x590] sm:$0xff]
  %v456 = vld [vmem:[%s4 + $0x598] sm:$0xff]
  %v457 = vld [vmem:[%s4 + $0x5a0] sm:$0xff]
  %v458 = vld [vmem:[%s4 + $0x5a8] sm:$0xff]
  %v459 = vld [vmem:[%s4 + $0x5b0] sm:$0xff]
  %v460 = vld [vmem:[%s4 + $0x5b8] sm:$0xff]
  %v461 = vld [vmem:[%s4 + $0x5c0] sm:$0xff]
  %v462 = vld [vmem:[%s4 + $0x5c8] sm:$0xff]
  %v463 = vld [vmem:[%s4 + $0x5d0] sm:$0xff]
  %v464 = vld [vmem:[%s4 + $0x5d8] sm:$0xff]
  %v465 = vld [vmem:[%s4 + $0x5e0] sm:$0xff]
  %v466 = vld [vmem:[%s4 + $0x5e8] sm:$0xff]
  %v467 = vld [vmem:[%s4 + $0x5f0] sm:$0xff]
  %v468 = vld [vmem:[%s4 + $0x5f8] sm:$0xff]
  %v469 = vld [vmem:[%s4 + $0x600] sm:$0xff]
  %v470 = vld [vmem:[%s4 + $0x608] sm:$0xff]
  %v471 = vld [vmem:[%s4 + $0x610] sm:$0xff]
  %v472 = vld [vmem:[%s4 + $0x618] sm:$0xff]
  %v473 = vld [vmem:[%s4 + $0x620] sm:$0xff]
  %v474 = vld [vmem:[%s4 + $0x628] sm:$0xff]
  %v475 = vld [vmem:[%s4 + $0x630] sm:$0xff]
  %v476 = vld [vmem:[%s4 + $0x638] sm:$0xff]
  %v477 = vld [vmem:[%s4 + $0x640] sm:$0xff]
  %v478 = vld [vmem:[%s4 + $0x648] sm:$0xff]
  %v479 = vld [vmem:[%s4 + $0x650] sm:$0xff]
  %v480 = vld [vmem:[%s4 + $0x658] sm:$0xff]
  %v481 = vld [vmem:[%s4 + $0x660] sm:$0xff]
  %v482 = vld [vmem:[%s4 + $0x668] sm:$0xff]
  %v483 = vld [vmem:[%s4 + $0x670] sm:$0xff]
  %v484 = vld [vmem:[%s4 + $0x678] sm:$0xff]
  %v485 = vld [vmem:[%s4 + $0x680] sm:$0xff]
  %v486 = vld [vmem:[%s4 + $0x688] sm:$0xff]
  %v487 = vld [vmem:[%s4 + $0x690] sm:$0xff]
  %v488 = vld [vmem:[%s4 + $0x698] sm:$0xff]
  %v489 = vld [vmem:[%s4 + $0x6a0] sm:$0xff]
  %v490 = vld [vmem:[%s4 + $0x6a8] sm:$0xff]
  %v491 = vld [vmem:[%s4 + $0x6b0] sm:$0xff]
  %v492 = vld [vmem:[%s4 + $0x6b8] sm:$0xff]
  %v493 = vld [vmem:[%s4 + $0x6c0] sm:$0xff]
  %v494 = vld [vmem:[%s4 + $0x6c8] sm:$0xff]
  %v495 = vld [vmem:[%s4 + $0x6d0] sm:$0xff]
  %v496 = vld [vmem:[%s4 + $0x6d8] sm:$0xff]
  %v497 = vld [vmem:[%s4 + $0x6e0] sm:$0xff]
  %v498 = vld [vmem:[%s4 + $0x6e8] sm:$0xff]
  %v499 = vld [vmem:[%s4 + $0x6f0] sm:$0xff]
  %v500 = vld [vmem:[%s4 + $0x6f8] sm:$0xff]
  %v501 = vld [vmem:[%s4 + $0x700] sm:$0xff]
  %v502 = vld [vmem:[%s4 + $0x708] sm:$0xff]
  %v503 = vld [vmem:[%s4 + $0x710] sm:$0xff]
  %v504 = vld [vmem:[%s4 + $0x718] sm:$0xff]
  %v505 = vld [vmem:[%s4 + $0x720] sm:$0xff]
  %v506 = vld [vmem:[%s4 + $0x728] sm:$0xff]
  %v507 = vld [vmem:[%s4 + $0x730] sm:$0xff]
  %v508 = vld [vmem:[%s4 + $0x738] sm:$0xff]
  %v509 = vld [vmem:[%s4 + $0x740] sm:$0xff]
  %v510 = vld [vmem:[%s4 + $0x748] sm:$0xff]
  %v511 = vld [vmem:[%s4 + $0x750] sm:$0xff]
  %v512 = vld [vmem:[%s4 + $0x758] sm:$0xff]
  %v513 = vld [vmem:[%s4 + $0x760] sm:$0xff]
  %v514 = vld [vmem:[%s4 + $0x768] sm:$0xff]
  %v515 = vld [vmem:[%s4 + $0x770] sm:$0xff]
  %v516 = vld [vmem:[%s4 + $0x778] sm:$0xff]
  %v517 = vld [vmem:[%s4 + $0x780] sm:$0xff]
  %v518 = vld [vmem:[%s4 + $0x788] sm:$0xff]
  %v519 = vld [vmem:[%s4 + $0x790] sm:$0xff]
  %v520 = vld [vmem:[%s4 + $0x798] sm:$0xff]
  %v521 = vld [vmem:[%s4 + $0x7a0] sm:$0xff]
  %v522 = vld [vmem:[%s4 + $0x7a8] sm:$0xff]
  %v523 = vld [vmem:[%s4 + $0x7b0] sm:$0xff]
  %v524 = vld [vmem:[%s4 + $0x7b8] sm:$0xff]
  %v525 = vld [vmem:[%s4 + $0x7c0] sm:$0xff]
  %v526 = vld [vmem:[%s4 + $0x7c8] sm:$0xff]
  %v527 = vld [vmem:[%s4 + $0x7d0] sm:$0xff]
  %v528 = vld [vmem:[%s4 + $0x7d8] sm:$0xff]
  %v529 = vld [vmem:[%s4 + $0x7e0] sm:$0xff]
  %v530 = vld [vmem:[%s4 + $0x7e8] sm:$0xff]
  %v531 = vld [vmem:[%s4 + $0x7f0] sm:$0xff]
  %v532 = vld [vmem:[%s4 + $0x7f8] sm:$0xff]
  %v533 = vld [vmem:[%s4 + $0x800] sm:$0xff]
  %v534 = vld [vmem:[%s4 + $0x808] sm:$0xff]
  %v535 = vld [vmem:[%s4 + $0x810] sm:$0xff]
  %v536 = vld [vmem:[%s4 + $0x818] sm:$0xff]
  %v537 = vld [vmem:[%s4 + $0x820] sm:$0xff]
  %v538 = vld [vmem:[%s4 + $0x828] sm:$0xff]
  %v539 = vld [vmem:[%s4 + $0x830] sm:$0xff]
  %v540 = vld [vmem:[%s4 + $0x838] sm:$0xff]
  %v541 = vld [vmem:[%s4 + $0x840] sm:$0xff]
  %v542 = vld [vmem:[%s4 + $0x848] sm:$0xff]
  %v543 = vld [vmem:[%s4 + $0x850] sm:$0xff]
  %v544 = vld [vmem:[%s4 + $0x858] sm:$0xff]
  %v545 = vld [vmem:[%s4 + $0x860] sm:$0xff]
  %v546 = vld [vmem:[%s4 + $0x868] sm:$0xff]
  %v547 = vld [vmem:[%s4 + $0x870] sm:$0xff]
  %v548 = vld [vmem:[%s4 + $0x878] sm:$0xff]
  %v549 = vld [vmem:[%s4 + $0x880] sm:$0xff]
  %v550 = vld [vmem:[%s4 + $0x888] sm:$0xff]
  %v551 = vld [vmem:[%s4 + $0x890] sm:$0xff]
  %v552 = vld [vmem:[%s4 + $0x898] sm:$0xff]
  %v553 = vld [vmem:[%s4 + $0x8a0] sm:$0xff]
  %v554 = vld [vmem:[%s4 + $0x8a8] sm:$0xff]
  %v555 = vld [vmem:[%s4 + $0x8b0] sm:$0xff]
  %v556 = vld [vmem:[%s4 + $0x8b8] sm:$0xff]
  %v557 = vld [vmem:[%s4 + $0x8c0] sm:$0xff]
  %v558 = vld [vmem:[%s4 + $0x8c8] sm:$0xff]
  %v559 = vld [vmem:[%s4 + $0x8d0] sm:$0xff]
  %v560 = vld [vmem:[%s4 + $0x8d8] sm:$0xff]
  %v561 = vld [vmem:[%s4 + $0x8e0] sm:$0xff]
  %v562 = vld [vmem:[%s4 + $0x8e8] sm:$0xff]
  %v563 = vld [vmem:[%s4 + $0x8f0] sm:$0xff]
  %v564 = vld [vmem:[%s4 + $0x8f8] sm:$0xff]
  %v565 = vld [vmem:[%s4 + $0x900] sm:$0xff]
  %v566 = vld [vmem:[%s4 + $0x908] sm:$0xff]
  %v567 = vld [vmem:[%s4 + $0x910] sm:$0xff]
  %v568 = vld [vmem:[%s4 + $0x918] sm:$0xff]
  %v569 = vld [vmem:[%s4 + $0x920] sm:$0xff]
  %v570 = vld [vmem:[%s4 + $0x928] sm:$0xff]
  %v571 = vld [vmem:[%s4 + $0x930] sm:$0xff]
  %v572 = vld [vmem:[%s4 + $0x938] sm:$0xff]
  %v573 = vld [vmem:[%s4 + $0x940] sm:$0xff]
  %v574 = vld [vmem:[%s4 + $0x948] sm:$0xff]
  %v575 = vld [vmem:[%s4 + $0x950] sm:$0xff]
  %v576 = vld [vmem:[%s4 + $0x958] sm:$0xff]
  %v577 = vld [vmem:[%s5] sm:$0xff]
  %v578 = vld [vmem:[%s5 + $0x8] sm:$0xff]
  %v579 = vld [vmem:[%s5 + $0x10] sm:$0xff]
  %v580 = vld [vmem:[%s5 + $0x18] sm:$0xff]
  %v581 = vld [vmem:[%s5 + $0x20] sm:$0xff]
  %v582 = vld [vmem:[%s5 + $0x28] sm:$0xff]
  %v583 = vld [vmem:[%s5 + $0x30] sm:$0xff]
  %v584 = vld [vmem:[%s5 + $0x38] sm:$0xff]
  %v585 = vld [vmem:[%s5 + $0x40] sm:$0xff]
  %v586 = vld [vmem:[%s5 + $0x48] sm:$0xff]
  %v587 = vld [vmem:[%s5 + $0x50] sm:$0xff]
  %v588 = vld [vmem:[%s5 + $0x58] sm:$0xff]
  %v589 = vld [vmem:[%s5 + $0x60] sm:$0xff]
  %v590 = vld [vmem:[%s5 + $0x68] sm:$0xff]
  %v591 = vld [vmem:[%s5 + $0x70] sm:$0xff]
  %v592 = vld [vmem:[%s5 + $0x78] sm:$0xff]
  %v593 = vld [vmem:[%s5 + $0x80] sm:$0xff]
  %v594 = vld [vmem:[%s5 + $0x88] sm:$0xff]
  %v595 = vld [vmem:[%s5 + $0x90] sm:$0xff]
  %v596 = vld [vmem:[%s5 + $0x98] sm:$0xff]
  %vm597 = vcmask 654336
  %v599 = vsel %vm597, %v255, 0
  %601 = vmatprep.subr.mxu0 0.0
  %602 = vmatpush1.msra.mxu0 0.0
  %603 = vmatprep.subr.mxu0 0.0
  %604 = vmatpush1.msra.mxu0 0.0
  %605 = vmatprep.subr.mxu0 0.0
  %606 = vmatpush1.msra.mxu0 0.0
  %607 = vmatprep.subr.mxu0 0.0
  %608 = vmatpush1.msra.mxu0 0.0
  %609 = vmatprep.subr.mxu0 0.0
  %610 = vmatpush1.msra.mxu0 0.0
  %611 = vmatprep.subr.mxu0 0.0
  %612 = vmatpush1.msra.mxu0 0.0
  %613 = vmatprep.subr.mxu0 %v596
  %614 = vmatpush1.msra.mxu0 %v595
  %615 = vmatprep.subr.mxu0 %v594
  %616 = vmatpush1.msra.mxu0 %v593
  %617 = vmatprep.subr.mxu0 %v592
  %618 = vmatpush1.msra.mxu0 %v591
  %619 = vmatprep.subr.mxu0 %v590
  %620 = vmatpush1.msra.mxu0 %v589
  %621 = vmatprep.subr.mxu0 %v588
  %622 = vmatpush1.msra.mxu0 %v587
  %623 = vmatprep.subr.mxu0 %v586
  %624 = vmatpush1.msra.mxu0 %v585
  %625 = vmatprep.subr.mxu0 %v584
  %626 = vmatpush1.msra.mxu0 %v583
  %627 = vmatprep.subr.mxu0 %v582
  %628 = vmatpush1.msra.mxu0 %v581
  %629 = vmatprep.subr.mxu0 %v580
  %630 = vmatpush1.msra.mxu0 %v579
  %631 = vmatprep.subr.mxu0 %v578
  %632 = vmatpush1.msra.mxu0 %v577
  %633 = vmatprep.subr.mxu0 0.0
  %634 = vmatpush2.msra.mxu0 0.0
  %635 = vmatprep.subr.mxu0 0.0
  %636 = vmatpush2.msra.mxu0 0.0
  %637 = vmatprep.subr.mxu0 0.0
  %638 = vmatpush2.msra.mxu0 0.0
  %639 = vmatprep.subr.mxu0 0.0
  %640 = vmatpush2.msra.mxu0 0.0
  %641 = vmatprep.subr.mxu0 0.0
  %642 = vmatpush2.msra.mxu0 0.0
  %643 = vmatprep.subr.mxu0 0.0
  %644 = vmatpush2.msra.mxu0 0.0
  %645 = vmatprep.subr.mxu0 0.0
  %646 = vmatpush2.msra.mxu0 0.0
  %647 = vmatprep.subr.mxu0 0.0
  %648 = vmatpush2.msra.mxu0 0.0
  %649 = vmatprep.subr.mxu0 0.0
  %650 = vmatpush2.msra.mxu0 0.0
  %651 = vmatprep.subr.mxu0 0.0
  %652 = vmatpush2.msra.mxu0 0.0
  %653 = vmatprep.subr.mxu0 0.0
  %654 = vmatpush2.msra.mxu0 0.0
  %655 = vmatprep.subr.mxu0 0.0
  %656 = vmatpush2.msra.mxu0 0.0
  %657 = vmatprep.subr.mxu0 0.0
  %658 = vmatpush2.msra.mxu0 0.0
  %659 = vmatprep.subr.mxu0 0.0
  %660 = vmatpush2.msra.mxu0 0.0
  %661 = vmatprep.subr.mxu0 0.0
  %662 = vmatpush2.msra.mxu0 0.0
  %663 = vmatprep.subr.mxu0 0.0
  %664 = vmatpush2.msra.mxu0 0.0
  %665 = vmatprep.mubr.f32.mxu0 0.0
  %666 = vmatmul.mubr.f32.gmra.mxu0 %v599
  %v667 = vpop.f32.mrf.mxu0
  %v668 = vadd.f32 0.0, %v667
  %v669 = vpop.f32.mrf.mxu0
  %v670 = vadd.f32 0.0, %v669
  %671 = vdwg.mxu0
  %vm672 = vcmask 392192
  %v674 = vsel %vm672, %v276, 0
  %676 = vmatprep.subr.mxu0 %v308
  %677 = vmatpush1.msra.mxu0 %v307
  %678 = vmatprep.subr.mxu0 %v306
  %679 = vmatpush1.msra.mxu0 %v305
  %680 = vmatprep.subr.mxu0 %v304
  %681 = vmatpush1.msra.mxu0 %v303
  %682 = vmatprep.subr.mxu0 %v302
  %683 = vmatpush1.msra.mxu0 %v301
  %684 = vmatprep.subr.mxu0 %v300
  %685 = vmatpush1.msra.mxu0 %v299
  %686 = vmatprep.subr.mxu0 %v298
  %687 = vmatpush1.msra.mxu0 %v297
  %688 = vmatprep.subr.mxu0 %v296
  %689 = vmatpush1.msra.mxu0 %v295
  %690 = vmatprep.subr.mxu0 %v294
  %691 = vmatpush1.msra.mxu0 %v293
  %692 = vmatprep.subr.mxu0 %v292
  %693 = vmatpush1.msra.mxu0 %v291
  %694 = vmatprep.subr.mxu0 %v290
  %695 = vmatpush1.msra.mxu0 %v289
  %696 = vmatprep.subr.mxu0 %v288
  %697 = vmatpush1.msra.mxu0 %v287
  %698 = vmatprep.subr.mxu0 %v286
  %699 = vmatpush1.msra.mxu0 %v285
  %700 = vmatprep.subr.mxu0 %v284
  %701 = vmatpush1.msra.mxu0 %v283
  %702 = vmatprep.subr.mxu0 %v282
  %703 = vmatpush1.msra.mxu0 %v281
  %704 = vmatprep.subr.mxu0 %v280
  %705 = vmatpush1.msra.mxu0 %v279
  %706 = vmatprep.subr.mxu0 %v278
  %707 = vmatpush1.msra.mxu0 %v277
  %708 = vmatprep.subr.mxu0 %v340
  %709 = vmatpush2.msra.mxu0 %v339
  %710 = vmatprep.subr.mxu0 %v338
  %711 = vmatpush2.msra.mxu0 %v337
  %712 = vmatprep.subr.mxu0 %v336
  %713 = vmatpush2.msra.mxu0 %v335
  %714 = vmatprep.subr.mxu0 %v334
  %715 = vmatpush2.msra.mxu0 %v333
  %716 = vmatprep.subr.mxu0 %v332
  %717 = vmatpush2.msra.mxu0 %v331
  %718 = vmatprep.subr.mxu0 %v330
  %719 = vmatpush2.msra.mxu0 %v329
  %720 = vmatprep.subr.mxu0 %v328
  %721 = vmatpush2.msra.mxu0 %v327
  %722 = vmatprep.subr.mxu0 %v326
  %723 = vmatpush2.msra.mxu0 %v325
  %724 = vmatprep.subr.mxu0 %v324
  %725 = vmatpush2.msra.mxu0 %v323
  %726 = vmatprep.subr.mxu0 %v322
  %727 = vmatpush2.msra.mxu0 %v321
  %728 = vmatprep.subr.mxu0 %v320
  %729 = vmatpush2.msra.mxu0 %v319
  %730 = vmatprep.subr.mxu0 %v318
  %731 = vmatpush2.msra.mxu0 %v317
  %732 = vmatprep.subr.mxu0 %v316
  %733 = vmatpush2.msra.mxu0 %v315
  %734 = vmatprep.subr.mxu0 %v314
  %735 = vmatpush2.msra.mxu0 %v313
  %736 = vmatprep.subr.mxu0 %v312
  %737 = vmatpush2.msra.mxu0 %v311
  %738 = vmatprep.subr.mxu0 %v310
  %739 = vmatpush2.msra.mxu0 %v309
  %740 = vmatprep.mubr.f32.mxu0 %v268
  %741 = vmatmul.mubr.f32.gmra.mxu0 %v267
  %v742 = vpop.f32.mrf.mxu0
  %v743 = vadd.f32 %v668, %v742
  %v744 = vpop.f32.mrf.mxu0
  %v745 = vadd.f32 %v670, %v744
  %746 = vdwg.mxu0
  %747 = vmatprep.subr.mxu0 %v372
  %748 = vmatpush1.msra.mxu0 %v371
  %749 = vmatprep.subr.mxu0 %v370
  %750 = vmatpush1.msra.mxu0 %v369
  %751 = vmatprep.subr.mxu0 %v368
  %752 = vmatpush1.msra.mxu0 %v367
  %753 = vmatprep.subr.mxu0 %v366
  %754 = vmatpush1.msra.mxu0 %v365
  %755 = vmatprep.subr.mxu0 %v364
  %756 = vmatpush1.msra.mxu0 %v363
  %757 = vmatprep.subr.mxu0 %v362
  %758 = vmatpush1.msra.mxu0 %v361
  %759 = vmatprep.subr.mxu0 %v360
  %760 = vmatpush1.msra.mxu0 %v359
  %761 = vmatprep.subr.mxu0 %v358
  %762 = vmatpush1.msra.mxu0 %v357
  %763 = vmatprep.subr.mxu0 %v356
  %764 = vmatpush1.msra.mxu0 %v355
  %765 = vmatprep.subr.mxu0 %v354
  %766 = vmatpush1.msra.mxu0 %v353
  %767 = vmatprep.subr.mxu0 %v352
  %768 = vmatpush1.msra.mxu0 %v351
  %769 = vmatprep.subr.mxu0 %v350
  %770 = vmatpush1.msra.mxu0 %v349
  %771 = vmatprep.subr.mxu0 %v348
  %772 = vmatpush1.msra.mxu0 %v347
  %773 = vmatprep.subr.mxu0 %v346
  %774 = vmatpush1.msra.mxu0 %v345
  %775 = vmatprep.subr.mxu0 %v344
  %776 = vmatpush1.msra.mxu0 %v343
  %777 = vmatprep.subr.mxu0 %v342
  %778 = vmatpush1.msra.mxu0 %v341
  %779 = vmatprep.subr.mxu0 %v404
  %780 = vmatpush2.msra.mxu0 %v403
  %781 = vmatprep.subr.mxu0 %v402
  %782 = vmatpush2.msra.mxu0 %v401
  %783 = vmatprep.subr.mxu0 %v400
  %784 = vmatpush2.msra.mxu0 %v399
  %785 = vmatprep.subr.mxu0 %v398
  %786 = vmatpush2.msra.mxu0 %v397
  %787 = vmatprep.subr.mxu0 %v396
  %788 = vmatpush2.msra.mxu0 %v395
  %789 = vmatprep.subr.mxu0 %v394
  %790 = vmatpush2.msra.mxu0 %v393
  %791 = vmatprep.subr.mxu0 %v392
  %792 = vmatpush2.msra.mxu0 %v391
  %793 = vmatprep.subr.mxu0 %v390
  %794 = vmatpush2.msra.mxu0 %v389
  %795 = vmatprep.subr.mxu0 %v388
  %796 = vmatpush2.msra.mxu0 %v387
  %797 = vmatprep.subr.mxu0 %v386
  %798 = vmatpush2.msra.mxu0 %v385
  %799 = vmatprep.subr.mxu0 %v384
  %800 = vmatpush2.msra.mxu0 %v383
  %801 = vmatprep.subr.mxu0 %v382
  %802 = vmatpush2.msra.mxu0 %v381
  %803 = vmatprep.subr.mxu0 %v380
  %804 = vmatpush2.msra.mxu0 %v379
  %805 = vmatprep.subr.mxu0 %v378
  %806 = vmatpush2.msra.mxu0 %v377
  %807 = vmatprep.subr.mxu0 %v376
  %808 = vmatpush2.msra.mxu0 %v375
  %809 = vmatprep.subr.mxu0 %v374
  %810 = vmatpush2.msra.mxu0 %v373
  %811 = vmatprep.mubr.f32.mxu0 %v270
  %812 = vmatmul.mubr.f32.gmra.mxu0 %v269
  %v813 = vpop.f32.mrf.mxu0
  %v814 = vadd.f32 %v743, %v813
  %v815 = vpop.f32.mrf.mxu0
  %v816 = vadd.f32 %v745, %v815
  %817 = vdwg.mxu0
  %818 = vmatprep.subr.mxu0 %v436
  %819 = vmatpush1.msra.mxu0 %v435
  %820 = vmatprep.subr.mxu0 %v434
  %821 = vmatpush1.msra.mxu0 %v433
  %822 = vmatprep.subr.mxu0 %v432
  %823 = vmatpush1.msra.mxu0 %v431
  %824 = vmatprep.subr.mxu0 %v430
  %825 = vmatpush1.msra.mxu0 %v429
  %826 = vmatprep.subr.mxu0 %v428
  %827 = vmatpush1.msra.mxu0 %v427
  %828 = vmatprep.subr.mxu0 %v426
  %829 = vmatpush1.msra.mxu0 %v425
  %830 = vmatprep.subr.mxu0 %v424
  %831 = vmatpush1.msra.mxu0 %v423
  %832 = vmatprep.subr.mxu0 %v422
  %833 = vmatpush1.msra.mxu0 %v421
  %834 = vmatprep.subr.mxu0 %v420
  %835 = vmatpush1.msra.mxu0 %v419
  %836 = vmatprep.subr.mxu0 %v418
  %837 = vmatpush1.msra.mxu0 %v417
  %838 = vmatprep.subr.mxu0 %v416
  %839 = vmatpush1.msra.mxu0 %v415
  %840 = vmatprep.subr.mxu0 %v414
  %841 = vmatpush1.msra.mxu0 %v413
  %842 = vmatprep.subr.mxu0 %v412
  %843 = vmatpush1.msra.mxu0 %v411
  %844 = vmatprep.subr.mxu0 %v410
  %845 = vmatpush1.msra.mxu0 %v409
  %846 = vmatprep.subr.mxu0 %v408
  %847 = vmatpush1.msra.mxu0 %v407
  %848 = vmatprep.subr.mxu0 %v406
  %849 = vmatpush1.msra.mxu0 %v405
  %850 = vmatprep.subr.mxu0 %v468
  %851 = vmatpush2.msra.mxu0 %v467
  %852 = vmatprep.subr.mxu0 %v466
  %853 = vmatpush2.msra.mxu0 %v465
  %854 = vmatprep.subr.mxu0 %v464
  %855 = vmatpush2.msra.mxu0 %v463
  %856 = vmatprep.subr.mxu0 %v462
  %857 = vmatpush2.msra.mxu0 %v461
  %858 = vmatprep.subr.mxu0 %v460
  %859 = vmatpush2.msra.mxu0 %v459
  %860 = vmatprep.subr.mxu0 %v458
  %861 = vmatpush2.msra.mxu0 %v457
  %862 = vmatprep.subr.mxu0 %v456
  %863 = vmatpush2.msra.mxu0 %v455
  %864 = vmatprep.subr.mxu0 %v454
  %865 = vmatpush2.msra.mxu0 %v453
  %866 = vmatprep.subr.mxu0 %v452
  %867 = vmatpush2.msra.mxu0 %v451
  %868 = vmatprep.subr.mxu0 %v450
  %869 = vmatpush2.msra.mxu0 %v449
  %870 = vmatprep.subr.mxu0 %v448
  %871 = vmatpush2.msra.mxu0 %v447
  %872 = vmatprep.subr.mxu0 %v446
  %873 = vmatpush2.msra.mxu0 %v445
  %874 = vmatprep.subr.mxu0 %v444
  %875 = vmatpush2.msra.mxu0 %v443
  %876 = vmatprep.subr.mxu0 %v442
  %877 = vmatpush2.msra.mxu0 %v441
  %878 = vmatprep.subr.mxu0 %v440
  %879 = vmatpush2.msra.mxu0 %v439
  %880 = vmatprep.subr.mxu0 %v438
  %881 = vmatpush2.msra.mxu0 %v437
  %882 = vmatprep.mubr.f32.mxu0 %v272
  %883 = vmatmul.mubr.f32.gmra.mxu0 %v271
  %v884 = vpop.f32.mrf.mxu0
  %v885 = vadd.f32 %v814, %v884
  %v886 = vpop.f32.mrf.mxu0
  %v887 = vadd.f32 %v816, %v886
  %888 = vdwg.mxu0
  %889 = vmatprep.subr.mxu0 %v500
  %890 = vmatpush1.msra.mxu0 %v499
  %891 = vmatprep.subr.mxu0 %v498
  %892 = vmatpush1.msra.mxu0 %v497
  %893 = vmatprep.subr.mxu0 %v496
  %894 = vmatpush1.msra.mxu0 %v495
  %895 = vmatprep.subr.mxu0 %v494
  %896 = vmatpush1.msra.mxu0 %v493
  %897 = vmatprep.subr.mxu0 %v492
  %898 = vmatpush1.msra.mxu0 %v491
  %899 = vmatprep.subr.mxu0 %v490
  %900 = vmatpush1.msra.mxu0 %v489
  %901 = vmatprep.subr.mxu0 %v488
  %902 = vmatpush1.msra.mxu0 %v487
  %903 = vmatprep.subr.mxu0 %v486
  %904 = vmatpush1.msra.mxu0 %v485
  %905 = vmatprep.subr.mxu0 %v484
  %906 = vmatpush1.msra.mxu0 %v483
  %907 = vmatprep.subr.mxu0 %v482
  %908 = vmatpush1.msra.mxu0 %v481
  %909 = vmatprep.subr.mxu0 %v480
  %910 = vmatpush1.msra.mxu0 %v479
  %911 = vmatprep.subr.mxu0 %v478
  %912 = vmatpush1.msra.mxu0 %v477
  %913 = vmatprep.subr.mxu0 %v476
  %914 = vmatpush1.msra.mxu0 %v475
  %915 = vmatprep.subr.mxu0 %v474
  %916 = vmatpush1.msra.mxu0 %v473
  %917 = vmatprep.subr.mxu0 %v472
  %918 = vmatpush1.msra.mxu0 %v471
  %919 = vmatprep.subr.mxu0 %v470
  %920 = vmatpush1.msra.mxu0 %v469
  %921 = vmatprep.subr.mxu0 %v532
  %922 = vmatpush2.msra.mxu0 %v531
  %923 = vmatprep.subr.mxu0 %v530
  %924 = vmatpush2.msra.mxu0 %v529
  %925 = vmatprep.subr.mxu0 %v528
  %926 = vmatpush2.msra.mxu0 %v527
  %927 = vmatprep.subr.mxu0 %v526
  %928 = vmatpush2.msra.mxu0 %v525
  %929 = vmatprep.subr.mxu0 %v524
  %930 = vmatpush2.msra.mxu0 %v523
  %931 = vmatprep.subr.mxu0 %v522
  %932 = vmatpush2.msra.mxu0 %v521
  %933 = vmatprep.subr.mxu0 %v520
  %934 = vmatpush2.msra.mxu0 %v519
  %935 = vmatprep.subr.mxu0 %v518
  %936 = vmatpush2.msra.mxu0 %v517
  %937 = vmatprep.subr.mxu0 %v516
  %938 = vmatpush2.msra.mxu0 %v515
  %939 = vmatprep.subr.mxu0 %v514
  %940 = vmatpush2.msra.mxu0 %v513
  %941 = vmatprep.subr.mxu0 %v512
  %942 = vmatpush2.msra.mxu0 %v511
  %943 = vmatprep.subr.mxu0 %v510
  %944 = vmatpush2.msra.mxu0 %v509
  %945 = vmatprep.subr.mxu0 %v508
  %946 = vmatpush2.msra.mxu0 %v507
  %947 = vmatprep.subr.mxu0 %v506
  %948 = vmatpush2.msra.mxu0 %v505
  %949 = vmatprep.subr.mxu0 %v504
  %950 = vmatpush2.msra.mxu0 %v503
  %951 = vmatprep.subr.mxu0 %v502
  %952 = vmatpush2.msra.mxu0 %v501
  %953 = vmatprep.mubr.f32.mxu0 %v274
  %954 = vmatmul.mubr.f32.gmra.mxu0 %v273
  %v955 = vpop.f32.mrf.mxu0
  %v956 = vadd.f32 %v885, %v955
  %v957 = vpop.f32.mrf.mxu0
  %v958 = vadd.f32 %v887, %v957
  %959 = vdwg.mxu0
  %960 = vmatprep.subr.mxu0 %v564
  %961 = vmatpush1.msra.mxu0 %v563
  %962 = vmatprep.subr.mxu0 %v562
  %963 = vmatpush1.msra.mxu0 %v561
  %964 = vmatprep.subr.mxu0 %v560
  %965 = vmatpush1.msra.mxu0 %v559
  %966 = vmatprep.subr.mxu0 %v558
  %967 = vmatpush1.msra.mxu0 %v557
  %968 = vmatprep.subr.mxu0 %v556
  %969 = vmatpush1.msra.mxu0 %v555
  %970 = vmatprep.subr.mxu0 %v554
  %971 = vmatpush1.msra.mxu0 %v553
  %972 = vmatprep.subr.mxu0 %v552
  %973 = vmatpush1.msra.mxu0 %v551
  %974 = vmatprep.subr.mxu0 %v550
  %975 = vmatpush1.msra.mxu0 %v549
  %976 = vmatprep.subr.mxu0 %v548
  %977 = vmatpush1.msra.mxu0 %v547
  %978 = vmatprep.subr.mxu0 %v546
  %979 = vmatpush1.msra.mxu0 %v545
  %980 = vmatprep.subr.mxu0 %v544
  %981 = vmatpush1.msra.mxu0 %v543
  %982 = vmatprep.subr.mxu0 %v542
  %983 = vmatpush1.msra.mxu0 %v541
  %984 = vmatprep.subr.mxu0 %v540
  %985 = vmatpush1.msra.mxu0 %v539
  %986 = vmatprep.subr.mxu0 %v538
  %987 = vmatpush1.msra.mxu0 %v537
  %988 = vmatprep.subr.mxu0 %v536
  %989 = vmatpush1.msra.mxu0 %v535
  %990 = vmatprep.subr.mxu0 %v534
  %991 = vmatpush1.msra.mxu0 %v533
  %992 = vmatprep.subr.mxu0 0.0
  %993 = vmatpush2.msra.mxu0 0.0
  %994 = vmatprep.subr.mxu0 0.0
  %995 = vmatpush2.msra.mxu0 0.0
  %996 = vmatprep.subr.mxu0 0.0
  %997 = vmatpush2.msra.mxu0 0.0
  %998 = vmatprep.subr.mxu0 0.0
  %999 = vmatpush2.msra.mxu0 0.0
  %1000 = vmatprep.subr.mxu0 0.0
  %1001 = vmatpush2.msra.mxu0 0.0
  %1002 = vmatprep.subr.mxu0 0.0
  %1003 = vmatpush2.msra.mxu0 0.0
  %1004 = vmatprep.subr.mxu0 0.0
  %1005 = vmatpush2.msra.mxu0 0.0
  %1006 = vmatprep.subr.mxu0 0.0
  %1007 = vmatpush2.msra.mxu0 0.0
  %1008 = vmatprep.subr.mxu0 0.0
  %1009 = vmatpush2.msra.mxu0 0.0
  %1010 = vmatprep.subr.mxu0 0.0
  %1011 = vmatpush2.msra.mxu0 0.0
  %1012 = vmatprep.subr.mxu0 %v576
  %1013 = vmatpush2.msra.mxu0 %v575
  %1014 = vmatprep.subr.mxu0 %v574
  %1015 = vmatpush2.msra.mxu0 %v573
  %1016 = vmatprep.subr.mxu0 %v572
  %1017 = vmatpush2.msra.mxu0 %v571
  %1018 = vmatprep.subr.mxu0 %v570
  %1019 = vmatpush2.msra.mxu0 %v569
  %1020 = vmatprep.subr.mxu0 %v568
  %1021 = vmatpush2.msra.mxu0 %v567
  %1022 = vmatprep.subr.mxu0 %v566
  %1023 = vmatpush2.msra.mxu0 %v565
  %1024 = vmatprep.mubr.f32.mxu0 %v674
  %1025 = vmatmul.mubr.f32.gmra.mxu0 %v275
  %v1026 = vpop.f32.mrf.mxu0
  %v1027 = vadd.f32 %v956, %v1026
  %v1028 = vpop.f32.mrf.mxu0
  %v1029 = vadd.f32 %v958, %v1028
  %1030 = vdwg.mxu0
  %v1031 = vld [vmem:[%s5 + $0xa0] sm:$0xff]
  %v1032 = vld [vmem:[%s5 + $0xa8] sm:$0xff]
  %v1033 = vld [vmem:[%s5 + $0xb0] sm:$0xff]
  %v1034 = vld [vmem:[%s5 + $0xb8] sm:$0xff]
  %v1035 = vld [vmem:[%s5 + $0xc0] sm:$0xff]
  %v1036 = vld [vmem:[%s5 + $0xc8] sm:$0xff]
  %v1037 = vld [vmem:[%s5 + $0xd0] sm:$0xff]
  %v1038 = vld [vmem:[%s5 + $0xd8] sm:$0xff]
  %v1039 = vld [vmem:[%s5 + $0xe0] sm:$0xff]
  %v1040 = vld [vmem:[%s5 + $0xe8] sm:$0xff]
  %v1041 = vld [vmem:[%s5 + $0xf0] sm:$0xff]
  %v1042 = vld [vmem:[%s5 + $0xf8] sm:$0xff]
  %v1043 = vld [vmem:[%s5 + $0x100] sm:$0xff]
  %v1044 = vld [vmem:[%s5 + $0x108] sm:$0xff]
  %v1045 = vld [vmem:[%s5 + $0x110] sm:$0xff]
  %v1046 = vld [vmem:[%s5 + $0x118] sm:$0xff]
  %v1047 = vld [vmem:[%s5 + $0x120] sm:$0xff]
  %v1048 = vld [vmem:[%s5 + $0x128] sm:$0xff]
  %v1049 = vld [vmem:[%s5 + $0x130] sm:$0xff]
  %v1050 = vld [vmem:[%s5 + $0x138] sm:$0xff]
  %v1052 = vsel %vm597, %v256, 0
  %1054 = vmatprep.subr.mxu0 0.0
  %1055 = vmatpush1.msra.mxu0 0.0
  %1056 = vmatprep.subr.mxu0 0.0
  %1057 = vmatpush1.msra.mxu0 0.0
  %1058 = vmatprep.subr.mxu0 0.0
  %1059 = vmatpush1.msra.mxu0 0.0
  %1060 = vmatprep.subr.mxu0 0.0
  %1061 = vmatpush1.msra.mxu0 0.0
  %1062 = vmatprep.subr.mxu0 0.0
  %1063 = vmatpush1.msra.mxu0 0.0
  %1064 = vmatprep.subr.mxu0 0.0
  %1065 = vmatpush1.msra.mxu0 0.0
  %1066 = vmatprep.subr.mxu0 %v1050
  %1067 = vmatpush1.msra.mxu0 %v1049
  %1068 = vmatprep.subr.mxu0 %v1048
  %1069 = vmatpush1.msra.mxu0 %v1047
  %1070 = vmatprep.subr.mxu0 %v1046
  %1071 = vmatpush1.msra.mxu0 %v1045
  %1072 = vmatprep.subr.mxu0 %v1044
  %1073 = vmatpush1.msra.mxu0 %v1043
  %1074 = vmatprep.subr.mxu0 %v1042
  %1075 = vmatpush1.msra.mxu0 %v1041
  %1076 = vmatprep.subr.mxu0 %v1040
  %1077 = vmatpush1.msra.mxu0 %v1039
  %1078 = vmatprep.subr.mxu0 %v1038
  %1079 = vmatpush1.msra.mxu0 %v1037
  %1080 = vmatprep.subr.mxu0 %v1036
  %1081 = vmatpush1.msra.mxu0 %v1035
  %1082 = vmatprep.subr.mxu0 %v1034
  %1083 = vmatpush1.msra.mxu0 %v1033
  %1084 = vmatprep.subr.mxu0 %v1032
  %1085 = vmatpush1.msra.mxu0 %v1031
  %1086 = vmatprep.subr.mxu0 0.0
  %1087 = vmatpush2.msra.mxu0 0.0
  %1088 = vmatprep.subr.mxu0 0.0
  %1089 = vmatpush2.msra.mxu0 0.0
  %1090 = vmatprep.subr.mxu0 0.0
  %1091 = vmatpush2.msra.mxu0 0.0
  %1092 = vmatprep.subr.mxu0 0.0
  %1093 = vmatpush2.msra.mxu0 0.0
  %1094 = vmatprep.subr.mxu0 0.0
  %1095 = vmatpush2.msra.mxu0 0.0
  %1096 = vmatprep.subr.mxu0 0.0
  %1097 = vmatpush2.msra.mxu0 0.0
  %1098 = vmatprep.subr.mxu0 0.0
  %1099 = vmatpush2.msra.mxu0 0.0
  %1100 = vmatprep.subr.mxu0 0.0
  %1101 = vmatpush2.msra.mxu0 0.0
  %1102 = vmatprep.subr.mxu0 0.0
  %1103 = vmatpush2.msra.mxu0 0.0
  %1104 = vmatprep.subr.mxu0 0.0
  %1105 = vmatpush2.msra.mxu0 0.0
  %1106 = vmatprep.subr.mxu0 0.0
  %1107 = vmatpush2.msra.mxu0 0.0
  %1108 = vmatprep.subr.mxu0 0.0
  %1109 = vmatpush2.msra.mxu0 0.0
  %1110 = vmatprep.subr.mxu0 0.0
  %1111 = vmatpush2.msra.mxu0 0.0
  %1112 = vmatprep.subr.mxu0 0.0
  %1113 = vmatpush2.msra.mxu0 0.0
  %1114 = vmatprep.subr.mxu0 0.0
  %1115 = vmatpush2.msra.mxu0 0.0
  %1116 = vmatprep.subr.mxu0 0.0
  %1117 = vmatpush2.msra.mxu0 0.0
  %1118 = vmatprep.mubr.f32.mxu0 0.0
  %1119 = vmatmul.mubr.f32.gmra.mxu0 %v1052
  %v1120 = vpop.f32.mrf.mxu0
  %v1121 = vadd.f32 0.0, %v1120
  %v1122 = vpop.f32.mrf.mxu0
  %v1123 = vadd.f32 0.0, %v1122
  %1124 = vdwg.mxu0
  %v1125 = vadd.f32 %v1027, %v1121
  %v1126 = vadd.f32 %v1029, %v1123
  %v1127 = vld [vmem:[%s5 + $0x140] sm:$0xff]
  %v1128 = vld [vmem:[%s5 + $0x148] sm:$0xff]
  %v1129 = vld [vmem:[%s5 + $0x150] sm:$0xff]
  %v1130 = vld [vmem:[%s5 + $0x158] sm:$0xff]
  %v1131 = vld [vmem:[%s5 + $0x160] sm:$0xff]
  %v1132 = vld [vmem:[%s5 + $0x168] sm:$0xff]
  %v1133 = vld [vmem:[%s5 + $0x170] sm:$0xff]
  %v1134 = vld [vmem:[%s5 + $0x178] sm:$0xff]
  %v1135 = vld [vmem:[%s5 + $0x180] sm:$0xff]
  %v1136 = vld [vmem:[%s5 + $0x188] sm:$0xff]
  %v1137 = vld [vmem:[%s5 + $0x190] sm:$0xff]
  %v1138 = vld [vmem:[%s5 + $0x198] sm:$0xff]
  %v1139 = vld [vmem:[%s5 + $0x1a0] sm:$0xff]
  %v1140 = vld [vmem:[%s5 + $0x1a8] sm:$0xff]
  %v1141 = vld [vmem:[%s5 + $0x1b0] sm:$0xff]
  %v1142 = vld [vmem:[%s5 + $0x1b8] sm:$0xff]
  %v1143 = vld [vmem:[%s5 + $0x1c0] sm:$0xff]
  %v1144 = vld [vmem:[%s5 + $0x1c8] sm:$0xff]
  %v1145 = vld [vmem:[%s5 + $0x1d0] sm:$0xff]
  %v1146 = vld [vmem:[%s5 + $0x1d8] sm:$0xff]
  %v1148 = vsel %vm597, %v257, 0
  %1150 = vmatprep.subr.mxu0 0.0
  %1151 = vmatpush1.msra.mxu0 0.0
  %1152 = vmatprep.subr.mxu0 0.0
  %1153 = vmatpush1.msra.mxu0 0.0
  %1154 = vmatprep.subr.mxu0 0.0
  %1155 = vmatpush1.msra.mxu0 0.0
  %1156 = vmatprep.subr.mxu0 0.0
  %1157 = vmatpush1.msra.mxu0 0.0
  %1158 = vmatprep.subr.mxu0 0.0
  %1159 = vmatpush1.msra.mxu0 0.0
  %1160 = vmatprep.subr.mxu0 0.0
  %1161 = vmatpush1.msra.mxu0 0.0
  %1162 = vmatprep.subr.mxu0 %v1146
  %1163 = vmatpush1.msra.mxu0 %v1145
  %1164 = vmatprep.subr.mxu0 %v1144
  %1165 = vmatpush1.msra.mxu0 %v1143
  %1166 = vmatprep.subr.mxu0 %v1142
  %1167 = vmatpush1.msra.mxu0 %v1141
  %1168 = vmatprep.subr.mxu0 %v1140
  %1169 = vmatpush1.msra.mxu0 %v1139
  %1170 = vmatprep.subr.mxu0 %v1138
  %1171 = vmatpush1.msra.mxu0 %v1137
  %1172 = vmatprep.subr.mxu0 %v1136
  %1173 = vmatpush1.msra.mxu0 %v1135
  %1174 = vmatprep.subr.mxu0 %v1134
  %1175 = vmatpush1.msra.mxu0 %v1133
  %1176 = vmatprep.subr.mxu0 %v1132
  %1177 = vmatpush1.msra.mxu0 %v1131
  %1178 = vmatprep.subr.mxu0 %v1130
  %1179 = vmatpush1.msra.mxu0 %v1129
  %1180 = vmatprep.subr.mxu0 %v1128
  %1181 = vmatpush1.msra.mxu0 %v1127
  %1182 = vmatprep.subr.mxu0 0.0
  %1183 = vmatpush2.msra.mxu0 0.0
  %1184 = vmatprep.subr.mxu0 0.0
  %1185 = vmatpush2.msra.mxu0 0.0
  %1186 = vmatprep.subr.mxu0 0.0
  %1187 = vmatpush2.msra.mxu0 0.0
  %1188 = vmatprep.subr.mxu0 0.0
  %1189 = vmatpush2.msra.mxu0 0.0
  %1190 = vmatprep.subr.mxu0 0.0
  %1191 = vmatpush2.msra.mxu0 0.0
  %1192 = vmatprep.subr.mxu0 0.0
  %1193 = vmatpush2.msra.mxu0 0.0
  %1194 = vmatprep.subr.mxu0 0.0
  %1195 = vmatpush2.msra.mxu0 0.0
  %1196 = vmatprep.subr.mxu0 0.0
  %1197 = vmatpush2.msra.mxu0 0.0
  %1198 = vmatprep.subr.mxu0 0.0
  %1199 = vmatpush2.msra.mxu0 0.0
  %1200 = vmatprep.subr.mxu0 0.0
  %1201 = vmatpush2.msra.mxu0 0.0
  %1202 = vmatprep.subr.mxu0 0.0
  %1203 = vmatpush2.msra.mxu0 0.0
  %1204 = vmatprep.subr.mxu0 0.0
  %1205 = vmatpush2.msra.mxu0 0.0
  %1206 = vmatprep.subr.mxu0 0.0
  %1207 = vmatpush2.msra.mxu0 0.0
  %1208 = vmatprep.subr.mxu0 0.0
  %1209 = vmatpush2.msra.mxu0 0.0
  %1210 = vmatprep.subr.mxu0 0.0
  %1211 = vmatpush2.msra.mxu0 0.0
  %1212 = vmatprep.subr.mxu0 0.0
  %1213 = vmatpush2.msra.mxu0 0.0
  %1214 = vmatprep.mubr.f32.mxu0 0.0
  %1215 = vmatmul.mubr.f32.gmra.mxu0 %v1148
  %v1216 = vpop.f32.mrf.mxu0
  %v1217 = vadd.f32 0.0, %v1216
  %v1218 = vpop.f32.mrf.mxu0
  %v1219 = vadd.f32 0.0, %v1218
  %1220 = vdwg.mxu0
  %v1221 = vadd.f32 %v1125, %v1217
  %v1222 = vadd.f32 %v1126, %v1219
  %v1223 = vld [vmem:[%s5 + $0x1e0] sm:$0xff]
  %v1224 = vld [vmem:[%s5 + $0x1e8] sm:$0xff]
  %v1225 = vld [vmem:[%s5 + $0x1f0] sm:$0xff]
  %v1226 = vld [vmem:[%s5 + $0x1f8] sm:$0xff]
  %v1227 = vld [vmem:[%s5 + $0x200] sm:$0xff]
  %v1228 = vld [vmem:[%s5 + $0x208] sm:$0xff]
  %v1229 = vld [vmem:[%s5 + $0x210] sm:$0xff]
  %v1230 = vld [vmem:[%s5 + $0x218] sm:$0xff]
  %v1231 = vld [vmem:[%s5 + $0x220] sm:$0xff]
  %v1232 = vld [vmem:[%s5 + $0x228] sm:$0xff]
  %v1233 = vld [vmem:[%s5 + $0x230] sm:$0xff]
  %v1234 = vld [vmem:[%s5 + $0x238] sm:$0xff]
  %v1235 = vld [vmem:[%s5 + $0x240] sm:$0xff]
  %v1236 = vld [vmem:[%s5 + $0x248] sm:$0xff]
  %v1237 = vld [vmem:[%s5 + $0x250] sm:$0xff]
  %v1238 = vld [vmem:[%s5 + $0x258] sm:$0xff]
  %v1239 = vld [vmem:[%s5 + $0x260] sm:$0xff]
  %v1240 = vld [vmem:[%s5 + $0x268] sm:$0xff]
  %v1241 = vld [vmem:[%s5 + $0x270] sm:$0xff]
  %v1242 = vld [vmem:[%s5 + $0x278] sm:$0xff]
  %v1244 = vsel %vm597, %v258, 0
  %1246 = vmatprep.subr.mxu0 0.0
  %1247 = vmatpush1.msra.mxu0 0.0
  %1248 = vmatprep.subr.mxu0 0.0
  %1249 = vmatpush1.msra.mxu0 0.0
  %1250 = vmatprep.subr.mxu0 0.0
  %1251 = vmatpush1.msra.mxu0 0.0
  %1252 = vmatprep.subr.mxu0 0.0
  %1253 = vmatpush1.msra.mxu0 0.0
  %1254 = vmatprep.subr.mxu0 0.0
  %1255 = vmatpush1.msra.mxu0 0.0
  %1256 = vmatprep.subr.mxu0 0.0
  %1257 = vmatpush1.msra.mxu0 0.0
  %1258 = vmatprep.subr.mxu0 %v1242
  %1259 = vmatpush1.msra.mxu0 %v1241
  %1260 = vmatprep.subr.mxu0 %v1240
  %1261 = vmatpush1.msra.mxu0 %v1239
  %1262 = vmatprep.subr.mxu0 %v1238
  %1263 = vmatpush1.msra.mxu0 %v1237
  %1264 = vmatprep.subr.mxu0 %v1236
  %1265 = vmatpush1.msra.mxu0 %v1235
  %1266 = vmatprep.subr.mxu0 %v1234
  %1267 = vmatpush1.msra.mxu0 %v1233
  %1268 = vmatprep.subr.mxu0 %v1232
  %1269 = vmatpush1.msra.mxu0 %v1231
  %1270 = vmatprep.subr.mxu0 %v1230
  %1271 = vmatpush1.msra.mxu0 %v1229
  %1272 = vmatprep.subr.mxu0 %v1228
  %1273 = vmatpush1.msra.mxu0 %v1227
  %1274 = vmatprep.subr.mxu0 %v1226
  %1275 = vmatpush1.msra.mxu0 %v1225
  %1276 = vmatprep.subr.mxu0 %v1224
  %1277 = vmatpush1.msra.mxu0 %v1223
  %1278 = vmatprep.subr.mxu0 0.0
  %1279 = vmatpush2.msra.mxu0 0.0
  %1280 = vmatprep.subr.mxu0 0.0
  %1281 = vmatpush2.msra.mxu0 0.0
  %1282 = vmatprep.subr.mxu0 0.0
  %1283 = vmatpush2.msra.mxu0 0.0
  %1284 = vmatprep.subr.mxu0 0.0
  %1285 = vmatpush2.msra.mxu0 0.0
  %1286 = vmatprep.subr.mxu0 0.0
  %1287 = vmatpush2.msra.mxu0 0.0
  %1288 = vmatprep.subr.mxu0 0.0
  %1289 = vmatpush2.msra.mxu0 0.0
  %1290 = vmatprep.subr.mxu0 0.0
  %1291 = vmatpush2.msra.mxu0 0.0
  %1292 = vmatprep.subr.mxu0 0.0
  %1293 = vmatpush2.msra.mxu0 0.0
  %1294 = vmatprep.subr.mxu0 0.0
  %1295 = vmatpush2.msra.mxu0 0.0
  %1296 = vmatprep.subr.mxu0 0.0
  %1297 = vmatpush2.msra.mxu0 0.0
  %1298 = vmatprep.subr.mxu0 0.0
  %1299 = vmatpush2.msra.mxu0 0.0
  %1300 = vmatprep.subr.mxu0 0.0
  %1301 = vmatpush2.msra.mxu0 0.0
  %1302 = vmatprep.subr.mxu0 0.0
  %1303 = vmatpush2.msra.mxu0 0.0
  %1304 = vmatprep.subr.mxu0 0.0
  %1305 = vmatpush2.msra.mxu0 0.0
  %1306 = vmatprep.subr.mxu0 0.0
  %1307 = vmatpush2.msra.mxu0 0.0
  %1308 = vmatprep.subr.mxu0 0.0
  %1309 = vmatpush2.msra.mxu0 0.0
  %1310 = vmatprep.mubr.f32.mxu0 0.0
  %1311 = vmatmul.mubr.f32.gmra.mxu0 %v1244
  %v1312 = vpop.f32.mrf.mxu0
  %v1313 = vadd.f32 0.0, %v1312
  %v1314 = vpop.f32.mrf.mxu0
  %v1315 = vadd.f32 0.0, %v1314
  %1316 = vdwg.mxu0
  %v1317 = vadd.f32 %v1221, %v1313
  %v1318 = vadd.f32 %v1222, %v1315
  %v1319 = vld [vmem:[%s5 + $0x280] sm:$0xff]
  %v1320 = vld [vmem:[%s5 + $0x288] sm:$0xff]
  %v1321 = vld [vmem:[%s5 + $0x290] sm:$0xff]
  %v1322 = vld [vmem:[%s5 + $0x298] sm:$0xff]
  %v1323 = vld [vmem:[%s5 + $0x2a0] sm:$0xff]
  %v1324 = vld [vmem:[%s5 + $0x2a8] sm:$0xff]
  %v1325 = vld [vmem:[%s5 + $0x2b0] sm:$0xff]
  %v1326 = vld [vmem:[%s5 + $0x2b8] sm:$0xff]
  %v1327 = vld [vmem:[%s5 + $0x2c0] sm:$0xff]
  %v1328 = vld [vmem:[%s5 + $0x2c8] sm:$0xff]
  %v1329 = vld [vmem:[%s5 + $0x2d0] sm:$0xff]
  %v1330 = vld [vmem:[%s5 + $0x2d8] sm:$0xff]
  %v1331 = vld [vmem:[%s5 + $0x2e0] sm:$0xff]
  %v1332 = vld [vmem:[%s5 + $0x2e8] sm:$0xff]
  %v1333 = vld [vmem:[%s5 + $0x2f0] sm:$0xff]
  %v1334 = vld [vmem:[%s5 + $0x2f8] sm:$0xff]
  %v1335 = vld [vmem:[%s5 + $0x300] sm:$0xff]
  %v1336 = vld [vmem:[%s5 + $0x308] sm:$0xff]
  %v1337 = vld [vmem:[%s5 + $0x310] sm:$0xff]
  %v1338 = vld [vmem:[%s5 + $0x318] sm:$0xff]
  %v1340 = vsel %vm597, %v259, 0
  %1342 = vmatprep.subr.mxu0 0.0
  %1343 = vmatpush1.msra.mxu0 0.0
  %1344 = vmatprep.subr.mxu0 0.0
  %1345 = vmatpush1.msra.mxu0 0.0
  %1346 = vmatprep.subr.mxu0 0.0
  %1347 = vmatpush1.msra.mxu0 0.0
  %1348 = vmatprep.subr.mxu0 0.0
  %1349 = vmatpush1.msra.mxu0 0.0
  %1350 = vmatprep.subr.mxu0 0.0
  %1351 = vmatpush1.msra.mxu0 0.0
  %1352 = vmatprep.subr.mxu0 0.0
  %1353 = vmatpush1.msra.mxu0 0.0
  %1354 = vmatprep.subr.mxu0 %v1338
  %1355 = vmatpush1.msra.mxu0 %v1337
  %1356 = vmatprep.subr.mxu0 %v1336
  %1357 = vmatpush1.msra.mxu0 %v1335
  %1358 = vmatprep.subr.mxu0 %v1334
  %1359 = vmatpush1.msra.mxu0 %v1333
  %1360 = vmatprep.subr.mxu0 %v1332
  %1361 = vmatpush1.msra.mxu0 %v1331
  %1362 = vmatprep.subr.mxu0 %v1330
  %1363 = vmatpush1.msra.mxu0 %v1329
  %1364 = vmatprep.subr.mxu0 %v1328
  %1365 = vmatpush1.msra.mxu0 %v1327
  %1366 = vmatprep.subr.mxu0 %v1326
  %1367 = vmatpush1.msra.mxu0 %v1325
  %1368 = vmatprep.subr.mxu0 %v1324
  %1369 = vmatpush1.msra.mxu0 %v1323
  %1370 = vmatprep.subr.mxu0 %v1322
  %1371 = vmatpush1.msra.mxu0 %v1321
  %1372 = vmatprep.subr.mxu0 %v1320
  %1373 = vmatpush1.msra.mxu0 %v1319
  %1374 = vmatprep.subr.mxu0 0.0
  %1375 = vmatpush2.msra.mxu0 0.0
  %1376 = vmatprep.subr.mxu0 0.0
  %1377 = vmatpush2.msra.mxu0 0.0
  %1378 = vmatprep.subr.mxu0 0.0
  %1379 = vmatpush2.msra.mxu0 0.0
  %1380 = vmatprep.subr.mxu0 0.0
  %1381 = vmatpush2.msra.mxu0 0.0
  %1382 = vmatprep.subr.mxu0 0.0
  %1383 = vmatpush2.msra.mxu0 0.0
  %1384 = vmatprep.subr.mxu0 0.0
  %1385 = vmatpush2.msra.mxu0 0.0
  %1386 = vmatprep.subr.mxu0 0.0
  %1387 = vmatpush2.msra.mxu0 0.0
  %1388 = vmatprep.subr.mxu0 0.0
  %1389 = vmatpush2.msra.mxu0 0.0
  %1390 = vmatprep.subr.mxu0 0.0
  %1391 = vmatpush2.msra.mxu0 0.0
  %1392 = vmatprep.subr.mxu0 0.0
  %1393 = vmatpush2.msra.mxu0 0.0
  %1394 = vmatprep.subr.mxu0 0.0
  %1395 = vmatpush2.msra.mxu0 0.0
  %1396 = vmatprep.subr.mxu0 0.0
  %1397 = vmatpush2.msra.mxu0 0.0
  %1398 = vmatprep.subr.mxu0 0.0
  %1399 = vmatpush2.msra.mxu0 0.0
  %1400 = vmatprep.subr.mxu0 0.0
  %1401 = vmatpush2.msra.mxu0 0.0
  %1402 = vmatprep.subr.mxu0 0.0
  %1403 = vmatpush2.msra.mxu0 0.0
  %1404 = vmatprep.subr.mxu0 0.0
  %1405 = vmatpush2.msra.mxu0 0.0
  %1406 = vmatprep.mubr.f32.mxu0 0.0
  %1407 = vmatmul.mubr.f32.gmra.mxu0 %v1340
  %v1408 = vpop.f32.mrf.mxu0
  %v1409 = vadd.f32 0.0, %v1408
  %v1410 = vpop.f32.mrf.mxu0
  %v1411 = vadd.f32 0.0, %v1410
  %1412 = vdwg.mxu0
  %v1413 = vadd.f32 %v1317, %v1409
  %v1414 = vadd.f32 %v1318, %v1411
  %v1415 = vld [vmem:[%s5 + $0x320] sm:$0xff]
  %v1416 = vld [vmem:[%s5 + $0x328] sm:$0xff]
  %v1417 = vld [vmem:[%s5 + $0x330] sm:$0xff]
  %v1418 = vld [vmem:[%s5 + $0x338] sm:$0xff]
  %v1419 = vld [vmem:[%s5 + $0x340] sm:$0xff]
  %v1420 = vld [vmem:[%s5 + $0x348] sm:$0xff]
  %v1421 = vld [vmem:[%s5 + $0x350] sm:$0xff]
  %v1422 = vld [vmem:[%s5 + $0x358] sm:$0xff]
  %v1423 = vld [vmem:[%s5 + $0x360] sm:$0xff]
  %v1424 = vld [vmem:[%s5 + $0x368] sm:$0xff]
  %v1425 = vld [vmem:[%s5 + $0x370] sm:$0xff]
  %v1426 = vld [vmem:[%s5 + $0x378] sm:$0xff]
  %v1427 = vld [vmem:[%s5 + $0x380] sm:$0xff]
  %v1428 = vld [vmem:[%s5 + $0x388] sm:$0xff]
  %v1429 = vld [vmem:[%s5 + $0x390] sm:$0xff]
  %v1430 = vld [vmem:[%s5 + $0x398] sm:$0xff]
  %v1431 = vld [vmem:[%s5 + $0x3a0] sm:$0xff]
  %v1432 = vld [vmem:[%s5 + $0x3a8] sm:$0xff]
  %v1433 = vld [vmem:[%s5 + $0x3b0] sm:$0xff]
  %v1434 = vld [vmem:[%s5 + $0x3b8] sm:$0xff]
  %v1436 = vsel %vm597, %v260, 0
  %1438 = vmatprep.subr.mxu0 0.0
  %1439 = vmatpush1.msra.mxu0 0.0
  %1440 = vmatprep.subr.mxu0 0.0
  %1441 = vmatpush1.msra.mxu0 0.0
  %1442 = vmatprep.subr.mxu0 0.0
  %1443 = vmatpush1.msra.mxu0 0.0
  %1444 = vmatprep.subr.mxu0 0.0
  %1445 = vmatpush1.msra.mxu0 0.0
  %1446 = vmatprep.subr.mxu0 0.0
  %1447 = vmatpush1.msra.mxu0 0.0
  %1448 = vmatprep.subr.mxu0 0.0
  %1449 = vmatpush1.msra.mxu0 0.0
  %1450 = vmatprep.subr.mxu0 %v1434
  %1451 = vmatpush1.msra.mxu0 %v1433
  %1452 = vmatprep.subr.mxu0 %v1432
  %1453 = vmatpush1.msra.mxu0 %v1431
  %1454 = vmatprep.subr.mxu0 %v1430
  %1455 = vmatpush1.msra.mxu0 %v1429
  %1456 = vmatprep.subr.mxu0 %v1428
  %1457 = vmatpush1.msra.mxu0 %v1427
  %1458 = vmatprep.subr.mxu0 %v1426
  %1459 = vmatpush1.msra.mxu0 %v1425
  %1460 = vmatprep.subr.mxu0 %v1424
  %1461 = vmatpush1.msra.mxu0 %v1423
  %1462 = vmatprep.subr.mxu0 %v1422
  %1463 = vmatpush1.msra.mxu0 %v1421
  %1464 = vmatprep.subr.mxu0 %v1420
  %1465 = vmatpush1.msra.mxu0 %v1419
  %1466 = vmatprep.subr.mxu0 %v1418
  %1467 = vmatpush1.msra.mxu0 %v1417
  %1468 = vmatprep.subr.mxu0 %v1416
  %1469 = vmatpush1.msra.mxu0 %v1415
  %1470 = vmatprep.subr.mxu0 0.0
  %1471 = vmatpush2.msra.mxu0 0.0
  %1472 = vmatprep.subr.mxu0 0.0
  %1473 = vmatpush2.msra.mxu0 0.0
  %1474 = vmatprep.subr.mxu0 0.0
  %1475 = vmatpush2.msra.mxu0 0.0
  %1476 = vmatprep.subr.mxu0 0.0
  %1477 = vmatpush2.msra.mxu0 0.0
  %1478 = vmatprep.subr.mxu0 0.0
  %1479 = vmatpush2.msra.mxu0 0.0
  %1480 = vmatprep.subr.mxu0 0.0
  %1481 = vmatpush2.msra.mxu0 0.0
  %1482 = vmatprep.subr.mxu0 0.0
  %1483 = vmatpush2.msra.mxu0 0.0
  %1484 = vmatprep.subr.mxu0 0.0
  %1485 = vmatpush2.msra.mxu0 0.0
  %1486 = vmatprep.subr.mxu0 0.0
  %1487 = vmatpush2.msra.mxu0 0.0
  %1488 = vmatprep.subr.mxu0 0.0
  %1489 = vmatpush2.msra.mxu0 0.0
  %1490 = vmatprep.subr.mxu0 0.0
  %1491 = vmatpush2.msra.mxu0 0.0
  %1492 = vmatprep.subr.mxu0 0.0
  %1493 = vmatpush2.msra.mxu0 0.0
  %1494 = vmatprep.subr.mxu0 0.0
  %1495 = vmatpush2.msra.mxu0 0.0
  %1496 = vmatprep.subr.mxu0 0.0
  %1497 = vmatpush2.msra.mxu0 0.0
  %1498 = vmatprep.subr.mxu0 0.0
  %1499 = vmatpush2.msra.mxu0 0.0
  %1500 = vmatprep.subr.mxu0 0.0
  %1501 = vmatpush2.msra.mxu0 0.0
  %1502 = vmatprep.mubr.f32.mxu0 0.0
  %1503 = vmatmul.mubr.f32.gmra.mxu0 %v1436
  %v1504 = vpop.f32.mrf.mxu0
  %v1505 = vadd.f32 0.0, %v1504
  %v1506 = vpop.f32.mrf.mxu0
  %v1507 = vadd.f32 0.0, %v1506
  %1508 = vdwg.mxu0
  %v1509 = vadd.f32 %v1413, %v1505
  %v1510 = vadd.f32 %v1414, %v1507
  %v1511 = vld [vmem:[%s5 + $0x3c0] sm:$0xff]
  %v1512 = vld [vmem:[%s5 + $0x3c8] sm:$0xff]
  %v1513 = vld [vmem:[%s5 + $0x3d0] sm:$0xff]
  %v1514 = vld [vmem:[%s5 + $0x3d8] sm:$0xff]
  %v1515 = vld [vmem:[%s5 + $0x3e0] sm:$0xff]
  %v1516 = vld [vmem:[%s5 + $0x3e8] sm:$0xff]
  %v1517 = vld [vmem:[%s5 + $0x3f0] sm:$0xff]
  %v1518 = vld [vmem:[%s5 + $0x3f8] sm:$0xff]
  %v1519 = vld [vmem:[%s5 + $0x400] sm:$0xff]
  %v1520 = vld [vmem:[%s5 + $0x408] sm:$0xff]
  %v1521 = vld [vmem:[%s5 + $0x410] sm:$0xff]
  %v1522 = vld [vmem:[%s5 + $0x418] sm:$0xff]
  %v1523 = vld [vmem:[%s5 + $0x420] sm:$0xff]
  %v1524 = vld [vmem:[%s5 + $0x428] sm:$0xff]
  %v1525 = vld [vmem:[%s5 + $0x430] sm:$0xff]
  %v1526 = vld [vmem:[%s5 + $0x438] sm:$0xff]
  %v1527 = vld [vmem:[%s5 + $0x440] sm:$0xff]
  %v1528 = vld [vmem:[%s5 + $0x448] sm:$0xff]
  %v1529 = vld [vmem:[%s5 + $0x450] sm:$0xff]
  %v1530 = vld [vmem:[%s5 + $0x458] sm:$0xff]
  %v1532 = vsel %vm597, %v261, 0
  %1534 = vmatprep.subr.mxu0 0.0
  %1535 = vmatpush1.msra.mxu0 0.0
  %1536 = vmatprep.subr.mxu0 0.0
  %1537 = vmatpush1.msra.mxu0 0.0
  %1538 = vmatprep.subr.mxu0 0.0
  %1539 = vmatpush1.msra.mxu0 0.0
  %1540 = vmatprep.subr.mxu0 0.0
  %1541 = vmatpush1.msra.mxu0 0.0
  %1542 = vmatprep.subr.mxu0 0.0
  %1543 = vmatpush1.msra.mxu0 0.0
  %1544 = vmatprep.subr.mxu0 0.0
  %1545 = vmatpush1.msra.mxu0 0.0
  %1546 = vmatprep.subr.mxu0 %v1530
  %1547 = vmatpush1.msra.mxu0 %v1529
  %1548 = vmatprep.subr.mxu0 %v1528
  %1549 = vmatpush1.msra.mxu0 %v1527
  %1550 = vmatprep.subr.mxu0 %v1526
  %1551 = vmatpush1.msra.mxu0 %v1525
  %1552 = vmatprep.subr.mxu0 %v1524
  %1553 = vmatpush1.msra.mxu0 %v1523
  %1554 = vmatprep.subr.mxu0 %v1522
  %1555 = vmatpush1.msra.mxu0 %v1521
  %1556 = vmatprep.subr.mxu0 %v1520
  %1557 = vmatpush1.msra.mxu0 %v1519
  %1558 = vmatprep.subr.mxu0 %v1518
  %1559 = vmatpush1.msra.mxu0 %v1517
  %1560 = vmatprep.subr.mxu0 %v1516
  %1561 = vmatpush1.msra.mxu0 %v1515
  %1562 = vmatprep.subr.mxu0 %v1514
  %1563 = vmatpush1.msra.mxu0 %v1513
  %1564 = vmatprep.subr.mxu0 %v1512
  %1565 = vmatpush1.msra.mxu0 %v1511
  %1566 = vmatprep.subr.mxu0 0.0
  %1567 = vmatpush2.msra.mxu0 0.0
  %1568 = vmatprep.subr.mxu0 0.0
  %1569 = vmatpush2.msra.mxu0 0.0
  %1570 = vmatprep.subr.mxu0 0.0
  %1571 = vmatpush2.msra.mxu0 0.0
  %1572 = vmatprep.subr.mxu0 0.0
  %1573 = vmatpush2.msra.mxu0 0.0
  %1574 = vmatprep.subr.mxu0 0.0
  %1575 = vmatpush2.msra.mxu0 0.0
  %1576 = vmatprep.subr.mxu0 0.0
  %1577 = vmatpush2.msra.mxu0 0.0
  %1578 = vmatprep.subr.mxu0 0.0
  %1579 = vmatpush2.msra.mxu0 0.0
  %1580 = vmatprep.subr.mxu0 0.0
  %1581 = vmatpush2.msra.mxu0 0.0
  %1582 = vmatprep.subr.mxu0 0.0
  %1583 = vmatpush2.msra.mxu0 0.0
  %1584 = vmatprep.subr.mxu0 0.0
  %1585 = vmatpush2.msra.mxu0 0.0
  %1586 = vmatprep.subr.mxu0 0.0
  %1587 = vmatpush2.msra.mxu0 0.0
  %1588 = vmatprep.subr.mxu0 0.0
  %1589 = vmatpush2.msra.mxu0 0.0
  %1590 = vmatprep.subr.mxu0 0.0
  %1591 = vmatpush2.msra.mxu0 0.0
  %1592 = vmatprep.subr.mxu0 0.0
  %1593 = vmatpush2.msra.mxu0 0.0
  %1594 = vmatprep.subr.mxu0 0.0
  %1595 = vmatpush2.msra.mxu0 0.0
  %1596 = vmatprep.subr.mxu0 0.0
  %1597 = vmatpush2.msra.mxu0 0.0
  %1598 = vmatprep.mubr.f32.mxu0 0.0
  %1599 = vmatmul.mubr.f32.gmra.mxu0 %v1532
  %v1600 = vpop.f32.mrf.mxu0
  %v1601 = vadd.f32 0.0, %v1600
  %v1602 = vpop.f32.mrf.mxu0
  %v1603 = vadd.f32 0.0, %v1602
  %1604 = vdwg.mxu0
  %v1605 = vadd.f32 %v1509, %v1601
  %v1606 = vadd.f32 %v1510, %v1603
  %v1607 = vld [vmem:[%s5 + $0x460] sm:$0xff]
  %v1608 = vld [vmem:[%s5 + $0x468] sm:$0xff]
  %v1609 = vld [vmem:[%s5 + $0x470] sm:$0xff]
  %v1610 = vld [vmem:[%s5 + $0x478] sm:$0xff]
  %v1611 = vld [vmem:[%s5 + $0x480] sm:$0xff]
  %v1612 = vld [vmem:[%s5 + $0x488] sm:$0xff]
  %v1613 = vld [vmem:[%s5 + $0x490] sm:$0xff]
  %v1614 = vld [vmem:[%s5 + $0x498] sm:$0xff]
  %v1615 = vld [vmem:[%s5 + $0x4a0] sm:$0xff]
  %v1616 = vld [vmem:[%s5 + $0x4a8] sm:$0xff]
  %v1617 = vld [vmem:[%s5 + $0x4b0] sm:$0xff]
  %v1618 = vld [vmem:[%s5 + $0x4b8] sm:$0xff]
  %v1619 = vld [vmem:[%s5 + $0x4c0] sm:$0xff]
  %v1620 = vld [vmem:[%s5 + $0x4c8] sm:$0xff]
  %v1621 = vld [vmem:[%s5 + $0x4d0] sm:$0xff]
  %v1622 = vld [vmem:[%s5 + $0x4d8] sm:$0xff]
  %v1623 = vld [vmem:[%s5 + $0x4e0] sm:$0xff]
  %v1624 = vld [vmem:[%s5 + $0x4e8] sm:$0xff]
  %v1625 = vld [vmem:[%s5 + $0x4f0] sm:$0xff]
  %v1626 = vld [vmem:[%s5 + $0x4f8] sm:$0xff]
  %v1628 = vsel %vm597, %v262, 0
  %1630 = vmatprep.subr.mxu0 0.0
  %1631 = vmatpush1.msra.mxu0 0.0
  %1632 = vmatprep.subr.mxu0 0.0
  %1633 = vmatpush1.msra.mxu0 0.0
  %1634 = vmatprep.subr.mxu0 0.0
  %1635 = vmatpush1.msra.mxu0 0.0
  %1636 = vmatprep.subr.mxu0 0.0
  %1637 = vmatpush1.msra.mxu0 0.0
  %1638 = vmatprep.subr.mxu0 0.0
  %1639 = vmatpush1.msra.mxu0 0.0
  %1640 = vmatprep.subr.mxu0 0.0
  %1641 = vmatpush1.msra.mxu0 0.0
  %1642 = vmatprep.subr.mxu0 %v1626
  %1643 = vmatpush1.msra.mxu0 %v1625
  %1644 = vmatprep.subr.mxu0 %v1624
  %1645 = vmatpush1.msra.mxu0 %v1623
  %1646 = vmatprep.subr.mxu0 %v1622
  %1647 = vmatpush1.msra.mxu0 %v1621
  %1648 = vmatprep.subr.mxu0 %v1620
  %1649 = vmatpush1.msra.mxu0 %v1619
  %1650 = vmatprep.subr.mxu0 %v1618
  %1651 = vmatpush1.msra.mxu0 %v1617
  %1652 = vmatprep.subr.mxu0 %v1616
  %1653 = vmatpush1.msra.mxu0 %v1615
  %1654 = vmatprep.subr.mxu0 %v1614
  %1655 = vmatpush1.msra.mxu0 %v1613
  %1656 = vmatprep.subr.mxu0 %v1612
  %1657 = vmatpush1.msra.mxu0 %v1611
  %1658 = vmatprep.subr.mxu0 %v1610
  %1659 = vmatpush1.msra.mxu0 %v1609
  %1660 = vmatprep.subr.mxu0 %v1608
  %1661 = vmatpush1.msra.mxu0 %v1607
  %1662 = vmatprep.subr.mxu0 0.0
  %1663 = vmatpush2.msra.mxu0 0.0
  %1664 = vmatprep.subr.mxu0 0.0
  %1665 = vmatpush2.msra.mxu0 0.0
  %1666 = vmatprep.subr.mxu0 0.0
  %1667 = vmatpush2.msra.mxu0 0.0
  %1668 = vmatprep.subr.mxu0 0.0
  %1669 = vmatpush2.msra.mxu0 0.0
  %1670 = vmatprep.subr.mxu0 0.0
  %1671 = vmatpush2.msra.mxu0 0.0
  %1672 = vmatprep.subr.mxu0 0.0
  %1673 = vmatpush2.msra.mxu0 0.0
  %1674 = vmatprep.subr.mxu0 0.0
  %1675 = vmatpush2.msra.mxu0 0.0
  %1676 = vmatprep.subr.mxu0 0.0
  %1677 = vmatpush2.msra.mxu0 0.0
  %1678 = vmatprep.subr.mxu0 0.0
  %1679 = vmatpush2.msra.mxu0 0.0
  %1680 = vmatprep.subr.mxu0 0.0
  %1681 = vmatpush2.msra.mxu0 0.0
  %1682 = vmatprep.subr.mxu0 0.0
  %1683 = vmatpush2.msra.mxu0 0.0
  %1684 = vmatprep.subr.mxu0 0.0
  %1685 = vmatpush2.msra.mxu0 0.0
  %1686 = vmatprep.subr.mxu0 0.0
  %1687 = vmatpush2.msra.mxu0 0.0
  %1688 = vmatprep.subr.mxu0 0.0
  %1689 = vmatpush2.msra.mxu0 0.0
  %1690 = vmatprep.subr.mxu0 0.0
  %1691 = vmatpush2.msra.mxu0 0.0
  %1692 = vmatprep.subr.mxu0 0.0
  %1693 = vmatpush2.msra.mxu0 0.0
  %1694 = vmatprep.mubr.f32.mxu0 0.0
  %1695 = vmatmul.mubr.f32.gmra.mxu0 %v1628
  %v1696 = vpop.f32.mrf.mxu0
  %v1697 = vadd.f32 0.0, %v1696
  %v1698 = vpop.f32.mrf.mxu0
  %v1699 = vadd.f32 0.0, %v1698
  %1700 = vdwg.mxu0
  %v1701 = vadd.f32 %v1605, %v1697
  %v1702 = vadd.f32 %v1606, %v1699
  %v1703 = vld [vmem:[%s5 + $0x500] sm:$0xff]
  %v1704 = vld [vmem:[%s5 + $0x508] sm:$0xff]
  %v1705 = vld [vmem:[%s5 + $0x510] sm:$0xff]
  %v1706 = vld [vmem:[%s5 + $0x518] sm:$0xff]
  %v1707 = vld [vmem:[%s5 + $0x520] sm:$0xff]
  %v1708 = vld [vmem:[%s5 + $0x528] sm:$0xff]
  %v1709 = vld [vmem:[%s5 + $0x530] sm:$0xff]
  %v1710 = vld [vmem:[%s5 + $0x538] sm:$0xff]
  %v1711 = vld [vmem:[%s5 + $0x540] sm:$0xff]
  %v1712 = vld [vmem:[%s5 + $0x548] sm:$0xff]
  %v1713 = vld [vmem:[%s5 + $0x550] sm:$0xff]
  %v1714 = vld [vmem:[%s5 + $0x558] sm:$0xff]
  %v1715 = vld [vmem:[%s5 + $0x560] sm:$0xff]
  %v1716 = vld [vmem:[%s5 + $0x568] sm:$0xff]
  %v1717 = vld [vmem:[%s5 + $0x570] sm:$0xff]
  %v1718 = vld [vmem:[%s5 + $0x578] sm:$0xff]
  %v1719 = vld [vmem:[%s5 + $0x580] sm:$0xff]
  %v1720 = vld [vmem:[%s5 + $0x588] sm:$0xff]
  %v1721 = vld [vmem:[%s5 + $0x590] sm:$0xff]
  %v1722 = vld [vmem:[%s5 + $0x598] sm:$0xff]
  %v1724 = vsel %vm597, %v263, 0
  %1726 = vmatprep.subr.mxu0 0.0
  %1727 = vmatpush1.msra.mxu0 0.0
  %1728 = vmatprep.subr.mxu0 0.0
  %1729 = vmatpush1.msra.mxu0 0.0
  %1730 = vmatprep.subr.mxu0 0.0
  %1731 = vmatpush1.msra.mxu0 0.0
  %1732 = vmatprep.subr.mxu0 0.0
  %1733 = vmatpush1.msra.mxu0 0.0
  %1734 = vmatprep.subr.mxu0 0.0
  %1735 = vmatpush1.msra.mxu0 0.0
  %1736 = vmatprep.subr.mxu0 0.0
  %1737 = vmatpush1.msra.mxu0 0.0
  %1738 = vmatprep.subr.mxu0 %v1722
  %1739 = vmatpush1.msra.mxu0 %v1721
  %1740 = vmatprep.subr.mxu0 %v1720
  %1741 = vmatpush1.msra.mxu0 %v1719
  %1742 = vmatprep.subr.mxu0 %v1718
  %1743 = vmatpush1.msra.mxu0 %v1717
  %1744 = vmatprep.subr.mxu0 %v1716
  %1745 = vmatpush1.msra.mxu0 %v1715
  %1746 = vmatprep.subr.mxu0 %v1714
  %1747 = vmatpush1.msra.mxu0 %v1713
  %1748 = vmatprep.subr.mxu0 %v1712
  %1749 = vmatpush1.msra.mxu0 %v1711
  %1750 = vmatprep.subr.mxu0 %v1710
  %1751 = vmatpush1.msra.mxu0 %v1709
  %1752 = vmatprep.subr.mxu0 %v1708
  %1753 = vmatpush1.msra.mxu0 %v1707
  %1754 = vmatprep.subr.mxu0 %v1706
  %1755 = vmatpush1.msra.mxu0 %v1705
  %1756 = vmatprep.subr.mxu0 %v1704
  %1757 = vmatpush1.msra.mxu0 %v1703
  %1758 = vmatprep.subr.mxu0 0.0
  %1759 = vmatpush2.msra.mxu0 0.0
  %1760 = vmatprep.subr.mxu0 0.0
  %1761 = vmatpush2.msra.mxu0 0.0
  %1762 = vmatprep.subr.mxu0 0.0
  %1763 = vmatpush2.msra.mxu0 0.0
  %1764 = vmatprep.subr.mxu0 0.0
  %1765 = vmatpush2.msra.mxu0 0.0
  %1766 = vmatprep.subr.mxu0 0.0
  %1767 = vmatpush2.msra.mxu0 0.0
  %1768 = vmatprep.subr.mxu0 0.0
  %1769 = vmatpush2.msra.mxu0 0.0
  %1770 = vmatprep.subr.mxu0 0.0
  %1771 = vmatpush2.msra.mxu0 0.0
  %1772 = vmatprep.subr.mxu0 0.0
  %1773 = vmatpush2.msra.mxu0 0.0
  %1774 = vmatprep.subr.mxu0 0.0
  %1775 = vmatpush2.msra.mxu0 0.0
  %1776 = vmatprep.subr.mxu0 0.0
  %1777 = vmatpush2.msra.mxu0 0.0
  %1778 = vmatprep.subr.mxu0 0.0
  %1779 = vmatpush2.msra.mxu0 0.0
  %1780 = vmatprep.subr.mxu0 0.0
  %1781 = vmatpush2.msra.mxu0 0.0
  %1782 = vmatprep.subr.mxu0 0.0
  %1783 = vmatpush2.msra.mxu0 0.0
  %1784 = vmatprep.subr.mxu0 0.0
  %1785 = vmatpush2.msra.mxu0 0.0
  %1786 = vmatprep.subr.mxu0 0.0
  %1787 = vmatpush2.msra.mxu0 0.0
  %1788 = vmatprep.subr.mxu0 0.0
  %1789 = vmatpush2.msra.mxu0 0.0
  %1790 = vmatprep.mubr.f32.mxu0 0.0
  %1791 = vmatmul.mubr.f32.gmra.mxu0 %v1724
  %v1792 = vpop.f32.mrf.mxu0
  %v1793 = vadd.f32 0.0, %v1792
  %v1794 = vpop.f32.mrf.mxu0
  %v1795 = vadd.f32 0.0, %v1794
  %1796 = vdwg.mxu0
  %v1797 = vadd.f32 %v1701, %v1793
  %v1798 = vadd.f32 %v1702, %v1795
  %v1799 = vld [vmem:[%s5 + $0x5a0] sm:$0xff]
  %v1800 = vld [vmem:[%s5 + $0x5a8] sm:$0xff]
  %v1801 = vld [vmem:[%s5 + $0x5b0] sm:$0xff]
  %v1802 = vld [vmem:[%s5 + $0x5b8] sm:$0xff]
  %v1803 = vld [vmem:[%s5 + $0x5c0] sm:$0xff]
  %v1804 = vld [vmem:[%s5 + $0x5c8] sm:$0xff]
  %v1805 = vld [vmem:[%s5 + $0x5d0] sm:$0xff]
  %v1806 = vld [vmem:[%s5 + $0x5d8] sm:$0xff]
  %v1807 = vld [vmem:[%s5 + $0x5e0] sm:$0xff]
  %v1808 = vld [vmem:[%s5 + $0x5e8] sm:$0xff]
  %v1809 = vld [vmem:[%s5 + $0x5f0] sm:$0xff]
  %v1810 = vld [vmem:[%s5 + $0x5f8] sm:$0xff]
  %v1811 = vld [vmem:[%s5 + $0x600] sm:$0xff]
  %v1812 = vld [vmem:[%s5 + $0x608] sm:$0xff]
  %v1813 = vld [vmem:[%s5 + $0x610] sm:$0xff]
  %v1814 = vld [vmem:[%s5 + $0x618] sm:$0xff]
  %v1815 = vld [vmem:[%s5 + $0x620] sm:$0xff]
  %v1816 = vld [vmem:[%s5 + $0x628] sm:$0xff]
  %v1817 = vld [vmem:[%s5 + $0x630] sm:$0xff]
  %v1818 = vld [vmem:[%s5 + $0x638] sm:$0xff]
  %v1820 = vsel %vm597, %v264, 0
  %1822 = vmatprep.subr.mxu0 0.0
  %1823 = vmatpush1.msra.mxu0 0.0
  %1824 = vmatprep.subr.mxu0 0.0
  %1825 = vmatpush1.msra.mxu0 0.0
  %1826 = vmatprep.subr.mxu0 0.0
  %1827 = vmatpush1.msra.mxu0 0.0
  %1828 = vmatprep.subr.mxu0 0.0
  %1829 = vmatpush1.msra.mxu0 0.0
  %1830 = vmatprep.subr.mxu0 0.0
  %1831 = vmatpush1.msra.mxu0 0.0
  %1832 = vmatprep.subr.mxu0 0.0
  %1833 = vmatpush1.msra.mxu0 0.0
  %1834 = vmatprep.subr.mxu0 %v1818
  %1835 = vmatpush1.msra.mxu0 %v1817
  %1836 = vmatprep.subr.mxu0 %v1816
  %1837 = vmatpush1.msra.mxu0 %v1815
  %1838 = vmatprep.subr.mxu0 %v1814
  %1839 = vmatpush1.msra.mxu0 %v1813
  %1840 = vmatprep.subr.mxu0 %v1812
  %1841 = vmatpush1.msra.mxu0 %v1811
  %1842 = vmatprep.subr.mxu0 %v1810
  %1843 = vmatpush1.msra.mxu0 %v1809
  %1844 = vmatprep.subr.mxu0 %v1808
  %1845 = vmatpush1.msra.mxu0 %v1807
  %1846 = vmatprep.subr.mxu0 %v1806
  %1847 = vmatpush1.msra.mxu0 %v1805
  %1848 = vmatprep.subr.mxu0 %v1804
  %1849 = vmatpush1.msra.mxu0 %v1803
  %1850 = vmatprep.subr.mxu0 %v1802
  %1851 = vmatpush1.msra.mxu0 %v1801
  %1852 = vmatprep.subr.mxu0 %v1800
  %1853 = vmatpush1.msra.mxu0 %v1799
  %1854 = vmatprep.subr.mxu0 0.0
  %1855 = vmatpush2.msra.mxu0 0.0
  %1856 = vmatprep.subr.mxu0 0.0
  %1857 = vmatpush2.msra.mxu0 0.0
  %1858 = vmatprep.subr.mxu0 0.0
  %1859 = vmatpush2.msra.mxu0 0.0
  %1860 = vmatprep.subr.mxu0 0.0
  %1861 = vmatpush2.msra.mxu0 0.0
  %1862 = vmatprep.subr.mxu0 0.0
  %1863 = vmatpush2.msra.mxu0 0.0
  %1864 = vmatprep.subr.mxu0 0.0
  %1865 = vmatpush2.msra.mxu0 0.0
  %1866 = vmatprep.subr.mxu0 0.0
  %1867 = vmatpush2.msra.mxu0 0.0
  %1868 = vmatprep.subr.mxu0 0.0
  %1869 = vmatpush2.msra.mxu0 0.0
  %1870 = vmatprep.subr.mxu0 0.0
  %1871 = vmatpush2.msra.mxu0 0.0
  %1872 = vmatprep.subr.mxu0 0.0
  %1873 = vmatpush2.msra.mxu0 0.0
  %1874 = vmatprep.subr.mxu0 0.0
  %1875 = vmatpush2.msra.mxu0 0.0
  %1876 = vmatprep.subr.mxu0 0.0
  %1877 = vmatpush2.msra.mxu0 0.0
  %1878 = vmatprep.subr.mxu0 0.0
  %1879 = vmatpush2.msra.mxu0 0.0
  %1880 = vmatprep.subr.mxu0 0.0
  %1881 = vmatpush2.msra.mxu0 0.0
  %1882 = vmatprep.subr.mxu0 0.0
  %1883 = vmatpush2.msra.mxu0 0.0
  %1884 = vmatprep.subr.mxu0 0.0
  %1885 = vmatpush2.msra.mxu0 0.0
  %1886 = vmatprep.mubr.f32.mxu0 0.0
  %1887 = vmatmul.mubr.f32.gmra.mxu0 %v1820
  %v1888 = vpop.f32.mrf.mxu0
  %v1889 = vadd.f32 0.0, %v1888
  %v1890 = vpop.f32.mrf.mxu0
  %v1891 = vadd.f32 0.0, %v1890
  %1892 = vdwg.mxu0
  %v1893 = vadd.f32 %v1797, %v1889
  %v1894 = vadd.f32 %v1798, %v1891
  %v1895 = vld [vmem:[%s5 + $0x640] sm:$0xff]
  %v1896 = vld [vmem:[%s5 + $0x648] sm:$0xff]
  %v1897 = vld [vmem:[%s5 + $0x650] sm:$0xff]
  %v1898 = vld [vmem:[%s5 + $0x658] sm:$0xff]
  %v1899 = vld [vmem:[%s5 + $0x660] sm:$0xff]
  %v1900 = vld [vmem:[%s5 + $0x668] sm:$0xff]
  %v1901 = vld [vmem:[%s5 + $0x670] sm:$0xff]
  %v1902 = vld [vmem:[%s5 + $0x678] sm:$0xff]
  %v1903 = vld [vmem:[%s5 + $0x680] sm:$0xff]
  %v1904 = vld [vmem:[%s5 + $0x688] sm:$0xff]
  %v1905 = vld [vmem:[%s5 + $0x690] sm:$0xff]
  %v1906 = vld [vmem:[%s5 + $0x698] sm:$0xff]
  %v1907 = vld [vmem:[%s5 + $0x6a0] sm:$0xff]
  %v1908 = vld [vmem:[%s5 + $0x6a8] sm:$0xff]
  %v1909 = vld [vmem:[%s5 + $0x6b0] sm:$0xff]
  %v1910 = vld [vmem:[%s5 + $0x6b8] sm:$0xff]
  %v1911 = vld [vmem:[%s5 + $0x6c0] sm:$0xff]
  %v1912 = vld [vmem:[%s5 + $0x6c8] sm:$0xff]
  %v1913 = vld [vmem:[%s5 + $0x6d0] sm:$0xff]
  %v1914 = vld [vmem:[%s5 + $0x6d8] sm:$0xff]
  %v1916 = vsel %vm597, %v265, 0
  %1918 = vmatprep.subr.mxu0 0.0
  %1919 = vmatpush1.msra.mxu0 0.0
  %1920 = vmatprep.subr.mxu0 0.0
  %1921 = vmatpush1.msra.mxu0 0.0
  %1922 = vmatprep.subr.mxu0 0.0
  %1923 = vmatpush1.msra.mxu0 0.0
  %1924 = vmatprep.subr.mxu0 0.0
  %1925 = vmatpush1.msra.mxu0 0.0
  %1926 = vmatprep.subr.mxu0 0.0
  %1927 = vmatpush1.msra.mxu0 0.0
  %1928 = vmatprep.subr.mxu0 0.0
  %1929 = vmatpush1.msra.mxu0 0.0
  %1930 = vmatprep.subr.mxu0 %v1914
  %1931 = vmatpush1.msra.mxu0 %v1913
  %1932 = vmatprep.subr.mxu0 %v1912
  %1933 = vmatpush1.msra.mxu0 %v1911
  %1934 = vmatprep.subr.mxu0 %v1910
  %1935 = vmatpush1.msra.mxu0 %v1909
  %1936 = vmatprep.subr.mxu0 %v1908
  %1937 = vmatpush1.msra.mxu0 %v1907
  %1938 = vmatprep.subr.mxu0 %v1906
  %1939 = vmatpush1.msra.mxu0 %v1905
  %1940 = vmatprep.subr.mxu0 %v1904
  %1941 = vmatpush1.msra.mxu0 %v1903
  %1942 = vmatprep.subr.mxu0 %v1902
  %1943 = vmatpush1.msra.mxu0 %v1901
  %1944 = vmatprep.subr.mxu0 %v1900
  %1945 = vmatpush1.msra.mxu0 %v1899
  %1946 = vmatprep.subr.mxu0 %v1898
  %1947 = vmatpush1.msra.mxu0 %v1897
  %1948 = vmatprep.subr.mxu0 %v1896
  %1949 = vmatpush1.msra.mxu0 %v1895
  %1950 = vmatprep.subr.mxu0 0.0
  %1951 = vmatpush2.msra.mxu0 0.0
  %1952 = vmatprep.subr.mxu0 0.0
  %1953 = vmatpush2.msra.mxu0 0.0
  %1954 = vmatprep.subr.mxu0 0.0
  %1955 = vmatpush2.msra.mxu0 0.0
  %1956 = vmatprep.subr.mxu0 0.0
  %1957 = vmatpush2.msra.mxu0 0.0
  %1958 = vmatprep.subr.mxu0 0.0
  %1959 = vmatpush2.msra.mxu0 0.0
  %1960 = vmatprep.subr.mxu0 0.0
  %1961 = vmatpush2.msra.mxu0 0.0
  %1962 = vmatprep.subr.mxu0 0.0
  %1963 = vmatpush2.msra.mxu0 0.0
  %1964 = vmatprep.subr.mxu0 0.0
  %1965 = vmatpush2.msra.mxu0 0.0
  %1966 = vmatprep.subr.mxu0 0.0
  %1967 = vmatpush2.msra.mxu0 0.0
  %1968 = vmatprep.subr.mxu0 0.0
  %1969 = vmatpush2.msra.mxu0 0.0
  %1970 = vmatprep.subr.mxu0 0.0
  %1971 = vmatpush2.msra.mxu0 0.0
  %1972 = vmatprep.subr.mxu0 0.0
  %1973 = vmatpush2.msra.mxu0 0.0
  %1974 = vmatprep.subr.mxu0 0.0
  %1975 = vmatpush2.msra.mxu0 0.0
  %1976 = vmatprep.subr.mxu0 0.0
  %1977 = vmatpush2.msra.mxu0 0.0
  %1978 = vmatprep.subr.mxu0 0.0
  %1979 = vmatpush2.msra.mxu0 0.0
  %1980 = vmatprep.subr.mxu0 0.0
  %1981 = vmatpush2.msra.mxu0 0.0
  %1982 = vmatprep.mubr.f32.mxu0 0.0
  %1983 = vmatmul.mubr.f32.gmra.mxu0 %v1916
  %v1984 = vpop.f32.mrf.mxu0
  %v1985 = vadd.f32 0.0, %v1984
  %v1986 = vpop.f32.mrf.mxu0
  %v1987 = vadd.f32 0.0, %v1986
  %1988 = vdwg.mxu0
  %v1989 = vadd.f32 %v1893, %v1985
  %v1990 = vadd.f32 %v1894, %v1987
  %v1991 = vld [vmem:[%s5 + $0x6e0] sm:$0xff]
  %v1992 = vld [vmem:[%s5 + $0x6e8] sm:$0xff]
  %v1993 = vld [vmem:[%s5 + $0x6f0] sm:$0xff]
  %v1994 = vld [vmem:[%s5 + $0x6f8] sm:$0xff]
  %v1995 = vld [vmem:[%s5 + $0x700] sm:$0xff]
  %v1996 = vld [vmem:[%s5 + $0x708] sm:$0xff]
  %v1997 = vld [vmem:[%s5 + $0x710] sm:$0xff]
  %v1998 = vld [vmem:[%s5 + $0x718] sm:$0xff]
  %v1999 = vld [vmem:[%s5 + $0x720] sm:$0xff]
  %v2000 = vld [vmem:[%s5 + $0x728] sm:$0xff]
  %v2001 = vld [vmem:[%s5 + $0x730] sm:$0xff]
  %v2002 = vld [vmem:[%s5 + $0x738] sm:$0xff]
  %v2003 = vld [vmem:[%s5 + $0x740] sm:$0xff]
  %v2004 = vld [vmem:[%s5 + $0x748] sm:$0xff]
  %v2005 = vld [vmem:[%s5 + $0x750] sm:$0xff]
  %v2006 = vld [vmem:[%s5 + $0x758] sm:$0xff]
  %v2007 = vld [vmem:[%s5 + $0x760] sm:$0xff]
  %v2008 = vld [vmem:[%s5 + $0x768] sm:$0xff]
  %v2009 = vld [vmem:[%s5 + $0x770] sm:$0xff]
  %v2010 = vld [vmem:[%s5 + $0x778] sm:$0xff]
  %v2012 = vsel %vm597, %v266, 0
  %2014 = vmatprep.subr.mxu0 0.0
  %2015 = vmatpush1.msra.mxu0 0.0
  %2016 = vmatprep.subr.mxu0 0.0
  %2017 = vmatpush1.msra.mxu0 0.0
  %2018 = vmatprep.subr.mxu0 0.0
  %2019 = vmatpush1.msra.mxu0 0.0
  %2020 = vmatprep.subr.mxu0 0.0
  %2021 = vmatpush1.msra.mxu0 0.0
  %2022 = vmatprep.subr.mxu0 0.0
  %2023 = vmatpush1.msra.mxu0 0.0
  %2024 = vmatprep.subr.mxu0 0.0
  %2025 = vmatpush1.msra.mxu0 0.0
  %2026 = vmatprep.subr.mxu0 %v2010
  %2027 = vmatpush1.msra.mxu0 %v2009
  %2028 = vmatprep.subr.mxu0 %v2008
  %2029 = vmatpush1.msra.mxu0 %v2007
  %2030 = vmatprep.subr.mxu0 %v2006
  %2031 = vmatpush1.msra.mxu0 %v2005
  %2032 = vmatprep.subr.mxu0 %v2004
  %2033 = vmatpush1.msra.mxu0 %v2003
  %2034 = vmatprep.subr.mxu0 %v2002
  %2035 = vmatpush1.msra.mxu0 %v2001
  %2036 = vmatprep.subr.mxu0 %v2000
  %2037 = vmatpush1.msra.mxu0 %v1999
  %2038 = vmatprep.subr.mxu0 %v1998
  %2039 = vmatpush1.msra.mxu0 %v1997
  %2040 = vmatprep.subr.mxu0 %v1996
  %2041 = vmatpush1.msra.mxu0 %v1995
  %2042 = vmatprep.subr.mxu0 %v1994
  %2043 = vmatpush1.msra.mxu0 %v1993
  %2044 = vmatprep.subr.mxu0 %v1992
  %2045 = vmatpush1.msra.mxu0 %v1991
  %2046 = vmatprep.subr.mxu0 0.0
  %2047 = vmatpush2.msra.mxu0 0.0
  %2048 = vmatprep.subr.mxu0 0.0
  %2049 = vmatpush2.msra.mxu0 0.0
  %2050 = vmatprep.subr.mxu0 0.0
  %2051 = vmatpush2.msra.mxu0 0.0
  %2052 = vmatprep.subr.mxu0 0.0
  %2053 = vmatpush2.msra.mxu0 0.0
  %2054 = vmatprep.subr.mxu0 0.0
  %2055 = vmatpush2.msra.mxu0 0.0
  %2056 = vmatprep.subr.mxu0 0.0
  %2057 = vmatpush2.msra.mxu0 0.0
  %2058 = vmatprep.subr.mxu0 0.0
  %2059 = vmatpush2.msra.mxu0 0.0
  %2060 = vmatprep.subr.mxu0 0.0
  %2061 = vmatpush2.msra.mxu0 0.0
  %2062 = vmatprep.subr.mxu0 0.0
  %2063 = vmatpush2.msra.mxu0 0.0
  %2064 = vmatprep.subr.mxu0 0.0
  %2065 = vmatpush2.msra.mxu0 0.0
  %2066 = vmatprep.subr.mxu0 0.0
  %2067 = vmatpush2.msra.mxu0 0.0
  %2068 = vmatprep.subr.mxu0 0.0
  %2069 = vmatpush2.msra.mxu0 0.0
  %2070 = vmatprep.subr.mxu0 0.0
  %2071 = vmatpush2.msra.mxu0 0.0
  %2072 = vmatprep.subr.mxu0 0.0
  %2073 = vmatpush2.msra.mxu0 0.0
  %2074 = vmatprep.subr.mxu0 0.0
  %2075 = vmatpush2.msra.mxu0 0.0
  %2076 = vmatprep.subr.mxu0 0.0
  %2077 = vmatpush2.msra.mxu0 0.0
  %2078 = vmatprep.mubr.f32.mxu0 0.0
  %2079 = vmatmul.mubr.f32.gmra.mxu0 %v2012
  %v2080 = vpop.f32.mrf.mxu0
  %v2081 = vadd.f32 0.0, %v2080
  %v2082 = vpop.f32.mrf.mxu0
  %v2083 = vadd.f32 0.0, %v2082
  %2084 = vdwg.mxu0
  %v2085 = vadd.f32 %v1989, %v2081
  %v2086 = vadd.f32 %v1990, %v2083
  %v2087 = vld [vmem:[%s6] sm:$0x3]
  %v2089 = vlaneseq
  %v2090 = vshrl.u32 %v2089, 7
  %v2091 = vsub.s32 0, %v2090
  %v2092 = vrot.slane %v2087, %v2091
  %v2093 = vlaneseq
  %v2094 = vshrl.u32 %v2093, 7
  %v2095 = vsub.s32 1, %v2094
  %v2096 = vrot.slane %v2087, %v2095
  %v2099 = vadd.f32 %v2085, %v2092
  %v2100 = vadd.f32 %v2086, %v2096
  %v2101 = vmax.f32 %v2099, 0.0
  %v2102 = vmax.f32 %v2100, 0.0
  %v2103 = vld [vmem:[%s7] sm:$0xff]
  %v2104 = vld [vmem:[%s7 + $0x8] sm:$0xff]
  %v2105 = vld [vmem:[%s7 + $0x10] sm:$0xff]
  %v2106 = vld [vmem:[%s7 + $0x18] sm:$0xff]
  %v2107 = vld [vmem:[%s7 + $0x20] sm:$0xff]
  %v2108 = vld [vmem:[%s7 + $0x28] sm:$0xff]
  %v2109 = vld [vmem:[%s7 + $0x30] sm:$0xff]
  %v2110 = vld [vmem:[%s7 + $0x38] sm:$0xff]
  %v2111 = vld [vmem:[%s7 + $0x40] sm:$0xff]
  %v2112 = vld [vmem:[%s7 + $0x48] sm:$0xff]
  %v2113 = vld [vmem:[%s7 + $0x50] sm:$0xff]
  %v2114 = vld [vmem:[%s7 + $0x58] sm:$0xff]
  %v2115 = vld [vmem:[%s7 + $0x60] sm:$0xff]
  %v2116 = vld [vmem:[%s7 + $0x68] sm:$0xff]
  %v2117 = vld [vmem:[%s7 + $0x70] sm:$0xff]
  %v2118 = vld [vmem:[%s7 + $0x78] sm:$0xff]
  %v2119 = vld [vmem:[%s7 + $0x80] sm:$0xff]
  %v2120 = vld [vmem:[%s7 + $0x88] sm:$0xff]
  %v2121 = vld [vmem:[%s7 + $0x90] sm:$0xff]
  %v2122 = vld [vmem:[%s7 + $0x98] sm:$0xff]
  %v2123 = vld [vmem:[%s7 + $0xa0] sm:$0xff]
  %v2124 = vld [vmem:[%s7 + $0xa8] sm:$0xff]
  %v2125 = vld [vmem:[%s7 + $0xb0] sm:$0xff]
  %v2126 = vld [vmem:[%s7 + $0xb8] sm:$0xff]
  %v2127 = vld [vmem:[%s7 + $0xc0] sm:$0xff]
  %v2128 = vld [vmem:[%s7 + $0xc8] sm:$0xff]
  %v2129 = vld [vmem:[%s7 + $0xd0] sm:$0xff]
  %v2130 = vld [vmem:[%s7 + $0xd8] sm:$0xff]
  %v2131 = vld [vmem:[%s7 + $0xe0] sm:$0xff]
  %v2132 = vld [vmem:[%s7 + $0xe8] sm:$0xff]
  %v2133 = vld [vmem:[%s7 + $0xf0] sm:$0xff]
  %v2134 = vld [vmem:[%s7 + $0xf8] sm:$0xff]
  %v2135 = vld [vmem:[%s7 + $0x100] sm:$0xff]
  %v2136 = vld [vmem:[%s7 + $0x108] sm:$0xff]
  %v2137 = vld [vmem:[%s7 + $0x110] sm:$0xff]
  %v2138 = vld [vmem:[%s7 + $0x118] sm:$0xff]
  %v2139 = vld [vmem:[%s7 + $0x120] sm:$0xff]
  %v2140 = vld [vmem:[%s7 + $0x128] sm:$0xff]
  %v2141 = vld [vmem:[%s7 + $0x130] sm:$0xff]
  %v2142 = vld [vmem:[%s7 + $0x138] sm:$0xff]
  %v2143 = vld [vmem:[%s7 + $0x140] sm:$0xff]
  %v2144 = vld [vmem:[%s7 + $0x148] sm:$0xff]
  %v2145 = vld [vmem:[%s7 + $0x150] sm:$0xff]
  %v2146 = vld [vmem:[%s7 + $0x158] sm:$0xff]
  %v2147 = vld [vmem:[%s7 + $0x160] sm:$0xff]
  %v2148 = vld [vmem:[%s7 + $0x168] sm:$0xff]
  %v2149 = vld [vmem:[%s7 + $0x170] sm:$0xff]
  %v2150 = vld [vmem:[%s7 + $0x178] sm:$0xff]
  %v2151 = vld [vmem:[%s7 + $0x180] sm:$0xff]
  %v2152 = vld [vmem:[%s7 + $0x188] sm:$0xff]
  %v2153 = vld [vmem:[%s7 + $0x190] sm:$0xff]
  %v2154 = vld [vmem:[%s7 + $0x198] sm:$0xff]
  %v2155 = vld [vmem:[%s7 + $0x1a0] sm:$0xff]
  %v2156 = vld [vmem:[%s7 + $0x1a8] sm:$0xff]
  %v2157 = vld [vmem:[%s7 + $0x1b0] sm:$0xff]
  %v2158 = vld [vmem:[%s7 + $0x1b8] sm:$0xff]
  %v2159 = vld [vmem:[%s7 + $0x1c0] sm:$0xff]
  %v2160 = vld [vmem:[%s7 + $0x1c8] sm:$0xff]
  %v2161 = vld [vmem:[%s7 + $0x1d0] sm:$0xff]
  %v2162 = vld [vmem:[%s7 + $0x1d8] sm:$0xff]
  %v2163 = vld [vmem:[%s7 + $0x1e0] sm:$0xff]
  %v2164 = vld [vmem:[%s7 + $0x1e8] sm:$0xff]
  %v2165 = vld [vmem:[%s7 + $0x1f0] sm:$0xff]
  %v2166 = vld [vmem:[%s7 + $0x1f8] sm:$0xff]
  %v2167 = vld [vmem:[%s7 + $0x200] sm:$0xff]
  %v2168 = vld [vmem:[%s7 + $0x208] sm:$0xff]
  %v2169 = vld [vmem:[%s7 + $0x210] sm:$0xff]
  %v2170 = vld [vmem:[%s7 + $0x218] sm:$0xff]
  %v2171 = vld [vmem:[%s7 + $0x220] sm:$0xff]
  %v2172 = vld [vmem:[%s7 + $0x228] sm:$0xff]
  %v2173 = vld [vmem:[%s7 + $0x230] sm:$0xff]
  %v2174 = vld [vmem:[%s7 + $0x238] sm:$0xff]
  %v2175 = vld [vmem:[%s7 + $0x240] sm:$0xff]
  %v2176 = vld [vmem:[%s7 + $0x248] sm:$0xff]
  %v2177 = vld [vmem:[%s7 + $0x250] sm:$0xff]
  %v2178 = vld [vmem:[%s7 + $0x258] sm:$0xff]
  %v2179 = vld [vmem:[%s7 + $0x260] sm:$0xff]
  %v2180 = vld [vmem:[%s7 + $0x268] sm:$0xff]
  %v2181 = vld [vmem:[%s7 + $0x270] sm:$0xff]
  %v2182 = vld [vmem:[%s7 + $0x278] sm:$0xff]
  %v2183 = vld [vmem:[%s7 + $0x280] sm:$0xff]
  %v2184 = vld [vmem:[%s7 + $0x288] sm:$0xff]
  %v2185 = vld [vmem:[%s7 + $0x290] sm:$0xff]
  %v2186 = vld [vmem:[%s7 + $0x298] sm:$0xff]
  %v2187 = vld [vmem:[%s7 + $0x2a0] sm:$0xff]
  %v2188 = vld [vmem:[%s7 + $0x2a8] sm:$0xff]
  %v2189 = vld [vmem:[%s7 + $0x2b0] sm:$0xff]
  %v2190 = vld [vmem:[%s7 + $0x2b8] sm:$0xff]
  %v2191 = vld [vmem:[%s7 + $0x2c0] sm:$0xff]
  %v2192 = vld [vmem:[%s7 + $0x2c8] sm:$0xff]
  %v2193 = vld [vmem:[%s7 + $0x2d0] sm:$0xff]
  %v2194 = vld [vmem:[%s7 + $0x2d8] sm:$0xff]
  %v2195 = vld [vmem:[%s7 + $0x2e0] sm:$0xff]
  %v2196 = vld [vmem:[%s7 + $0x2e8] sm:$0xff]
  %v2197 = vld [vmem:[%s7 + $0x2f0] sm:$0xff]
  %v2198 = vld [vmem:[%s7 + $0x2f8] sm:$0xff]
  %v2199 = vld [vmem:[%s7 + $0x300] sm:$0xff]
  %v2200 = vld [vmem:[%s7 + $0x308] sm:$0xff]
  %v2201 = vld [vmem:[%s7 + $0x310] sm:$0xff]
  %v2202 = vld [vmem:[%s7 + $0x318] sm:$0xff]
  %v2203 = vld [vmem:[%s7 + $0x320] sm:$0xff]
  %v2204 = vld [vmem:[%s7 + $0x328] sm:$0xff]
  %v2205 = vld [vmem:[%s7 + $0x330] sm:$0xff]
  %v2206 = vld [vmem:[%s7 + $0x338] sm:$0xff]
  %v2207 = vld [vmem:[%s7 + $0x340] sm:$0xff]
  %v2208 = vld [vmem:[%s7 + $0x348] sm:$0xff]
  %v2209 = vld [vmem:[%s7 + $0x350] sm:$0xff]
  %v2210 = vld [vmem:[%s7 + $0x358] sm:$0xff]
  %v2211 = vld [vmem:[%s7 + $0x360] sm:$0xff]
  %v2212 = vld [vmem:[%s7 + $0x368] sm:$0xff]
  %v2213 = vld [vmem:[%s7 + $0x370] sm:$0xff]
  %v2214 = vld [vmem:[%s7 + $0x378] sm:$0xff]
  %v2215 = vld [vmem:[%s7 + $0x380] sm:$0xff]
  %v2216 = vld [vmem:[%s7 + $0x388] sm:$0xff]
  %v2217 = vld [vmem:[%s7 + $0x390] sm:$0xff]
  %v2218 = vld [vmem:[%s7 + $0x398] sm:$0xff]
  %v2219 = vld [vmem:[%s7 + $0x3a0] sm:$0xff]
  %v2220 = vld [vmem:[%s7 + $0x3a8] sm:$0xff]
  %v2221 = vld [vmem:[%s7 + $0x3b0] sm:$0xff]
  %v2222 = vld [vmem:[%s7 + $0x3b8] sm:$0xff]
  %v2223 = vld [vmem:[%s7 + $0x3c0] sm:$0xff]
  %v2224 = vld [vmem:[%s7 + $0x3c8] sm:$0xff]
  %v2225 = vld [vmem:[%s7 + $0x3d0] sm:$0xff]
  %v2226 = vld [vmem:[%s7 + $0x3d8] sm:$0xff]
  %v2227 = vld [vmem:[%s7 + $0x3e0] sm:$0xff]
  %v2228 = vld [vmem:[%s7 + $0x3e8] sm:$0xff]
  %v2229 = vld [vmem:[%s7 + $0x3f0] sm:$0xff]
  %v2230 = vld [vmem:[%s7 + $0x3f8] sm:$0xff]
  %v2231 = vld [vmem:[%s7 + $0x400] sm:$0xff]
  %v2232 = vld [vmem:[%s7 + $0x408] sm:$0xff]
  %v2233 = vld [vmem:[%s7 + $0x410] sm:$0xff]
  %v2234 = vld [vmem:[%s7 + $0x418] sm:$0xff]
  %v2235 = vld [vmem:[%s7 + $0x420] sm:$0xff]
  %v2236 = vld [vmem:[%s7 + $0x428] sm:$0xff]
  %v2237 = vld [vmem:[%s7 + $0x430] sm:$0xff]
  %v2238 = vld [vmem:[%s7 + $0x438] sm:$0xff]
  %v2239 = vld [vmem:[%s7 + $0x440] sm:$0xff]
  %v2240 = vld [vmem:[%s7 + $0x448] sm:$0xff]
  %v2241 = vld [vmem:[%s7 + $0x450] sm:$0xff]
  %v2242 = vld [vmem:[%s7 + $0x458] sm:$0xff]
  %v2243 = vld [vmem:[%s7 + $0x460] sm:$0xff]
  %v2244 = vld [vmem:[%s7 + $0x468] sm:$0xff]
  %v2245 = vld [vmem:[%s7 + $0x470] sm:$0xff]
  %v2246 = vld [vmem:[%s7 + $0x478] sm:$0xff]
  %v2247 = vld [vmem:[%s7 + $0x480] sm:$0xff]
  %v2248 = vld [vmem:[%s7 + $0x488] sm:$0xff]
  %v2249 = vld [vmem:[%s7 + $0x490] sm:$0xff]
  %v2250 = vld [vmem:[%s7 + $0x498] sm:$0xff]
  %v2251 = vld [vmem:[%s7 + $0x4a0] sm:$0xff]
  %v2252 = vld [vmem:[%s7 + $0x4a8] sm:$0xff]
  %v2253 = vld [vmem:[%s7 + $0x4b0] sm:$0xff]
  %v2254 = vld [vmem:[%s7 + $0x4b8] sm:$0xff]
  %v2255 = vld [vmem:[%s7 + $0x4c0] sm:$0xff]
  %v2256 = vld [vmem:[%s7 + $0x4c8] sm:$0xff]
  %v2257 = vld [vmem:[%s7 + $0x4d0] sm:$0xff]
  %v2258 = vld [vmem:[%s7 + $0x4d8] sm:$0xff]
  %v2259 = vld [vmem:[%s7 + $0x4e0] sm:$0xff]
  %v2260 = vld [vmem:[%s7 + $0x4e8] sm:$0xff]
  %v2261 = vld [vmem:[%s7 + $0x4f0] sm:$0xff]
  %v2262 = vld [vmem:[%s7 + $0x4f8] sm:$0xff]
  %v2263 = vld [vmem:[%s7 + $0x500] sm:$0xff]
  %v2264 = vld [vmem:[%s7 + $0x508] sm:$0xff]
  %v2265 = vld [vmem:[%s7 + $0x510] sm:$0xff]
  %v2266 = vld [vmem:[%s7 + $0x518] sm:$0xff]
  %v2267 = vld [vmem:[%s7 + $0x520] sm:$0xff]
  %v2268 = vld [vmem:[%s7 + $0x528] sm:$0xff]
  %v2269 = vld [vmem:[%s7 + $0x530] sm:$0xff]
  %v2270 = vld [vmem:[%s7 + $0x538] sm:$0xff]
  %v2271 = vld [vmem:[%s7 + $0x540] sm:$0xff]
  %v2272 = vld [vmem:[%s7 + $0x548] sm:$0xff]
  %v2273 = vld [vmem:[%s7 + $0x550] sm:$0xff]
  %v2274 = vld [vmem:[%s7 + $0x558] sm:$0xff]
  %v2275 = vld [vmem:[%s7 + $0x560] sm:$0xff]
  %v2276 = vld [vmem:[%s7 + $0x568] sm:$0xff]
  %v2277 = vld [vmem:[%s7 + $0x570] sm:$0xff]
  %v2278 = vld [vmem:[%s7 + $0x578] sm:$0xff]
  %v2279 = vld [vmem:[%s7 + $0x580] sm:$0xff]
  %v2280 = vld [vmem:[%s7 + $0x588] sm:$0xff]
  %v2281 = vld [vmem:[%s7 + $0x590] sm:$0xff]
  %v2282 = vld [vmem:[%s7 + $0x598] sm:$0xff]
  %v2283 = vld [vmem:[%s7 + $0x5a0] sm:$0xff]
  %v2284 = vld [vmem:[%s7 + $0x5a8] sm:$0xff]
  %v2285 = vld [vmem:[%s7 + $0x5b0] sm:$0xff]
  %v2286 = vld [vmem:[%s7 + $0x5b8] sm:$0xff]
  %v2287 = vld [vmem:[%s7 + $0x5c0] sm:$0xff]
  %v2288 = vld [vmem:[%s7 + $0x5c8] sm:$0xff]
  %v2289 = vld [vmem:[%s7 + $0x5d0] sm:$0xff]
  %v2290 = vld [vmem:[%s7 + $0x5d8] sm:$0xff]
  %v2291 = vld [vmem:[%s7 + $0x5e0] sm:$0xff]
  %v2292 = vld [vmem:[%s7 + $0x5e8] sm:$0xff]
  %v2293 = vld [vmem:[%s7 + $0x5f0] sm:$0xff]
  %v2294 = vld [vmem:[%s7 + $0x5f8] sm:$0xff]
  %v2295 = vld [vmem:[%s7 + $0x600] sm:$0xff]
  %v2296 = vld [vmem:[%s7 + $0x608] sm:$0xff]
  %v2297 = vld [vmem:[%s7 + $0x610] sm:$0xff]
  %v2298 = vld [vmem:[%s7 + $0x618] sm:$0xff]
  %v2299 = vld [vmem:[%s7 + $0x620] sm:$0xff]
  %v2300 = vld [vmem:[%s7 + $0x628] sm:$0xff]
  %v2301 = vld [vmem:[%s7 + $0x630] sm:$0xff]
  %v2302 = vld [vmem:[%s7 + $0x638] sm:$0xff]
  %v2303 = vld [vmem:[%s7 + $0x640] sm:$0xff]
  %v2304 = vld [vmem:[%s7 + $0x648] sm:$0xff]
  %v2305 = vld [vmem:[%s7 + $0x650] sm:$0xff]
  %v2306 = vld [vmem:[%s7 + $0x658] sm:$0xff]
  %v2307 = vld [vmem:[%s7 + $0x660] sm:$0xff]
  %v2308 = vld [vmem:[%s7 + $0x668] sm:$0xff]
  %v2309 = vld [vmem:[%s7 + $0x670] sm:$0xff]
  %v2310 = vld [vmem:[%s7 + $0x678] sm:$0xff]
  %v2311 = vld [vmem:[%s7 + $0x680] sm:$0xff]
  %v2312 = vld [vmem:[%s7 + $0x688] sm:$0xff]
  %v2313 = vld [vmem:[%s7 + $0x690] sm:$0xff]
  %v2314 = vld [vmem:[%s7 + $0x698] sm:$0xff]
  %v2315 = vld [vmem:[%s7 + $0x6a0] sm:$0xff]
  %v2316 = vld [vmem:[%s7 + $0x6a8] sm:$0xff]
  %v2317 = vld [vmem:[%s7 + $0x6b0] sm:$0xff]
  %v2318 = vld [vmem:[%s7 + $0x6b8] sm:$0xff]
  %v2319 = vld [vmem:[%s7 + $0x6c0] sm:$0xff]
  %v2320 = vld [vmem:[%s7 + $0x6c8] sm:$0xff]
  %v2321 = vld [vmem:[%s7 + $0x6d0] sm:$0xff]
  %v2322 = vld [vmem:[%s7 + $0x6d8] sm:$0xff]
  %v2323 = vld [vmem:[%s8] sm:$0xff]
  %v2324 = vld [vmem:[%s8 + $0x8] sm:$0x7]
  %v2327 = vlaneseq
  %v2328 = vshrl.u32 %v2327, 7
  %v2329 = vsub.s32 0, %v2328
  %v2330 = vrot.slane %v2323, %v2329
  %v2331 = vlaneseq
  %v2332 = vshrl.u32 %v2331, 7
  %v2333 = vsub.s32 1, %v2332
  %v2334 = vrot.slane %v2323, %v2333
  %v2335 = vlaneseq
  %v2336 = vshrl.u32 %v2335, 7
  %v2337 = vsub.s32 2, %v2336
  %v2338 = vrot.slane %v2323, %v2337
  %v2339 = vlaneseq
  %v2340 = vshrl.u32 %v2339, 7
  %v2341 = vsub.s32 3, %v2340
  %v2342 = vrot.slane %v2323, %v2341
  %v2343 = vlaneseq
  %v2344 = vshrl.u32 %v2343, 7
  %v2345 = vsub.s32 4, %v2344
  %v2346 = vrot.slane %v2323, %v2345
  %v2347 = vlaneseq
  %v2348 = vshrl.u32 %v2347, 7
  %v2349 = vsub.s32 5, %v2348
  %v2350 = vrot.slane %v2323, %v2349
  %v2351 = vlaneseq
  %v2352 = vshrl.u32 %v2351, 7
  %v2353 = vsub.s32 6, %v2352
  %v2354 = vrot.slane %v2323, %v2353
  %v2355 = vlaneseq
  %v2356 = vshrl.u32 %v2355, 7
  %v2357 = vsub.s32 7, %v2356
  %v2358 = vrot.slane %v2323, %v2357
  %v2359 = vlaneseq
  %v2360 = vshrl.u32 %v2359, 7
  %v2361 = vsub.s32 0, %v2360
  %v2362 = vrot.slane %v2324, %v2361
  %v2363 = vlaneseq
  %v2364 = vshrl.u32 %v2363, 7
  %v2365 = vsub.s32 1, %v2364
  %v2366 = vrot.slane %v2324, %v2365
  %v2367 = vlaneseq
  %v2368 = vshrl.u32 %v2367, 7
  %v2369 = vsub.s32 2, %v2368
  %v2370 = vrot.slane %v2324, %v2369
  %vm2382 = vcmask 261120
  %v2384 = vsel %vm2382, %v2102, 0
  %2386 = vmatprep.subr.mxu0 %v2269
  %2387 = vmatpush1.msra.mxu0 %v2268
  %2388 = vmatprep.subr.mxu0 %v2258
  %2389 = vmatpush1.msra.mxu0 %v2257
  %2390 = vmatprep.subr.mxu0 %v2247
  %2391 = vmatpush1.msra.mxu0 %v2246
  %2392 = vmatprep.subr.mxu0 %v2236
  %2393 = vmatpush1.msra.mxu0 %v2235
  %2394 = vmatprep.subr.mxu0 %v2225
  %2395 = vmatpush1.msra.mxu0 %v2224
  %2396 = vmatprep.subr.mxu0 %v2214
  %2397 = vmatpush1.msra.mxu0 %v2213
  %2398 = vmatprep.subr.mxu0 %v2203
  %2399 = vmatpush1.msra.mxu0 %v2202
  %2400 = vmatprep.subr.mxu0 %v2192
  %2401 = vmatpush1.msra.mxu0 %v2191
  %2402 = vmatprep.subr.mxu0 %v2181
  %2403 = vmatpush1.msra.mxu0 %v2180
  %2404 = vmatprep.subr.mxu0 %v2170
  %2405 = vmatpush1.msra.mxu0 %v2169
  %2406 = vmatprep.subr.mxu0 %v2159
  %2407 = vmatpush1.msra.mxu0 %v2158
  %2408 = vmatprep.subr.mxu0 %v2148
  %2409 = vmatpush1.msra.mxu0 %v2147
  %2410 = vmatprep.subr.mxu0 %v2137
  %2411 = vmatpush1.msra.mxu0 %v2136
  %2412 = vmatprep.subr.mxu0 %v2126
  %2413 = vmatpush1.msra.mxu0 %v2125
  %2414 = vmatprep.subr.mxu0 %v2115
  %2415 = vmatpush1.msra.mxu0 %v2114
  %2416 = vmatprep.subr.mxu0 %v2104
  %2417 = vmatpush1.msra.mxu0 %v2103
  %2418 = vmatprep.subr.mxu0 0.0
  %2419 = vmatpush2.msra.mxu0 0.0
  %2420 = vmatprep.subr.mxu0 0.0
  %2421 = vmatpush2.msra.mxu0 0.0
  %2422 = vmatprep.subr.mxu0 0.0
  %2423 = vmatpush2.msra.mxu0 0.0
  %2424 = vmatprep.subr.mxu0 0.0
  %2425 = vmatpush2.msra.mxu0 0.0
  %2426 = vmatprep.subr.mxu0 0.0
  %2427 = vmatpush2.msra.mxu0 0.0
  %2428 = vmatprep.subr.mxu0 0.0
  %2429 = vmatpush2.msra.mxu0 0.0
  %2430 = vmatprep.subr.mxu0 0.0
  %2431 = vmatpush2.msra.mxu0 0.0
  %2432 = vmatprep.subr.mxu0 0.0
  %2433 = vmatpush2.msra.mxu0 0.0
  %2434 = vmatprep.subr.mxu0 0.0
  %2435 = vmatpush2.msra.mxu0 0.0
  %2436 = vmatprep.subr.mxu0 0.0
  %2437 = vmatpush2.msra.mxu0 0.0
  %2438 = vmatprep.subr.mxu0 0.0
  %2439 = vmatpush2.msra.mxu0 0.0
  %2440 = vmatprep.subr.mxu0 0.0
  %2441 = vmatpush2.msra.mxu0 0.0
  %2442 = vmatprep.subr.mxu0 %v2313
  %2443 = vmatpush2.msra.mxu0 %v2312
  %2444 = vmatprep.subr.mxu0 %v2302
  %2445 = vmatpush2.msra.mxu0 %v2301
  %2446 = vmatprep.subr.mxu0 %v2291
  %2447 = vmatpush2.msra.mxu0 %v2290
  %2448 = vmatprep.subr.mxu0 %v2280
  %2449 = vmatpush2.msra.mxu0 %v2279
  %2450 = vmatprep.mubr.f32.mxu0 %v2384
  %2451 = vmatmul.mubr.f32.gmra.mxu0 %v2101
  %v2452 = vpop.f32.mrf.mxu0
  %v2453 = vadd.f32 %v2330, %v2452
  %v2454 = vpop.f32.mrf.mxu0
  %v2455 = vadd.f32 %v2334, %v2454
  %2456 = vdwg.mxu0
  %2457 = vmatprep.subr.mxu0 %v2271
  %2458 = vmatpush1.msra.mxu0 %v2270
  %2459 = vmatprep.subr.mxu0 %v2260
  %2460 = vmatpush1.msra.mxu0 %v2259
  %2461 = vmatprep.subr.mxu0 %v2249
  %2462 = vmatpush1.msra.mxu0 %v2248
  %2463 = vmatprep.subr.mxu0 %v2238
  %2464 = vmatpush1.msra.mxu0 %v2237
  %2465 = vmatprep.subr.mxu0 %v2227
  %2466 = vmatpush1.msra.mxu0 %v2226
  %2467 = vmatprep.subr.mxu0 %v2216
  %2468 = vmatpush1.msra.mxu0 %v2215
  %2469 = vmatprep.subr.mxu0 %v2205
  %2470 = vmatpush1.msra.mxu0 %v2204
  %2471 = vmatprep.subr.mxu0 %v2194
  %2472 = vmatpush1.msra.mxu0 %v2193
  %2473 = vmatprep.subr.mxu0 %v2183
  %2474 = vmatpush1.msra.mxu0 %v2182
  %2475 = vmatprep.subr.mxu0 %v2172
  %2476 = vmatpush1.msra.mxu0 %v2171
  %2477 = vmatprep.subr.mxu0 %v2161
  %2478 = vmatpush1.msra.mxu0 %v2160
  %2479 = vmatprep.subr.mxu0 %v2150
  %2480 = vmatpush1.msra.mxu0 %v2149
  %2481 = vmatprep.subr.mxu0 %v2139
  %2482 = vmatpush1.msra.mxu0 %v2138
  %2483 = vmatprep.subr.mxu0 %v2128
  %2484 = vmatpush1.msra.mxu0 %v2127
  %2485 = vmatprep.subr.mxu0 %v2117
  %2486 = vmatpush1.msra.mxu0 %v2116
  %2487 = vmatprep.subr.mxu0 %v2106
  %2488 = vmatpush1.msra.mxu0 %v2105
  %2489 = vmatprep.subr.mxu0 0.0
  %2490 = vmatpush2.msra.mxu0 0.0
  %2491 = vmatprep.subr.mxu0 0.0
  %2492 = vmatpush2.msra.mxu0 0.0
  %2493 = vmatprep.subr.mxu0 0.0
  %2494 = vmatpush2.msra.mxu0 0.0
  %2495 = vmatprep.subr.mxu0 0.0
  %2496 = vmatpush2.msra.mxu0 0.0
  %2497 = vmatprep.subr.mxu0 0.0
  %2498 = vmatpush2.msra.mxu0 0.0
  %2499 = vmatprep.subr.mxu0 0.0
  %2500 = vmatpush2.msra.mxu0 0.0
  %2501 = vmatprep.subr.mxu0 0.0
  %2502 = vmatpush2.msra.mxu0 0.0
  %2503 = vmatprep.subr.mxu0 0.0
  %2504 = vmatpush2.msra.mxu0 0.0
  %2505 = vmatprep.subr.mxu0 0.0
  %2506 = vmatpush2.msra.mxu0 0.0
  %2507 = vmatprep.subr.mxu0 0.0
  %2508 = vmatpush2.msra.mxu0 0.0
  %2509 = vmatprep.subr.mxu0 0.0
  %2510 = vmatpush2.msra.mxu0 0.0
  %2511 = vmatprep.subr.mxu0 0.0
  %2512 = vmatpush2.msra.mxu0 0.0
  %2513 = vmatprep.subr.mxu0 %v2315
  %2514 = vmatpush2.msra.mxu0 %v2314
  %2515 = vmatprep.subr.mxu0 %v2304
  %2516 = vmatpush2.msra.mxu0 %v2303
  %2517 = vmatprep.subr.mxu0 %v2293
  %2518 = vmatpush2.msra.mxu0 %v2292
  %2519 = vmatprep.subr.mxu0 %v2282
  %2520 = vmatpush2.msra.mxu0 %v2281
  %2521 = vmatprep.mubr.f32.mxu0 %v2384
  %2522 = vmatmul.mubr.f32.gmra.mxu0 %v2101
  %v2523 = vpop.f32.mrf.mxu0
  %v2524 = vadd.f32 %v2338, %v2523
  %v2525 = vpop.f32.mrf.mxu0
  %v2526 = vadd.f32 %v2342, %v2525
  %2527 = vdwg.mxu0
  %2528 = vmatprep.subr.mxu0 %v2273
  %2529 = vmatpush1.msra.mxu0 %v2272
  %2530 = vmatprep.subr.mxu0 %v2262
  %2531 = vmatpush1.msra.mxu0 %v2261
  %2532 = vmatprep.subr.mxu0 %v2251
  %2533 = vmatpush1.msra.mxu0 %v2250
  %2534 = vmatprep.subr.mxu0 %v2240
  %2535 = vmatpush1.msra.mxu0 %v2239
  %2536 = vmatprep.subr.mxu0 %v2229
  %2537 = vmatpush1.msra.mxu0 %v2228
  %2538 = vmatprep.subr.mxu0 %v2218
  %2539 = vmatpush1.msra.mxu0 %v2217
  %2540 = vmatprep.subr.mxu0 %v2207
  %2541 = vmatpush1.msra.mxu0 %v2206
  %2542 = vmatprep.subr.mxu0 %v2196
  %2543 = vmatpush1.msra.mxu0 %v2195
  %2544 = vmatprep.subr.mxu0 %v2185
  %2545 = vmatpush1.msra.mxu0 %v2184
  %2546 = vmatprep.subr.mxu0 %v2174
  %2547 = vmatpush1.msra.mxu0 %v2173
  %2548 = vmatprep.subr.mxu0 %v2163
  %2549 = vmatpush1.msra.mxu0 %v2162
  %2550 = vmatprep.subr.mxu0 %v2152
  %2551 = vmatpush1.msra.mxu0 %v2151
  %2552 = vmatprep.subr.mxu0 %v2141
  %2553 = vmatpush1.msra.mxu0 %v2140
  %2554 = vmatprep.subr.mxu0 %v2130
  %2555 = vmatpush1.msra.mxu0 %v2129
  %2556 = vmatprep.subr.mxu0 %v2119
  %2557 = vmatpush1.msra.mxu0 %v2118
  %2558 = vmatprep.subr.mxu0 %v2108
  %2559 = vmatpush1.msra.mxu0 %v2107
  %2560 = vmatprep.subr.mxu0 0.0
  %2561 = vmatpush2.msra.mxu0 0.0
  %2562 = vmatprep.subr.mxu0 0.0
  %2563 = vmatpush2.msra.mxu0 0.0
  %2564 = vmatprep.subr.mxu0 0.0
  %2565 = vmatpush2.msra.mxu0 0.0
  %2566 = vmatprep.subr.mxu0 0.0
  %2567 = vmatpush2.msra.mxu0 0.0
  %2568 = vmatprep.subr.mxu0 0.0
  %2569 = vmatpush2.msra.mxu0 0.0
  %2570 = vmatprep.subr.mxu0 0.0
  %2571 = vmatpush2.msra.mxu0 0.0
  %2572 = vmatprep.subr.mxu0 0.0
  %2573 = vmatpush2.msra.mxu0 0.0
  %2574 = vmatprep.subr.mxu0 0.0
  %2575 = vmatpush2.msra.mxu0 0.0
  %2576 = vmatprep.subr.mxu0 0.0
  %2577 = vmatpush2.msra.mxu0 0.0
  %2578 = vmatprep.subr.mxu0 0.0
  %2579 = vmatpush2.msra.mxu0 0.0
  %2580 = vmatprep.subr.mxu0 0.0
  %2581 = vmatpush2.msra.mxu0 0.0
  %2582 = vmatprep.subr.mxu0 0.0
  %2583 = vmatpush2.msra.mxu0 0.0
  %2584 = vmatprep.subr.mxu0 %v2317
  %2585 = vmatpush2.msra.mxu0 %v2316
  %2586 = vmatprep.subr.mxu0 %v2306
  %2587 = vmatpush2.msra.mxu0 %v2305
  %2588 = vmatprep.subr.mxu0 %v2295
  %2589 = vmatpush2.msra.mxu0 %v2294
  %2590 = vmatprep.subr.mxu0 %v2284
  %2591 = vmatpush2.msra.mxu0 %v2283
  %2592 = vmatprep.mubr.f32.mxu0 %v2384
  %2593 = vmatmul.mubr.f32.gmra.mxu0 %v2101
  %v2594 = vpop.f32.mrf.mxu0
  %v2595 = vadd.f32 %v2346, %v2594
  %v2596 = vpop.f32.mrf.mxu0
  %v2597 = vadd.f32 %v2350, %v2596
  %2598 = vdwg.mxu0
  %2599 = vmatprep.subr.mxu0 %v2275
  %2600 = vmatpush1.msra.mxu0 %v2274
  %2601 = vmatprep.subr.mxu0 %v2264
  %2602 = vmatpush1.msra.mxu0 %v2263
  %2603 = vmatprep.subr.mxu0 %v2253
  %2604 = vmatpush1.msra.mxu0 %v2252
  %2605 = vmatprep.subr.mxu0 %v2242
  %2606 = vmatpush1.msra.mxu0 %v2241
  %2607 = vmatprep.subr.mxu0 %v2231
  %2608 = vmatpush1.msra.mxu0 %v2230
  %2609 = vmatprep.subr.mxu0 %v2220
  %2610 = vmatpush1.msra.mxu0 %v2219
  %2611 = vmatprep.subr.mxu0 %v2209
  %2612 = vmatpush1.msra.mxu0 %v2208
  %2613 = vmatprep.subr.mxu0 %v2198
  %2614 = vmatpush1.msra.mxu0 %v2197
  %2615 = vmatprep.subr.mxu0 %v2187
  %2616 = vmatpush1.msra.mxu0 %v2186
  %2617 = vmatprep.subr.mxu0 %v2176
  %2618 = vmatpush1.msra.mxu0 %v2175
  %2619 = vmatprep.subr.mxu0 %v2165
  %2620 = vmatpush1.msra.mxu0 %v2164
  %2621 = vmatprep.subr.mxu0 %v2154
  %2622 = vmatpush1.msra.mxu0 %v2153
  %2623 = vmatprep.subr.mxu0 %v2143
  %2624 = vmatpush1.msra.mxu0 %v2142
  %2625 = vmatprep.subr.mxu0 %v2132
  %2626 = vmatpush1.msra.mxu0 %v2131
  %2627 = vmatprep.subr.mxu0 %v2121
  %2628 = vmatpush1.msra.mxu0 %v2120
  %2629 = vmatprep.subr.mxu0 %v2110
  %2630 = vmatpush1.msra.mxu0 %v2109
  %2631 = vmatprep.subr.mxu0 0.0
  %2632 = vmatpush2.msra.mxu0 0.0
  %2633 = vmatprep.subr.mxu0 0.0
  %2634 = vmatpush2.msra.mxu0 0.0
  %2635 = vmatprep.subr.mxu0 0.0
  %2636 = vmatpush2.msra.mxu0 0.0
  %2637 = vmatprep.subr.mxu0 0.0
  %2638 = vmatpush2.msra.mxu0 0.0
  %2639 = vmatprep.subr.mxu0 0.0
  %2640 = vmatpush2.msra.mxu0 0.0
  %2641 = vmatprep.subr.mxu0 0.0
  %2642 = vmatpush2.msra.mxu0 0.0
  %2643 = vmatprep.subr.mxu0 0.0
  %2644 = vmatpush2.msra.mxu0 0.0
  %2645 = vmatprep.subr.mxu0 0.0
  %2646 = vmatpush2.msra.mxu0 0.0
  %2647 = vmatprep.subr.mxu0 0.0
  %2648 = vmatpush2.msra.mxu0 0.0
  %2649 = vmatprep.subr.mxu0 0.0
  %2650 = vmatpush2.msra.mxu0 0.0
  %2651 = vmatprep.subr.mxu0 0.0
  %2652 = vmatpush2.msra.mxu0 0.0
  %2653 = vmatprep.subr.mxu0 0.0
  %2654 = vmatpush2.msra.mxu0 0.0
  %2655 = vmatprep.subr.mxu0 %v2319
  %2656 = vmatpush2.msra.mxu0 %v2318
  %2657 = vmatprep.subr.mxu0 %v2308
  %2658 = vmatpush2.msra.mxu0 %v2307
  %2659 = vmatprep.subr.mxu0 %v2297
  %2660 = vmatpush2.msra.mxu0 %v2296
  %2661 = vmatprep.subr.mxu0 %v2286
  %2662 = vmatpush2.msra.mxu0 %v2285
  %2663 = vmatprep.mubr.f32.mxu0 %v2384
  %2664 = vmatmul.mubr.f32.gmra.mxu0 %v2101
  %v2665 = vpop.f32.mrf.mxu0
  %v2666 = vadd.f32 %v2354, %v2665
  %v2667 = vpop.f32.mrf.mxu0
  %v2668 = vadd.f32 %v2358, %v2667
  %2669 = vdwg.mxu0
  %2670 = vmatprep.subr.mxu0 %v2277
  %2671 = vmatpush1.msra.mxu0 %v2276
  %2672 = vmatprep.subr.mxu0 %v2266
  %2673 = vmatpush1.msra.mxu0 %v2265
  %2674 = vmatprep.subr.mxu0 %v2255
  %2675 = vmatpush1.msra.mxu0 %v2254
  %2676 = vmatprep.subr.mxu0 %v2244
  %2677 = vmatpush1.msra.mxu0 %v2243
  %2678 = vmatprep.subr.mxu0 %v2233
  %2679 = vmatpush1.msra.mxu0 %v2232
  %2680 = vmatprep.subr.mxu0 %v2222
  %2681 = vmatpush1.msra.mxu0 %v2221
  %2682 = vmatprep.subr.mxu0 %v2211
  %2683 = vmatpush1.msra.mxu0 %v2210
  %2684 = vmatprep.subr.mxu0 %v2200
  %2685 = vmatpush1.msra.mxu0 %v2199
  %2686 = vmatprep.subr.mxu0 %v2189
  %2687 = vmatpush1.msra.mxu0 %v2188
  %2688 = vmatprep.subr.mxu0 %v2178
  %2689 = vmatpush1.msra.mxu0 %v2177
  %2690 = vmatprep.subr.mxu0 %v2167
  %2691 = vmatpush1.msra.mxu0 %v2166
  %2692 = vmatprep.subr.mxu0 %v2156
  %2693 = vmatpush1.msra.mxu0 %v2155
  %2694 = vmatprep.subr.mxu0 %v2145
  %2695 = vmatpush1.msra.mxu0 %v2144
  %2696 = vmatprep.subr.mxu0 %v2134
  %2697 = vmatpush1.msra.mxu0 %v2133
  %2698 = vmatprep.subr.mxu0 %v2123
  %2699 = vmatpush1.msra.mxu0 %v2122
  %2700 = vmatprep.subr.mxu0 %v2112
  %2701 = vmatpush1.msra.mxu0 %v2111
  %2702 = vmatprep.subr.mxu0 0.0
  %2703 = vmatpush2.msra.mxu0 0.0
  %2704 = vmatprep.subr.mxu0 0.0
  %2705 = vmatpush2.msra.mxu0 0.0
  %2706 = vmatprep.subr.mxu0 0.0
  %2707 = vmatpush2.msra.mxu0 0.0
  %2708 = vmatprep.subr.mxu0 0.0
  %2709 = vmatpush2.msra.mxu0 0.0
  %2710 = vmatprep.subr.mxu0 0.0
  %2711 = vmatpush2.msra.mxu0 0.0
  %2712 = vmatprep.subr.mxu0 0.0
  %2713 = vmatpush2.msra.mxu0 0.0
  %2714 = vmatprep.subr.mxu0 0.0
  %2715 = vmatpush2.msra.mxu0 0.0
  %2716 = vmatprep.subr.mxu0 0.0
  %2717 = vmatpush2.msra.mxu0 0.0
  %2718 = vmatprep.subr.mxu0 0.0
  %2719 = vmatpush2.msra.mxu0 0.0
  %2720 = vmatprep.subr.mxu0 0.0
  %2721 = vmatpush2.msra.mxu0 0.0
  %2722 = vmatprep.subr.mxu0 0.0
  %2723 = vmatpush2.msra.mxu0 0.0
  %2724 = vmatprep.subr.mxu0 0.0
  %2725 = vmatpush2.msra.mxu0 0.0
  %2726 = vmatprep.subr.mxu0 %v2321
  %2727 = vmatpush2.msra.mxu0 %v2320
  %2728 = vmatprep.subr.mxu0 %v2310
  %2729 = vmatpush2.msra.mxu0 %v2309
  %2730 = vmatprep.subr.mxu0 %v2299
  %2731 = vmatpush2.msra.mxu0 %v2298
  %2732 = vmatprep.subr.mxu0 %v2288
  %2733 = vmatpush2.msra.mxu0 %v2287
  %2734 = vmatprep.mubr.f32.mxu0 %v2384
  %2735 = vmatmul.mubr.f32.gmra.mxu0 %v2101
  %v2736 = vpop.f32.mrf.mxu0
  %v2737 = vadd.f32 %v2362, %v2736
  %v2738 = vpop.f32.mrf.mxu0
  %v2739 = vadd.f32 %v2366, %v2738
  %2740 = vdwg.mxu0
  %2741 = vmatprep.subr.mxu0 0.0
  %2742 = vmatpush1.msra.mxu0 %v2278
  %2743 = vmatprep.subr.mxu0 0.0
  %2744 = vmatpush1.msra.mxu0 %v2267
  %2745 = vmatprep.subr.mxu0 0.0
  %2746 = vmatpush1.msra.mxu0 %v2256
  %2747 = vmatprep.subr.mxu0 0.0
  %2748 = vmatpush1.msra.mxu0 %v2245
  %2749 = vmatprep.subr.mxu0 0.0
  %2750 = vmatpush1.msra.mxu0 %v2234
  %2751 = vmatprep.subr.mxu0 0.0
  %2752 = vmatpush1.msra.mxu0 %v2223
  %2753 = vmatprep.subr.mxu0 0.0
  %2754 = vmatpush1.msra.mxu0 %v2212
  %2755 = vmatprep.subr.mxu0 0.0
  %2756 = vmatpush1.msra.mxu0 %v2201
  %2757 = vmatprep.subr.mxu0 0.0
  %2758 = vmatpush1.msra.mxu0 %v2190
  %2759 = vmatprep.subr.mxu0 0.0
  %2760 = vmatpush1.msra.mxu0 %v2179
  %2761 = vmatprep.subr.mxu0 0.0
  %2762 = vmatpush1.msra.mxu0 %v2168
  %2763 = vmatprep.subr.mxu0 0.0
  %2764 = vmatpush1.msra.mxu0 %v2157
  %2765 = vmatprep.subr.mxu0 0.0
  %2766 = vmatpush1.msra.mxu0 %v2146
  %2767 = vmatprep.subr.mxu0 0.0
  %2768 = vmatpush1.msra.mxu0 %v2135
  %2769 = vmatprep.subr.mxu0 0.0
  %2770 = vmatpush1.msra.mxu0 %v2124
  %2771 = vmatprep.subr.mxu0 0.0
  %2772 = vmatpush1.msra.mxu0 %v2113
  %2773 = vmatprep.subr.mxu0 0.0
  %2774 = vmatpush2.msra.mxu0 0.0
  %2775 = vmatprep.subr.mxu0 0.0
  %2776 = vmatpush2.msra.mxu0 0.0
  %2777 = vmatprep.subr.mxu0 0.0
  %2778 = vmatpush2.msra.mxu0 0.0
  %2779 = vmatprep.subr.mxu0 0.0
  %2780 = vmatpush2.msra.mxu0 0.0
  %2781 = vmatprep.subr.mxu0 0.0
  %2782 = vmatpush2.msra.mxu0 0.0
  %2783 = vmatprep.subr.mxu0 0.0
  %2784 = vmatpush2.msra.mxu0 0.0
  %2785 = vmatprep.subr.mxu0 0.0
  %2786 = vmatpush2.msra.mxu0 0.0
  %2787 = vmatprep.subr.mxu0 0.0
  %2788 = vmatpush2.msra.mxu0 0.0
  %2789 = vmatprep.subr.mxu0 0.0
  %2790 = vmatpush2.msra.mxu0 0.0
  %2791 = vmatprep.subr.mxu0 0.0
  %2792 = vmatpush2.msra.mxu0 0.0
  %2793 = vmatprep.subr.mxu0 0.0
  %2794 = vmatpush2.msra.mxu0 0.0
  %2795 = vmatprep.subr.mxu0 0.0
  %2796 = vmatpush2.msra.mxu0 0.0
  %2797 = vmatprep.subr.mxu0 0.0
  %2798 = vmatpush2.msra.mxu0 %v2322
  %2799 = vmatprep.subr.mxu0 0.0
  %2800 = vmatpush2.msra.mxu0 %v2311
  %2801 = vmatprep.subr.mxu0 0.0
  %2802 = vmatpush2.msra.mxu0 %v2300
  %2803 = vmatprep.subr.mxu0 0.0
  %2804 = vmatpush2.msra.mxu0 %v2289
  %2805 = vmatprep.mubr.f32.mxu0 %v2384
  %2806 = vmatmul.mubr.f32.gmra.mxu0 %v2101
  %v2807 = vpop.f32.mrf.mxu0
  %v2808 = vadd.f32 %v2370, %v2807
  %v2809 = vpop.f32.mrf.mxu0
  %2810 = vdwg.mxu0
  %2811 = vst [vmem:[%s9] sm:$0xff] %v2453
  %2812 = vst [vmem:[%s9 + $0x8] sm:$0xff] %v2455
  %2813 = vst [vmem:[%s9 + $0x10] sm:$0xff] %v2524
  %2814 = vst [vmem:[%s9 + $0x18] sm:$0xff] %v2526
  %2815 = vst [vmem:[%s9 + $0x20] sm:$0xff] %v2595
  %2816 = vst [vmem:[%s9 + $0x28] sm:$0xff] %v2597
  %2817 = vst [vmem:[%s9 + $0x30] sm:$0xff] %v2666
  %2818 = vst [vmem:[%s9 + $0x38] sm:$0xff] %v2668
  %2819 = vst [vmem:[%s9 + $0x40] sm:$0xff] %v2737
  %2820 = vst [vmem:[%s9 + $0x48] sm:$0xff] %v2739
  %2821 = vst [vmem:[%s9 + $0x50] sm:$0xff] %v2808
  // Predicated region
  $region38: #{deepid_forward.7} parent=0 // pred_check
    _
  $region39: #{deepid_forward.7} parent=0 // pred_check_branch
    %2823 = sbr.rel (0) target = $region41
  $region40: #{deepid_forward.7} parent=0 // pred_region
    _
  $region41: #{deepid_forward.7} parent=0 // pred_fallthru
    _
  // Predicated region
  $region42: #{deepid_forward.7} parent=0 // pred_check
    _
  $region43: #{deepid_forward.7} parent=0 // pred_check_branch
    %2825 = sbr.rel (0) target = $region45
  $region44: #{deepid_forward.7} parent=0 // pred_region
    _
  $region45: #{deepid_forward.7} parent=0 // pred_fallthru
    _

</llo_original>
